<compile_context>
chip_gen: v7x
topology: tpu7x:2x2x1
jax: 0.10.0
libtpu: 0.0.40
codegen_flags: <defaults>
</compile_context>

<pallas_src>
import math

import jax
import jax.numpy as jnp
from jax.experimental import pallas as pl
from jax.experimental.pallas import tpu as pltpu

CMIN = 8      # minimum sublane width used for channel axes
NPAD = 128    # padded width of the fc output column


# ----------------------------------------------------------------------------
# in-kernel building blocks (operate on (C, L) float32 values)
# ----------------------------------------------------------------------------
def _conv3(x, w_ref, b_ref, *, stride=1, relu=False, residual=None):
    """conv1d(kernel=3, padding=1, stride=stride) on a (Cin, L) slab.

    w_ref : (3, Cout, Cin)  -- tap-major, already transposed to (out, in)
    b_ref : (Cout, 1)
    Returns (Cout, L // stride).

    Each tap is two plain MXU matmuls: x @ sel_k gathers the (optionally
    strided) shifted columns; the 'same' zero padding falls out of edge rows
    of the 0/1 selection matrix that simply select nothing.
    """
    _, L = x.shape
    lout = L // stride
    j = jax.lax.broadcasted_iota(jnp.int32, (L, lout), 0)   # input position
    o = jax.lax.broadcasted_iota(jnp.int32, (L, lout), 1)   # output position
    acc = None
    for k in range(3):                                      # unrolled taps
        sel = (j == stride * o + (k - 1)).astype(jnp.float32)           # (L, lout)
        xs = jnp.dot(x, sel, preferred_element_type=jnp.float32)        # (Cin, lout)
        t = jnp.dot(w_ref[k], xs, preferred_element_type=jnp.float32)   # (Cout, lout)
        acc = t if acc is None else acc + t
    acc = acc + b_ref[...]
    if residual is not None:
        acc = acc + residual
    if relu:
        acc = jnp.maximum(acc, 0.0)
    return acc


def _resblock(x, w1, b1, w2, b2):
    h = _conv3(x, w1, b1, relu=True)
    return _conv3(h, w2, b2, relu=True, residual=x)


def _attention(x, wq, bq, wk, bk, wv, bv):
    """Scaled dot-product self-attention + residual.

    x : (T, D) with T = channels used as tokens, D = length used as features.
    """
    d = x.shape[1]
    q = jnp.dot(x, wq[...], preferred_element_type=jnp.float32) + bq[...]
    k = jnp.dot(x, wk[...], preferred_element_type=jnp.float32) + bk[...]
    v = jnp.dot(x, wv[...], preferred_element_type=jnp.float32) + bv[...]
    s = jax.lax.dot_general(q, k, (((1,), (1,)), ((), ())),
                            preferred_element_type=jnp.float32)
    s = s * (1.0 / math.sqrt(d))
    s = s - jnp.max(s, axis=-1, keepdims=True)
    p = jnp.exp(s)
    p = p * pl.reciprocal(jnp.sum(p, axis=-1, keepdims=True), approx=True)
    return jnp.dot(p, v, preferred_element_type=jnp.float32) + x


def _fc(x, w_ref, b_ref):
    """fc on the torch-order flatten of x.

    x     : (C=32, L=4) -- row-major flatten == torch x.view(b, -1)
    w_ref : (4, NPAD, 32) with w_ref[l, n, c] = W_fc[c * 4 + l, n]
    b_ref : (NPAD, 1)
    Returns the logits as an (NPAD, 1) column.
    """
    n_l = x.shape[1]
    npad = w_ref.shape[1]
    lane = jax.lax.broadcasted_iota(jnp.int32, (npad, n_l), 1)
    z = jnp.zeros((npad, n_l), jnp.float32)
    for l in range(n_l):                                     # unrolled, 4 steps
        m = jnp.dot(w_ref[l], x, preferred_element_type=jnp.float32)    # (NPAD, 4)
        z = z + jnp.where(lane == l, m, 0.0)
    return jnp.sum(z, axis=1, keepdims=True) + b_ref[...]


def _fused_forward_kernel(*refs):
    """Entire ResAttentionModel forward for one batch element."""
    x_ref, o_ref = refs[0], refs[-1]
    wrefs = refs[1:-1]
    pos = [0]

    def take(n):
        out = wrefs[pos[0]:pos[0] + n]
        pos[0] += n
        return out

    # (1, 1, L) block -> (1, L); widen the single input channel to CMIN
    # zero-padded sublane channels so every matmul has >= 8-wide operands.
    x1 = x_ref[0]
    row = jax.lax.broadcasted_iota(jnp.int32, (CMIN, x1.shape[1]), 0)
    x = jnp.where(row == 0, x1, 0.0)

    # first_part: 3 x (ResBlock + stride-2 downsample conv)
    for _ in range(3):
        w1, b1, w2, b2, wd, bd = take(6)
        x = _resblock(x, w1, b1, w2, b2)
        x = _conv3(x, wd, bd, stride=2)

    # attention over the 8 channel tokens (no transpose needed in (C, L) layout)
    wq, bq, wk, bk, wv, bv = take(6)
    x = _attention(x, wq, bq, wk, bk, wv, bv)

    # second_part: 2 x (ResBlock + stride-2 downsample conv)
    for _ in range(2):
        w1, b1, w2, b2, wd, bd = take(6)
        x = _resblock(x, w1, b1, w2, b2)
        x = _conv3(x, wd, bd, stride=2)

    # flatten (row-major over (32, 4) == torch .view(b, -1)) + fc
    wf, bf = take(2)
    o_ref[0] = _fc(x, wf, bf)


# ----------------------------------------------------------------------------
# host-side wrapper
# ----------------------------------------------------------------------------
def res_attention_forward(x_ncl, weights, num_label):
    """x_ncl: (B, 1, 128) float32, PyTorch NCL layout."""
    B, _, L = x_ncl.shape

    def const_spec(a):
        return pl.BlockSpec(a.shape, lambda b, n=a.ndim: (0,) * n)

    in_specs = [pl.BlockSpec((1, 1, L), lambda b: (b, 0, 0))]
    in_specs += [const_spec(a) for a in weights]

    out = pl.pallas_call(
        _fused_forward_kernel,
        out_shape=jax.ShapeDtypeStruct((B, NPAD, 1), jnp.float32),
        grid=(B,),
        in_specs=in_specs,
        out_specs=pl.BlockSpec((1, NPAD, 1), lambda b: (b, 0, 0)),
        compiler_params=pltpu.CompilerParams(
            dimension_semantics=("parallel",)),
    )(x_ncl, *weights)
    return out[:, :num_label, 0]


# ----------------------------------------------------------------------------
# parameter init (deterministic, PyTorch-default-style uniform bounds)
# ----------------------------------------------------------------------------
def _uniform(key, shape, bound):
    return jax.random.uniform(key, shape, jnp.float32, -bound, bound)


def _init_conv(key, cin, cout, k=3):
    """(k, Cout, Cin) weight + (Cout, 1) bias, torch Conv1d default init;
    channel axes zero-padded up to CMIN sublanes (padded channels stay 0)."""
    kw, kb = jax.random.split(key)
    bound = 1.0 / math.sqrt(cin * k)
    w = _uniform(kw, (k, cout, cin), bound)
    b = _uniform(kb, (cout, 1), bound)
    cop, cip = max(cout, CMIN), max(cin, CMIN)
    wp = jnp.zeros((k, cop, cip), jnp.float32).at[:, :cout, :cin].set(w)
    bp = jnp.zeros((cop, 1), jnp.float32).at[:cout].set(b)
    return wp, bp


def _init_linear(key, fin, fout):
    kw, kb = jax.random.split(key)
    bound = 1.0 / math.sqrt(fin)
    return _uniform(kw, (fin, fout), bound), _uniform(kb, (fout,), bound)


def init_params(key, num_label):
    """Flat list of weight arrays in the exact order the fused kernel reads."""
    arrays = []
    ch = 1
    for n_blocks in (3, 2):
        for _ in range(n_blocks):
            key, k1, k2, k3 = jax.random.split(key, 4)
            w1, b1 = _init_conv(k1, ch, ch)
            w2, b2 = _init_conv(k2, ch, ch)
            wd, bd = _init_conv(k3, ch, 2 * ch)
            arrays += [w1, b1, w2, b2, wd, bd]
            ch *= 2
        if n_blocks == 3:                    # attention sits between the parts
            d = 16
            key, kq, kk, kv = jax.random.split(key, 4)
            for kproj in (kq, kk, kv):
                w, b = _init_linear(kproj, d, d)
                arrays += [w, b.reshape(1, d)]
    # fc = Linear(4 * 32, num_label); fold torch's row-major .view(b, -1)
    # flatten order into the weight layout: w3[l, n, c] = W_fc[c * 4 + l, n].
    key, kf = jax.random.split(key)
    wf, bf = _init_linear(kf, 4 * 32, num_label)            # (128, N), (N,)
    w3 = jnp.transpose(wf.reshape(32, 4, num_label), (1, 2, 0))   # (4, N, 32)
    w3 = jnp.zeros((4, NPAD, 32), jnp.float32).at[:, :num_label, :].set(w3)
    b3 = jnp.zeros((NPAD, 1), jnp.float32).at[:num_label, 0].set(bf)
    arrays += [w3, b3]
    return arrays


# ----------------------------------------------------------------------------
if __name__ == "__main__":
    B, L, num_label = 2, 128, 5     # L=128 is forced by fc = Linear(4*32, ...)
    key = jax.random.PRNGKey(0)
    kx, kp = jax.random.split(key)
    x = jax.random.normal(kx, (B, 1, L), jnp.float32)   # PyTorch NCL input
    weights = init_params(kp, num_label)

    fwd = jax.jit(lambda xx, ww: res_attention_forward(xx, ww, num_label))
    out = jax.block_until_ready(fwd(x, weights))
    assert out.shape == (B, num_label), out.shape
    assert jnp.all(jnp.isfinite(out))
    print("KERNEL_OK")
</pallas_src>

<mosaic_0001>
module attributes {stable_mosaic.version = 11 : i64} {
  func.func @_fused_forward_kernel(%arg0: i32, %arg1: memref<1x1x128xf32, #tpu.memory_space<vmem>>, %arg2: memref<3x8x8xf32, #tpu.memory_space<vmem>>, %arg3: memref<8x1xf32, #tpu.memory_space<vmem>>, %arg4: memref<3x8x8xf32, #tpu.memory_space<vmem>>, %arg5: memref<8x1xf32, #tpu.memory_space<vmem>>, %arg6: memref<3x8x8xf32, #tpu.memory_space<vmem>>, %arg7: memref<8x1xf32, #tpu.memory_space<vmem>>, %arg8: memref<3x8x8xf32, #tpu.memory_space<vmem>>, %arg9: memref<8x1xf32, #tpu.memory_space<vmem>>, %arg10: memref<3x8x8xf32, #tpu.memory_space<vmem>>, %arg11: memref<8x1xf32, #tpu.memory_space<vmem>>, %arg12: memref<3x8x8xf32, #tpu.memory_space<vmem>>, %arg13: memref<8x1xf32, #tpu.memory_space<vmem>>, %arg14: memref<3x8x8xf32, #tpu.memory_space<vmem>>, %arg15: memref<8x1xf32, #tpu.memory_space<vmem>>, %arg16: memref<3x8x8xf32, #tpu.memory_space<vmem>>, %arg17: memref<8x1xf32, #tpu.memory_space<vmem>>, %arg18: memref<3x8x8xf32, #tpu.memory_space<vmem>>, %arg19: memref<8x1xf32, #tpu.memory_space<vmem>>, %arg20: memref<16x16xf32, #tpu.memory_space<vmem>>, %arg21: memref<1x16xf32, #tpu.memory_space<vmem>>, %arg22: memref<16x16xf32, #tpu.memory_space<vmem>>, %arg23: memref<1x16xf32, #tpu.memory_space<vmem>>, %arg24: memref<16x16xf32, #tpu.memory_space<vmem>>, %arg25: memref<1x16xf32, #tpu.memory_space<vmem>>, %arg26: memref<3x8x8xf32, #tpu.memory_space<vmem>>, %arg27: memref<8x1xf32, #tpu.memory_space<vmem>>, %arg28: memref<3x8x8xf32, #tpu.memory_space<vmem>>, %arg29: memref<8x1xf32, #tpu.memory_space<vmem>>, %arg30: memref<3x16x8xf32, #tpu.memory_space<vmem>>, %arg31: memref<16x1xf32, #tpu.memory_space<vmem>>, %arg32: memref<3x16x16xf32, #tpu.memory_space<vmem>>, %arg33: memref<16x1xf32, #tpu.memory_space<vmem>>, %arg34: memref<3x16x16xf32, #tpu.memory_space<vmem>>, %arg35: memref<16x1xf32, #tpu.memory_space<vmem>>, %arg36: memref<3x32x16xf32, #tpu.memory_space<vmem>>, %arg37: memref<32x1xf32, #tpu.memory_space<vmem>>, %arg38: memref<4x128x32xf32, #tpu.memory_space<vmem>>, %arg39: memref<128x1xf32, #tpu.memory_space<vmem>>, %arg40: memref<1x128x1xf32, #tpu.memory_space<vmem>>) attributes {dimension_semantics = [#tpu.dimension_semantics<parallel>], iteration_bounds = array<i64: 2>, scalar_prefetch = 0 : i64, scratch_operands = 0 : i64, tpu.core_type = #tpu.core_type<tc>, window_params = [{transform_indices = @transform_0, window_bounds = array<i64: 1, 1, 128>}, {pipeline_mode = #tpu.pipeline_mode<synchronous>, transform_indices = @transform_1, window_bounds = array<i64: 3, 8, 8>}, {pipeline_mode = #tpu.pipeline_mode<synchronous>, transform_indices = @transform_2, window_bounds = array<i64: 8, 1>}, {pipeline_mode = #tpu.pipeline_mode<synchronous>, transform_indices = @transform_3, window_bounds = array<i64: 3, 8, 8>}, {pipeline_mode = #tpu.pipeline_mode<synchronous>, transform_indices = @transform_4, window_bounds = array<i64: 8, 1>}, {pipeline_mode = #tpu.pipeline_mode<synchronous>, transform_indices = @transform_5, window_bounds = array<i64: 3, 8, 8>}, {pipeline_mode = #tpu.pipeline_mode<synchronous>, transform_indices = @transform_6, window_bounds = array<i64: 8, 1>}, {pipeline_mode = #tpu.pipeline_mode<synchronous>, transform_indices = @transform_7, window_bounds = array<i64: 3, 8, 8>}, {pipeline_mode = #tpu.pipeline_mode<synchronous>, transform_indices = @transform_8, window_bounds = array<i64: 8, 1>}, {pipeline_mode = #tpu.pipeline_mode<synchronous>, transform_indices = @transform_9, window_bounds = array<i64: 3, 8, 8>}, {pipeline_mode = #tpu.pipeline_mode<synchronous>, transform_indices = @transform_10, window_bounds = array<i64: 8, 1>}, {pipeline_mode = #tpu.pipeline_mode<synchronous>, transform_indices = @transform_11, window_bounds = array<i64: 3, 8, 8>}, {pipeline_mode = #tpu.pipeline_mode<synchronous>, transform_indices = @transform_12, window_bounds = array<i64: 8, 1>}, {pipeline_mode = #tpu.pipeline_mode<synchronous>, transform_indices = @transform_13, window_bounds = array<i64: 3, 8, 8>}, {pipeline_mode = #tpu.pipeline_mode<synchronous>, transform_indices = @transform_14, window_bounds = array<i64: 8, 1>}, {pipeline_mode = #tpu.pipeline_mode<synchronous>, transform_indices = @transform_15, window_bounds = array<i64: 3, 8, 8>}, {pipeline_mode = #tpu.pipeline_mode<synchronous>, transform_indices = @transform_16, window_bounds = array<i64: 8, 1>}, {pipeline_mode = #tpu.pipeline_mode<synchronous>, transform_indices = @transform_17, window_bounds = array<i64: 3, 8, 8>}, {pipeline_mode = #tpu.pipeline_mode<synchronous>, transform_indices = @transform_18, window_bounds = array<i64: 8, 1>}, {pipeline_mode = #tpu.pipeline_mode<synchronous>, transform_indices = @transform_19, window_bounds = array<i64: 16, 16>}, {pipeline_mode = #tpu.pipeline_mode<synchronous>, transform_indices = @transform_20, window_bounds = array<i64: 1, 16>}, {pipeline_mode = #tpu.pipeline_mode<synchronous>, transform_indices = @transform_21, window_bounds = array<i64: 16, 16>}, {pipeline_mode = #tpu.pipeline_mode<synchronous>, transform_indices = @transform_22, window_bounds = array<i64: 1, 16>}, {pipeline_mode = #tpu.pipeline_mode<synchronous>, transform_indices = @transform_23, window_bounds = array<i64: 16, 16>}, {pipeline_mode = #tpu.pipeline_mode<synchronous>, transform_indices = @transform_24, window_bounds = array<i64: 1, 16>}, {pipeline_mode = #tpu.pipeline_mode<synchronous>, transform_indices = @transform_25, window_bounds = array<i64: 3, 8, 8>}, {pipeline_mode = #tpu.pipeline_mode<synchronous>, transform_indices = @transform_26, window_bounds = array<i64: 8, 1>}, {pipeline_mode = #tpu.pipeline_mode<synchronous>, transform_indices = @transform_27, window_bounds = array<i64: 3, 8, 8>}, {pipeline_mode = #tpu.pipeline_mode<synchronous>, transform_indices = @transform_28, window_bounds = array<i64: 8, 1>}, {pipeline_mode = #tpu.pipeline_mode<synchronous>, transform_indices = @transform_29, window_bounds = array<i64: 3, 16, 8>}, {pipeline_mode = #tpu.pipeline_mode<synchronous>, transform_indices = @transform_30, window_bounds = array<i64: 16, 1>}, {pipeline_mode = #tpu.pipeline_mode<synchronous>, transform_indices = @transform_31, window_bounds = array<i64: 3, 16, 16>}, {pipeline_mode = #tpu.pipeline_mode<synchronous>, transform_indices = @transform_32, window_bounds = array<i64: 16, 1>}, {pipeline_mode = #tpu.pipeline_mode<synchronous>, transform_indices = @transform_33, window_bounds = array<i64: 3, 16, 16>}, {pipeline_mode = #tpu.pipeline_mode<synchronous>, transform_indices = @transform_34, window_bounds = array<i64: 16, 1>}, {pipeline_mode = #tpu.pipeline_mode<synchronous>, transform_indices = @transform_35, window_bounds = array<i64: 3, 32, 16>}, {pipeline_mode = #tpu.pipeline_mode<synchronous>, transform_indices = @transform_36, window_bounds = array<i64: 32, 1>}, {pipeline_mode = #tpu.pipeline_mode<synchronous>, transform_indices = @transform_37, window_bounds = array<i64: 4, 128, 32>}, {pipeline_mode = #tpu.pipeline_mode<synchronous>, transform_indices = @transform_38, window_bounds = array<i64: 128, 1>}, {transform_indices = @transform_39, window_bounds = array<i64: 1, 128, 1>}]} {
    %c0 = arith.constant 0 : index
    %c0_0 = arith.constant 0 : index
    %c0_1 = arith.constant 0 : index
    %0 = vector.load %arg1[%c0, %c0_0, %c0_1] : memref<1x1x128xf32, #tpu.memory_space<vmem>>, vector<1x1x128xf32>
    %1 = vector.shape_cast %0 : vector<1x1x128xf32> to vector<1x128xf32>
    %2 = tpu.iota {dimensions = array<i32: 0>} : vector<8x128xi32>
    %c0_i32 = arith.constant 0 : i32
    %3 = vector.broadcast %c0_i32 : i32 to vector<8x128xi32>
    %4 = arith.cmpi eq, %2, %3 : vector<8x128xi32>
    %cst = arith.constant 0.000000e+00 : f32
    %5 = vector.shape_cast %1 : vector<1x128xf32> to vector<1x128xf32>
    %6 = vector.broadcast %5 : vector<1x128xf32> to vector<8x128xf32>
    %7 = vector.broadcast %cst : f32 to vector<8x128xf32>
    %8 = arith.select %4, %6, %7 : vector<8x128xi1>, vector<8x128xf32>
    %9 = tpu.iota {dimensions = array<i32: 0>} : vector<128x128xi32>
    %10 = tpu.iota {dimensions = array<i32: 1>} : vector<128x128xi32>
    %c1_i32 = arith.constant 1 : i32
    %11 = vector.broadcast %c1_i32 : i32 to vector<128x128xi32>
    %12 = arith.muli %11, %10 : vector<128x128xi32>
    %c-1_i32 = arith.constant -1 : i32
    %13 = vector.broadcast %c-1_i32 : i32 to vector<128x128xi32>
    %14 = arith.addi %12, %13 : vector<128x128xi32>
    %15 = arith.cmpi eq, %9, %14 : vector<128x128xi32>
    %16 = arith.extui %15 : vector<128x128xi1> to vector<128x128xi32>
    %17 = arith.sitofp %16 : vector<128x128xi32> to vector<128x128xf32>
    %cst_2 = arith.constant dense<0.000000e+00> : vector<8x128xf32>
    %18 = tpu.matmul %8, %17, %cst_2 {dimension_numbers = #tpu.dot_dimension_numbers<[1], [0], [0], [1], [0, 0, 1, 1], [], []>} : vector<8x128xf32>, vector<128x128xf32>, vector<8x128xf32> -> vector<8x128xf32>
    %c0_3 = arith.constant 0 : index
    %c0_4 = arith.constant 0 : index
    %c0_5 = arith.constant 0 : index
    %19 = vector.load %arg2[%c0_3, %c0_4, %c0_5] : memref<3x8x8xf32, #tpu.memory_space<vmem>>, vector<1x8x8xf32>
    %20 = vector.shape_cast %19 : vector<1x8x8xf32> to vector<8x8xf32>
    %cst_6 = arith.constant dense<0.000000e+00> : vector<8x128xf32>
    %21 = tpu.matmul %20, %18, %cst_6 {dimension_numbers = #tpu.dot_dimension_numbers<[1], [0], [0], [1], [0, 0, 1, 1], [], []>} : vector<8x8xf32>, vector<8x128xf32>, vector<8x128xf32> -> vector<8x128xf32>
    %c1_i32_7 = arith.constant 1 : i32
    %22 = vector.broadcast %c1_i32_7 : i32 to vector<128x128xi32>
    %23 = arith.muli %22, %10 : vector<128x128xi32>
    %c0_i32_8 = arith.constant 0 : i32
    %24 = vector.broadcast %c0_i32_8 : i32 to vector<128x128xi32>
    %25 = arith.addi %23, %24 : vector<128x128xi32>
    %26 = arith.cmpi eq, %9, %25 : vector<128x128xi32>
    %27 = arith.extui %26 : vector<128x128xi1> to vector<128x128xi32>
    %28 = arith.sitofp %27 : vector<128x128xi32> to vector<128x128xf32>
    %cst_9 = arith.constant dense<0.000000e+00> : vector<8x128xf32>
    %29 = tpu.matmul %8, %28, %cst_9 {dimension_numbers = #tpu.dot_dimension_numbers<[1], [0], [0], [1], [0, 0, 1, 1], [], []>} : vector<8x128xf32>, vector<128x128xf32>, vector<8x128xf32> -> vector<8x128xf32>
    %c1 = arith.constant 1 : index
    %c0_10 = arith.constant 0 : index
    %c0_11 = arith.constant 0 : index
    %30 = vector.load %arg2[%c1, %c0_10, %c0_11] : memref<3x8x8xf32, #tpu.memory_space<vmem>>, vector<1x8x8xf32>
    %31 = vector.shape_cast %30 : vector<1x8x8xf32> to vector<8x8xf32>
    %cst_12 = arith.constant dense<0.000000e+00> : vector<8x128xf32>
    %32 = tpu.matmul %31, %29, %cst_12 {dimension_numbers = #tpu.dot_dimension_numbers<[1], [0], [0], [1], [0, 0, 1, 1], [], []>} : vector<8x8xf32>, vector<8x128xf32>, vector<8x128xf32> -> vector<8x128xf32>
    %33 = arith.addf %21, %32 : vector<8x128xf32>
    %c1_i32_13 = arith.constant 1 : i32
    %34 = vector.broadcast %c1_i32_13 : i32 to vector<128x128xi32>
    %35 = arith.muli %34, %10 : vector<128x128xi32>
    %c1_i32_14 = arith.constant 1 : i32
    %36 = vector.broadcast %c1_i32_14 : i32 to vector<128x128xi32>
    %37 = arith.addi %35, %36 : vector<128x128xi32>
    %38 = arith.cmpi eq, %9, %37 : vector<128x128xi32>
    %39 = arith.extui %38 : vector<128x128xi1> to vector<128x128xi32>
    %40 = arith.sitofp %39 : vector<128x128xi32> to vector<128x128xf32>
    %cst_15 = arith.constant dense<0.000000e+00> : vector<8x128xf32>
    %41 = tpu.matmul %8, %40, %cst_15 {dimension_numbers = #tpu.dot_dimension_numbers<[1], [0], [0], [1], [0, 0, 1, 1], [], []>} : vector<8x128xf32>, vector<128x128xf32>, vector<8x128xf32> -> vector<8x128xf32>
    %c2 = arith.constant 2 : index
    %c0_16 = arith.constant 0 : index
    %c0_17 = arith.constant 0 : index
    %42 = vector.load %arg2[%c2, %c0_16, %c0_17] : memref<3x8x8xf32, #tpu.memory_space<vmem>>, vector<1x8x8xf32>
    %43 = vector.shape_cast %42 : vector<1x8x8xf32> to vector<8x8xf32>
    %cst_18 = arith.constant dense<0.000000e+00> : vector<8x128xf32>
    %44 = tpu.matmul %43, %41, %cst_18 {dimension_numbers = #tpu.dot_dimension_numbers<[1], [0], [0], [1], [0, 0, 1, 1], [], []>} : vector<8x8xf32>, vector<8x128xf32>, vector<8x128xf32> -> vector<8x128xf32>
    %45 = arith.addf %33, %44 : vector<8x128xf32>
    %c0_19 = arith.constant 0 : index
    %c0_20 = arith.constant 0 : index
    %46 = vector.load %arg3[%c0_19, %c0_20] : memref<8x1xf32, #tpu.memory_space<vmem>>, vector<8x1xf32>
    %47 = vector.broadcast %46 : vector<8x1xf32> to vector<8x128xf32>
    %48 = arith.addf %45, %47 : vector<8x128xf32>
    %cst_21 = arith.constant 0.000000e+00 : f32
    %49 = vector.broadcast %cst_21 : f32 to vector<8x128xf32>
    %50 = arith.maximumf %48, %49 : vector<8x128xf32>
    %51 = tpu.iota {dimensions = array<i32: 0>} : vector<128x128xi32>
    %52 = tpu.iota {dimensions = array<i32: 1>} : vector<128x128xi32>
    %c1_i32_22 = arith.constant 1 : i32
    %53 = vector.broadcast %c1_i32_22 : i32 to vector<128x128xi32>
    %54 = arith.muli %53, %52 : vector<128x128xi32>
    %c-1_i32_23 = arith.constant -1 : i32
    %55 = vector.broadcast %c-1_i32_23 : i32 to vector<128x128xi32>
    %56 = arith.addi %54, %55 : vector<128x128xi32>
    %57 = arith.cmpi eq, %51, %56 : vector<128x128xi32>
    %58 = arith.extui %57 : vector<128x128xi1> to vector<128x128xi32>
    %59 = arith.sitofp %58 : vector<128x128xi32> to vector<128x128xf32>
    %cst_24 = arith.constant dense<0.000000e+00> : vector<8x128xf32>
    %60 = tpu.matmul %50, %59, %cst_24 {dimension_numbers = #tpu.dot_dimension_numbers<[1], [0], [0], [1], [0, 0, 1, 1], [], []>} : vector<8x128xf32>, vector<128x128xf32>, vector<8x128xf32> -> vector<8x128xf32>
    %c0_25 = arith.constant 0 : index
    %c0_26 = arith.constant 0 : index
    %c0_27 = arith.constant 0 : index
    %61 = vector.load %arg4[%c0_25, %c0_26, %c0_27] : memref<3x8x8xf32, #tpu.memory_space<vmem>>, vector<1x8x8xf32>
    %62 = vector.shape_cast %61 : vector<1x8x8xf32> to vector<8x8xf32>
    %cst_28 = arith.constant dense<0.000000e+00> : vector<8x128xf32>
    %63 = tpu.matmul %62, %60, %cst_28 {dimension_numbers = #tpu.dot_dimension_numbers<[1], [0], [0], [1], [0, 0, 1, 1], [], []>} : vector<8x8xf32>, vector<8x128xf32>, vector<8x128xf32> -> vector<8x128xf32>
    %c1_i32_29 = arith.constant 1 : i32
    %64 = vector.broadcast %c1_i32_29 : i32 to vector<128x128xi32>
    %65 = arith.muli %64, %52 : vector<128x128xi32>
    %c0_i32_30 = arith.constant 0 : i32
    %66 = vector.broadcast %c0_i32_30 : i32 to vector<128x128xi32>
    %67 = arith.addi %65, %66 : vector<128x128xi32>
    %68 = arith.cmpi eq, %51, %67 : vector<128x128xi32>
    %69 = arith.extui %68 : vector<128x128xi1> to vector<128x128xi32>
    %70 = arith.sitofp %69 : vector<128x128xi32> to vector<128x128xf32>
    %cst_31 = arith.constant dense<0.000000e+00> : vector<8x128xf32>
    %71 = tpu.matmul %50, %70, %cst_31 {dimension_numbers = #tpu.dot_dimension_numbers<[1], [0], [0], [1], [0, 0, 1, 1], [], []>} : vector<8x128xf32>, vector<128x128xf32>, vector<8x128xf32> -> vector<8x128xf32>
    %c1_32 = arith.constant 1 : index
    %c0_33 = arith.constant 0 : index
    %c0_34 = arith.constant 0 : index
    %72 = vector.load %arg4[%c1_32, %c0_33, %c0_34] : memref<3x8x8xf32, #tpu.memory_space<vmem>>, vector<1x8x8xf32>
    %73 = vector.shape_cast %72 : vector<1x8x8xf32> to vector<8x8xf32>
    %cst_35 = arith.constant dense<0.000000e+00> : vector<8x128xf32>
    %74 = tpu.matmul %73, %71, %cst_35 {dimension_numbers = #tpu.dot_dimension_numbers<[1], [0], [0], [1], [0, 0, 1, 1], [], []>} : vector<8x8xf32>, vector<8x128xf32>, vector<8x128xf32> -> vector<8x128xf32>
    %75 = arith.addf %63, %74 : vector<8x128xf32>
    %c1_i32_36 = arith.constant 1 : i32
    %76 = vector.broadcast %c1_i32_36 : i32 to vector<128x128xi32>
    %77 = arith.muli %76, %52 : vector<128x128xi32>
    %c1_i32_37 = arith.constant 1 : i32
    %78 = vector.broadcast %c1_i32_37 : i32 to vector<128x128xi32>
    %79 = arith.addi %77, %78 : vector<128x128xi32>
    %80 = arith.cmpi eq, %51, %79 : vector<128x128xi32>
    %81 = arith.extui %80 : vector<128x128xi1> to vector<128x128xi32>
    %82 = arith.sitofp %81 : vector<128x128xi32> to vector<128x128xf32>
    %cst_38 = arith.constant dense<0.000000e+00> : vector<8x128xf32>
    %83 = tpu.matmul %50, %82, %cst_38 {dimension_numbers = #tpu.dot_dimension_numbers<[1], [0], [0], [1], [0, 0, 1, 1], [], []>} : vector<8x128xf32>, vector<128x128xf32>, vector<8x128xf32> -> vector<8x128xf32>
    %c2_39 = arith.constant 2 : index
    %c0_40 = arith.constant 0 : index
    %c0_41 = arith.constant 0 : index
    %84 = vector.load %arg4[%c2_39, %c0_40, %c0_41] : memref<3x8x8xf32, #tpu.memory_space<vmem>>, vector<1x8x8xf32>
    %85 = vector.shape_cast %84 : vector<1x8x8xf32> to vector<8x8xf32>
    %cst_42 = arith.constant dense<0.000000e+00> : vector<8x128xf32>
    %86 = tpu.matmul %85, %83, %cst_42 {dimension_numbers = #tpu.dot_dimension_numbers<[1], [0], [0], [1], [0, 0, 1, 1], [], []>} : vector<8x8xf32>, vector<8x128xf32>, vector<8x128xf32> -> vector<8x128xf32>
    %87 = arith.addf %75, %86 : vector<8x128xf32>
    %c0_43 = arith.constant 0 : index
    %c0_44 = arith.constant 0 : index
    %88 = vector.load %arg5[%c0_43, %c0_44] : memref<8x1xf32, #tpu.memory_space<vmem>>, vector<8x1xf32>
    %89 = vector.broadcast %88 : vector<8x1xf32> to vector<8x128xf32>
    %90 = arith.addf %87, %89 : vector<8x128xf32>
    %91 = arith.addf %90, %8 : vector<8x128xf32>
    %cst_45 = arith.constant 0.000000e+00 : f32
    %92 = vector.broadcast %cst_45 : f32 to vector<8x128xf32>
    %93 = arith.maximumf %91, %92 : vector<8x128xf32>
    %94 = tpu.iota {dimensions = array<i32: 0>} : vector<128x64xi32>
    %95 = tpu.iota {dimensions = array<i32: 1>} : vector<128x64xi32>
    %c2_i32 = arith.constant 2 : i32
    %96 = vector.broadcast %c2_i32 : i32 to vector<128x64xi32>
    %97 = arith.muli %96, %95 : vector<128x64xi32>
    %c-1_i32_46 = arith.constant -1 : i32
    %98 = vector.broadcast %c-1_i32_46 : i32 to vector<128x64xi32>
    %99 = arith.addi %97, %98 : vector<128x64xi32>
    %100 = arith.cmpi eq, %94, %99 : vector<128x64xi32>
    %101 = arith.extui %100 : vector<128x64xi1> to vector<128x64xi32>
    %102 = arith.sitofp %101 : vector<128x64xi32> to vector<128x64xf32>
    %cst_47 = arith.constant dense<0.000000e+00> : vector<8x64xf32>
    %103 = tpu.matmul %93, %102, %cst_47 {dimension_numbers = #tpu.dot_dimension_numbers<[1], [0], [0], [1], [0, 0, 1, 1], [], []>} : vector<8x128xf32>, vector<128x64xf32>, vector<8x64xf32> -> vector<8x64xf32>
    %c0_48 = arith.constant 0 : index
    %c0_49 = arith.constant 0 : index
    %c0_50 = arith.constant 0 : index
    %104 = vector.load %arg6[%c0_48, %c0_49, %c0_50] : memref<3x8x8xf32, #tpu.memory_space<vmem>>, vector<1x8x8xf32>
    %105 = vector.shape_cast %104 : vector<1x8x8xf32> to vector<8x8xf32>
    %cst_51 = arith.constant dense<0.000000e+00> : vector<8x64xf32>
    %106 = tpu.matmul %105, %103, %cst_51 {dimension_numbers = #tpu.dot_dimension_numbers<[1], [0], [0], [1], [0, 0, 1, 1], [], []>} : vector<8x8xf32>, vector<8x64xf32>, vector<8x64xf32> -> vector<8x64xf32>
    %c2_i32_52 = arith.constant 2 : i32
    %107 = vector.broadcast %c2_i32_52 : i32 to vector<128x64xi32>
    %108 = arith.muli %107, %95 : vector<128x64xi32>
    %c0_i32_53 = arith.constant 0 : i32
    %109 = vector.broadcast %c0_i32_53 : i32 to vector<128x64xi32>
    %110 = arith.addi %108, %109 : vector<128x64xi32>
    %111 = arith.cmpi eq, %94, %110 : vector<128x64xi32>
    %112 = arith.extui %111 : vector<128x64xi1> to vector<128x64xi32>
    %113 = arith.sitofp %112 : vector<128x64xi32> to vector<128x64xf32>
    %cst_54 = arith.constant dense<0.000000e+00> : vector<8x64xf32>
    %114 = tpu.matmul %93, %113, %cst_54 {dimension_numbers = #tpu.dot_dimension_numbers<[1], [0], [0], [1], [0, 0, 1, 1], [], []>} : vector<8x128xf32>, vector<128x64xf32>, vector<8x64xf32> -> vector<8x64xf32>
    %c1_55 = arith.constant 1 : index
    %c0_56 = arith.constant 0 : index
    %c0_57 = arith.constant 0 : index
    %115 = vector.load %arg6[%c1_55, %c0_56, %c0_57] : memref<3x8x8xf32, #tpu.memory_space<vmem>>, vector<1x8x8xf32>
    %116 = vector.shape_cast %115 : vector<1x8x8xf32> to vector<8x8xf32>
    %cst_58 = arith.constant dense<0.000000e+00> : vector<8x64xf32>
    %117 = tpu.matmul %116, %114, %cst_58 {dimension_numbers = #tpu.dot_dimension_numbers<[1], [0], [0], [1], [0, 0, 1, 1], [], []>} : vector<8x8xf32>, vector<8x64xf32>, vector<8x64xf32> -> vector<8x64xf32>
    %118 = arith.addf %106, %117 : vector<8x64xf32>
    %c2_i32_59 = arith.constant 2 : i32
    %119 = vector.broadcast %c2_i32_59 : i32 to vector<128x64xi32>
    %120 = arith.muli %119, %95 : vector<128x64xi32>
    %c1_i32_60 = arith.constant 1 : i32
    %121 = vector.broadcast %c1_i32_60 : i32 to vector<128x64xi32>
    %122 = arith.addi %120, %121 : vector<128x64xi32>
    %123 = arith.cmpi eq, %94, %122 : vector<128x64xi32>
    %124 = arith.extui %123 : vector<128x64xi1> to vector<128x64xi32>
    %125 = arith.sitofp %124 : vector<128x64xi32> to vector<128x64xf32>
    %cst_61 = arith.constant dense<0.000000e+00> : vector<8x64xf32>
    %126 = tpu.matmul %93, %125, %cst_61 {dimension_numbers = #tpu.dot_dimension_numbers<[1], [0], [0], [1], [0, 0, 1, 1], [], []>} : vector<8x128xf32>, vector<128x64xf32>, vector<8x64xf32> -> vector<8x64xf32>
    %c2_62 = arith.constant 2 : index
    %c0_63 = arith.constant 0 : index
    %c0_64 = arith.constant 0 : index
    %127 = vector.load %arg6[%c2_62, %c0_63, %c0_64] : memref<3x8x8xf32, #tpu.memory_space<vmem>>, vector<1x8x8xf32>
    %128 = vector.shape_cast %127 : vector<1x8x8xf32> to vector<8x8xf32>
    %cst_65 = arith.constant dense<0.000000e+00> : vector<8x64xf32>
    %129 = tpu.matmul %128, %126, %cst_65 {dimension_numbers = #tpu.dot_dimension_numbers<[1], [0], [0], [1], [0, 0, 1, 1], [], []>} : vector<8x8xf32>, vector<8x64xf32>, vector<8x64xf32> -> vector<8x64xf32>
    %130 = arith.addf %118, %129 : vector<8x64xf32>
    %c0_66 = arith.constant 0 : index
    %c0_67 = arith.constant 0 : index
    %131 = vector.load %arg7[%c0_66, %c0_67] : memref<8x1xf32, #tpu.memory_space<vmem>>, vector<8x1xf32>
    %132 = vector.broadcast %131 : vector<8x1xf32> to vector<8x64xf32>
    %133 = arith.addf %130, %132 : vector<8x64xf32>
    %134 = tpu.iota {dimensions = array<i32: 0>} : vector<64x64xi32>
    %135 = tpu.iota {dimensions = array<i32: 1>} : vector<64x64xi32>
    %c1_i32_68 = arith.constant 1 : i32
    %136 = vector.broadcast %c1_i32_68 : i32 to vector<64x64xi32>
    %137 = arith.muli %136, %135 : vector<64x64xi32>
    %c-1_i32_69 = arith.constant -1 : i32
    %138 = vector.broadcast %c-1_i32_69 : i32 to vector<64x64xi32>
    %139 = arith.addi %137, %138 : vector<64x64xi32>
    %140 = arith.cmpi eq, %134, %139 : vector<64x64xi32>
    %141 = arith.extui %140 : vector<64x64xi1> to vector<64x64xi32>
    %142 = arith.sitofp %141 : vector<64x64xi32> to vector<64x64xf32>
    %cst_70 = arith.constant dense<0.000000e+00> : vector<8x64xf32>
    %143 = tpu.matmul %133, %142, %cst_70 {dimension_numbers = #tpu.dot_dimension_numbers<[1], [0], [0], [1], [0, 0, 1, 1], [], []>} : vector<8x64xf32>, vector<64x64xf32>, vector<8x64xf32> -> vector<8x64xf32>
    %c0_71 = arith.constant 0 : index
    %c0_72 = arith.constant 0 : index
    %c0_73 = arith.constant 0 : index
    %144 = vector.load %arg8[%c0_71, %c0_72, %c0_73] : memref<3x8x8xf32, #tpu.memory_space<vmem>>, vector<1x8x8xf32>
    %145 = vector.shape_cast %144 : vector<1x8x8xf32> to vector<8x8xf32>
    %cst_74 = arith.constant dense<0.000000e+00> : vector<8x64xf32>
    %146 = tpu.matmul %145, %143, %cst_74 {dimension_numbers = #tpu.dot_dimension_numbers<[1], [0], [0], [1], [0, 0, 1, 1], [], []>} : vector<8x8xf32>, vector<8x64xf32>, vector<8x64xf32> -> vector<8x64xf32>
    %c1_i32_75 = arith.constant 1 : i32
    %147 = vector.broadcast %c1_i32_75 : i32 to vector<64x64xi32>
    %148 = arith.muli %147, %135 : vector<64x64xi32>
    %c0_i32_76 = arith.constant 0 : i32
    %149 = vector.broadcast %c0_i32_76 : i32 to vector<64x64xi32>
    %150 = arith.addi %148, %149 : vector<64x64xi32>
    %151 = arith.cmpi eq, %134, %150 : vector<64x64xi32>
    %152 = arith.extui %151 : vector<64x64xi1> to vector<64x64xi32>
    %153 = arith.sitofp %152 : vector<64x64xi32> to vector<64x64xf32>
    %cst_77 = arith.constant dense<0.000000e+00> : vector<8x64xf32>
    %154 = tpu.matmul %133, %153, %cst_77 {dimension_numbers = #tpu.dot_dimension_numbers<[1], [0], [0], [1], [0, 0, 1, 1], [], []>} : vector<8x64xf32>, vector<64x64xf32>, vector<8x64xf32> -> vector<8x64xf32>
    %c1_78 = arith.constant 1 : index
    %c0_79 = arith.constant 0 : index
    %c0_80 = arith.constant 0 : index
    %155 = vector.load %arg8[%c1_78, %c0_79, %c0_80] : memref<3x8x8xf32, #tpu.memory_space<vmem>>, vector<1x8x8xf32>
    %156 = vector.shape_cast %155 : vector<1x8x8xf32> to vector<8x8xf32>
    %cst_81 = arith.constant dense<0.000000e+00> : vector<8x64xf32>
    %157 = tpu.matmul %156, %154, %cst_81 {dimension_numbers = #tpu.dot_dimension_numbers<[1], [0], [0], [1], [0, 0, 1, 1], [], []>} : vector<8x8xf32>, vector<8x64xf32>, vector<8x64xf32> -> vector<8x64xf32>
    %158 = arith.addf %146, %157 : vector<8x64xf32>
    %c1_i32_82 = arith.constant 1 : i32
    %159 = vector.broadcast %c1_i32_82 : i32 to vector<64x64xi32>
    %160 = arith.muli %159, %135 : vector<64x64xi32>
    %c1_i32_83 = arith.constant 1 : i32
    %161 = vector.broadcast %c1_i32_83 : i32 to vector<64x64xi32>
    %162 = arith.addi %160, %161 : vector<64x64xi32>
    %163 = arith.cmpi eq, %134, %162 : vector<64x64xi32>
    %164 = arith.extui %163 : vector<64x64xi1> to vector<64x64xi32>
    %165 = arith.sitofp %164 : vector<64x64xi32> to vector<64x64xf32>
    %cst_84 = arith.constant dense<0.000000e+00> : vector<8x64xf32>
    %166 = tpu.matmul %133, %165, %cst_84 {dimension_numbers = #tpu.dot_dimension_numbers<[1], [0], [0], [1], [0, 0, 1, 1], [], []>} : vector<8x64xf32>, vector<64x64xf32>, vector<8x64xf32> -> vector<8x64xf32>
    %c2_85 = arith.constant 2 : index
    %c0_86 = arith.constant 0 : index
    %c0_87 = arith.constant 0 : index
    %167 = vector.load %arg8[%c2_85, %c0_86, %c0_87] : memref<3x8x8xf32, #tpu.memory_space<vmem>>, vector<1x8x8xf32>
    %168 = vector.shape_cast %167 : vector<1x8x8xf32> to vector<8x8xf32>
    %cst_88 = arith.constant dense<0.000000e+00> : vector<8x64xf32>
    %169 = tpu.matmul %168, %166, %cst_88 {dimension_numbers = #tpu.dot_dimension_numbers<[1], [0], [0], [1], [0, 0, 1, 1], [], []>} : vector<8x8xf32>, vector<8x64xf32>, vector<8x64xf32> -> vector<8x64xf32>
    %170 = arith.addf %158, %169 : vector<8x64xf32>
    %c0_89 = arith.constant 0 : index
    %c0_90 = arith.constant 0 : index
    %171 = vector.load %arg9[%c0_89, %c0_90] : memref<8x1xf32, #tpu.memory_space<vmem>>, vector<8x1xf32>
    %172 = vector.broadcast %171 : vector<8x1xf32> to vector<8x64xf32>
    %173 = arith.addf %170, %172 : vector<8x64xf32>
    %cst_91 = arith.constant 0.000000e+00 : f32
    %174 = vector.broadcast %cst_91 : f32 to vector<8x64xf32>
    %175 = arith.maximumf %173, %174 : vector<8x64xf32>
    %176 = tpu.iota {dimensions = array<i32: 0>} : vector<64x64xi32>
    %177 = tpu.iota {dimensions = array<i32: 1>} : vector<64x64xi32>
    %c1_i32_92 = arith.constant 1 : i32
    %178 = vector.broadcast %c1_i32_92 : i32 to vector<64x64xi32>
    %179 = arith.muli %178, %177 : vector<64x64xi32>
    %c-1_i32_93 = arith.constant -1 : i32
    %180 = vector.broadcast %c-1_i32_93 : i32 to vector<64x64xi32>
    %181 = arith.addi %179, %180 : vector<64x64xi32>
    %182 = arith.cmpi eq, %176, %181 : vector<64x64xi32>
    %183 = arith.extui %182 : vector<64x64xi1> to vector<64x64xi32>
    %184 = arith.sitofp %183 : vector<64x64xi32> to vector<64x64xf32>
    %cst_94 = arith.constant dense<0.000000e+00> : vector<8x64xf32>
    %185 = tpu.matmul %175, %184, %cst_94 {dimension_numbers = #tpu.dot_dimension_numbers<[1], [0], [0], [1], [0, 0, 1, 1], [], []>} : vector<8x64xf32>, vector<64x64xf32>, vector<8x64xf32> -> vector<8x64xf32>
    %c0_95 = arith.constant 0 : index
    %c0_96 = arith.constant 0 : index
    %c0_97 = arith.constant 0 : index
    %186 = vector.load %arg10[%c0_95, %c0_96, %c0_97] : memref<3x8x8xf32, #tpu.memory_space<vmem>>, vector<1x8x8xf32>
    %187 = vector.shape_cast %186 : vector<1x8x8xf32> to vector<8x8xf32>
    %cst_98 = arith.constant dense<0.000000e+00> : vector<8x64xf32>
    %188 = tpu.matmul %187, %185, %cst_98 {dimension_numbers = #tpu.dot_dimension_numbers<[1], [0], [0], [1], [0, 0, 1, 1], [], []>} : vector<8x8xf32>, vector<8x64xf32>, vector<8x64xf32> -> vector<8x64xf32>
    %c1_i32_99 = arith.constant 1 : i32
    %189 = vector.broadcast %c1_i32_99 : i32 to vector<64x64xi32>
    %190 = arith.muli %189, %177 : vector<64x64xi32>
    %c0_i32_100 = arith.constant 0 : i32
    %191 = vector.broadcast %c0_i32_100 : i32 to vector<64x64xi32>
    %192 = arith.addi %190, %191 : vector<64x64xi32>
    %193 = arith.cmpi eq, %176, %192 : vector<64x64xi32>
    %194 = arith.extui %193 : vector<64x64xi1> to vector<64x64xi32>
    %195 = arith.sitofp %194 : vector<64x64xi32> to vector<64x64xf32>
    %cst_101 = arith.constant dense<0.000000e+00> : vector<8x64xf32>
    %196 = tpu.matmul %175, %195, %cst_101 {dimension_numbers = #tpu.dot_dimension_numbers<[1], [0], [0], [1], [0, 0, 1, 1], [], []>} : vector<8x64xf32>, vector<64x64xf32>, vector<8x64xf32> -> vector<8x64xf32>
    %c1_102 = arith.constant 1 : index
    %c0_103 = arith.constant 0 : index
    %c0_104 = arith.constant 0 : index
    %197 = vector.load %arg10[%c1_102, %c0_103, %c0_104] : memref<3x8x8xf32, #tpu.memory_space<vmem>>, vector<1x8x8xf32>
    %198 = vector.shape_cast %197 : vector<1x8x8xf32> to vector<8x8xf32>
    %cst_105 = arith.constant dense<0.000000e+00> : vector<8x64xf32>
    %199 = tpu.matmul %198, %196, %cst_105 {dimension_numbers = #tpu.dot_dimension_numbers<[1], [0], [0], [1], [0, 0, 1, 1], [], []>} : vector<8x8xf32>, vector<8x64xf32>, vector<8x64xf32> -> vector<8x64xf32>
    %200 = arith.addf %188, %199 : vector<8x64xf32>
    %c1_i32_106 = arith.constant 1 : i32
    %201 = vector.broadcast %c1_i32_106 : i32 to vector<64x64xi32>
    %202 = arith.muli %201, %177 : vector<64x64xi32>
    %c1_i32_107 = arith.constant 1 : i32
    %203 = vector.broadcast %c1_i32_107 : i32 to vector<64x64xi32>
    %204 = arith.addi %202, %203 : vector<64x64xi32>
    %205 = arith.cmpi eq, %176, %204 : vector<64x64xi32>
    %206 = arith.extui %205 : vector<64x64xi1> to vector<64x64xi32>
    %207 = arith.sitofp %206 : vector<64x64xi32> to vector<64x64xf32>
    %cst_108 = arith.constant dense<0.000000e+00> : vector<8x64xf32>
    %208 = tpu.matmul %175, %207, %cst_108 {dimension_numbers = #tpu.dot_dimension_numbers<[1], [0], [0], [1], [0, 0, 1, 1], [], []>} : vector<8x64xf32>, vector<64x64xf32>, vector<8x64xf32> -> vector<8x64xf32>
    %c2_109 = arith.constant 2 : index
    %c0_110 = arith.constant 0 : index
    %c0_111 = arith.constant 0 : index
    %209 = vector.load %arg10[%c2_109, %c0_110, %c0_111] : memref<3x8x8xf32, #tpu.memory_space<vmem>>, vector<1x8x8xf32>
    %210 = vector.shape_cast %209 : vector<1x8x8xf32> to vector<8x8xf32>
    %cst_112 = arith.constant dense<0.000000e+00> : vector<8x64xf32>
    %211 = tpu.matmul %210, %208, %cst_112 {dimension_numbers = #tpu.dot_dimension_numbers<[1], [0], [0], [1], [0, 0, 1, 1], [], []>} : vector<8x8xf32>, vector<8x64xf32>, vector<8x64xf32> -> vector<8x64xf32>
    %212 = arith.addf %200, %211 : vector<8x64xf32>
    %c0_113 = arith.constant 0 : index
    %c0_114 = arith.constant 0 : index
    %213 = vector.load %arg11[%c0_113, %c0_114] : memref<8x1xf32, #tpu.memory_space<vmem>>, vector<8x1xf32>
    %214 = vector.broadcast %213 : vector<8x1xf32> to vector<8x64xf32>
    %215 = arith.addf %212, %214 : vector<8x64xf32>
    %216 = arith.addf %215, %133 : vector<8x64xf32>
    %cst_115 = arith.constant 0.000000e+00 : f32
    %217 = vector.broadcast %cst_115 : f32 to vector<8x64xf32>
    %218 = arith.maximumf %216, %217 : vector<8x64xf32>
    %219 = tpu.iota {dimensions = array<i32: 0>} : vector<64x32xi32>
    %220 = tpu.iota {dimensions = array<i32: 1>} : vector<64x32xi32>
    %c2_i32_116 = arith.constant 2 : i32
    %221 = vector.broadcast %c2_i32_116 : i32 to vector<64x32xi32>
    %222 = arith.muli %221, %220 : vector<64x32xi32>
    %c-1_i32_117 = arith.constant -1 : i32
    %223 = vector.broadcast %c-1_i32_117 : i32 to vector<64x32xi32>
    %224 = arith.addi %222, %223 : vector<64x32xi32>
    %225 = arith.cmpi eq, %219, %224 : vector<64x32xi32>
    %226 = arith.extui %225 : vector<64x32xi1> to vector<64x32xi32>
    %227 = arith.sitofp %226 : vector<64x32xi32> to vector<64x32xf32>
    %cst_118 = arith.constant dense<0.000000e+00> : vector<8x32xf32>
    %228 = tpu.matmul %218, %227, %cst_118 {dimension_numbers = #tpu.dot_dimension_numbers<[1], [0], [0], [1], [0, 0, 1, 1], [], []>} : vector<8x64xf32>, vector<64x32xf32>, vector<8x32xf32> -> vector<8x32xf32>
    %c0_119 = arith.constant 0 : index
    %c0_120 = arith.constant 0 : index
    %c0_121 = arith.constant 0 : index
    %229 = vector.load %arg12[%c0_119, %c0_120, %c0_121] : memref<3x8x8xf32, #tpu.memory_space<vmem>>, vector<1x8x8xf32>
    %230 = vector.shape_cast %229 : vector<1x8x8xf32> to vector<8x8xf32>
    %cst_122 = arith.constant dense<0.000000e+00> : vector<8x32xf32>
    %231 = tpu.matmul %230, %228, %cst_122 {dimension_numbers = #tpu.dot_dimension_numbers<[1], [0], [0], [1], [0, 0, 1, 1], [], []>} : vector<8x8xf32>, vector<8x32xf32>, vector<8x32xf32> -> vector<8x32xf32>
    %c2_i32_123 = arith.constant 2 : i32
    %232 = vector.broadcast %c2_i32_123 : i32 to vector<64x32xi32>
    %233 = arith.muli %232, %220 : vector<64x32xi32>
    %c0_i32_124 = arith.constant 0 : i32
    %234 = vector.broadcast %c0_i32_124 : i32 to vector<64x32xi32>
    %235 = arith.addi %233, %234 : vector<64x32xi32>
    %236 = arith.cmpi eq, %219, %235 : vector<64x32xi32>
    %237 = arith.extui %236 : vector<64x32xi1> to vector<64x32xi32>
    %238 = arith.sitofp %237 : vector<64x32xi32> to vector<64x32xf32>
    %cst_125 = arith.constant dense<0.000000e+00> : vector<8x32xf32>
    %239 = tpu.matmul %218, %238, %cst_125 {dimension_numbers = #tpu.dot_dimension_numbers<[1], [0], [0], [1], [0, 0, 1, 1], [], []>} : vector<8x64xf32>, vector<64x32xf32>, vector<8x32xf32> -> vector<8x32xf32>
    %c1_126 = arith.constant 1 : index
    %c0_127 = arith.constant 0 : index
    %c0_128 = arith.constant 0 : index
    %240 = vector.load %arg12[%c1_126, %c0_127, %c0_128] : memref<3x8x8xf32, #tpu.memory_space<vmem>>, vector<1x8x8xf32>
    %241 = vector.shape_cast %240 : vector<1x8x8xf32> to vector<8x8xf32>
    %cst_129 = arith.constant dense<0.000000e+00> : vector<8x32xf32>
    %242 = tpu.matmul %241, %239, %cst_129 {dimension_numbers = #tpu.dot_dimension_numbers<[1], [0], [0], [1], [0, 0, 1, 1], [], []>} : vector<8x8xf32>, vector<8x32xf32>, vector<8x32xf32> -> vector<8x32xf32>
    %243 = arith.addf %231, %242 : vector<8x32xf32>
    %c2_i32_130 = arith.constant 2 : i32
    %244 = vector.broadcast %c2_i32_130 : i32 to vector<64x32xi32>
    %245 = arith.muli %244, %220 : vector<64x32xi32>
    %c1_i32_131 = arith.constant 1 : i32
    %246 = vector.broadcast %c1_i32_131 : i32 to vector<64x32xi32>
    %247 = arith.addi %245, %246 : vector<64x32xi32>
    %248 = arith.cmpi eq, %219, %247 : vector<64x32xi32>
    %249 = arith.extui %248 : vector<64x32xi1> to vector<64x32xi32>
    %250 = arith.sitofp %249 : vector<64x32xi32> to vector<64x32xf32>
    %cst_132 = arith.constant dense<0.000000e+00> : vector<8x32xf32>
    %251 = tpu.matmul %218, %250, %cst_132 {dimension_numbers = #tpu.dot_dimension_numbers<[1], [0], [0], [1], [0, 0, 1, 1], [], []>} : vector<8x64xf32>, vector<64x32xf32>, vector<8x32xf32> -> vector<8x32xf32>
    %c2_133 = arith.constant 2 : index
    %c0_134 = arith.constant 0 : index
    %c0_135 = arith.constant 0 : index
    %252 = vector.load %arg12[%c2_133, %c0_134, %c0_135] : memref<3x8x8xf32, #tpu.memory_space<vmem>>, vector<1x8x8xf32>
    %253 = vector.shape_cast %252 : vector<1x8x8xf32> to vector<8x8xf32>
    %cst_136 = arith.constant dense<0.000000e+00> : vector<8x32xf32>
    %254 = tpu.matmul %253, %251, %cst_136 {dimension_numbers = #tpu.dot_dimension_numbers<[1], [0], [0], [1], [0, 0, 1, 1], [], []>} : vector<8x8xf32>, vector<8x32xf32>, vector<8x32xf32> -> vector<8x32xf32>
    %255 = arith.addf %243, %254 : vector<8x32xf32>
    %c0_137 = arith.constant 0 : index
    %c0_138 = arith.constant 0 : index
    %256 = vector.load %arg13[%c0_137, %c0_138] : memref<8x1xf32, #tpu.memory_space<vmem>>, vector<8x1xf32>
    %257 = vector.broadcast %256 : vector<8x1xf32> to vector<8x32xf32>
    %258 = arith.addf %255, %257 : vector<8x32xf32>
    %259 = tpu.iota {dimensions = array<i32: 0>} : vector<32x32xi32>
    %260 = tpu.iota {dimensions = array<i32: 1>} : vector<32x32xi32>
    %c1_i32_139 = arith.constant 1 : i32
    %261 = vector.broadcast %c1_i32_139 : i32 to vector<32x32xi32>
    %262 = arith.muli %261, %260 : vector<32x32xi32>
    %c-1_i32_140 = arith.constant -1 : i32
    %263 = vector.broadcast %c-1_i32_140 : i32 to vector<32x32xi32>
    %264 = arith.addi %262, %263 : vector<32x32xi32>
    %265 = arith.cmpi eq, %259, %264 : vector<32x32xi32>
    %266 = arith.extui %265 : vector<32x32xi1> to vector<32x32xi32>
    %267 = arith.sitofp %266 : vector<32x32xi32> to vector<32x32xf32>
    %cst_141 = arith.constant dense<0.000000e+00> : vector<8x32xf32>
    %268 = tpu.matmul %258, %267, %cst_141 {dimension_numbers = #tpu.dot_dimension_numbers<[1], [0], [0], [1], [0, 0, 1, 1], [], []>} : vector<8x32xf32>, vector<32x32xf32>, vector<8x32xf32> -> vector<8x32xf32>
    %c0_142 = arith.constant 0 : index
    %c0_143 = arith.constant 0 : index
    %c0_144 = arith.constant 0 : index
    %269 = vector.load %arg14[%c0_142, %c0_143, %c0_144] : memref<3x8x8xf32, #tpu.memory_space<vmem>>, vector<1x8x8xf32>
    %270 = vector.shape_cast %269 : vector<1x8x8xf32> to vector<8x8xf32>
    %cst_145 = arith.constant dense<0.000000e+00> : vector<8x32xf32>
    %271 = tpu.matmul %270, %268, %cst_145 {dimension_numbers = #tpu.dot_dimension_numbers<[1], [0], [0], [1], [0, 0, 1, 1], [], []>} : vector<8x8xf32>, vector<8x32xf32>, vector<8x32xf32> -> vector<8x32xf32>
    %c1_i32_146 = arith.constant 1 : i32
    %272 = vector.broadcast %c1_i32_146 : i32 to vector<32x32xi32>
    %273 = arith.muli %272, %260 : vector<32x32xi32>
    %c0_i32_147 = arith.constant 0 : i32
    %274 = vector.broadcast %c0_i32_147 : i32 to vector<32x32xi32>
    %275 = arith.addi %273, %274 : vector<32x32xi32>
    %276 = arith.cmpi eq, %259, %275 : vector<32x32xi32>
    %277 = arith.extui %276 : vector<32x32xi1> to vector<32x32xi32>
    %278 = arith.sitofp %277 : vector<32x32xi32> to vector<32x32xf32>
    %cst_148 = arith.constant dense<0.000000e+00> : vector<8x32xf32>
    %279 = tpu.matmul %258, %278, %cst_148 {dimension_numbers = #tpu.dot_dimension_numbers<[1], [0], [0], [1], [0, 0, 1, 1], [], []>} : vector<8x32xf32>, vector<32x32xf32>, vector<8x32xf32> -> vector<8x32xf32>
    %c1_149 = arith.constant 1 : index
    %c0_150 = arith.constant 0 : index
    %c0_151 = arith.constant 0 : index
    %280 = vector.load %arg14[%c1_149, %c0_150, %c0_151] : memref<3x8x8xf32, #tpu.memory_space<vmem>>, vector<1x8x8xf32>
    %281 = vector.shape_cast %280 : vector<1x8x8xf32> to vector<8x8xf32>
    %cst_152 = arith.constant dense<0.000000e+00> : vector<8x32xf32>
    %282 = tpu.matmul %281, %279, %cst_152 {dimension_numbers = #tpu.dot_dimension_numbers<[1], [0], [0], [1], [0, 0, 1, 1], [], []>} : vector<8x8xf32>, vector<8x32xf32>, vector<8x32xf32> -> vector<8x32xf32>
    %283 = arith.addf %271, %282 : vector<8x32xf32>
    %c1_i32_153 = arith.constant 1 : i32
    %284 = vector.broadcast %c1_i32_153 : i32 to vector<32x32xi32>
    %285 = arith.muli %284, %260 : vector<32x32xi32>
    %c1_i32_154 = arith.constant 1 : i32
    %286 = vector.broadcast %c1_i32_154 : i32 to vector<32x32xi32>
    %287 = arith.addi %285, %286 : vector<32x32xi32>
    %288 = arith.cmpi eq, %259, %287 : vector<32x32xi32>
    %289 = arith.extui %288 : vector<32x32xi1> to vector<32x32xi32>
    %290 = arith.sitofp %289 : vector<32x32xi32> to vector<32x32xf32>
    %cst_155 = arith.constant dense<0.000000e+00> : vector<8x32xf32>
    %291 = tpu.matmul %258, %290, %cst_155 {dimension_numbers = #tpu.dot_dimension_numbers<[1], [0], [0], [1], [0, 0, 1, 1], [], []>} : vector<8x32xf32>, vector<32x32xf32>, vector<8x32xf32> -> vector<8x32xf32>
    %c2_156 = arith.constant 2 : index
    %c0_157 = arith.constant 0 : index
    %c0_158 = arith.constant 0 : index
    %292 = vector.load %arg14[%c2_156, %c0_157, %c0_158] : memref<3x8x8xf32, #tpu.memory_space<vmem>>, vector<1x8x8xf32>
    %293 = vector.shape_cast %292 : vector<1x8x8xf32> to vector<8x8xf32>
    %cst_159 = arith.constant dense<0.000000e+00> : vector<8x32xf32>
    %294 = tpu.matmul %293, %291, %cst_159 {dimension_numbers = #tpu.dot_dimension_numbers<[1], [0], [0], [1], [0, 0, 1, 1], [], []>} : vector<8x8xf32>, vector<8x32xf32>, vector<8x32xf32> -> vector<8x32xf32>
    %295 = arith.addf %283, %294 : vector<8x32xf32>
    %c0_160 = arith.constant 0 : index
    %c0_161 = arith.constant 0 : index
    %296 = vector.load %arg15[%c0_160, %c0_161] : memref<8x1xf32, #tpu.memory_space<vmem>>, vector<8x1xf32>
    %297 = vector.broadcast %296 : vector<8x1xf32> to vector<8x32xf32>
    %298 = arith.addf %295, %297 : vector<8x32xf32>
    %cst_162 = arith.constant 0.000000e+00 : f32
    %299 = vector.broadcast %cst_162 : f32 to vector<8x32xf32>
    %300 = arith.maximumf %298, %299 : vector<8x32xf32>
    %301 = tpu.iota {dimensions = array<i32: 0>} : vector<32x32xi32>
    %302 = tpu.iota {dimensions = array<i32: 1>} : vector<32x32xi32>
    %c1_i32_163 = arith.constant 1 : i32
    %303 = vector.broadcast %c1_i32_163 : i32 to vector<32x32xi32>
    %304 = arith.muli %303, %302 : vector<32x32xi32>
    %c-1_i32_164 = arith.constant -1 : i32
    %305 = vector.broadcast %c-1_i32_164 : i32 to vector<32x32xi32>
    %306 = arith.addi %304, %305 : vector<32x32xi32>
    %307 = arith.cmpi eq, %301, %306 : vector<32x32xi32>
    %308 = arith.extui %307 : vector<32x32xi1> to vector<32x32xi32>
    %309 = arith.sitofp %308 : vector<32x32xi32> to vector<32x32xf32>
    %cst_165 = arith.constant dense<0.000000e+00> : vector<8x32xf32>
    %310 = tpu.matmul %300, %309, %cst_165 {dimension_numbers = #tpu.dot_dimension_numbers<[1], [0], [0], [1], [0, 0, 1, 1], [], []>} : vector<8x32xf32>, vector<32x32xf32>, vector<8x32xf32> -> vector<8x32xf32>
    %c0_166 = arith.constant 0 : index
    %c0_167 = arith.constant 0 : index
    %c0_168 = arith.constant 0 : index
    %311 = vector.load %arg16[%c0_166, %c0_167, %c0_168] : memref<3x8x8xf32, #tpu.memory_space<vmem>>, vector<1x8x8xf32>
    %312 = vector.shape_cast %311 : vector<1x8x8xf32> to vector<8x8xf32>
    %cst_169 = arith.constant dense<0.000000e+00> : vector<8x32xf32>
    %313 = tpu.matmul %312, %310, %cst_169 {dimension_numbers = #tpu.dot_dimension_numbers<[1], [0], [0], [1], [0, 0, 1, 1], [], []>} : vector<8x8xf32>, vector<8x32xf32>, vector<8x32xf32> -> vector<8x32xf32>
    %c1_i32_170 = arith.constant 1 : i32
    %314 = vector.broadcast %c1_i32_170 : i32 to vector<32x32xi32>
    %315 = arith.muli %314, %302 : vector<32x32xi32>
    %c0_i32_171 = arith.constant 0 : i32
    %316 = vector.broadcast %c0_i32_171 : i32 to vector<32x32xi32>
    %317 = arith.addi %315, %316 : vector<32x32xi32>
    %318 = arith.cmpi eq, %301, %317 : vector<32x32xi32>
    %319 = arith.extui %318 : vector<32x32xi1> to vector<32x32xi32>
    %320 = arith.sitofp %319 : vector<32x32xi32> to vector<32x32xf32>
    %cst_172 = arith.constant dense<0.000000e+00> : vector<8x32xf32>
    %321 = tpu.matmul %300, %320, %cst_172 {dimension_numbers = #tpu.dot_dimension_numbers<[1], [0], [0], [1], [0, 0, 1, 1], [], []>} : vector<8x32xf32>, vector<32x32xf32>, vector<8x32xf32> -> vector<8x32xf32>
    %c1_173 = arith.constant 1 : index
    %c0_174 = arith.constant 0 : index
    %c0_175 = arith.constant 0 : index
    %322 = vector.load %arg16[%c1_173, %c0_174, %c0_175] : memref<3x8x8xf32, #tpu.memory_space<vmem>>, vector<1x8x8xf32>
    %323 = vector.shape_cast %322 : vector<1x8x8xf32> to vector<8x8xf32>
    %cst_176 = arith.constant dense<0.000000e+00> : vector<8x32xf32>
    %324 = tpu.matmul %323, %321, %cst_176 {dimension_numbers = #tpu.dot_dimension_numbers<[1], [0], [0], [1], [0, 0, 1, 1], [], []>} : vector<8x8xf32>, vector<8x32xf32>, vector<8x32xf32> -> vector<8x32xf32>
    %325 = arith.addf %313, %324 : vector<8x32xf32>
    %c1_i32_177 = arith.constant 1 : i32
    %326 = vector.broadcast %c1_i32_177 : i32 to vector<32x32xi32>
    %327 = arith.muli %326, %302 : vector<32x32xi32>
    %c1_i32_178 = arith.constant 1 : i32
    %328 = vector.broadcast %c1_i32_178 : i32 to vector<32x32xi32>
    %329 = arith.addi %327, %328 : vector<32x32xi32>
    %330 = arith.cmpi eq, %301, %329 : vector<32x32xi32>
    %331 = arith.extui %330 : vector<32x32xi1> to vector<32x32xi32>
    %332 = arith.sitofp %331 : vector<32x32xi32> to vector<32x32xf32>
    %cst_179 = arith.constant dense<0.000000e+00> : vector<8x32xf32>
    %333 = tpu.matmul %300, %332, %cst_179 {dimension_numbers = #tpu.dot_dimension_numbers<[1], [0], [0], [1], [0, 0, 1, 1], [], []>} : vector<8x32xf32>, vector<32x32xf32>, vector<8x32xf32> -> vector<8x32xf32>
    %c2_180 = arith.constant 2 : index
    %c0_181 = arith.constant 0 : index
    %c0_182 = arith.constant 0 : index
    %334 = vector.load %arg16[%c2_180, %c0_181, %c0_182] : memref<3x8x8xf32, #tpu.memory_space<vmem>>, vector<1x8x8xf32>
    %335 = vector.shape_cast %334 : vector<1x8x8xf32> to vector<8x8xf32>
    %cst_183 = arith.constant dense<0.000000e+00> : vector<8x32xf32>
    %336 = tpu.matmul %335, %333, %cst_183 {dimension_numbers = #tpu.dot_dimension_numbers<[1], [0], [0], [1], [0, 0, 1, 1], [], []>} : vector<8x8xf32>, vector<8x32xf32>, vector<8x32xf32> -> vector<8x32xf32>
    %337 = arith.addf %325, %336 : vector<8x32xf32>
    %c0_184 = arith.constant 0 : index
    %c0_185 = arith.constant 0 : index
    %338 = vector.load %arg17[%c0_184, %c0_185] : memref<8x1xf32, #tpu.memory_space<vmem>>, vector<8x1xf32>
    %339 = vector.broadcast %338 : vector<8x1xf32> to vector<8x32xf32>
    %340 = arith.addf %337, %339 : vector<8x32xf32>
    %341 = arith.addf %340, %258 : vector<8x32xf32>
    %cst_186 = arith.constant 0.000000e+00 : f32
    %342 = vector.broadcast %cst_186 : f32 to vector<8x32xf32>
    %343 = arith.maximumf %341, %342 : vector<8x32xf32>
    %344 = tpu.iota {dimensions = array<i32: 0>} : vector<32x16xi32>
    %345 = tpu.iota {dimensions = array<i32: 1>} : vector<32x16xi32>
    %c2_i32_187 = arith.constant 2 : i32
    %346 = vector.broadcast %c2_i32_187 : i32 to vector<32x16xi32>
    %347 = arith.muli %346, %345 : vector<32x16xi32>
    %c-1_i32_188 = arith.constant -1 : i32
    %348 = vector.broadcast %c-1_i32_188 : i32 to vector<32x16xi32>
    %349 = arith.addi %347, %348 : vector<32x16xi32>
    %350 = arith.cmpi eq, %344, %349 : vector<32x16xi32>
    %351 = arith.extui %350 : vector<32x16xi1> to vector<32x16xi32>
    %352 = arith.sitofp %351 : vector<32x16xi32> to vector<32x16xf32>
    %cst_189 = arith.constant dense<0.000000e+00> : vector<8x16xf32>
    %353 = tpu.matmul %343, %352, %cst_189 {dimension_numbers = #tpu.dot_dimension_numbers<[1], [0], [0], [1], [0, 0, 1, 1], [], []>} : vector<8x32xf32>, vector<32x16xf32>, vector<8x16xf32> -> vector<8x16xf32>
    %c0_190 = arith.constant 0 : index
    %c0_191 = arith.constant 0 : index
    %c0_192 = arith.constant 0 : index
    %354 = vector.load %arg18[%c0_190, %c0_191, %c0_192] : memref<3x8x8xf32, #tpu.memory_space<vmem>>, vector<1x8x8xf32>
    %355 = vector.shape_cast %354 : vector<1x8x8xf32> to vector<8x8xf32>
    %cst_193 = arith.constant dense<0.000000e+00> : vector<8x16xf32>
    %356 = tpu.matmul %355, %353, %cst_193 {dimension_numbers = #tpu.dot_dimension_numbers<[1], [0], [0], [1], [0, 0, 1, 1], [], []>} : vector<8x8xf32>, vector<8x16xf32>, vector<8x16xf32> -> vector<8x16xf32>
    %c2_i32_194 = arith.constant 2 : i32
    %357 = vector.broadcast %c2_i32_194 : i32 to vector<32x16xi32>
    %358 = arith.muli %357, %345 : vector<32x16xi32>
    %c0_i32_195 = arith.constant 0 : i32
    %359 = vector.broadcast %c0_i32_195 : i32 to vector<32x16xi32>
    %360 = arith.addi %358, %359 : vector<32x16xi32>
    %361 = arith.cmpi eq, %344, %360 : vector<32x16xi32>
    %362 = arith.extui %361 : vector<32x16xi1> to vector<32x16xi32>
    %363 = arith.sitofp %362 : vector<32x16xi32> to vector<32x16xf32>
    %cst_196 = arith.constant dense<0.000000e+00> : vector<8x16xf32>
    %364 = tpu.matmul %343, %363, %cst_196 {dimension_numbers = #tpu.dot_dimension_numbers<[1], [0], [0], [1], [0, 0, 1, 1], [], []>} : vector<8x32xf32>, vector<32x16xf32>, vector<8x16xf32> -> vector<8x16xf32>
    %c1_197 = arith.constant 1 : index
    %c0_198 = arith.constant 0 : index
    %c0_199 = arith.constant 0 : index
    %365 = vector.load %arg18[%c1_197, %c0_198, %c0_199] : memref<3x8x8xf32, #tpu.memory_space<vmem>>, vector<1x8x8xf32>
    %366 = vector.shape_cast %365 : vector<1x8x8xf32> to vector<8x8xf32>
    %cst_200 = arith.constant dense<0.000000e+00> : vector<8x16xf32>
    %367 = tpu.matmul %366, %364, %cst_200 {dimension_numbers = #tpu.dot_dimension_numbers<[1], [0], [0], [1], [0, 0, 1, 1], [], []>} : vector<8x8xf32>, vector<8x16xf32>, vector<8x16xf32> -> vector<8x16xf32>
    %368 = arith.addf %356, %367 : vector<8x16xf32>
    %c2_i32_201 = arith.constant 2 : i32
    %369 = vector.broadcast %c2_i32_201 : i32 to vector<32x16xi32>
    %370 = arith.muli %369, %345 : vector<32x16xi32>
    %c1_i32_202 = arith.constant 1 : i32
    %371 = vector.broadcast %c1_i32_202 : i32 to vector<32x16xi32>
    %372 = arith.addi %370, %371 : vector<32x16xi32>
    %373 = arith.cmpi eq, %344, %372 : vector<32x16xi32>
    %374 = arith.extui %373 : vector<32x16xi1> to vector<32x16xi32>
    %375 = arith.sitofp %374 : vector<32x16xi32> to vector<32x16xf32>
    %cst_203 = arith.constant dense<0.000000e+00> : vector<8x16xf32>
    %376 = tpu.matmul %343, %375, %cst_203 {dimension_numbers = #tpu.dot_dimension_numbers<[1], [0], [0], [1], [0, 0, 1, 1], [], []>} : vector<8x32xf32>, vector<32x16xf32>, vector<8x16xf32> -> vector<8x16xf32>
    %c2_204 = arith.constant 2 : index
    %c0_205 = arith.constant 0 : index
    %c0_206 = arith.constant 0 : index
    %377 = vector.load %arg18[%c2_204, %c0_205, %c0_206] : memref<3x8x8xf32, #tpu.memory_space<vmem>>, vector<1x8x8xf32>
    %378 = vector.shape_cast %377 : vector<1x8x8xf32> to vector<8x8xf32>
    %cst_207 = arith.constant dense<0.000000e+00> : vector<8x16xf32>
    %379 = tpu.matmul %378, %376, %cst_207 {dimension_numbers = #tpu.dot_dimension_numbers<[1], [0], [0], [1], [0, 0, 1, 1], [], []>} : vector<8x8xf32>, vector<8x16xf32>, vector<8x16xf32> -> vector<8x16xf32>
    %380 = arith.addf %368, %379 : vector<8x16xf32>
    %c0_208 = arith.constant 0 : index
    %c0_209 = arith.constant 0 : index
    %381 = vector.load %arg19[%c0_208, %c0_209] : memref<8x1xf32, #tpu.memory_space<vmem>>, vector<8x1xf32>
    %382 = vector.broadcast %381 : vector<8x1xf32> to vector<8x16xf32>
    %383 = arith.addf %380, %382 : vector<8x16xf32>
    %c0_210 = arith.constant 0 : index
    %c0_211 = arith.constant 0 : index
    %384 = vector.load %arg20[%c0_210, %c0_211] : memref<16x16xf32, #tpu.memory_space<vmem>>, vector<16x16xf32>
    %cst_212 = arith.constant dense<0.000000e+00> : vector<8x16xf32>
    %385 = tpu.matmul %383, %384, %cst_212 {dimension_numbers = #tpu.dot_dimension_numbers<[1], [0], [0], [1], [0, 0, 1, 1], [], []>} : vector<8x16xf32>, vector<16x16xf32>, vector<8x16xf32> -> vector<8x16xf32>
    %c0_213 = arith.constant 0 : index
    %c0_214 = arith.constant 0 : index
    %386 = vector.load %arg21[%c0_213, %c0_214] : memref<1x16xf32, #tpu.memory_space<vmem>>, vector<1x16xf32>
    %387 = vector.broadcast %386 : vector<1x16xf32> to vector<8x16xf32>
    %388 = arith.addf %385, %387 : vector<8x16xf32>
    %c0_215 = arith.constant 0 : index
    %c0_216 = arith.constant 0 : index
    %389 = vector.load %arg22[%c0_215, %c0_216] : memref<16x16xf32, #tpu.memory_space<vmem>>, vector<16x16xf32>
    %cst_217 = arith.constant dense<0.000000e+00> : vector<8x16xf32>
    %390 = tpu.matmul %383, %389, %cst_217 {dimension_numbers = #tpu.dot_dimension_numbers<[1], [0], [0], [1], [0, 0, 1, 1], [], []>} : vector<8x16xf32>, vector<16x16xf32>, vector<8x16xf32> -> vector<8x16xf32>
    %c0_218 = arith.constant 0 : index
    %c0_219 = arith.constant 0 : index
    %391 = vector.load %arg23[%c0_218, %c0_219] : memref<1x16xf32, #tpu.memory_space<vmem>>, vector<1x16xf32>
    %392 = vector.broadcast %391 : vector<1x16xf32> to vector<8x16xf32>
    %393 = arith.addf %390, %392 : vector<8x16xf32>
    %c0_220 = arith.constant 0 : index
    %c0_221 = arith.constant 0 : index
    %394 = vector.load %arg24[%c0_220, %c0_221] : memref<16x16xf32, #tpu.memory_space<vmem>>, vector<16x16xf32>
    %cst_222 = arith.constant dense<0.000000e+00> : vector<8x16xf32>
    %395 = tpu.matmul %383, %394, %cst_222 {dimension_numbers = #tpu.dot_dimension_numbers<[1], [0], [0], [1], [0, 0, 1, 1], [], []>} : vector<8x16xf32>, vector<16x16xf32>, vector<8x16xf32> -> vector<8x16xf32>
    %c0_223 = arith.constant 0 : index
    %c0_224 = arith.constant 0 : index
    %396 = vector.load %arg25[%c0_223, %c0_224] : memref<1x16xf32, #tpu.memory_space<vmem>>, vector<1x16xf32>
    %397 = vector.broadcast %396 : vector<1x16xf32> to vector<8x16xf32>
    %398 = arith.addf %395, %397 : vector<8x16xf32>
    %cst_225 = arith.constant dense<0.000000e+00> : vector<8x8xf32>
    %399 = tpu.matmul %388, %393, %cst_225 {dimension_numbers = #tpu.dot_dimension_numbers<[1], [1], [0], [0], [0, 0, 1, 0], [], []>} : vector<8x16xf32>, vector<8x16xf32>, vector<8x8xf32> -> vector<8x8xf32>
    %cst_226 = arith.constant 2.500000e-01 : f32
    %400 = vector.broadcast %cst_226 : f32 to vector<8x8xf32>
    %401 = arith.mulf %399, %400 : vector<8x8xf32>
    %cst_227 = arith.constant dense<0xFF800000> : vector<8xf32>
    %402 = vector.multi_reduction <maximumf>, %401, %cst_227 [1] : vector<8x8xf32> to vector<8xf32>
    %403 = vector.shape_cast %402 : vector<8xf32> to vector<8x1xf32>
    %404 = vector.broadcast %403 : vector<8x1xf32> to vector<8x8xf32>
    %405 = arith.subf %401, %404 : vector<8x8xf32>
    %406 = math.exp %405 : vector<8x8xf32>
    %cst_228 = arith.constant dense<0.000000e+00> : vector<8xf32>
    %407 = vector.multi_reduction <add>, %406, %cst_228 [1] : vector<8x8xf32> to vector<8xf32>
    %408 = vector.shape_cast %407 : vector<8xf32> to vector<8x1xf32>
    %409 = tpu.reciprocal %408 {approx = true} : vector<8x1xf32> -> vector<8x1xf32>
    %410 = vector.broadcast %409 : vector<8x1xf32> to vector<8x8xf32>
    %411 = arith.mulf %406, %410 : vector<8x8xf32>
    %cst_229 = arith.constant dense<0.000000e+00> : vector<8x16xf32>
    %412 = tpu.matmul %411, %398, %cst_229 {dimension_numbers = #tpu.dot_dimension_numbers<[1], [0], [0], [1], [0, 0, 1, 1], [], []>} : vector<8x8xf32>, vector<8x16xf32>, vector<8x16xf32> -> vector<8x16xf32>
    %413 = arith.addf %412, %383 : vector<8x16xf32>
    %414 = tpu.iota {dimensions = array<i32: 0>} : vector<16x16xi32>
    %415 = tpu.iota {dimensions = array<i32: 1>} : vector<16x16xi32>
    %c1_i32_230 = arith.constant 1 : i32
    %416 = vector.broadcast %c1_i32_230 : i32 to vector<16x16xi32>
    %417 = arith.muli %416, %415 : vector<16x16xi32>
    %c-1_i32_231 = arith.constant -1 : i32
    %418 = vector.broadcast %c-1_i32_231 : i32 to vector<16x16xi32>
    %419 = arith.addi %417, %418 : vector<16x16xi32>
    %420 = arith.cmpi eq, %414, %419 : vector<16x16xi32>
    %421 = arith.extui %420 : vector<16x16xi1> to vector<16x16xi32>
    %422 = arith.sitofp %421 : vector<16x16xi32> to vector<16x16xf32>
    %cst_232 = arith.constant dense<0.000000e+00> : vector<8x16xf32>
    %423 = tpu.matmul %413, %422, %cst_232 {dimension_numbers = #tpu.dot_dimension_numbers<[1], [0], [0], [1], [0, 0, 1, 1], [], []>} : vector<8x16xf32>, vector<16x16xf32>, vector<8x16xf32> -> vector<8x16xf32>
    %c0_233 = arith.constant 0 : index
    %c0_234 = arith.constant 0 : index
    %c0_235 = arith.constant 0 : index
    %424 = vector.load %arg26[%c0_233, %c0_234, %c0_235] : memref<3x8x8xf32, #tpu.memory_space<vmem>>, vector<1x8x8xf32>
    %425 = vector.shape_cast %424 : vector<1x8x8xf32> to vector<8x8xf32>
    %cst_236 = arith.constant dense<0.000000e+00> : vector<8x16xf32>
    %426 = tpu.matmul %425, %423, %cst_236 {dimension_numbers = #tpu.dot_dimension_numbers<[1], [0], [0], [1], [0, 0, 1, 1], [], []>} : vector<8x8xf32>, vector<8x16xf32>, vector<8x16xf32> -> vector<8x16xf32>
    %c1_i32_237 = arith.constant 1 : i32
    %427 = vector.broadcast %c1_i32_237 : i32 to vector<16x16xi32>
    %428 = arith.muli %427, %415 : vector<16x16xi32>
    %c0_i32_238 = arith.constant 0 : i32
    %429 = vector.broadcast %c0_i32_238 : i32 to vector<16x16xi32>
    %430 = arith.addi %428, %429 : vector<16x16xi32>
    %431 = arith.cmpi eq, %414, %430 : vector<16x16xi32>
    %432 = arith.extui %431 : vector<16x16xi1> to vector<16x16xi32>
    %433 = arith.sitofp %432 : vector<16x16xi32> to vector<16x16xf32>
    %cst_239 = arith.constant dense<0.000000e+00> : vector<8x16xf32>
    %434 = tpu.matmul %413, %433, %cst_239 {dimension_numbers = #tpu.dot_dimension_numbers<[1], [0], [0], [1], [0, 0, 1, 1], [], []>} : vector<8x16xf32>, vector<16x16xf32>, vector<8x16xf32> -> vector<8x16xf32>
    %c1_240 = arith.constant 1 : index
    %c0_241 = arith.constant 0 : index
    %c0_242 = arith.constant 0 : index
    %435 = vector.load %arg26[%c1_240, %c0_241, %c0_242] : memref<3x8x8xf32, #tpu.memory_space<vmem>>, vector<1x8x8xf32>
    %436 = vector.shape_cast %435 : vector<1x8x8xf32> to vector<8x8xf32>
    %cst_243 = arith.constant dense<0.000000e+00> : vector<8x16xf32>
    %437 = tpu.matmul %436, %434, %cst_243 {dimension_numbers = #tpu.dot_dimension_numbers<[1], [0], [0], [1], [0, 0, 1, 1], [], []>} : vector<8x8xf32>, vector<8x16xf32>, vector<8x16xf32> -> vector<8x16xf32>
    %438 = arith.addf %426, %437 : vector<8x16xf32>
    %c1_i32_244 = arith.constant 1 : i32
    %439 = vector.broadcast %c1_i32_244 : i32 to vector<16x16xi32>
    %440 = arith.muli %439, %415 : vector<16x16xi32>
    %c1_i32_245 = arith.constant 1 : i32
    %441 = vector.broadcast %c1_i32_245 : i32 to vector<16x16xi32>
    %442 = arith.addi %440, %441 : vector<16x16xi32>
    %443 = arith.cmpi eq, %414, %442 : vector<16x16xi32>
    %444 = arith.extui %443 : vector<16x16xi1> to vector<16x16xi32>
    %445 = arith.sitofp %444 : vector<16x16xi32> to vector<16x16xf32>
    %cst_246 = arith.constant dense<0.000000e+00> : vector<8x16xf32>
    %446 = tpu.matmul %413, %445, %cst_246 {dimension_numbers = #tpu.dot_dimension_numbers<[1], [0], [0], [1], [0, 0, 1, 1], [], []>} : vector<8x16xf32>, vector<16x16xf32>, vector<8x16xf32> -> vector<8x16xf32>
    %c2_247 = arith.constant 2 : index
    %c0_248 = arith.constant 0 : index
    %c0_249 = arith.constant 0 : index
    %447 = vector.load %arg26[%c2_247, %c0_248, %c0_249] : memref<3x8x8xf32, #tpu.memory_space<vmem>>, vector<1x8x8xf32>
    %448 = vector.shape_cast %447 : vector<1x8x8xf32> to vector<8x8xf32>
    %cst_250 = arith.constant dense<0.000000e+00> : vector<8x16xf32>
    %449 = tpu.matmul %448, %446, %cst_250 {dimension_numbers = #tpu.dot_dimension_numbers<[1], [0], [0], [1], [0, 0, 1, 1], [], []>} : vector<8x8xf32>, vector<8x16xf32>, vector<8x16xf32> -> vector<8x16xf32>
    %450 = arith.addf %438, %449 : vector<8x16xf32>
    %c0_251 = arith.constant 0 : index
    %c0_252 = arith.constant 0 : index
    %451 = vector.load %arg27[%c0_251, %c0_252] : memref<8x1xf32, #tpu.memory_space<vmem>>, vector<8x1xf32>
    %452 = vector.broadcast %451 : vector<8x1xf32> to vector<8x16xf32>
    %453 = arith.addf %450, %452 : vector<8x16xf32>
    %cst_253 = arith.constant 0.000000e+00 : f32
    %454 = vector.broadcast %cst_253 : f32 to vector<8x16xf32>
    %455 = arith.maximumf %453, %454 : vector<8x16xf32>
    %456 = tpu.iota {dimensions = array<i32: 0>} : vector<16x16xi32>
    %457 = tpu.iota {dimensions = array<i32: 1>} : vector<16x16xi32>
    %c1_i32_254 = arith.constant 1 : i32
    %458 = vector.broadcast %c1_i32_254 : i32 to vector<16x16xi32>
    %459 = arith.muli %458, %457 : vector<16x16xi32>
    %c-1_i32_255 = arith.constant -1 : i32
    %460 = vector.broadcast %c-1_i32_255 : i32 to vector<16x16xi32>
    %461 = arith.addi %459, %460 : vector<16x16xi32>
    %462 = arith.cmpi eq, %456, %461 : vector<16x16xi32>
    %463 = arith.extui %462 : vector<16x16xi1> to vector<16x16xi32>
    %464 = arith.sitofp %463 : vector<16x16xi32> to vector<16x16xf32>
    %cst_256 = arith.constant dense<0.000000e+00> : vector<8x16xf32>
    %465 = tpu.matmul %455, %464, %cst_256 {dimension_numbers = #tpu.dot_dimension_numbers<[1], [0], [0], [1], [0, 0, 1, 1], [], []>} : vector<8x16xf32>, vector<16x16xf32>, vector<8x16xf32> -> vector<8x16xf32>
    %c0_257 = arith.constant 0 : index
    %c0_258 = arith.constant 0 : index
    %c0_259 = arith.constant 0 : index
    %466 = vector.load %arg28[%c0_257, %c0_258, %c0_259] : memref<3x8x8xf32, #tpu.memory_space<vmem>>, vector<1x8x8xf32>
    %467 = vector.shape_cast %466 : vector<1x8x8xf32> to vector<8x8xf32>
    %cst_260 = arith.constant dense<0.000000e+00> : vector<8x16xf32>
    %468 = tpu.matmul %467, %465, %cst_260 {dimension_numbers = #tpu.dot_dimension_numbers<[1], [0], [0], [1], [0, 0, 1, 1], [], []>} : vector<8x8xf32>, vector<8x16xf32>, vector<8x16xf32> -> vector<8x16xf32>
    %c1_i32_261 = arith.constant 1 : i32
    %469 = vector.broadcast %c1_i32_261 : i32 to vector<16x16xi32>
    %470 = arith.muli %469, %457 : vector<16x16xi32>
    %c0_i32_262 = arith.constant 0 : i32
    %471 = vector.broadcast %c0_i32_262 : i32 to vector<16x16xi32>
    %472 = arith.addi %470, %471 : vector<16x16xi32>
    %473 = arith.cmpi eq, %456, %472 : vector<16x16xi32>
    %474 = arith.extui %473 : vector<16x16xi1> to vector<16x16xi32>
    %475 = arith.sitofp %474 : vector<16x16xi32> to vector<16x16xf32>
    %cst_263 = arith.constant dense<0.000000e+00> : vector<8x16xf32>
    %476 = tpu.matmul %455, %475, %cst_263 {dimension_numbers = #tpu.dot_dimension_numbers<[1], [0], [0], [1], [0, 0, 1, 1], [], []>} : vector<8x16xf32>, vector<16x16xf32>, vector<8x16xf32> -> vector<8x16xf32>
    %c1_264 = arith.constant 1 : index
    %c0_265 = arith.constant 0 : index
    %c0_266 = arith.constant 0 : index
    %477 = vector.load %arg28[%c1_264, %c0_265, %c0_266] : memref<3x8x8xf32, #tpu.memory_space<vmem>>, vector<1x8x8xf32>
    %478 = vector.shape_cast %477 : vector<1x8x8xf32> to vector<8x8xf32>
    %cst_267 = arith.constant dense<0.000000e+00> : vector<8x16xf32>
    %479 = tpu.matmul %478, %476, %cst_267 {dimension_numbers = #tpu.dot_dimension_numbers<[1], [0], [0], [1], [0, 0, 1, 1], [], []>} : vector<8x8xf32>, vector<8x16xf32>, vector<8x16xf32> -> vector<8x16xf32>
    %480 = arith.addf %468, %479 : vector<8x16xf32>
    %c1_i32_268 = arith.constant 1 : i32
    %481 = vector.broadcast %c1_i32_268 : i32 to vector<16x16xi32>
    %482 = arith.muli %481, %457 : vector<16x16xi32>
    %c1_i32_269 = arith.constant 1 : i32
    %483 = vector.broadcast %c1_i32_269 : i32 to vector<16x16xi32>
    %484 = arith.addi %482, %483 : vector<16x16xi32>
    %485 = arith.cmpi eq, %456, %484 : vector<16x16xi32>
    %486 = arith.extui %485 : vector<16x16xi1> to vector<16x16xi32>
    %487 = arith.sitofp %486 : vector<16x16xi32> to vector<16x16xf32>
    %cst_270 = arith.constant dense<0.000000e+00> : vector<8x16xf32>
    %488 = tpu.matmul %455, %487, %cst_270 {dimension_numbers = #tpu.dot_dimension_numbers<[1], [0], [0], [1], [0, 0, 1, 1], [], []>} : vector<8x16xf32>, vector<16x16xf32>, vector<8x16xf32> -> vector<8x16xf32>
    %c2_271 = arith.constant 2 : index
    %c0_272 = arith.constant 0 : index
    %c0_273 = arith.constant 0 : index
    %489 = vector.load %arg28[%c2_271, %c0_272, %c0_273] : memref<3x8x8xf32, #tpu.memory_space<vmem>>, vector<1x8x8xf32>
    %490 = vector.shape_cast %489 : vector<1x8x8xf32> to vector<8x8xf32>
    %cst_274 = arith.constant dense<0.000000e+00> : vector<8x16xf32>
    %491 = tpu.matmul %490, %488, %cst_274 {dimension_numbers = #tpu.dot_dimension_numbers<[1], [0], [0], [1], [0, 0, 1, 1], [], []>} : vector<8x8xf32>, vector<8x16xf32>, vector<8x16xf32> -> vector<8x16xf32>
    %492 = arith.addf %480, %491 : vector<8x16xf32>
    %c0_275 = arith.constant 0 : index
    %c0_276 = arith.constant 0 : index
    %493 = vector.load %arg29[%c0_275, %c0_276] : memref<8x1xf32, #tpu.memory_space<vmem>>, vector<8x1xf32>
    %494 = vector.broadcast %493 : vector<8x1xf32> to vector<8x16xf32>
    %495 = arith.addf %492, %494 : vector<8x16xf32>
    %496 = arith.addf %495, %413 : vector<8x16xf32>
    %cst_277 = arith.constant 0.000000e+00 : f32
    %497 = vector.broadcast %cst_277 : f32 to vector<8x16xf32>
    %498 = arith.maximumf %496, %497 : vector<8x16xf32>
    %499 = tpu.iota {dimensions = array<i32: 0>} : vector<16x8xi32>
    %500 = tpu.iota {dimensions = array<i32: 1>} : vector<16x8xi32>
    %c2_i32_278 = arith.constant 2 : i32
    %501 = vector.broadcast %c2_i32_278 : i32 to vector<16x8xi32>
    %502 = arith.muli %501, %500 : vector<16x8xi32>
    %c-1_i32_279 = arith.constant -1 : i32
    %503 = vector.broadcast %c-1_i32_279 : i32 to vector<16x8xi32>
    %504 = arith.addi %502, %503 : vector<16x8xi32>
    %505 = arith.cmpi eq, %499, %504 : vector<16x8xi32>
    %506 = arith.extui %505 : vector<16x8xi1> to vector<16x8xi32>
    %507 = arith.sitofp %506 : vector<16x8xi32> to vector<16x8xf32>
    %cst_280 = arith.constant dense<0.000000e+00> : vector<8x8xf32>
    %508 = tpu.matmul %498, %507, %cst_280 {dimension_numbers = #tpu.dot_dimension_numbers<[1], [0], [0], [1], [0, 0, 1, 1], [], []>} : vector<8x16xf32>, vector<16x8xf32>, vector<8x8xf32> -> vector<8x8xf32>
    %c0_281 = arith.constant 0 : index
    %c0_282 = arith.constant 0 : index
    %c0_283 = arith.constant 0 : index
    %509 = vector.load %arg30[%c0_281, %c0_282, %c0_283] : memref<3x16x8xf32, #tpu.memory_space<vmem>>, vector<1x16x8xf32>
    %510 = vector.shape_cast %509 : vector<1x16x8xf32> to vector<16x8xf32>
    %cst_284 = arith.constant dense<0.000000e+00> : vector<16x8xf32>
    %511 = tpu.matmul %510, %508, %cst_284 {dimension_numbers = #tpu.dot_dimension_numbers<[1], [0], [0], [1], [0, 0, 1, 1], [], []>} : vector<16x8xf32>, vector<8x8xf32>, vector<16x8xf32> -> vector<16x8xf32>
    %c2_i32_285 = arith.constant 2 : i32
    %512 = vector.broadcast %c2_i32_285 : i32 to vector<16x8xi32>
    %513 = arith.muli %512, %500 : vector<16x8xi32>
    %c0_i32_286 = arith.constant 0 : i32
    %514 = vector.broadcast %c0_i32_286 : i32 to vector<16x8xi32>
    %515 = arith.addi %513, %514 : vector<16x8xi32>
    %516 = arith.cmpi eq, %499, %515 : vector<16x8xi32>
    %517 = arith.extui %516 : vector<16x8xi1> to vector<16x8xi32>
    %518 = arith.sitofp %517 : vector<16x8xi32> to vector<16x8xf32>
    %cst_287 = arith.constant dense<0.000000e+00> : vector<8x8xf32>
    %519 = tpu.matmul %498, %518, %cst_287 {dimension_numbers = #tpu.dot_dimension_numbers<[1], [0], [0], [1], [0, 0, 1, 1], [], []>} : vector<8x16xf32>, vector<16x8xf32>, vector<8x8xf32> -> vector<8x8xf32>
    %c1_288 = arith.constant 1 : index
    %c0_289 = arith.constant 0 : index
    %c0_290 = arith.constant 0 : index
    %520 = vector.load %arg30[%c1_288, %c0_289, %c0_290] : memref<3x16x8xf32, #tpu.memory_space<vmem>>, vector<1x16x8xf32>
    %521 = vector.shape_cast %520 : vector<1x16x8xf32> to vector<16x8xf32>
    %cst_291 = arith.constant dense<0.000000e+00> : vector<16x8xf32>
    %522 = tpu.matmul %521, %519, %cst_291 {dimension_numbers = #tpu.dot_dimension_numbers<[1], [0], [0], [1], [0, 0, 1, 1], [], []>} : vector<16x8xf32>, vector<8x8xf32>, vector<16x8xf32> -> vector<16x8xf32>
    %523 = arith.addf %511, %522 : vector<16x8xf32>
    %c2_i32_292 = arith.constant 2 : i32
    %524 = vector.broadcast %c2_i32_292 : i32 to vector<16x8xi32>
    %525 = arith.muli %524, %500 : vector<16x8xi32>
    %c1_i32_293 = arith.constant 1 : i32
    %526 = vector.broadcast %c1_i32_293 : i32 to vector<16x8xi32>
    %527 = arith.addi %525, %526 : vector<16x8xi32>
    %528 = arith.cmpi eq, %499, %527 : vector<16x8xi32>
    %529 = arith.extui %528 : vector<16x8xi1> to vector<16x8xi32>
    %530 = arith.sitofp %529 : vector<16x8xi32> to vector<16x8xf32>
    %cst_294 = arith.constant dense<0.000000e+00> : vector<8x8xf32>
    %531 = tpu.matmul %498, %530, %cst_294 {dimension_numbers = #tpu.dot_dimension_numbers<[1], [0], [0], [1], [0, 0, 1, 1], [], []>} : vector<8x16xf32>, vector<16x8xf32>, vector<8x8xf32> -> vector<8x8xf32>
    %c2_295 = arith.constant 2 : index
    %c0_296 = arith.constant 0 : index
    %c0_297 = arith.constant 0 : index
    %532 = vector.load %arg30[%c2_295, %c0_296, %c0_297] : memref<3x16x8xf32, #tpu.memory_space<vmem>>, vector<1x16x8xf32>
    %533 = vector.shape_cast %532 : vector<1x16x8xf32> to vector<16x8xf32>
    %cst_298 = arith.constant dense<0.000000e+00> : vector<16x8xf32>
    %534 = tpu.matmul %533, %531, %cst_298 {dimension_numbers = #tpu.dot_dimension_numbers<[1], [0], [0], [1], [0, 0, 1, 1], [], []>} : vector<16x8xf32>, vector<8x8xf32>, vector<16x8xf32> -> vector<16x8xf32>
    %535 = arith.addf %523, %534 : vector<16x8xf32>
    %c0_299 = arith.constant 0 : index
    %c0_300 = arith.constant 0 : index
    %536 = vector.load %arg31[%c0_299, %c0_300] : memref<16x1xf32, #tpu.memory_space<vmem>>, vector<16x1xf32>
    %537 = vector.broadcast %536 : vector<16x1xf32> to vector<16x8xf32>
    %538 = arith.addf %535, %537 : vector<16x8xf32>
    %539 = tpu.iota {dimensions = array<i32: 0>} : vector<8x8xi32>
    %540 = tpu.iota {dimensions = array<i32: 1>} : vector<8x8xi32>
    %c1_i32_301 = arith.constant 1 : i32
    %541 = vector.broadcast %c1_i32_301 : i32 to vector<8x8xi32>
    %542 = arith.muli %541, %540 : vector<8x8xi32>
    %c-1_i32_302 = arith.constant -1 : i32
    %543 = vector.broadcast %c-1_i32_302 : i32 to vector<8x8xi32>
    %544 = arith.addi %542, %543 : vector<8x8xi32>
    %545 = arith.cmpi eq, %539, %544 : vector<8x8xi32>
    %546 = arith.extui %545 : vector<8x8xi1> to vector<8x8xi32>
    %547 = arith.sitofp %546 : vector<8x8xi32> to vector<8x8xf32>
    %cst_303 = arith.constant dense<0.000000e+00> : vector<16x8xf32>
    %548 = tpu.matmul %538, %547, %cst_303 {dimension_numbers = #tpu.dot_dimension_numbers<[1], [0], [0], [1], [0, 0, 1, 1], [], []>} : vector<16x8xf32>, vector<8x8xf32>, vector<16x8xf32> -> vector<16x8xf32>
    %c0_304 = arith.constant 0 : index
    %c0_305 = arith.constant 0 : index
    %c0_306 = arith.constant 0 : index
    %549 = vector.load %arg32[%c0_304, %c0_305, %c0_306] : memref<3x16x16xf32, #tpu.memory_space<vmem>>, vector<1x16x16xf32>
    %550 = vector.shape_cast %549 : vector<1x16x16xf32> to vector<16x16xf32>
    %cst_307 = arith.constant dense<0.000000e+00> : vector<16x8xf32>
    %551 = tpu.matmul %550, %548, %cst_307 {dimension_numbers = #tpu.dot_dimension_numbers<[1], [0], [0], [1], [0, 0, 1, 1], [], []>} : vector<16x16xf32>, vector<16x8xf32>, vector<16x8xf32> -> vector<16x8xf32>
    %c1_i32_308 = arith.constant 1 : i32
    %552 = vector.broadcast %c1_i32_308 : i32 to vector<8x8xi32>
    %553 = arith.muli %552, %540 : vector<8x8xi32>
    %c0_i32_309 = arith.constant 0 : i32
    %554 = vector.broadcast %c0_i32_309 : i32 to vector<8x8xi32>
    %555 = arith.addi %553, %554 : vector<8x8xi32>
    %556 = arith.cmpi eq, %539, %555 : vector<8x8xi32>
    %557 = arith.extui %556 : vector<8x8xi1> to vector<8x8xi32>
    %558 = arith.sitofp %557 : vector<8x8xi32> to vector<8x8xf32>
    %cst_310 = arith.constant dense<0.000000e+00> : vector<16x8xf32>
    %559 = tpu.matmul %538, %558, %cst_310 {dimension_numbers = #tpu.dot_dimension_numbers<[1], [0], [0], [1], [0, 0, 1, 1], [], []>} : vector<16x8xf32>, vector<8x8xf32>, vector<16x8xf32> -> vector<16x8xf32>
    %c1_311 = arith.constant 1 : index
    %c0_312 = arith.constant 0 : index
    %c0_313 = arith.constant 0 : index
    %560 = vector.load %arg32[%c1_311, %c0_312, %c0_313] : memref<3x16x16xf32, #tpu.memory_space<vmem>>, vector<1x16x16xf32>
    %561 = vector.shape_cast %560 : vector<1x16x16xf32> to vector<16x16xf32>
    %cst_314 = arith.constant dense<0.000000e+00> : vector<16x8xf32>
    %562 = tpu.matmul %561, %559, %cst_314 {dimension_numbers = #tpu.dot_dimension_numbers<[1], [0], [0], [1], [0, 0, 1, 1], [], []>} : vector<16x16xf32>, vector<16x8xf32>, vector<16x8xf32> -> vector<16x8xf32>
    %563 = arith.addf %551, %562 : vector<16x8xf32>
    %c1_i32_315 = arith.constant 1 : i32
    %564 = vector.broadcast %c1_i32_315 : i32 to vector<8x8xi32>
    %565 = arith.muli %564, %540 : vector<8x8xi32>
    %c1_i32_316 = arith.constant 1 : i32
    %566 = vector.broadcast %c1_i32_316 : i32 to vector<8x8xi32>
    %567 = arith.addi %565, %566 : vector<8x8xi32>
    %568 = arith.cmpi eq, %539, %567 : vector<8x8xi32>
    %569 = arith.extui %568 : vector<8x8xi1> to vector<8x8xi32>
    %570 = arith.sitofp %569 : vector<8x8xi32> to vector<8x8xf32>
    %cst_317 = arith.constant dense<0.000000e+00> : vector<16x8xf32>
    %571 = tpu.matmul %538, %570, %cst_317 {dimension_numbers = #tpu.dot_dimension_numbers<[1], [0], [0], [1], [0, 0, 1, 1], [], []>} : vector<16x8xf32>, vector<8x8xf32>, vector<16x8xf32> -> vector<16x8xf32>
    %c2_318 = arith.constant 2 : index
    %c0_319 = arith.constant 0 : index
    %c0_320 = arith.constant 0 : index
    %572 = vector.load %arg32[%c2_318, %c0_319, %c0_320] : memref<3x16x16xf32, #tpu.memory_space<vmem>>, vector<1x16x16xf32>
    %573 = vector.shape_cast %572 : vector<1x16x16xf32> to vector<16x16xf32>
    %cst_321 = arith.constant dense<0.000000e+00> : vector<16x8xf32>
    %574 = tpu.matmul %573, %571, %cst_321 {dimension_numbers = #tpu.dot_dimension_numbers<[1], [0], [0], [1], [0, 0, 1, 1], [], []>} : vector<16x16xf32>, vector<16x8xf32>, vector<16x8xf32> -> vector<16x8xf32>
    %575 = arith.addf %563, %574 : vector<16x8xf32>
    %c0_322 = arith.constant 0 : index
    %c0_323 = arith.constant 0 : index
    %576 = vector.load %arg33[%c0_322, %c0_323] : memref<16x1xf32, #tpu.memory_space<vmem>>, vector<16x1xf32>
    %577 = vector.broadcast %576 : vector<16x1xf32> to vector<16x8xf32>
    %578 = arith.addf %575, %577 : vector<16x8xf32>
    %cst_324 = arith.constant 0.000000e+00 : f32
    %579 = vector.broadcast %cst_324 : f32 to vector<16x8xf32>
    %580 = arith.maximumf %578, %579 : vector<16x8xf32>
    %581 = tpu.iota {dimensions = array<i32: 0>} : vector<8x8xi32>
    %582 = tpu.iota {dimensions = array<i32: 1>} : vector<8x8xi32>
    %c1_i32_325 = arith.constant 1 : i32
    %583 = vector.broadcast %c1_i32_325 : i32 to vector<8x8xi32>
    %584 = arith.muli %583, %582 : vector<8x8xi32>
    %c-1_i32_326 = arith.constant -1 : i32
    %585 = vector.broadcast %c-1_i32_326 : i32 to vector<8x8xi32>
    %586 = arith.addi %584, %585 : vector<8x8xi32>
    %587 = arith.cmpi eq, %581, %586 : vector<8x8xi32>
    %588 = arith.extui %587 : vector<8x8xi1> to vector<8x8xi32>
    %589 = arith.sitofp %588 : vector<8x8xi32> to vector<8x8xf32>
    %cst_327 = arith.constant dense<0.000000e+00> : vector<16x8xf32>
    %590 = tpu.matmul %580, %589, %cst_327 {dimension_numbers = #tpu.dot_dimension_numbers<[1], [0], [0], [1], [0, 0, 1, 1], [], []>} : vector<16x8xf32>, vector<8x8xf32>, vector<16x8xf32> -> vector<16x8xf32>
    %c0_328 = arith.constant 0 : index
    %c0_329 = arith.constant 0 : index
    %c0_330 = arith.constant 0 : index
    %591 = vector.load %arg34[%c0_328, %c0_329, %c0_330] : memref<3x16x16xf32, #tpu.memory_space<vmem>>, vector<1x16x16xf32>
    %592 = vector.shape_cast %591 : vector<1x16x16xf32> to vector<16x16xf32>
    %cst_331 = arith.constant dense<0.000000e+00> : vector<16x8xf32>
    %593 = tpu.matmul %592, %590, %cst_331 {dimension_numbers = #tpu.dot_dimension_numbers<[1], [0], [0], [1], [0, 0, 1, 1], [], []>} : vector<16x16xf32>, vector<16x8xf32>, vector<16x8xf32> -> vector<16x8xf32>
    %c1_i32_332 = arith.constant 1 : i32
    %594 = vector.broadcast %c1_i32_332 : i32 to vector<8x8xi32>
    %595 = arith.muli %594, %582 : vector<8x8xi32>
    %c0_i32_333 = arith.constant 0 : i32
    %596 = vector.broadcast %c0_i32_333 : i32 to vector<8x8xi32>
    %597 = arith.addi %595, %596 : vector<8x8xi32>
    %598 = arith.cmpi eq, %581, %597 : vector<8x8xi32>
    %599 = arith.extui %598 : vector<8x8xi1> to vector<8x8xi32>
    %600 = arith.sitofp %599 : vector<8x8xi32> to vector<8x8xf32>
    %cst_334 = arith.constant dense<0.000000e+00> : vector<16x8xf32>
    %601 = tpu.matmul %580, %600, %cst_334 {dimension_numbers = #tpu.dot_dimension_numbers<[1], [0], [0], [1], [0, 0, 1, 1], [], []>} : vector<16x8xf32>, vector<8x8xf32>, vector<16x8xf32> -> vector<16x8xf32>
    %c1_335 = arith.constant 1 : index
    %c0_336 = arith.constant 0 : index
    %c0_337 = arith.constant 0 : index
    %602 = vector.load %arg34[%c1_335, %c0_336, %c0_337] : memref<3x16x16xf32, #tpu.memory_space<vmem>>, vector<1x16x16xf32>
    %603 = vector.shape_cast %602 : vector<1x16x16xf32> to vector<16x16xf32>
    %cst_338 = arith.constant dense<0.000000e+00> : vector<16x8xf32>
    %604 = tpu.matmul %603, %601, %cst_338 {dimension_numbers = #tpu.dot_dimension_numbers<[1], [0], [0], [1], [0, 0, 1, 1], [], []>} : vector<16x16xf32>, vector<16x8xf32>, vector<16x8xf32> -> vector<16x8xf32>
    %605 = arith.addf %593, %604 : vector<16x8xf32>
    %c1_i32_339 = arith.constant 1 : i32
    %606 = vector.broadcast %c1_i32_339 : i32 to vector<8x8xi32>
    %607 = arith.muli %606, %582 : vector<8x8xi32>
    %c1_i32_340 = arith.constant 1 : i32
    %608 = vector.broadcast %c1_i32_340 : i32 to vector<8x8xi32>
    %609 = arith.addi %607, %608 : vector<8x8xi32>
    %610 = arith.cmpi eq, %581, %609 : vector<8x8xi32>
    %611 = arith.extui %610 : vector<8x8xi1> to vector<8x8xi32>
    %612 = arith.sitofp %611 : vector<8x8xi32> to vector<8x8xf32>
    %cst_341 = arith.constant dense<0.000000e+00> : vector<16x8xf32>
    %613 = tpu.matmul %580, %612, %cst_341 {dimension_numbers = #tpu.dot_dimension_numbers<[1], [0], [0], [1], [0, 0, 1, 1], [], []>} : vector<16x8xf32>, vector<8x8xf32>, vector<16x8xf32> -> vector<16x8xf32>
    %c2_342 = arith.constant 2 : index
    %c0_343 = arith.constant 0 : index
    %c0_344 = arith.constant 0 : index
    %614 = vector.load %arg34[%c2_342, %c0_343, %c0_344] : memref<3x16x16xf32, #tpu.memory_space<vmem>>, vector<1x16x16xf32>
    %615 = vector.shape_cast %614 : vector<1x16x16xf32> to vector<16x16xf32>
    %cst_345 = arith.constant dense<0.000000e+00> : vector<16x8xf32>
    %616 = tpu.matmul %615, %613, %cst_345 {dimension_numbers = #tpu.dot_dimension_numbers<[1], [0], [0], [1], [0, 0, 1, 1], [], []>} : vector<16x16xf32>, vector<16x8xf32>, vector<16x8xf32> -> vector<16x8xf32>
    %617 = arith.addf %605, %616 : vector<16x8xf32>
    %c0_346 = arith.constant 0 : index
    %c0_347 = arith.constant 0 : index
    %618 = vector.load %arg35[%c0_346, %c0_347] : memref<16x1xf32, #tpu.memory_space<vmem>>, vector<16x1xf32>
    %619 = vector.broadcast %618 : vector<16x1xf32> to vector<16x8xf32>
    %620 = arith.addf %617, %619 : vector<16x8xf32>
    %621 = arith.addf %620, %538 : vector<16x8xf32>
    %cst_348 = arith.constant 0.000000e+00 : f32
    %622 = vector.broadcast %cst_348 : f32 to vector<16x8xf32>
    %623 = arith.maximumf %621, %622 : vector<16x8xf32>
    %624 = tpu.iota {dimensions = array<i32: 0>} : vector<8x4xi32>
    %625 = tpu.iota {dimensions = array<i32: 1>} : vector<8x4xi32>
    %c2_i32_349 = arith.constant 2 : i32
    %626 = vector.broadcast %c2_i32_349 : i32 to vector<8x4xi32>
    %627 = arith.muli %626, %625 : vector<8x4xi32>
    %c-1_i32_350 = arith.constant -1 : i32
    %628 = vector.broadcast %c-1_i32_350 : i32 to vector<8x4xi32>
    %629 = arith.addi %627, %628 : vector<8x4xi32>
    %630 = arith.cmpi eq, %624, %629 : vector<8x4xi32>
    %631 = arith.extui %630 : vector<8x4xi1> to vector<8x4xi32>
    %632 = arith.sitofp %631 : vector<8x4xi32> to vector<8x4xf32>
    %cst_351 = arith.constant dense<0.000000e+00> : vector<16x4xf32>
    %633 = tpu.matmul %623, %632, %cst_351 {dimension_numbers = #tpu.dot_dimension_numbers<[1], [0], [0], [1], [0, 0, 1, 1], [], []>} : vector<16x8xf32>, vector<8x4xf32>, vector<16x4xf32> -> vector<16x4xf32>
    %c0_352 = arith.constant 0 : index
    %c0_353 = arith.constant 0 : index
    %c0_354 = arith.constant 0 : index
    %634 = vector.load %arg36[%c0_352, %c0_353, %c0_354] : memref<3x32x16xf32, #tpu.memory_space<vmem>>, vector<1x32x16xf32>
    %635 = vector.shape_cast %634 : vector<1x32x16xf32> to vector<32x16xf32>
    %cst_355 = arith.constant dense<0.000000e+00> : vector<32x4xf32>
    %636 = tpu.matmul %635, %633, %cst_355 {dimension_numbers = #tpu.dot_dimension_numbers<[1], [0], [0], [1], [0, 0, 1, 1], [], []>} : vector<32x16xf32>, vector<16x4xf32>, vector<32x4xf32> -> vector<32x4xf32>
    %c2_i32_356 = arith.constant 2 : i32
    %637 = vector.broadcast %c2_i32_356 : i32 to vector<8x4xi32>
    %638 = arith.muli %637, %625 : vector<8x4xi32>
    %c0_i32_357 = arith.constant 0 : i32
    %639 = vector.broadcast %c0_i32_357 : i32 to vector<8x4xi32>
    %640 = arith.addi %638, %639 : vector<8x4xi32>
    %641 = arith.cmpi eq, %624, %640 : vector<8x4xi32>
    %642 = arith.extui %641 : vector<8x4xi1> to vector<8x4xi32>
    %643 = arith.sitofp %642 : vector<8x4xi32> to vector<8x4xf32>
    %cst_358 = arith.constant dense<0.000000e+00> : vector<16x4xf32>
    %644 = tpu.matmul %623, %643, %cst_358 {dimension_numbers = #tpu.dot_dimension_numbers<[1], [0], [0], [1], [0, 0, 1, 1], [], []>} : vector<16x8xf32>, vector<8x4xf32>, vector<16x4xf32> -> vector<16x4xf32>
    %c1_359 = arith.constant 1 : index
    %c0_360 = arith.constant 0 : index
    %c0_361 = arith.constant 0 : index
    %645 = vector.load %arg36[%c1_359, %c0_360, %c0_361] : memref<3x32x16xf32, #tpu.memory_space<vmem>>, vector<1x32x16xf32>
    %646 = vector.shape_cast %645 : vector<1x32x16xf32> to vector<32x16xf32>
    %cst_362 = arith.constant dense<0.000000e+00> : vector<32x4xf32>
    %647 = tpu.matmul %646, %644, %cst_362 {dimension_numbers = #tpu.dot_dimension_numbers<[1], [0], [0], [1], [0, 0, 1, 1], [], []>} : vector<32x16xf32>, vector<16x4xf32>, vector<32x4xf32> -> vector<32x4xf32>
    %648 = arith.addf %636, %647 : vector<32x4xf32>
    %c2_i32_363 = arith.constant 2 : i32
    %649 = vector.broadcast %c2_i32_363 : i32 to vector<8x4xi32>
    %650 = arith.muli %649, %625 : vector<8x4xi32>
    %c1_i32_364 = arith.constant 1 : i32
    %651 = vector.broadcast %c1_i32_364 : i32 to vector<8x4xi32>
    %652 = arith.addi %650, %651 : vector<8x4xi32>
    %653 = arith.cmpi eq, %624, %652 : vector<8x4xi32>
    %654 = arith.extui %653 : vector<8x4xi1> to vector<8x4xi32>
    %655 = arith.sitofp %654 : vector<8x4xi32> to vector<8x4xf32>
    %cst_365 = arith.constant dense<0.000000e+00> : vector<16x4xf32>
    %656 = tpu.matmul %623, %655, %cst_365 {dimension_numbers = #tpu.dot_dimension_numbers<[1], [0], [0], [1], [0, 0, 1, 1], [], []>} : vector<16x8xf32>, vector<8x4xf32>, vector<16x4xf32> -> vector<16x4xf32>
    %c2_366 = arith.constant 2 : index
    %c0_367 = arith.constant 0 : index
    %c0_368 = arith.constant 0 : index
    %657 = vector.load %arg36[%c2_366, %c0_367, %c0_368] : memref<3x32x16xf32, #tpu.memory_space<vmem>>, vector<1x32x16xf32>
    %658 = vector.shape_cast %657 : vector<1x32x16xf32> to vector<32x16xf32>
    %cst_369 = arith.constant dense<0.000000e+00> : vector<32x4xf32>
    %659 = tpu.matmul %658, %656, %cst_369 {dimension_numbers = #tpu.dot_dimension_numbers<[1], [0], [0], [1], [0, 0, 1, 1], [], []>} : vector<32x16xf32>, vector<16x4xf32>, vector<32x4xf32> -> vector<32x4xf32>
    %660 = arith.addf %648, %659 : vector<32x4xf32>
    %c0_370 = arith.constant 0 : index
    %c0_371 = arith.constant 0 : index
    %661 = vector.load %arg37[%c0_370, %c0_371] : memref<32x1xf32, #tpu.memory_space<vmem>>, vector<32x1xf32>
    %662 = vector.broadcast %661 : vector<32x1xf32> to vector<32x4xf32>
    %663 = arith.addf %660, %662 : vector<32x4xf32>
    %664 = tpu.iota {dimensions = array<i32: 1>} : vector<128x4xi32>
    %cst_372 = arith.constant 0.000000e+00 : f32
    %665 = vector.broadcast %cst_372 : f32 to vector<128x4xf32>
    %c0_373 = arith.constant 0 : index
    %c0_374 = arith.constant 0 : index
    %c0_375 = arith.constant 0 : index
    %666 = vector.load %arg38[%c0_373, %c0_374, %c0_375] : memref<4x128x32xf32, #tpu.memory_space<vmem>>, vector<1x128x32xf32>
    %667 = vector.shape_cast %666 : vector<1x128x32xf32> to vector<128x32xf32>
    %cst_376 = arith.constant dense<0.000000e+00> : vector<128x4xf32>
    %668 = tpu.matmul %667, %663, %cst_376 {dimension_numbers = #tpu.dot_dimension_numbers<[1], [0], [0], [1], [0, 0, 1, 1], [], []>} : vector<128x32xf32>, vector<32x4xf32>, vector<128x4xf32> -> vector<128x4xf32>
    %c0_i32_377 = arith.constant 0 : i32
    %669 = vector.broadcast %c0_i32_377 : i32 to vector<128x4xi32>
    %670 = arith.cmpi eq, %664, %669 : vector<128x4xi32>
    %cst_378 = arith.constant 0.000000e+00 : f32
    %671 = vector.broadcast %cst_378 : f32 to vector<128x4xf32>
    %672 = arith.select %670, %668, %671 : vector<128x4xi1>, vector<128x4xf32>
    %673 = arith.addf %665, %672 : vector<128x4xf32>
    %c1_379 = arith.constant 1 : index
    %c0_380 = arith.constant 0 : index
    %c0_381 = arith.constant 0 : index
    %674 = vector.load %arg38[%c1_379, %c0_380, %c0_381] : memref<4x128x32xf32, #tpu.memory_space<vmem>>, vector<1x128x32xf32>
    %675 = vector.shape_cast %674 : vector<1x128x32xf32> to vector<128x32xf32>
    %cst_382 = arith.constant dense<0.000000e+00> : vector<128x4xf32>
    %676 = tpu.matmul %675, %663, %cst_382 {dimension_numbers = #tpu.dot_dimension_numbers<[1], [0], [0], [1], [0, 0, 1, 1], [], []>} : vector<128x32xf32>, vector<32x4xf32>, vector<128x4xf32> -> vector<128x4xf32>
    %c1_i32_383 = arith.constant 1 : i32
    %677 = vector.broadcast %c1_i32_383 : i32 to vector<128x4xi32>
    %678 = arith.cmpi eq, %664, %677 : vector<128x4xi32>
    %cst_384 = arith.constant 0.000000e+00 : f32
    %679 = vector.broadcast %cst_384 : f32 to vector<128x4xf32>
    %680 = arith.select %678, %676, %679 : vector<128x4xi1>, vector<128x4xf32>
    %681 = arith.addf %673, %680 : vector<128x4xf32>
    %c2_385 = arith.constant 2 : index
    %c0_386 = arith.constant 0 : index
    %c0_387 = arith.constant 0 : index
    %682 = vector.load %arg38[%c2_385, %c0_386, %c0_387] : memref<4x128x32xf32, #tpu.memory_space<vmem>>, vector<1x128x32xf32>
    %683 = vector.shape_cast %682 : vector<1x128x32xf32> to vector<128x32xf32>
    %cst_388 = arith.constant dense<0.000000e+00> : vector<128x4xf32>
    %684 = tpu.matmul %683, %663, %cst_388 {dimension_numbers = #tpu.dot_dimension_numbers<[1], [0], [0], [1], [0, 0, 1, 1], [], []>} : vector<128x32xf32>, vector<32x4xf32>, vector<128x4xf32> -> vector<128x4xf32>
    %c2_i32_389 = arith.constant 2 : i32
    %685 = vector.broadcast %c2_i32_389 : i32 to vector<128x4xi32>
    %686 = arith.cmpi eq, %664, %685 : vector<128x4xi32>
    %cst_390 = arith.constant 0.000000e+00 : f32
    %687 = vector.broadcast %cst_390 : f32 to vector<128x4xf32>
    %688 = arith.select %686, %684, %687 : vector<128x4xi1>, vector<128x4xf32>
    %689 = arith.addf %681, %688 : vector<128x4xf32>
    %c3 = arith.constant 3 : index
    %c0_391 = arith.constant 0 : index
    %c0_392 = arith.constant 0 : index
    %690 = vector.load %arg38[%c3, %c0_391, %c0_392] : memref<4x128x32xf32, #tpu.memory_space<vmem>>, vector<1x128x32xf32>
    %691 = vector.shape_cast %690 : vector<1x128x32xf32> to vector<128x32xf32>
    %cst_393 = arith.constant dense<0.000000e+00> : vector<128x4xf32>
    %692 = tpu.matmul %691, %663, %cst_393 {dimension_numbers = #tpu.dot_dimension_numbers<[1], [0], [0], [1], [0, 0, 1, 1], [], []>} : vector<128x32xf32>, vector<32x4xf32>, vector<128x4xf32> -> vector<128x4xf32>
    %c3_i32 = arith.constant 3 : i32
    %693 = vector.broadcast %c3_i32 : i32 to vector<128x4xi32>
    %694 = arith.cmpi eq, %664, %693 : vector<128x4xi32>
    %cst_394 = arith.constant 0.000000e+00 : f32
    %695 = vector.broadcast %cst_394 : f32 to vector<128x4xf32>
    %696 = arith.select %694, %692, %695 : vector<128x4xi1>, vector<128x4xf32>
    %697 = arith.addf %689, %696 : vector<128x4xf32>
    %cst_395 = arith.constant dense<0.000000e+00> : vector<128xf32>
    %698 = vector.multi_reduction <add>, %697, %cst_395 [1] : vector<128x4xf32> to vector<128xf32>
    %699 = vector.shape_cast %698 : vector<128xf32> to vector<128x1xf32>
    %c0_396 = arith.constant 0 : index
    %c0_397 = arith.constant 0 : index
    %700 = vector.load %arg39[%c0_396, %c0_397] : memref<128x1xf32, #tpu.memory_space<vmem>>, vector<128x1xf32>
    %701 = arith.addf %699, %700 : vector<128x1xf32>
    %c0_398 = arith.constant 0 : index
    %c0_399 = arith.constant 0 : index
    %c0_400 = arith.constant 0 : index
    %702 = vector.load %arg40[%c0_398, %c0_399, %c0_400] : memref<1x128x1xf32, #tpu.memory_space<vmem>>, vector<1x128x1xf32>
    %703 = vector.shape_cast %702 : vector<1x128x1xf32> to vector<128x1xf32>
    %704 = vector.shape_cast %701 : vector<128x1xf32> to vector<1x128x1xf32>
    tpu.vector_store %arg40[%c0_398, %c0_399, %c0_400], %704 {strides = array<i32>} : memref<1x128x1xf32, #tpu.memory_space<vmem>>, vector<1x128x1xf32>,
    return
  }
  func.func @transform_0(%arg0: i32) -> (i32, i32, i32) {
    %c0_i32 = arith.constant 0 : i32
    %c0_i32_0 = arith.constant 0 : i32
    %c0_i32_1 = arith.constant 0 : i32
    return %arg0, %c0_i32, %c0_i32_0 : i32, i32, i32
  }
  func.func @transform_1(%arg0: i32) -> (i32, i32, i32) {
    %c0_i32 = arith.constant 0 : i32
    %c0_i32_0 = arith.constant 0 : i32
    %c0_i32_1 = arith.constant 0 : i32
    %c0_i32_2 = arith.constant 0 : i32
    return %c0_i32, %c0_i32_0, %c0_i32_1 : i32, i32, i32
  }
  func.func @transform_2(%arg0: i32) -> (i32, i32) {
    %c0_i32 = arith.constant 0 : i32
    %c0_i32_0 = arith.constant 0 : i32
    %c0_i32_1 = arith.constant 0 : i32
    return %c0_i32, %c0_i32_0 : i32, i32
  }
  func.func @transform_3(%arg0: i32) -> (i32, i32, i32) {
    %c0_i32 = arith.constant 0 : i32
    %c0_i32_0 = arith.constant 0 : i32
    %c0_i32_1 = arith.constant 0 : i32
    %c0_i32_2 = arith.constant 0 : i32
    return %c0_i32, %c0_i32_0, %c0_i32_1 : i32, i32, i32
  }
  func.func @transform_4(%arg0: i32) -> (i32, i32) {
    %c0_i32 = arith.constant 0 : i32
    %c0_i32_0 = arith.constant 0 : i32
    %c0_i32_1 = arith.constant 0 : i32
    return %c0_i32, %c0_i32_0 : i32, i32
  }
  func.func @transform_5(%arg0: i32) -> (i32, i32, i32) {
    %c0_i32 = arith.constant 0 : i32
    %c0_i32_0 = arith.constant 0 : i32
    %c0_i32_1 = arith.constant 0 : i32
    %c0_i32_2 = arith.constant 0 : i32
    return %c0_i32, %c0_i32_0, %c0_i32_1 : i32, i32, i32
  }
  func.func @transform_6(%arg0: i32) -> (i32, i32) {
    %c0_i32 = arith.constant 0 : i32
    %c0_i32_0 = arith.constant 0 : i32
    %c0_i32_1 = arith.constant 0 : i32
    return %c0_i32, %c0_i32_0 : i32, i32
  }
  func.func @transform_7(%arg0: i32) -> (i32, i32, i32) {
    %c0_i32 = arith.constant 0 : i32
    %c0_i32_0 = arith.constant 0 : i32
    %c0_i32_1 = arith.constant 0 : i32
    %c0_i32_2 = arith.constant 0 : i32
    return %c0_i32, %c0_i32_0, %c0_i32_1 : i32, i32, i32
  }
  func.func @transform_8(%arg0: i32) -> (i32, i32) {
    %c0_i32 = arith.constant 0 : i32
    %c0_i32_0 = arith.constant 0 : i32
    %c0_i32_1 = arith.constant 0 : i32
    return %c0_i32, %c0_i32_0 : i32, i32
  }
  func.func @transform_9(%arg0: i32) -> (i32, i32, i32) {
    %c0_i32 = arith.constant 0 : i32
    %c0_i32_0 = arith.constant 0 : i32
    %c0_i32_1 = arith.constant 0 : i32
    %c0_i32_2 = arith.constant 0 : i32
    return %c0_i32, %c0_i32_0, %c0_i32_1 : i32, i32, i32
  }
  func.func @transform_10(%arg0: i32) -> (i32, i32) {
    %c0_i32 = arith.constant 0 : i32
    %c0_i32_0 = arith.constant 0 : i32
    %c0_i32_1 = arith.constant 0 : i32
    return %c0_i32, %c0_i32_0 : i32, i32
  }
  func.func @transform_11(%arg0: i32) -> (i32, i32, i32) {
    %c0_i32 = arith.constant 0 : i32
    %c0_i32_0 = arith.constant 0 : i32
    %c0_i32_1 = arith.constant 0 : i32
    %c0_i32_2 = arith.constant 0 : i32
    return %c0_i32, %c0_i32_0, %c0_i32_1 : i32, i32, i32
  }
  func.func @transform_12(%arg0: i32) -> (i32, i32) {
    %c0_i32 = arith.constant 0 : i32
    %c0_i32_0 = arith.constant 0 : i32
    %c0_i32_1 = arith.constant 0 : i32
    return %c0_i32, %c0_i32_0 : i32, i32
  }
  func.func @transform_13(%arg0: i32) -> (i32, i32, i32) {
    %c0_i32 = arith.constant 0 : i32
    %c0_i32_0 = arith.constant 0 : i32
    %c0_i32_1 = arith.constant 0 : i32
    %c0_i32_2 = arith.constant 0 : i32
    return %c0_i32, %c0_i32_0, %c0_i32_1 : i32, i32, i32
  }
  func.func @transform_14(%arg0: i32) -> (i32, i32) {
    %c0_i32 = arith.constant 0 : i32
    %c0_i32_0 = arith.constant 0 : i32
    %c0_i32_1 = arith.constant 0 : i32
    return %c0_i32, %c0_i32_0 : i32, i32
  }
  func.func @transform_15(%arg0: i32) -> (i32, i32, i32) {
    %c0_i32 = arith.constant 0 : i32
    %c0_i32_0 = arith.constant 0 : i32
    %c0_i32_1 = arith.constant 0 : i32
    %c0_i32_2 = arith.constant 0 : i32
    return %c0_i32, %c0_i32_0, %c0_i32_1 : i32, i32, i32
  }
  func.func @transform_16(%arg0: i32) -> (i32, i32) {
    %c0_i32 = arith.constant 0 : i32
    %c0_i32_0 = arith.constant 0 : i32
    %c0_i32_1 = arith.constant 0 : i32
    return %c0_i32, %c0_i32_0 : i32, i32
  }
  func.func @transform_17(%arg0: i32) -> (i32, i32, i32) {
    %c0_i32 = arith.constant 0 : i32
    %c0_i32_0 = arith.constant 0 : i32
    %c0_i32_1 = arith.constant 0 : i32
    %c0_i32_2 = arith.constant 0 : i32
    return %c0_i32, %c0_i32_0, %c0_i32_1 : i32, i32, i32
  }
  func.func @transform_18(%arg0: i32) -> (i32, i32) {
    %c0_i32 = arith.constant 0 : i32
    %c0_i32_0 = arith.constant 0 : i32
    %c0_i32_1 = arith.constant 0 : i32
    return %c0_i32, %c0_i32_0 : i32, i32
  }
  func.func @transform_19(%arg0: i32) -> (i32, i32) {
    %c0_i32 = arith.constant 0 : i32
    %c0_i32_0 = arith.constant 0 : i32
    %c0_i32_1 = arith.constant 0 : i32
    return %c0_i32, %c0_i32_0 : i32, i32
  }
  func.func @transform_20(%arg0: i32) -> (i32, i32) {
    %c0_i32 = arith.constant 0 : i32
    %c0_i32_0 = arith.constant 0 : i32
    %c0_i32_1 = arith.constant 0 : i32
    return %c0_i32, %c0_i32_0 : i32, i32
  }
  func.func @transform_21(%arg0: i32) -> (i32, i32) {
    %c0_i32 = arith.constant 0 : i32
    %c0_i32_0 = arith.constant 0 : i32
    %c0_i32_1 = arith.constant 0 : i32
    return %c0_i32, %c0_i32_0 : i32, i32
  }
  func.func @transform_22(%arg0: i32) -> (i32, i32) {
    %c0_i32 = arith.constant 0 : i32
    %c0_i32_0 = arith.constant 0 : i32
    %c0_i32_1 = arith.constant 0 : i32
    return %c0_i32, %c0_i32_0 : i32, i32
  }
  func.func @transform_23(%arg0: i32) -> (i32, i32) {
    %c0_i32 = arith.constant 0 : i32
    %c0_i32_0 = arith.constant 0 : i32
    %c0_i32_1 = arith.constant 0 : i32
    return %c0_i32, %c0_i32_0 : i32, i32
  }
  func.func @transform_24(%arg0: i32) -> (i32, i32) {
    %c0_i32 = arith.constant 0 : i32
    %c0_i32_0 = arith.constant 0 : i32
    %c0_i32_1 = arith.constant 0 : i32
    return %c0_i32, %c0_i32_0 : i32, i32
  }
  func.func @transform_25(%arg0: i32) -> (i32, i32, i32) {
    %c0_i32 = arith.constant 0 : i32
    %c0_i32_0 = arith.constant 0 : i32
    %c0_i32_1 = arith.constant 0 : i32
    %c0_i32_2 = arith.constant 0 : i32
    return %c0_i32, %c0_i32_0, %c0_i32_1 : i32, i32, i32
  }
  func.func @transform_26(%arg0: i32) -> (i32, i32) {
    %c0_i32 = arith.constant 0 : i32
    %c0_i32_0 = arith.constant 0 : i32
    %c0_i32_1 = arith.constant 0 : i32
    return %c0_i32, %c0_i32_0 : i32, i32
  }
  func.func @transform_27(%arg0: i32) -> (i32, i32, i32) {
    %c0_i32 = arith.constant 0 : i32
    %c0_i32_0 = arith.constant 0 : i32
    %c0_i32_1 = arith.constant 0 : i32
    %c0_i32_2 = arith.constant 0 : i32
    return %c0_i32, %c0_i32_0, %c0_i32_1 : i32, i32, i32
  }
  func.func @transform_28(%arg0: i32) -> (i32, i32) {
    %c0_i32 = arith.constant 0 : i32
    %c0_i32_0 = arith.constant 0 : i32
    %c0_i32_1 = arith.constant 0 : i32
    return %c0_i32, %c0_i32_0 : i32, i32
  }
  func.func @transform_29(%arg0: i32) -> (i32, i32, i32) {
    %c0_i32 = arith.constant 0 : i32
    %c0_i32_0 = arith.constant 0 : i32
    %c0_i32_1 = arith.constant 0 : i32
    %c0_i32_2 = arith.constant 0 : i32
    return %c0_i32, %c0_i32_0, %c0_i32_1 : i32, i32, i32
  }
  func.func @transform_30(%arg0: i32) -> (i32, i32) {
    %c0_i32 = arith.constant 0 : i32
    %c0_i32_0 = arith.constant 0 : i32
    %c0_i32_1 = arith.constant 0 : i32
    return %c0_i32, %c0_i32_0 : i32, i32
  }
  func.func @transform_31(%arg0: i32) -> (i32, i32, i32) {
    %c0_i32 = arith.constant 0 : i32
    %c0_i32_0 = arith.constant 0 : i32
    %c0_i32_1 = arith.constant 0 : i32
    %c0_i32_2 = arith.constant 0 : i32
    return %c0_i32, %c0_i32_0, %c0_i32_1 : i32, i32, i32
  }
  func.func @transform_32(%arg0: i32) -> (i32, i32) {
    %c0_i32 = arith.constant 0 : i32
    %c0_i32_0 = arith.constant 0 : i32
    %c0_i32_1 = arith.constant 0 : i32
    return %c0_i32, %c0_i32_0 : i32, i32
  }
  func.func @transform_33(%arg0: i32) -> (i32, i32, i32) {
    %c0_i32 = arith.constant 0 : i32
    %c0_i32_0 = arith.constant 0 : i32
    %c0_i32_1 = arith.constant 0 : i32
    %c0_i32_2 = arith.constant 0 : i32
    return %c0_i32, %c0_i32_0, %c0_i32_1 : i32, i32, i32
  }
  func.func @transform_34(%arg0: i32) -> (i32, i32) {
    %c0_i32 = arith.constant 0 : i32
    %c0_i32_0 = arith.constant 0 : i32
    %c0_i32_1 = arith.constant 0 : i32
    return %c0_i32, %c0_i32_0 : i32, i32
  }
  func.func @transform_35(%arg0: i32) -> (i32, i32, i32) {
    %c0_i32 = arith.constant 0 : i32
    %c0_i32_0 = arith.constant 0 : i32
    %c0_i32_1 = arith.constant 0 : i32
    %c0_i32_2 = arith.constant 0 : i32
    return %c0_i32, %c0_i32_0, %c0_i32_1 : i32, i32, i32
  }
  func.func @transform_36(%arg0: i32) -> (i32, i32) {
    %c0_i32 = arith.constant 0 : i32
    %c0_i32_0 = arith.constant 0 : i32
    %c0_i32_1 = arith.constant 0 : i32
    return %c0_i32, %c0_i32_0 : i32, i32
  }
  func.func @transform_37(%arg0: i32) -> (i32, i32, i32) {
    %c0_i32 = arith.constant 0 : i32
    %c0_i32_0 = arith.constant 0 : i32
    %c0_i32_1 = arith.constant 0 : i32
    %c0_i32_2 = arith.constant 0 : i32
    return %c0_i32, %c0_i32_0, %c0_i32_1 : i32, i32, i32
  }
  func.func @transform_38(%arg0: i32) -> (i32, i32) {
    %c0_i32 = arith.constant 0 : i32
    %c0_i32_0 = arith.constant 0 : i32
    %c0_i32_1 = arith.constant 0 : i32
    return %c0_i32, %c0_i32_0 : i32, i32
  }
  func.func @transform_39(%arg0: i32) -> (i32, i32, i32) {
    %c0_i32 = arith.constant 0 : i32
    %c0_i32_0 = arith.constant 0 : i32
    %c0_i32_1 = arith.constant 0 : i32
    return %arg0, %c0_i32, %c0_i32_0 : i32, i32, i32
  }
}

</mosaic_0001>

<llo_original>
// kernel: _lambda_.1
$region0: #{_lambda_.1}
  #allocation0 [shape = 'u32[]', space=smem, size = 0x4, offset = 0x4, fixed_abs, tag = 'smem constant byte address 0x4 - core index']
  #allocation1 [shape = 'u32[144,128]{1,0:T(1,128)}', space=vmem, size = 0x12000, scoped, tag = 'internal scratch']
  %s0 = inlined_call_operand.smem [shape: u32[40], index: -1, kind: input, shape index: {}]
  %s1 = sld [smem:[%s0]]
  %s2 = scalar_lea.smem %s0, 1
  %s3 = sld [smem:[%s2]]
  %s4 = scalar_lea.smem %s0, 2
  %s5 = sld [smem:[%s4]]
  %s6 = scalar_lea.smem %s0, 3
  %s7 = sld [smem:[%s6]]
  %s8 = scalar_lea.smem %s0, 4
  %s9 = sld [smem:[%s8]]
  %s10 = scalar_lea.smem %s0, 5
  %s11 = sld [smem:[%s10]]
  %s12 = scalar_lea.smem %s0, 6
  %s13 = sld [smem:[%s12]]
  %s14 = scalar_lea.smem %s0, 7
  %s15 = sld [smem:[%s14]]
  %s16 = scalar_lea.smem %s0, 8
  %s17 = sld [smem:[%s16]]
  %s18 = scalar_lea.smem %s0, 9
  %s19 = sld [smem:[%s18]]
  %s20 = scalar_lea.smem %s0, 10
  %s21 = sld [smem:[%s20]]
  %s22 = scalar_lea.smem %s0, 11
  %s23 = sld [smem:[%s22]]
  %s24 = scalar_lea.smem %s0, 12
  %s25 = sld [smem:[%s24]]
  %s26 = scalar_lea.smem %s0, 13
  %s27 = sld [smem:[%s26]]
  %s28 = scalar_lea.smem %s0, 14
  %s29 = sld [smem:[%s28]]
  %s30 = scalar_lea.smem %s0, 15
  %s31 = sld [smem:[%s30]]
  %s32 = scalar_lea.smem %s0, 16
  %s33 = sld [smem:[%s32]]
  %s34 = scalar_lea.smem %s0, 17
  %s35 = sld [smem:[%s34]]
  %s36 = scalar_lea.smem %s0, 18
  %s37 = sld [smem:[%s36]]
  %s38 = scalar_lea.smem %s0, 19
  %s39 = sld [smem:[%s38]]
  %s40 = scalar_lea.smem %s0, 20
  %s41 = sld [smem:[%s40]]
  %s42 = scalar_lea.smem %s0, 21
  %s43 = sld [smem:[%s42]]
  %s44 = scalar_lea.smem %s0, 22
  %s45 = sld [smem:[%s44]]
  %s46 = scalar_lea.smem %s0, 23
  %s47 = sld [smem:[%s46]]
  %s48 = scalar_lea.smem %s0, 24
  %s49 = sld [smem:[%s48]]
  %s50 = scalar_lea.smem %s0, 25
  %s51 = sld [smem:[%s50]]
  %s52 = scalar_lea.smem %s0, 26
  %s53 = sld [smem:[%s52]]
  %s54 = scalar_lea.smem %s0, 27
  %s55 = sld [smem:[%s54]]
  %s56 = scalar_lea.smem %s0, 28
  %s57 = sld [smem:[%s56]]
  %s58 = scalar_lea.smem %s0, 29
  %s59 = sld [smem:[%s58]]
  %s60 = scalar_lea.smem %s0, 30
  %s61 = sld [smem:[%s60]]
  %s62 = scalar_lea.smem %s0, 31
  %s63 = sld [smem:[%s62]]
  %s64 = scalar_lea.smem %s0, 32
  %s65 = sld [smem:[%s64]]
  %s66 = scalar_lea.smem %s0, 33
  %s67 = sld [smem:[%s66]]
  %s68 = scalar_lea.smem %s0, 34
  %s69 = sld [smem:[%s68]]
  %s70 = scalar_lea.smem %s0, 35
  %s71 = sld [smem:[%s70]]
  %s72 = scalar_lea.smem %s0, 36
  %s73 = sld [smem:[%s72]]
  %s74 = scalar_lea.smem %s0, 37
  %s75 = sld [smem:[%s74]]
  %s76 = scalar_lea.smem %s0, 38
  %s77 = sld [smem:[%s76]]
  %s78 = scalar_lea.smem %s0, 39
  %s79 = sld [smem:[%s78]]
  %s80 = sld [smem:[#allocation0]]
  $region189: #{_lambda_.1} parent=0
    _
  %s82 = ssub.s32 1, %s80
  %s83 = scalar_select 0, %s82, %s80
  loop: start=0, step=1, limit=4
  $region2: #{_lambda_.1} parent=0 // loop_pre_header
    _
  $region3: #{_lambda_.1} parent=0 // loop_header
    %s85 = sphi 0, %s89
    %p86 = scmp.ge.s32.totalorder %s85, 4
    %s95 = sphi 0, %s97
    %s98 = sphi 0, %s95
    %s99 = sphi 0, %s98
    %s115 = sphi 0, %s99
    %s119 = sphi 0, %s119
    %s121 = sphi 0, %s119
    %s122 = sphi 0, %s121
    %s136 = sphi 0, %s122
    %s140 = sphi 0, %s140
    %s142 = sphi 0, %s140
    %s143 = sphi 0, %s142
    %s157 = sphi 0, %s143
    %s161 = sphi 0, %s161
    %s163 = sphi 0, %s161
    %s164 = sphi 0, %s163
    %s178 = sphi 0, %s164
    %s182 = sphi 0, %s182
    %s184 = sphi 0, %s182
    %s185 = sphi 0, %s184
    %s199 = sphi 0, %s185
    %s203 = sphi 0, %s203
    %s205 = sphi 0, %s203
    %s206 = sphi 0, %s205
    %s220 = sphi 0, %s206
    %s224 = sphi 0, %s224
    %s226 = sphi 0, %s224
    %s227 = sphi 0, %s226
    %s241 = sphi 0, %s227
    %s245 = sphi 0, %s245
    %s247 = sphi 0, %s245
    %s248 = sphi 0, %s247
    %s262 = sphi 0, %s248
    %s266 = sphi 0, %s266
    %s268 = sphi 0, %s266
    %s269 = sphi 0, %s268
    %s283 = sphi 0, %s269
    %s287 = sphi 0, %s287
    %s289 = sphi 0, %s287
    %s290 = sphi 0, %s289
    %s304 = sphi 0, %s290
    %s308 = sphi 0, %s308
    %s310 = sphi 0, %s308
    %s311 = sphi 0, %s310
    %s325 = sphi 0, %s311
    %s329 = sphi 0, %s329
    %s331 = sphi 0, %s329
    %s332 = sphi 0, %s331
    %s346 = sphi 0, %s332
    %s350 = sphi 0, %s350
    %s352 = sphi 0, %s350
    %s353 = sphi 0, %s352
    %s367 = sphi 0, %s353
    %s371 = sphi 0, %s371
    %s373 = sphi 0, %s371
    %s374 = sphi 0, %s373
    %s388 = sphi 0, %s374
    %s392 = sphi 0, %s392
    %s394 = sphi 0, %s392
    %s395 = sphi 0, %s394
    %s409 = sphi 0, %s395
    %s413 = sphi 0, %s413
    %s415 = sphi 0, %s413
    %s416 = sphi 0, %s415
    %s430 = sphi 0, %s416
    %s434 = sphi 0, %s434
    %s436 = sphi 0, %s434
    %s437 = sphi 0, %s436
    %s451 = sphi 0, %s437
    %s455 = sphi 0, %s455
    %s457 = sphi 0, %s455
    %s458 = sphi 0, %s457
    %s472 = sphi 0, %s458
    %s476 = sphi 0, %s476
    %s478 = sphi 0, %s476
    %s479 = sphi 0, %s478
    %s493 = sphi 0, %s479
    %s497 = sphi 0, %s497
    %s499 = sphi 0, %s497
    %s500 = sphi 0, %s499
    %s514 = sphi 0, %s500
    %s518 = sphi 0, %s518
    %s520 = sphi 0, %s518
    %s521 = sphi 0, %s520
    %s535 = sphi 0, %s521
    %s539 = sphi 0, %s539
    %s541 = sphi 0, %s539
    %s542 = sphi 0, %s541
    %s556 = sphi 0, %s542
    %s560 = sphi 0, %s560
    %s562 = sphi 0, %s560
    %s563 = sphi 0, %s562
    %s577 = sphi 0, %s563
    %s581 = sphi 0, %s581
    %s583 = sphi 0, %s581
    %s584 = sphi 0, %s583
    %s598 = sphi 0, %s584
    %s602 = sphi 0, %s602
    %s604 = sphi 0, %s602
    %s605 = sphi 0, %s604
    %s619 = sphi 0, %s605
    %s623 = sphi 0, %s623
    %s625 = sphi 0, %s623
    %s626 = sphi 0, %s625
    %s640 = sphi 0, %s626
    %s644 = sphi 0, %s644
    %s646 = sphi 0, %s644
    %s647 = sphi 0, %s646
    %s661 = sphi 0, %s647
    %s665 = sphi 0, %s665
    %s667 = sphi 0, %s665
    %s668 = sphi 0, %s667
    %s682 = sphi 0, %s668
    %s686 = sphi 0, %s686
    %s688 = sphi 0, %s686
    %s689 = sphi 0, %s688
    %s703 = sphi 0, %s689
    %s707 = sphi 0, %s707
    %s709 = sphi 0, %s707
    %s710 = sphi 0, %s709
    %s724 = sphi 0, %s710
    %s728 = sphi 0, %s728
    %s730 = sphi 0, %s728
    %s731 = sphi 0, %s730
    %s745 = sphi 0, %s731
    %s749 = sphi 0, %s749
    %s751 = sphi 0, %s749
    %s752 = sphi 0, %s751
    %s766 = sphi 0, %s752
    %s770 = sphi 0, %s770
    %s772 = sphi 0, %s770
    %s773 = sphi 0, %s772
    %s787 = sphi 0, %s773
    %s791 = sphi 0, %s791
    %s793 = sphi 0, %s791
    %s794 = sphi 0, %s793
    %s808 = sphi 0, %s794
    %s812 = sphi 0, %s812
    %s814 = sphi 0, %s812
    %s815 = sphi 0, %s814
    %s829 = sphi 0, %s815
    %s833 = sphi 0, %s833
    %s835 = sphi 0, %s833
    %s836 = sphi 0, %s835
    %s850 = sphi 0, %s836
    %s854 = sphi 0, %s854
    %s856 = sphi 0, %s854
    %s857 = sphi 0, %s856
    %s871 = sphi 0, %s857
    %s875 = sphi 0, %s875
    %s877 = sphi 0, %s875
    %s878 = sphi 0, %s877
    %s892 = sphi 0, %s878
    %s896 = sphi 0, %s896
    %s898 = sphi 0, %s896
    %s899 = sphi 0, %s898
    %s913 = sphi 0, %s899
    %s919 = sphi 0, %s921
    %s922 = sphi 0, %s919
    %s923 = sphi 0, %s922
    %s939 = sphi 0, %s923
  $region4: #{_lambda_.1} parent=0 // loop_header_branch
    %88 = sbr.rel (%p86) target = $region8
  $region5: #{_lambda_.1} parent=0 // loop_body
    %s90 = ssub.s32 %s85, 1
    %s91 = ssub.s32 %s85, 2
    %s92 = sadd.s32 %s85, 1
    %s93 = ssub.s32 %s85, %s92
    %p94 = scmp.eq.s32.totalorder %s93, 0
    %s96 = sadd.s32 %s95, 1
    %s97 = scalar_select %p94, %s95, %s96
    %p100 = pneg %p94
    %p101 = scmp.eq.s32.totalorder %s85, 1
    %p102 = por %p100, %p101
    %p103 = scmp.ne.s32.totalorder %s95, %s98
    %p104 = scmp.eq.s32.totalorder %s85, 0
    %p105 = por %p103, %p104
    %p106 = scmp.ne.s32.totalorder %s95, %s98
    %p107 = scmp.eq.s32.totalorder %s90, 1
    %p108 = por %p106, %p107
    %p109 = scmp.ne.s32.totalorder %s98, %s99
    %p110 = scmp.eq.s32.totalorder %s90, 0
    %p111 = por %p109, %p110
    %p112 = scmp.ne.s32.totalorder %s98, %s99
    %p113 = scmp.eq.s32.totalorder %s91, 1
    %p114 = por %p112, %p113
    %p116 = scmp.ne.s32.totalorder %s99, %s115
    %p117 = scmp.eq.s32.totalorder %s91, 0
    %p118 = por %p116, %p117
    %s120 = sadd.s32 %s119, 1
    %p123 = scmp.eq.s32.totalorder %s85, 1
    %p124 = scmp.ne.s32.totalorder %s119, %s121
    %p125 = scmp.eq.s32.totalorder %s85, 0
    %p126 = por %p124, %p125
    %p127 = scmp.ne.s32.totalorder %s119, %s121
    %p128 = scmp.eq.s32.totalorder %s90, 1
    %p129 = por %p127, %p128
    %p130 = scmp.ne.s32.totalorder %s121, %s122
    %p131 = scmp.eq.s32.totalorder %s90, 0
    %p132 = por %p130, %p131
    %p133 = scmp.ne.s32.totalorder %s121, %s122
    %p134 = scmp.eq.s32.totalorder %s91, 1
    %p135 = por %p133, %p134
    %p137 = scmp.ne.s32.totalorder %s122, %s136
    %p138 = scmp.eq.s32.totalorder %s91, 0
    %p139 = por %p137, %p138
    %s141 = sadd.s32 %s140, 1
    %p144 = scmp.eq.s32.totalorder %s85, 1
    %p145 = scmp.ne.s32.totalorder %s140, %s142
    %p146 = scmp.eq.s32.totalorder %s85, 0
    %p147 = por %p145, %p146
    %p148 = scmp.ne.s32.totalorder %s140, %s142
    %p149 = scmp.eq.s32.totalorder %s90, 1
    %p150 = por %p148, %p149
    %p151 = scmp.ne.s32.totalorder %s142, %s143
    %p152 = scmp.eq.s32.totalorder %s90, 0
    %p153 = por %p151, %p152
    %p154 = scmp.ne.s32.totalorder %s142, %s143
    %p155 = scmp.eq.s32.totalorder %s91, 1
    %p156 = por %p154, %p155
    %p158 = scmp.ne.s32.totalorder %s143, %s157
    %p159 = scmp.eq.s32.totalorder %s91, 0
    %p160 = por %p158, %p159
    %s162 = sadd.s32 %s161, 1
    %p165 = scmp.eq.s32.totalorder %s85, 1
    %p166 = scmp.ne.s32.totalorder %s161, %s163
    %p167 = scmp.eq.s32.totalorder %s85, 0
    %p168 = por %p166, %p167
    %p169 = scmp.ne.s32.totalorder %s161, %s163
    %p170 = scmp.eq.s32.totalorder %s90, 1
    %p171 = por %p169, %p170
    %p172 = scmp.ne.s32.totalorder %s163, %s164
    %p173 = scmp.eq.s32.totalorder %s90, 0
    %p174 = por %p172, %p173
    %p175 = scmp.ne.s32.totalorder %s163, %s164
    %p176 = scmp.eq.s32.totalorder %s91, 1
    %p177 = por %p175, %p176
    %p179 = scmp.ne.s32.totalorder %s164, %s178
    %p180 = scmp.eq.s32.totalorder %s91, 0
    %p181 = por %p179, %p180
    %s183 = sadd.s32 %s182, 1
    %p186 = scmp.eq.s32.totalorder %s85, 1
    %p187 = scmp.ne.s32.totalorder %s182, %s184
    %p188 = scmp.eq.s32.totalorder %s85, 0
    %p189 = por %p187, %p188
    %p190 = scmp.ne.s32.totalorder %s182, %s184
    %p191 = scmp.eq.s32.totalorder %s90, 1
    %p192 = por %p190, %p191
    %p193 = scmp.ne.s32.totalorder %s184, %s185
    %p194 = scmp.eq.s32.totalorder %s90, 0
    %p195 = por %p193, %p194
    %p196 = scmp.ne.s32.totalorder %s184, %s185
    %p197 = scmp.eq.s32.totalorder %s91, 1
    %p198 = por %p196, %p197
    %p200 = scmp.ne.s32.totalorder %s185, %s199
    %p201 = scmp.eq.s32.totalorder %s91, 0
    %p202 = por %p200, %p201
    %s204 = sadd.s32 %s203, 1
    %p207 = scmp.eq.s32.totalorder %s85, 1
    %p208 = scmp.ne.s32.totalorder %s203, %s205
    %p209 = scmp.eq.s32.totalorder %s85, 0
    %p210 = por %p208, %p209
    %p211 = scmp.ne.s32.totalorder %s203, %s205
    %p212 = scmp.eq.s32.totalorder %s90, 1
    %p213 = por %p211, %p212
    %p214 = scmp.ne.s32.totalorder %s205, %s206
    %p215 = scmp.eq.s32.totalorder %s90, 0
    %p216 = por %p214, %p215
    %p217 = scmp.ne.s32.totalorder %s205, %s206
    %p218 = scmp.eq.s32.totalorder %s91, 1
    %p219 = por %p217, %p218
    %p221 = scmp.ne.s32.totalorder %s206, %s220
    %p222 = scmp.eq.s32.totalorder %s91, 0
    %p223 = por %p221, %p222
    %s225 = sadd.s32 %s224, 1
    %p228 = scmp.eq.s32.totalorder %s85, 1
    %p229 = scmp.ne.s32.totalorder %s224, %s226
    %p230 = scmp.eq.s32.totalorder %s85, 0
    %p231 = por %p229, %p230
    %p232 = scmp.ne.s32.totalorder %s224, %s226
    %p233 = scmp.eq.s32.totalorder %s90, 1
    %p234 = por %p232, %p233
    %p235 = scmp.ne.s32.totalorder %s226, %s227
    %p236 = scmp.eq.s32.totalorder %s90, 0
    %p237 = por %p235, %p236
    %p238 = scmp.ne.s32.totalorder %s226, %s227
    %p239 = scmp.eq.s32.totalorder %s91, 1
    %p240 = por %p238, %p239
    %p242 = scmp.ne.s32.totalorder %s227, %s241
    %p243 = scmp.eq.s32.totalorder %s91, 0
    %p244 = por %p242, %p243
    %s246 = sadd.s32 %s245, 1
    %p249 = scmp.eq.s32.totalorder %s85, 1
    %p250 = scmp.ne.s32.totalorder %s245, %s247
    %p251 = scmp.eq.s32.totalorder %s85, 0
    %p252 = por %p250, %p251
    %p253 = scmp.ne.s32.totalorder %s245, %s247
    %p254 = scmp.eq.s32.totalorder %s90, 1
    %p255 = por %p253, %p254
    %p256 = scmp.ne.s32.totalorder %s247, %s248
    %p257 = scmp.eq.s32.totalorder %s90, 0
    %p258 = por %p256, %p257
    %p259 = scmp.ne.s32.totalorder %s247, %s248
    %p260 = scmp.eq.s32.totalorder %s91, 1
    %p261 = por %p259, %p260
    %p263 = scmp.ne.s32.totalorder %s248, %s262
    %p264 = scmp.eq.s32.totalorder %s91, 0
    %p265 = por %p263, %p264
    %s267 = sadd.s32 %s266, 1
    %p270 = scmp.eq.s32.totalorder %s85, 1
    %p271 = scmp.ne.s32.totalorder %s266, %s268
    %p272 = scmp.eq.s32.totalorder %s85, 0
    %p273 = por %p271, %p272
    %p274 = scmp.ne.s32.totalorder %s266, %s268
    %p275 = scmp.eq.s32.totalorder %s90, 1
    %p276 = por %p274, %p275
    %p277 = scmp.ne.s32.totalorder %s268, %s269
    %p278 = scmp.eq.s32.totalorder %s90, 0
    %p279 = por %p277, %p278
    %p280 = scmp.ne.s32.totalorder %s268, %s269
    %p281 = scmp.eq.s32.totalorder %s91, 1
    %p282 = por %p280, %p281
    %p284 = scmp.ne.s32.totalorder %s269, %s283
    %p285 = scmp.eq.s32.totalorder %s91, 0
    %p286 = por %p284, %p285
    %s288 = sadd.s32 %s287, 1
    %p291 = scmp.eq.s32.totalorder %s85, 1
    %p292 = scmp.ne.s32.totalorder %s287, %s289
    %p293 = scmp.eq.s32.totalorder %s85, 0
    %p294 = por %p292, %p293
    %p295 = scmp.ne.s32.totalorder %s287, %s289
    %p296 = scmp.eq.s32.totalorder %s90, 1
    %p297 = por %p295, %p296
    %p298 = scmp.ne.s32.totalorder %s289, %s290
    %p299 = scmp.eq.s32.totalorder %s90, 0
    %p300 = por %p298, %p299
    %p301 = scmp.ne.s32.totalorder %s289, %s290
    %p302 = scmp.eq.s32.totalorder %s91, 1
    %p303 = por %p301, %p302
    %p305 = scmp.ne.s32.totalorder %s290, %s304
    %p306 = scmp.eq.s32.totalorder %s91, 0
    %p307 = por %p305, %p306
    %s309 = sadd.s32 %s308, 1
    %p312 = scmp.eq.s32.totalorder %s85, 1
    %p313 = scmp.ne.s32.totalorder %s308, %s310
    %p314 = scmp.eq.s32.totalorder %s85, 0
    %p315 = por %p313, %p314
    %p316 = scmp.ne.s32.totalorder %s308, %s310
    %p317 = scmp.eq.s32.totalorder %s90, 1
    %p318 = por %p316, %p317
    %p319 = scmp.ne.s32.totalorder %s310, %s311
    %p320 = scmp.eq.s32.totalorder %s90, 0
    %p321 = por %p319, %p320
    %p322 = scmp.ne.s32.totalorder %s310, %s311
    %p323 = scmp.eq.s32.totalorder %s91, 1
    %p324 = por %p322, %p323
    %p326 = scmp.ne.s32.totalorder %s311, %s325
    %p327 = scmp.eq.s32.totalorder %s91, 0
    %p328 = por %p326, %p327
    %s330 = sadd.s32 %s329, 1
    %p333 = scmp.eq.s32.totalorder %s85, 1
    %p334 = scmp.ne.s32.totalorder %s329, %s331
    %p335 = scmp.eq.s32.totalorder %s85, 0
    %p336 = por %p334, %p335
    %p337 = scmp.ne.s32.totalorder %s329, %s331
    %p338 = scmp.eq.s32.totalorder %s90, 1
    %p339 = por %p337, %p338
    %p340 = scmp.ne.s32.totalorder %s331, %s332
    %p341 = scmp.eq.s32.totalorder %s90, 0
    %p342 = por %p340, %p341
    %p343 = scmp.ne.s32.totalorder %s331, %s332
    %p344 = scmp.eq.s32.totalorder %s91, 1
    %p345 = por %p343, %p344
    %p347 = scmp.ne.s32.totalorder %s332, %s346
    %p348 = scmp.eq.s32.totalorder %s91, 0
    %p349 = por %p347, %p348
    %s351 = sadd.s32 %s350, 1
    %p354 = scmp.eq.s32.totalorder %s85, 1
    %p355 = scmp.ne.s32.totalorder %s350, %s352
    %p356 = scmp.eq.s32.totalorder %s85, 0
    %p357 = por %p355, %p356
    %p358 = scmp.ne.s32.totalorder %s350, %s352
    %p359 = scmp.eq.s32.totalorder %s90, 1
    %p360 = por %p358, %p359
    %p361 = scmp.ne.s32.totalorder %s352, %s353
    %p362 = scmp.eq.s32.totalorder %s90, 0
    %p363 = por %p361, %p362
    %p364 = scmp.ne.s32.totalorder %s352, %s353
    %p365 = scmp.eq.s32.totalorder %s91, 1
    %p366 = por %p364, %p365
    %p368 = scmp.ne.s32.totalorder %s353, %s367
    %p369 = scmp.eq.s32.totalorder %s91, 0
    %p370 = por %p368, %p369
    %s372 = sadd.s32 %s371, 1
    %p375 = scmp.eq.s32.totalorder %s85, 1
    %p376 = scmp.ne.s32.totalorder %s371, %s373
    %p377 = scmp.eq.s32.totalorder %s85, 0
    %p378 = por %p376, %p377
    %p379 = scmp.ne.s32.totalorder %s371, %s373
    %p380 = scmp.eq.s32.totalorder %s90, 1
    %p381 = por %p379, %p380
    %p382 = scmp.ne.s32.totalorder %s373, %s374
    %p383 = scmp.eq.s32.totalorder %s90, 0
    %p384 = por %p382, %p383
    %p385 = scmp.ne.s32.totalorder %s373, %s374
    %p386 = scmp.eq.s32.totalorder %s91, 1
    %p387 = por %p385, %p386
    %p389 = scmp.ne.s32.totalorder %s374, %s388
    %p390 = scmp.eq.s32.totalorder %s91, 0
    %p391 = por %p389, %p390
    %s393 = sadd.s32 %s392, 1
    %p396 = scmp.eq.s32.totalorder %s85, 1
    %p397 = scmp.ne.s32.totalorder %s392, %s394
    %p398 = scmp.eq.s32.totalorder %s85, 0
    %p399 = por %p397, %p398
    %p400 = scmp.ne.s32.totalorder %s392, %s394
    %p401 = scmp.eq.s32.totalorder %s90, 1
    %p402 = por %p400, %p401
    %p403 = scmp.ne.s32.totalorder %s394, %s395
    %p404 = scmp.eq.s32.totalorder %s90, 0
    %p405 = por %p403, %p404
    %p406 = scmp.ne.s32.totalorder %s394, %s395
    %p407 = scmp.eq.s32.totalorder %s91, 1
    %p408 = por %p406, %p407
    %p410 = scmp.ne.s32.totalorder %s395, %s409
    %p411 = scmp.eq.s32.totalorder %s91, 0
    %p412 = por %p410, %p411
    %s414 = sadd.s32 %s413, 1
    %p417 = scmp.eq.s32.totalorder %s85, 1
    %p418 = scmp.ne.s32.totalorder %s413, %s415
    %p419 = scmp.eq.s32.totalorder %s85, 0
    %p420 = por %p418, %p419
    %p421 = scmp.ne.s32.totalorder %s413, %s415
    %p422 = scmp.eq.s32.totalorder %s90, 1
    %p423 = por %p421, %p422
    %p424 = scmp.ne.s32.totalorder %s415, %s416
    %p425 = scmp.eq.s32.totalorder %s90, 0
    %p426 = por %p424, %p425
    %p427 = scmp.ne.s32.totalorder %s415, %s416
    %p428 = scmp.eq.s32.totalorder %s91, 1
    %p429 = por %p427, %p428
    %p431 = scmp.ne.s32.totalorder %s416, %s430
    %p432 = scmp.eq.s32.totalorder %s91, 0
    %p433 = por %p431, %p432
    %s435 = sadd.s32 %s434, 1
    %p438 = scmp.eq.s32.totalorder %s85, 1
    %p439 = scmp.ne.s32.totalorder %s434, %s436
    %p440 = scmp.eq.s32.totalorder %s85, 0
    %p441 = por %p439, %p440
    %p442 = scmp.ne.s32.totalorder %s434, %s436
    %p443 = scmp.eq.s32.totalorder %s90, 1
    %p444 = por %p442, %p443
    %p445 = scmp.ne.s32.totalorder %s436, %s437
    %p446 = scmp.eq.s32.totalorder %s90, 0
    %p447 = por %p445, %p446
    %p448 = scmp.ne.s32.totalorder %s436, %s437
    %p449 = scmp.eq.s32.totalorder %s91, 1
    %p450 = por %p448, %p449
    %p452 = scmp.ne.s32.totalorder %s437, %s451
    %p453 = scmp.eq.s32.totalorder %s91, 0
    %p454 = por %p452, %p453
    %s456 = sadd.s32 %s455, 1
    %p459 = scmp.eq.s32.totalorder %s85, 1
    %p460 = scmp.ne.s32.totalorder %s455, %s457
    %p461 = scmp.eq.s32.totalorder %s85, 0
    %p462 = por %p460, %p461
    %p463 = scmp.ne.s32.totalorder %s455, %s457
    %p464 = scmp.eq.s32.totalorder %s90, 1
    %p465 = por %p463, %p464
    %p466 = scmp.ne.s32.totalorder %s457, %s458
    %p467 = scmp.eq.s32.totalorder %s90, 0
    %p468 = por %p466, %p467
    %p469 = scmp.ne.s32.totalorder %s457, %s458
    %p470 = scmp.eq.s32.totalorder %s91, 1
    %p471 = por %p469, %p470
    %p473 = scmp.ne.s32.totalorder %s458, %s472
    %p474 = scmp.eq.s32.totalorder %s91, 0
    %p475 = por %p473, %p474
    %s477 = sadd.s32 %s476, 1
    %p480 = scmp.eq.s32.totalorder %s85, 1
    %p481 = scmp.ne.s32.totalorder %s476, %s478
    %p482 = scmp.eq.s32.totalorder %s85, 0
    %p483 = por %p481, %p482
    %p484 = scmp.ne.s32.totalorder %s476, %s478
    %p485 = scmp.eq.s32.totalorder %s90, 1
    %p486 = por %p484, %p485
    %p487 = scmp.ne.s32.totalorder %s478, %s479
    %p488 = scmp.eq.s32.totalorder %s90, 0
    %p489 = por %p487, %p488
    %p490 = scmp.ne.s32.totalorder %s478, %s479
    %p491 = scmp.eq.s32.totalorder %s91, 1
    %p492 = por %p490, %p491
    %p494 = scmp.ne.s32.totalorder %s479, %s493
    %p495 = scmp.eq.s32.totalorder %s91, 0
    %p496 = por %p494, %p495
    %s498 = sadd.s32 %s497, 1
    %p501 = scmp.eq.s32.totalorder %s85, 1
    %p502 = scmp.ne.s32.totalorder %s497, %s499
    %p503 = scmp.eq.s32.totalorder %s85, 0
    %p504 = por %p502, %p503
    %p505 = scmp.ne.s32.totalorder %s497, %s499
    %p506 = scmp.eq.s32.totalorder %s90, 1
    %p507 = por %p505, %p506
    %p508 = scmp.ne.s32.totalorder %s499, %s500
    %p509 = scmp.eq.s32.totalorder %s90, 0
    %p510 = por %p508, %p509
    %p511 = scmp.ne.s32.totalorder %s499, %s500
    %p512 = scmp.eq.s32.totalorder %s91, 1
    %p513 = por %p511, %p512
    %p515 = scmp.ne.s32.totalorder %s500, %s514
    %p516 = scmp.eq.s32.totalorder %s91, 0
    %p517 = por %p515, %p516
    %s519 = sadd.s32 %s518, 1
    %p522 = scmp.eq.s32.totalorder %s85, 1
    %p523 = scmp.ne.s32.totalorder %s518, %s520
    %p524 = scmp.eq.s32.totalorder %s85, 0
    %p525 = por %p523, %p524
    %p526 = scmp.ne.s32.totalorder %s518, %s520
    %p527 = scmp.eq.s32.totalorder %s90, 1
    %p528 = por %p526, %p527
    %p529 = scmp.ne.s32.totalorder %s520, %s521
    %p530 = scmp.eq.s32.totalorder %s90, 0
    %p531 = por %p529, %p530
    %p532 = scmp.ne.s32.totalorder %s520, %s521
    %p533 = scmp.eq.s32.totalorder %s91, 1
    %p534 = por %p532, %p533
    %p536 = scmp.ne.s32.totalorder %s521, %s535
    %p537 = scmp.eq.s32.totalorder %s91, 0
    %p538 = por %p536, %p537
    %s540 = sadd.s32 %s539, 1
    %p543 = scmp.eq.s32.totalorder %s85, 1
    %p544 = scmp.ne.s32.totalorder %s539, %s541
    %p545 = scmp.eq.s32.totalorder %s85, 0
    %p546 = por %p544, %p545
    %p547 = scmp.ne.s32.totalorder %s539, %s541
    %p548 = scmp.eq.s32.totalorder %s90, 1
    %p549 = por %p547, %p548
    %p550 = scmp.ne.s32.totalorder %s541, %s542
    %p551 = scmp.eq.s32.totalorder %s90, 0
    %p552 = por %p550, %p551
    %p553 = scmp.ne.s32.totalorder %s541, %s542
    %p554 = scmp.eq.s32.totalorder %s91, 1
    %p555 = por %p553, %p554
    %p557 = scmp.ne.s32.totalorder %s542, %s556
    %p558 = scmp.eq.s32.totalorder %s91, 0
    %p559 = por %p557, %p558
    %s561 = sadd.s32 %s560, 1
    %p564 = scmp.eq.s32.totalorder %s85, 1
    %p565 = scmp.ne.s32.totalorder %s560, %s562
    %p566 = scmp.eq.s32.totalorder %s85, 0
    %p567 = por %p565, %p566
    %p568 = scmp.ne.s32.totalorder %s560, %s562
    %p569 = scmp.eq.s32.totalorder %s90, 1
    %p570 = por %p568, %p569
    %p571 = scmp.ne.s32.totalorder %s562, %s563
    %p572 = scmp.eq.s32.totalorder %s90, 0
    %p573 = por %p571, %p572
    %p574 = scmp.ne.s32.totalorder %s562, %s563
    %p575 = scmp.eq.s32.totalorder %s91, 1
    %p576 = por %p574, %p575
    %p578 = scmp.ne.s32.totalorder %s563, %s577
    %p579 = scmp.eq.s32.totalorder %s91, 0
    %p580 = por %p578, %p579
    %s582 = sadd.s32 %s581, 1
    %p585 = scmp.eq.s32.totalorder %s85, 1
    %p586 = scmp.ne.s32.totalorder %s581, %s583
    %p587 = scmp.eq.s32.totalorder %s85, 0
    %p588 = por %p586, %p587
    %p589 = scmp.ne.s32.totalorder %s581, %s583
    %p590 = scmp.eq.s32.totalorder %s90, 1
    %p591 = por %p589, %p590
    %p592 = scmp.ne.s32.totalorder %s583, %s584
    %p593 = scmp.eq.s32.totalorder %s90, 0
    %p594 = por %p592, %p593
    %p595 = scmp.ne.s32.totalorder %s583, %s584
    %p596 = scmp.eq.s32.totalorder %s91, 1
    %p597 = por %p595, %p596
    %p599 = scmp.ne.s32.totalorder %s584, %s598
    %p600 = scmp.eq.s32.totalorder %s91, 0
    %p601 = por %p599, %p600
    %s603 = sadd.s32 %s602, 1
    %p606 = scmp.eq.s32.totalorder %s85, 1
    %p607 = scmp.ne.s32.totalorder %s602, %s604
    %p608 = scmp.eq.s32.totalorder %s85, 0
    %p609 = por %p607, %p608
    %p610 = scmp.ne.s32.totalorder %s602, %s604
    %p611 = scmp.eq.s32.totalorder %s90, 1
    %p612 = por %p610, %p611
    %p613 = scmp.ne.s32.totalorder %s604, %s605
    %p614 = scmp.eq.s32.totalorder %s90, 0
    %p615 = por %p613, %p614
    %p616 = scmp.ne.s32.totalorder %s604, %s605
    %p617 = scmp.eq.s32.totalorder %s91, 1
    %p618 = por %p616, %p617
    %p620 = scmp.ne.s32.totalorder %s605, %s619
    %p621 = scmp.eq.s32.totalorder %s91, 0
    %p622 = por %p620, %p621
    %s624 = sadd.s32 %s623, 1
    %p627 = scmp.eq.s32.totalorder %s85, 1
    %p628 = scmp.ne.s32.totalorder %s623, %s625
    %p629 = scmp.eq.s32.totalorder %s85, 0
    %p630 = por %p628, %p629
    %p631 = scmp.ne.s32.totalorder %s623, %s625
    %p632 = scmp.eq.s32.totalorder %s90, 1
    %p633 = por %p631, %p632
    %p634 = scmp.ne.s32.totalorder %s625, %s626
    %p635 = scmp.eq.s32.totalorder %s90, 0
    %p636 = por %p634, %p635
    %p637 = scmp.ne.s32.totalorder %s625, %s626
    %p638 = scmp.eq.s32.totalorder %s91, 1
    %p639 = por %p637, %p638
    %p641 = scmp.ne.s32.totalorder %s626, %s640
    %p642 = scmp.eq.s32.totalorder %s91, 0
    %p643 = por %p641, %p642
    %s645 = sadd.s32 %s644, 1
    %p648 = scmp.eq.s32.totalorder %s85, 1
    %p649 = scmp.ne.s32.totalorder %s644, %s646
    %p650 = scmp.eq.s32.totalorder %s85, 0
    %p651 = por %p649, %p650
    %p652 = scmp.ne.s32.totalorder %s644, %s646
    %p653 = scmp.eq.s32.totalorder %s90, 1
    %p654 = por %p652, %p653
    %p655 = scmp.ne.s32.totalorder %s646, %s647
    %p656 = scmp.eq.s32.totalorder %s90, 0
    %p657 = por %p655, %p656
    %p658 = scmp.ne.s32.totalorder %s646, %s647
    %p659 = scmp.eq.s32.totalorder %s91, 1
    %p660 = por %p658, %p659
    %p662 = scmp.ne.s32.totalorder %s647, %s661
    %p663 = scmp.eq.s32.totalorder %s91, 0
    %p664 = por %p662, %p663
    %s666 = sadd.s32 %s665, 1
    %p669 = scmp.eq.s32.totalorder %s85, 1
    %p670 = scmp.ne.s32.totalorder %s665, %s667
    %p671 = scmp.eq.s32.totalorder %s85, 0
    %p672 = por %p670, %p671
    %p673 = scmp.ne.s32.totalorder %s665, %s667
    %p674 = scmp.eq.s32.totalorder %s90, 1
    %p675 = por %p673, %p674
    %p676 = scmp.ne.s32.totalorder %s667, %s668
    %p677 = scmp.eq.s32.totalorder %s90, 0
    %p678 = por %p676, %p677
    %p679 = scmp.ne.s32.totalorder %s667, %s668
    %p680 = scmp.eq.s32.totalorder %s91, 1
    %p681 = por %p679, %p680
    %p683 = scmp.ne.s32.totalorder %s668, %s682
    %p684 = scmp.eq.s32.totalorder %s91, 0
    %p685 = por %p683, %p684
    %s687 = sadd.s32 %s686, 1
    %p690 = scmp.eq.s32.totalorder %s85, 1
    %p691 = scmp.ne.s32.totalorder %s686, %s688
    %p692 = scmp.eq.s32.totalorder %s85, 0
    %p693 = por %p691, %p692
    %p694 = scmp.ne.s32.totalorder %s686, %s688
    %p695 = scmp.eq.s32.totalorder %s90, 1
    %p696 = por %p694, %p695
    %p697 = scmp.ne.s32.totalorder %s688, %s689
    %p698 = scmp.eq.s32.totalorder %s90, 0
    %p699 = por %p697, %p698
    %p700 = scmp.ne.s32.totalorder %s688, %s689
    %p701 = scmp.eq.s32.totalorder %s91, 1
    %p702 = por %p700, %p701
    %p704 = scmp.ne.s32.totalorder %s689, %s703
    %p705 = scmp.eq.s32.totalorder %s91, 0
    %p706 = por %p704, %p705
    %s708 = sadd.s32 %s707, 1
    %p711 = scmp.eq.s32.totalorder %s85, 1
    %p712 = scmp.ne.s32.totalorder %s707, %s709
    %p713 = scmp.eq.s32.totalorder %s85, 0
    %p714 = por %p712, %p713
    %p715 = scmp.ne.s32.totalorder %s707, %s709
    %p716 = scmp.eq.s32.totalorder %s90, 1
    %p717 = por %p715, %p716
    %p718 = scmp.ne.s32.totalorder %s709, %s710
    %p719 = scmp.eq.s32.totalorder %s90, 0
    %p720 = por %p718, %p719
    %p721 = scmp.ne.s32.totalorder %s709, %s710
    %p722 = scmp.eq.s32.totalorder %s91, 1
    %p723 = por %p721, %p722
    %p725 = scmp.ne.s32.totalorder %s710, %s724
    %p726 = scmp.eq.s32.totalorder %s91, 0
    %p727 = por %p725, %p726
    %s729 = sadd.s32 %s728, 1
    %p732 = scmp.eq.s32.totalorder %s85, 1
    %p733 = scmp.ne.s32.totalorder %s728, %s730
    %p734 = scmp.eq.s32.totalorder %s85, 0
    %p735 = por %p733, %p734
    %p736 = scmp.ne.s32.totalorder %s728, %s730
    %p737 = scmp.eq.s32.totalorder %s90, 1
    %p738 = por %p736, %p737
    %p739 = scmp.ne.s32.totalorder %s730, %s731
    %p740 = scmp.eq.s32.totalorder %s90, 0
    %p741 = por %p739, %p740
    %p742 = scmp.ne.s32.totalorder %s730, %s731
    %p743 = scmp.eq.s32.totalorder %s91, 1
    %p744 = por %p742, %p743
    %p746 = scmp.ne.s32.totalorder %s731, %s745
    %p747 = scmp.eq.s32.totalorder %s91, 0
    %p748 = por %p746, %p747
    %s750 = sadd.s32 %s749, 1
    %p753 = scmp.eq.s32.totalorder %s85, 1
    %p754 = scmp.ne.s32.totalorder %s749, %s751
    %p755 = scmp.eq.s32.totalorder %s85, 0
    %p756 = por %p754, %p755
    %p757 = scmp.ne.s32.totalorder %s749, %s751
    %p758 = scmp.eq.s32.totalorder %s90, 1
    %p759 = por %p757, %p758
    %p760 = scmp.ne.s32.totalorder %s751, %s752
    %p761 = scmp.eq.s32.totalorder %s90, 0
    %p762 = por %p760, %p761
    %p763 = scmp.ne.s32.totalorder %s751, %s752
    %p764 = scmp.eq.s32.totalorder %s91, 1
    %p765 = por %p763, %p764
    %p767 = scmp.ne.s32.totalorder %s752, %s766
    %p768 = scmp.eq.s32.totalorder %s91, 0
    %p769 = por %p767, %p768
    %s771 = sadd.s32 %s770, 1
    %p774 = scmp.eq.s32.totalorder %s85, 1
    %p775 = scmp.ne.s32.totalorder %s770, %s772
    %p776 = scmp.eq.s32.totalorder %s85, 0
    %p777 = por %p775, %p776
    %p778 = scmp.ne.s32.totalorder %s770, %s772
    %p779 = scmp.eq.s32.totalorder %s90, 1
    %p780 = por %p778, %p779
    %p781 = scmp.ne.s32.totalorder %s772, %s773
    %p782 = scmp.eq.s32.totalorder %s90, 0
    %p783 = por %p781, %p782
    %p784 = scmp.ne.s32.totalorder %s772, %s773
    %p785 = scmp.eq.s32.totalorder %s91, 1
    %p786 = por %p784, %p785
    %p788 = scmp.ne.s32.totalorder %s773, %s787
    %p789 = scmp.eq.s32.totalorder %s91, 0
    %p790 = por %p788, %p789
    %s792 = sadd.s32 %s791, 1
    %p795 = scmp.eq.s32.totalorder %s85, 1
    %p796 = scmp.ne.s32.totalorder %s791, %s793
    %p797 = scmp.eq.s32.totalorder %s85, 0
    %p798 = por %p796, %p797
    %p799 = scmp.ne.s32.totalorder %s791, %s793
    %p800 = scmp.eq.s32.totalorder %s90, 1
    %p801 = por %p799, %p800
    %p802 = scmp.ne.s32.totalorder %s793, %s794
    %p803 = scmp.eq.s32.totalorder %s90, 0
    %p804 = por %p802, %p803
    %p805 = scmp.ne.s32.totalorder %s793, %s794
    %p806 = scmp.eq.s32.totalorder %s91, 1
    %p807 = por %p805, %p806
    %p809 = scmp.ne.s32.totalorder %s794, %s808
    %p810 = scmp.eq.s32.totalorder %s91, 0
    %p811 = por %p809, %p810
    %s813 = sadd.s32 %s812, 1
    %p816 = scmp.eq.s32.totalorder %s85, 1
    %p817 = scmp.ne.s32.totalorder %s812, %s814
    %p818 = scmp.eq.s32.totalorder %s85, 0
    %p819 = por %p817, %p818
    %p820 = scmp.ne.s32.totalorder %s812, %s814
    %p821 = scmp.eq.s32.totalorder %s90, 1
    %p822 = por %p820, %p821
    %p823 = scmp.ne.s32.totalorder %s814, %s815
    %p824 = scmp.eq.s32.totalorder %s90, 0
    %p825 = por %p823, %p824
    %p826 = scmp.ne.s32.totalorder %s814, %s815
    %p827 = scmp.eq.s32.totalorder %s91, 1
    %p828 = por %p826, %p827
    %p830 = scmp.ne.s32.totalorder %s815, %s829
    %p831 = scmp.eq.s32.totalorder %s91, 0
    %p832 = por %p830, %p831
    %s834 = sadd.s32 %s833, 1
    %p837 = scmp.eq.s32.totalorder %s85, 1
    %p838 = scmp.ne.s32.totalorder %s833, %s835
    %p839 = scmp.eq.s32.totalorder %s85, 0
    %p840 = por %p838, %p839
    %p841 = scmp.ne.s32.totalorder %s833, %s835
    %p842 = scmp.eq.s32.totalorder %s90, 1
    %p843 = por %p841, %p842
    %p844 = scmp.ne.s32.totalorder %s835, %s836
    %p845 = scmp.eq.s32.totalorder %s90, 0
    %p846 = por %p844, %p845
    %p847 = scmp.ne.s32.totalorder %s835, %s836
    %p848 = scmp.eq.s32.totalorder %s91, 1
    %p849 = por %p847, %p848
    %p851 = scmp.ne.s32.totalorder %s836, %s850
    %p852 = scmp.eq.s32.totalorder %s91, 0
    %p853 = por %p851, %p852
    %s855 = sadd.s32 %s854, 1
    %p858 = scmp.eq.s32.totalorder %s85, 1
    %p859 = scmp.ne.s32.totalorder %s854, %s856
    %p860 = scmp.eq.s32.totalorder %s85, 0
    %p861 = por %p859, %p860
    %p862 = scmp.ne.s32.totalorder %s854, %s856
    %p863 = scmp.eq.s32.totalorder %s90, 1
    %p864 = por %p862, %p863
    %p865 = scmp.ne.s32.totalorder %s856, %s857
    %p866 = scmp.eq.s32.totalorder %s90, 0
    %p867 = por %p865, %p866
    %p868 = scmp.ne.s32.totalorder %s856, %s857
    %p869 = scmp.eq.s32.totalorder %s91, 1
    %p870 = por %p868, %p869
    %p872 = scmp.ne.s32.totalorder %s857, %s871
    %p873 = scmp.eq.s32.totalorder %s91, 0
    %p874 = por %p872, %p873
    %s876 = sadd.s32 %s875, 1
    %p879 = scmp.eq.s32.totalorder %s85, 1
    %p880 = scmp.ne.s32.totalorder %s875, %s877
    %p881 = scmp.eq.s32.totalorder %s85, 0
    %p882 = por %p880, %p881
    %p883 = scmp.ne.s32.totalorder %s875, %s877
    %p884 = scmp.eq.s32.totalorder %s90, 1
    %p885 = por %p883, %p884
    %p886 = scmp.ne.s32.totalorder %s877, %s878
    %p887 = scmp.eq.s32.totalorder %s90, 0
    %p888 = por %p886, %p887
    %p889 = scmp.ne.s32.totalorder %s877, %s878
    %p890 = scmp.eq.s32.totalorder %s91, 1
    %p891 = por %p889, %p890
    %p893 = scmp.ne.s32.totalorder %s878, %s892
    %p894 = scmp.eq.s32.totalorder %s91, 0
    %p895 = por %p893, %p894
    %s897 = sadd.s32 %s896, 1
    %p900 = scmp.eq.s32.totalorder %s85, 1
    %p901 = scmp.ne.s32.totalorder %s896, %s898
    %p902 = scmp.eq.s32.totalorder %s85, 0
    %p903 = por %p901, %p902
    %p904 = scmp.ne.s32.totalorder %s896, %s898
    %p905 = scmp.eq.s32.totalorder %s90, 1
    %p906 = por %p904, %p905
    %p907 = scmp.ne.s32.totalorder %s898, %s899
    %p908 = scmp.eq.s32.totalorder %s90, 0
    %p909 = por %p907, %p908
    %p910 = scmp.ne.s32.totalorder %s898, %s899
    %p911 = scmp.eq.s32.totalorder %s91, 1
    %p912 = por %p910, %p911
    %p914 = scmp.ne.s32.totalorder %s899, %s913
    %p915 = scmp.eq.s32.totalorder %s91, 0
    %p916 = por %p914, %p915
    %s917 = ssub.s32 %s85, %s92
    %p918 = scmp.eq.s32.totalorder %s917, 0
    %s920 = sadd.s32 %s919, 1
    %s921 = scalar_select %p918, %s919, %s920
    %p924 = pneg %p918
    %p925 = scmp.eq.s32.totalorder %s85, 1
    %p926 = por %p924, %p925
    %p927 = scmp.ne.s32.totalorder %s919, %s922
    %p928 = scmp.eq.s32.totalorder %s85, 0
    %p929 = por %p927, %p928
    %p930 = scmp.ne.s32.totalorder %s919, %s922
    %p931 = scmp.eq.s32.totalorder %s90, 1
    %p932 = por %p930, %p931
    %p933 = scmp.ne.s32.totalorder %s922, %s923
    %p934 = scmp.eq.s32.totalorder %s90, 0
    %p935 = por %p933, %p934
    %p936 = scmp.ne.s32.totalorder %s922, %s923
    %p937 = scmp.eq.s32.totalorder %s91, 1
    %p938 = por %p936, %p937
    %p940 = scmp.ne.s32.totalorder %s923, %s939
    %p941 = scmp.eq.s32.totalorder %s91, 0
    %p942 = por %p940, %p941
    %p943 = scmp.le.s32.totalorder 1, %s85
    %p944 = scmp.lt.s32.totalorder %s85, 3
    %p945 = pnand %p943, %p944
    %p946 = pneg %p945
    // Predicated region
    $region9: #{_lambda_.1} parent=5 // pred_check
      _
    $region10: #{_lambda_.1} parent=5 // pred_check_branch
      %948 = sbr.rel (%p945) target = $region12
    $region11: #{_lambda_.1} parent=5 // pred_region
      %s949 = ssub.s32 %s85, 1
      // Predicated region
      $region13: #{_lambda_.1} parent=11 // pred_check
        %p950 = pneg %p132
      $region14: #{_lambda_.1} parent=11 // pred_check_branch
        %952 = sbr.rel (%p950) target = $region16
      $region15: #{_lambda_.1} parent=11 // pred_region
        _
      $region16: #{_lambda_.1} parent=11 // pred_fallthru
        _
      // Predicated region
      $region17: #{_lambda_.1} parent=11 // pred_check
        %p953 = pneg %p153
      $region18: #{_lambda_.1} parent=11 // pred_check_branch
        %955 = sbr.rel (%p953) target = $region20
      $region19: #{_lambda_.1} parent=11 // pred_region
        _
      $region20: #{_lambda_.1} parent=11 // pred_fallthru
        _
      // Predicated region
      $region21: #{_lambda_.1} parent=11 // pred_check
        %p956 = pneg %p174
      $region22: #{_lambda_.1} parent=11 // pred_check_branch
        %958 = sbr.rel (%p956) target = $region24
      $region23: #{_lambda_.1} parent=11 // pred_region
        _
      $region24: #{_lambda_.1} parent=11 // pred_fallthru
        _
      // Predicated region
      $region25: #{_lambda_.1} parent=11 // pred_check
        %p959 = pneg %p195
      $region26: #{_lambda_.1} parent=11 // pred_check_branch
        %961 = sbr.rel (%p959) target = $region28
      $region27: #{_lambda_.1} parent=11 // pred_region
        _
      $region28: #{_lambda_.1} parent=11 // pred_fallthru
        _
      // Predicated region
      $region29: #{_lambda_.1} parent=11 // pred_check
        %p962 = pneg %p216
      $region30: #{_lambda_.1} parent=11 // pred_check_branch
        %964 = sbr.rel (%p962) target = $region32
      $region31: #{_lambda_.1} parent=11 // pred_region
        _
      $region32: #{_lambda_.1} parent=11 // pred_fallthru
        _
      // Predicated region
      $region33: #{_lambda_.1} parent=11 // pred_check
        %p965 = pneg %p237
      $region34: #{_lambda_.1} parent=11 // pred_check_branch
        %967 = sbr.rel (%p965) target = $region36
      $region35: #{_lambda_.1} parent=11 // pred_region
        _
      $region36: #{_lambda_.1} parent=11 // pred_fallthru
        _
      // Predicated region
      $region37: #{_lambda_.1} parent=11 // pred_check
        %p968 = pneg %p258
      $region38: #{_lambda_.1} parent=11 // pred_check_branch
        %970 = sbr.rel (%p968) target = $region40
      $region39: #{_lambda_.1} parent=11 // pred_region
        _
      $region40: #{_lambda_.1} parent=11 // pred_fallthru
        _
      // Predicated region
      $region41: #{_lambda_.1} parent=11 // pred_check
        %p971 = pneg %p279
      $region42: #{_lambda_.1} parent=11 // pred_check_branch
        %973 = sbr.rel (%p971) target = $region44
      $region43: #{_lambda_.1} parent=11 // pred_region
        _
      $region44: #{_lambda_.1} parent=11 // pred_fallthru
        _
      // Predicated region
      $region45: #{_lambda_.1} parent=11 // pred_check
        %p974 = pneg %p300
      $region46: #{_lambda_.1} parent=11 // pred_check_branch
        %976 = sbr.rel (%p974) target = $region48
      $region47: #{_lambda_.1} parent=11 // pred_region
        _
      $region48: #{_lambda_.1} parent=11 // pred_fallthru
        _
      // Predicated region
      $region49: #{_lambda_.1} parent=11 // pred_check
        %p977 = pneg %p321
      $region50: #{_lambda_.1} parent=11 // pred_check_branch
        %979 = sbr.rel (%p977) target = $region52
      $region51: #{_lambda_.1} parent=11 // pred_region
        _
      $region52: #{_lambda_.1} parent=11 // pred_fallthru
        _
      // Predicated region
      $region53: #{_lambda_.1} parent=11 // pred_check
        %p980 = pneg %p342
      $region54: #{_lambda_.1} parent=11 // pred_check_branch
        %982 = sbr.rel (%p980) target = $region56
      $region55: #{_lambda_.1} parent=11 // pred_region
        _
      $region56: #{_lambda_.1} parent=11 // pred_fallthru
        _
      // Predicated region
      $region57: #{_lambda_.1} parent=11 // pred_check
        %p983 = pneg %p363
      $region58: #{_lambda_.1} parent=11 // pred_check_branch
        %985 = sbr.rel (%p983) target = $region60
      $region59: #{_lambda_.1} parent=11 // pred_region
        _
      $region60: #{_lambda_.1} parent=11 // pred_fallthru
        _
      // Predicated region
      $region61: #{_lambda_.1} parent=11 // pred_check
        %p986 = pneg %p384
      $region62: #{_lambda_.1} parent=11 // pred_check_branch
        %988 = sbr.rel (%p986) target = $region64
      $region63: #{_lambda_.1} parent=11 // pred_region
        _
      $region64: #{_lambda_.1} parent=11 // pred_fallthru
        _
      // Predicated region
      $region65: #{_lambda_.1} parent=11 // pred_check
        %p989 = pneg %p405
      $region66: #{_lambda_.1} parent=11 // pred_check_branch
        %991 = sbr.rel (%p989) target = $region68
      $region67: #{_lambda_.1} parent=11 // pred_region
        _
      $region68: #{_lambda_.1} parent=11 // pred_fallthru
        _
      // Predicated region
      $region69: #{_lambda_.1} parent=11 // pred_check
        %p992 = pneg %p426
      $region70: #{_lambda_.1} parent=11 // pred_check_branch
        %994 = sbr.rel (%p992) target = $region72
      $region71: #{_lambda_.1} parent=11 // pred_region
        _
      $region72: #{_lambda_.1} parent=11 // pred_fallthru
        _
      // Predicated region
      $region73: #{_lambda_.1} parent=11 // pred_check
        %p995 = pneg %p447
      $region74: #{_lambda_.1} parent=11 // pred_check_branch
        %997 = sbr.rel (%p995) target = $region76
      $region75: #{_lambda_.1} parent=11 // pred_region
        _
      $region76: #{_lambda_.1} parent=11 // pred_fallthru
        _
      // Predicated region
      $region77: #{_lambda_.1} parent=11 // pred_check
        %p998 = pneg %p468
      $region78: #{_lambda_.1} parent=11 // pred_check_branch
        %1000 = sbr.rel (%p998) target = $region80
      $region79: #{_lambda_.1} parent=11 // pred_region
        _
      $region80: #{_lambda_.1} parent=11 // pred_fallthru
        _
      // Predicated region
      $region81: #{_lambda_.1} parent=11 // pred_check
        %p1001 = pneg %p489
      $region82: #{_lambda_.1} parent=11 // pred_check_branch
        %1003 = sbr.rel (%p1001) target = $region84
      $region83: #{_lambda_.1} parent=11 // pred_region
        _
      $region84: #{_lambda_.1} parent=11 // pred_fallthru
        _
      // Predicated region
      $region85: #{_lambda_.1} parent=11 // pred_check
        %p1004 = pneg %p510
      $region86: #{_lambda_.1} parent=11 // pred_check_branch
        %1006 = sbr.rel (%p1004) target = $region88
      $region87: #{_lambda_.1} parent=11 // pred_region
        _
      $region88: #{_lambda_.1} parent=11 // pred_fallthru
        _
      // Predicated region
      $region89: #{_lambda_.1} parent=11 // pred_check
        %p1007 = pneg %p531
      $region90: #{_lambda_.1} parent=11 // pred_check_branch
        %1009 = sbr.rel (%p1007) target = $region92
      $region91: #{_lambda_.1} parent=11 // pred_region
        _
      $region92: #{_lambda_.1} parent=11 // pred_fallthru
        _
      // Predicated region
      $region93: #{_lambda_.1} parent=11 // pred_check
        %p1010 = pneg %p552
      $region94: #{_lambda_.1} parent=11 // pred_check_branch
        %1012 = sbr.rel (%p1010) target = $region96
      $region95: #{_lambda_.1} parent=11 // pred_region
        _
      $region96: #{_lambda_.1} parent=11 // pred_fallthru
        _
      // Predicated region
      $region97: #{_lambda_.1} parent=11 // pred_check
        %p1013 = pneg %p573
      $region98: #{_lambda_.1} parent=11 // pred_check_branch
        %1015 = sbr.rel (%p1013) target = $region100
      $region99: #{_lambda_.1} parent=11 // pred_region
        _
      $region100: #{_lambda_.1} parent=11 // pred_fallthru
        _
      // Predicated region
      $region101: #{_lambda_.1} parent=11 // pred_check
        %p1016 = pneg %p594
      $region102: #{_lambda_.1} parent=11 // pred_check_branch
        %1018 = sbr.rel (%p1016) target = $region104
      $region103: #{_lambda_.1} parent=11 // pred_region
        _
      $region104: #{_lambda_.1} parent=11 // pred_fallthru
        _
      // Predicated region
      $region105: #{_lambda_.1} parent=11 // pred_check
        %p1019 = pneg %p615
      $region106: #{_lambda_.1} parent=11 // pred_check_branch
        %1021 = sbr.rel (%p1019) target = $region108
      $region107: #{_lambda_.1} parent=11 // pred_region
        _
      $region108: #{_lambda_.1} parent=11 // pred_fallthru
        _
      // Predicated region
      $region109: #{_lambda_.1} parent=11 // pred_check
        %p1022 = pneg %p636
      $region110: #{_lambda_.1} parent=11 // pred_check_branch
        %1024 = sbr.rel (%p1022) target = $region112
      $region111: #{_lambda_.1} parent=11 // pred_region
        _
      $region112: #{_lambda_.1} parent=11 // pred_fallthru
        _
      // Predicated region
      $region113: #{_lambda_.1} parent=11 // pred_check
        %p1025 = pneg %p657
      $region114: #{_lambda_.1} parent=11 // pred_check_branch
        %1027 = sbr.rel (%p1025) target = $region116
      $region115: #{_lambda_.1} parent=11 // pred_region
        _
      $region116: #{_lambda_.1} parent=11 // pred_fallthru
        _
      // Predicated region
      $region117: #{_lambda_.1} parent=11 // pred_check
        %p1028 = pneg %p678
      $region118: #{_lambda_.1} parent=11 // pred_check_branch
        %1030 = sbr.rel (%p1028) target = $region120
      $region119: #{_lambda_.1} parent=11 // pred_region
        _
      $region120: #{_lambda_.1} parent=11 // pred_fallthru
        _
      // Predicated region
      $region121: #{_lambda_.1} parent=11 // pred_check
        %p1031 = pneg %p699
      $region122: #{_lambda_.1} parent=11 // pred_check_branch
        %1033 = sbr.rel (%p1031) target = $region124
      $region123: #{_lambda_.1} parent=11 // pred_region
        _
      $region124: #{_lambda_.1} parent=11 // pred_fallthru
        _
      // Predicated region
      $region125: #{_lambda_.1} parent=11 // pred_check
        %p1034 = pneg %p720
      $region126: #{_lambda_.1} parent=11 // pred_check_branch
        %1036 = sbr.rel (%p1034) target = $region128
      $region127: #{_lambda_.1} parent=11 // pred_region
        _
      $region128: #{_lambda_.1} parent=11 // pred_fallthru
        _
      // Predicated region
      $region129: #{_lambda_.1} parent=11 // pred_check
        %p1037 = pneg %p741
      $region130: #{_lambda_.1} parent=11 // pred_check_branch
        %1039 = sbr.rel (%p1037) target = $region132
      $region131: #{_lambda_.1} parent=11 // pred_region
        _
      $region132: #{_lambda_.1} parent=11 // pred_fallthru
        _
      // Predicated region
      $region133: #{_lambda_.1} parent=11 // pred_check
        %p1040 = pneg %p762
      $region134: #{_lambda_.1} parent=11 // pred_check_branch
        %1042 = sbr.rel (%p1040) target = $region136
      $region135: #{_lambda_.1} parent=11 // pred_region
        _
      $region136: #{_lambda_.1} parent=11 // pred_fallthru
        _
      // Predicated region
      $region137: #{_lambda_.1} parent=11 // pred_check
        %p1043 = pneg %p783
      $region138: #{_lambda_.1} parent=11 // pred_check_branch
        %1045 = sbr.rel (%p1043) target = $region140
      $region139: #{_lambda_.1} parent=11 // pred_region
        _
      $region140: #{_lambda_.1} parent=11 // pred_fallthru
        _
      // Predicated region
      $region141: #{_lambda_.1} parent=11 // pred_check
        %p1046 = pneg %p804
      $region142: #{_lambda_.1} parent=11 // pred_check_branch
        %1048 = sbr.rel (%p1046) target = $region144
      $region143: #{_lambda_.1} parent=11 // pred_region
        _
      $region144: #{_lambda_.1} parent=11 // pred_fallthru
        _
      // Predicated region
      $region145: #{_lambda_.1} parent=11 // pred_check
        %p1049 = pneg %p825
      $region146: #{_lambda_.1} parent=11 // pred_check_branch
        %1051 = sbr.rel (%p1049) target = $region148
      $region147: #{_lambda_.1} parent=11 // pred_region
        _
      $region148: #{_lambda_.1} parent=11 // pred_fallthru
        _
      // Predicated region
      $region149: #{_lambda_.1} parent=11 // pred_check
        %p1052 = pneg %p846
      $region150: #{_lambda_.1} parent=11 // pred_check_branch
        %1054 = sbr.rel (%p1052) target = $region152
      $region151: #{_lambda_.1} parent=11 // pred_region
        _
      $region152: #{_lambda_.1} parent=11 // pred_fallthru
        _
      // Predicated region
      $region153: #{_lambda_.1} parent=11 // pred_check
        %p1055 = pneg %p867
      $region154: #{_lambda_.1} parent=11 // pred_check_branch
        %1057 = sbr.rel (%p1055) target = $region156
      $region155: #{_lambda_.1} parent=11 // pred_region
        _
      $region156: #{_lambda_.1} parent=11 // pred_fallthru
        _
      // Predicated region
      $region157: #{_lambda_.1} parent=11 // pred_check
        %p1058 = pneg %p888
      $region158: #{_lambda_.1} parent=11 // pred_check_branch
        %1060 = sbr.rel (%p1058) target = $region160
      $region159: #{_lambda_.1} parent=11 // pred_region
        _
      $region160: #{_lambda_.1} parent=11 // pred_fallthru
        _
      // Predicated region
      $region161: #{_lambda_.1} parent=11 // pred_check
        %p1061 = pneg %p909
      $region162: #{_lambda_.1} parent=11 // pred_check_branch
        %1063 = sbr.rel (%p1061) target = $region164
      $region163: #{_lambda_.1} parent=11 // pred_region
        _
      $region164: #{_lambda_.1} parent=11 // pred_fallthru
        _
    $region12: #{_lambda_.1} parent=5 // pred_fallthru
      _
    %p1064 = scmp.lt.s32.totalorder %s85, 2
    // Predicated region
    $region165: #{_lambda_.1} parent=5 // pred_check
      %p1065 = pneg %p1064
    $region166: #{_lambda_.1} parent=5 // pred_check_branch
      %1067 = sbr.rel (%p1065) target = $region168
    $region167: #{_lambda_.1} parent=5 // pred_region
      // Predicated region
      $region169: #{_lambda_.1} parent=167 // pred_check
        %p1068 = pneg %p105
      $region170: #{_lambda_.1} parent=167 // pred_check_branch
        %1070 = sbr.rel (%p1068) target = $region172
      $region171: #{_lambda_.1} parent=167 // pred_region
        %p1071 = scmp.lt.s32.totalorder %s85, 1
        %s1072 = scalar_select %p1071, %s85, 1
        %s1073 = scalar_lea.vmem %s1, %s1072
      $region172: #{_lambda_.1} parent=167 // pred_fallthru
        _
    $region168: #{_lambda_.1} parent=5 // pred_fallthru
      _
    %p1074 = scmp.le.s32.totalorder 1, %s85
    %p1075 = scmp.lt.s32.totalorder %s85, 3
    %p1076 = pnand %p1074, %p1075
    %p1077 = pneg %p1076
    // Predicated region
    $region173: #{_lambda_.1} parent=5 // pred_check
      _
    $region174: #{_lambda_.1} parent=5 // pred_check_branch
      %1079 = sbr.rel (%p1076) target = $region176
    $region175: #{_lambda_.1} parent=5 // pred_region
      %s1080 = ssub.s32 %s85, 1
      %p1081 = scmp.lt.s32.totalorder %s90, 1
      %s1082 = scalar_select %p1081, %s90, 1
      %s1083 = scalar_lea.vmem %s1, %s1082
      %p1084 = pneg %p111
      %p1085 = pneg %p108
      %p1086 = pneg %p132
      %p1087 = pneg %p129
      %p1088 = pneg %p153
      %p1089 = pneg %p150
      %p1090 = pneg %p174
      %p1091 = pneg %p171
      %p1092 = pneg %p195
      %p1093 = pneg %p192
      %p1094 = pneg %p216
      %p1095 = pneg %p213
      %p1096 = pneg %p237
      %p1097 = pneg %p234
      %p1098 = pneg %p258
      %p1099 = pneg %p255
      %p1100 = pneg %p279
      %p1101 = pneg %p276
      %p1102 = pneg %p300
      %p1103 = pneg %p297
      %p1104 = pneg %p321
      %p1105 = pneg %p318
      %p1106 = pneg %p342
      %p1107 = pneg %p339
      %p1108 = pneg %p363
      %p1109 = pneg %p360
      %p1110 = pneg %p384
      %p1111 = pneg %p381
      %p1112 = pneg %p405
      %p1113 = pneg %p402
      %p1114 = pneg %p426
      %p1115 = pneg %p423
      %p1116 = pneg %p447
      %p1117 = pneg %p444
      %p1118 = pneg %p468
      %p1119 = pneg %p465
      %p1120 = pneg %p489
      %p1121 = pneg %p486
      %p1122 = pneg %p510
      %p1123 = pneg %p507
      %p1124 = pneg %p531
      %p1125 = pneg %p528
      %p1126 = pneg %p552
      %p1127 = pneg %p549
      %p1128 = pneg %p573
      %p1129 = pneg %p570
      %p1130 = pneg %p594
      %p1131 = pneg %p591
      %p1132 = pneg %p615
      %p1133 = pneg %p612
      %p1134 = pneg %p636
      %p1135 = pneg %p633
      %p1136 = pneg %p657
      %p1137 = pneg %p654
      %p1138 = pneg %p678
      %p1139 = pneg %p675
      %p1140 = pneg %p699
      %p1141 = pneg %p696
      %p1142 = pneg %p720
      %p1143 = pneg %p717
      %p1144 = pneg %p741
      %p1145 = pneg %p738
      %p1146 = pneg %p762
      %p1147 = pneg %p759
      %p1148 = pneg %p783
      %p1149 = pneg %p780
      %p1150 = pneg %p804
      %p1151 = pneg %p801
      %p1152 = pneg %p825
      %p1153 = pneg %p822
      %p1154 = pneg %p846
      %p1155 = pneg %p843
      %p1156 = pneg %p867
      %p1157 = pneg %p864
      %p1158 = pneg %p888
      %p1159 = pneg %p885
      %p1160 = pneg %p909
      %p1161 = pneg %p906
      %p1162 = pneg %p935
      %p1163 = pneg %p932
      %p1164 = scmp.lt.s32.totalorder %s90, 1
      %s1165 = scalar_select %p1164, %s90, 1
      %s1166 = smul.addr %s1165, 16
      %s1167 = smul.addr %s1166, 8
      %s1168 = scalar_lea.vmem %s79, %s1167
      %p1169 = scmp.lt.s32.totalorder %s90, 1
      %s1170 = scalar_select %p1169, %s90, 1
      %s1171 = scalar_lea.vmem %s1, %s1170
      %p1172 = scmp.lt.s32.totalorder %s90, 1
      %s1173 = scalar_select %p1172, %s90, 1
      %s1174 = smul.addr %s1173, 16
      %s1175 = smul.addr %s1174, 8
      %s1176 = scalar_lea.vmem %s79, %s1175
      %v1177 = vld [vmem:[%s1171] sm:$0x1]
      %v1178 = vlaneseq
      %v1179 = vshrl.u32 %v1178, 7
      %vm1180 = vcmp.eq.s32.totalorder %v1179, 0
      %v1182 = vlaneseq
      %v1183 = vshrl.u32 %v1182, 7
      %v1184 = vsub.s32 0, %v1183
      %v1185 = vrot.slane %v1177, %v1184
      %v1187 = vsel %vm1180, %v1185, 0.0
      %v1188 = vadd.s32 %v1179, 8
      %v1189 = vadd.s32 %v1179, 16
      %v1190 = vadd.s32 %v1179, 24
      %v1191 = vadd.s32 %v1179, 32
      %v1192 = vadd.s32 %v1179, 40
      %v1193 = vadd.s32 %v1179, 48
      %v1194 = vadd.s32 %v1179, 56
      %v1195 = vadd.s32 %v1179, 64
      %v1196 = vadd.s32 %v1179, 72
      %v1197 = vadd.s32 %v1179, 80
      %v1198 = vadd.s32 %v1179, 88
      %v1199 = vadd.s32 %v1179, 96
      %v1200 = vadd.s32 %v1179, 104
      %v1201 = vadd.s32 %v1179, 112
      %v1202 = vadd.s32 %v1179, 120
      %v1203 = vlaneseq
      %v1204 = vand.u32 %v1203, 127
      %v1205 = vadd.s32 %v1204, 4294967295
      %vm1206 = vcmp.eq.s32.totalorder %v1179, %v1205
      %vm1207 = vcmp.eq.s32.totalorder %v1188, %v1205
      %vm1208 = vcmp.eq.s32.totalorder %v1189, %v1205
      %vm1209 = vcmp.eq.s32.totalorder %v1190, %v1205
      %vm1210 = vcmp.eq.s32.totalorder %v1191, %v1205
      %vm1211 = vcmp.eq.s32.totalorder %v1192, %v1205
      %vm1212 = vcmp.eq.s32.totalorder %v1193, %v1205
      %vm1213 = vcmp.eq.s32.totalorder %v1194, %v1205
      %vm1214 = vcmp.eq.s32.totalorder %v1195, %v1205
      %vm1215 = vcmp.eq.s32.totalorder %v1196, %v1205
      %vm1216 = vcmp.eq.s32.totalorder %v1197, %v1205
      %vm1217 = vcmp.eq.s32.totalorder %v1198, %v1205
      %vm1218 = vcmp.eq.s32.totalorder %v1199, %v1205
      %vm1219 = vcmp.eq.s32.totalorder %v1200, %v1205
      %vm1220 = vcmp.eq.s32.totalorder %v1201, %v1205
      %vm1221 = vcmp.eq.s32.totalorder %v1202, %v1205
      %v1222 = vsel %vm1206, 1, 0
      %v1223 = vsel %vm1207, 1, 0
      %v1224 = vsel %vm1208, 1, 0
      %v1225 = vsel %vm1209, 1, 0
      %v1226 = vsel %vm1210, 1, 0
      %v1227 = vsel %vm1211, 1, 0
      %v1228 = vsel %vm1212, 1, 0
      %v1229 = vsel %vm1213, 1, 0
      %v1230 = vsel %vm1214, 1, 0
      %v1231 = vsel %vm1215, 1, 0
      %v1232 = vsel %vm1216, 1, 0
      %v1233 = vsel %vm1217, 1, 0
      %v1234 = vsel %vm1218, 1, 0
      %v1235 = vsel %vm1219, 1, 0
      %v1236 = vsel %vm1220, 1, 0
      %v1237 = vsel %vm1221, 1, 0
      %v1238 = vcvt.s32.f32 %v1222
      %v1239 = vcvt.s32.f32 %v1223
      %v1240 = vcvt.s32.f32 %v1224
      %v1241 = vcvt.s32.f32 %v1225
      %v1242 = vcvt.s32.f32 %v1226
      %v1243 = vcvt.s32.f32 %v1227
      %v1244 = vcvt.s32.f32 %v1228
      %v1245 = vcvt.s32.f32 %v1229
      %v1246 = vcvt.s32.f32 %v1230
      %v1247 = vcvt.s32.f32 %v1231
      %v1248 = vcvt.s32.f32 %v1232
      %v1249 = vcvt.s32.f32 %v1233
      %v1250 = vcvt.s32.f32 %v1234
      %v1251 = vcvt.s32.f32 %v1235
      %v1252 = vcvt.s32.f32 %v1236
      %v1253 = vcvt.s32.f32 %v1237
      %1254 = vmatprep.subr.mxu0 0.0
      %1255 = vmatpush1.msra.mxu0 %v1238
      %1256 = vmatprep.subr.mxu0 0.0
      %1257 = vmatpush1.msra.mxu0 %v1239
      %1258 = vmatprep.subr.mxu0 0.0
      %1259 = vmatpush1.msra.mxu0 %v1240
      %1260 = vmatprep.subr.mxu0 0.0
      %1261 = vmatpush1.msra.mxu0 %v1241
      %1262 = vmatprep.subr.mxu0 0.0
      %1263 = vmatpush1.msra.mxu0 %v1242
      %1264 = vmatprep.subr.mxu0 0.0
      %1265 = vmatpush1.msra.mxu0 %v1243
      %1266 = vmatprep.subr.mxu0 0.0
      %1267 = vmatpush1.msra.mxu0 %v1244
      %1268 = vmatprep.subr.mxu0 0.0
      %1269 = vmatpush1.msra.mxu0 %v1245
      %1270 = vmatprep.subr.mxu0 0.0
      %1271 = vmatpush1.msra.mxu0 %v1246
      %1272 = vmatprep.subr.mxu0 0.0
      %1273 = vmatpush1.msra.mxu0 %v1247
      %1274 = vmatprep.subr.mxu0 0.0
      %1275 = vmatpush1.msra.mxu0 %v1248
      %1276 = vmatprep.subr.mxu0 0.0
      %1277 = vmatpush1.msra.mxu0 %v1249
      %1278 = vmatprep.subr.mxu0 0.0
      %1279 = vmatpush1.msra.mxu0 %v1250
      %1280 = vmatprep.subr.mxu0 0.0
      %1281 = vmatpush1.msra.mxu0 %v1251
      %1282 = vmatprep.subr.mxu0 0.0
      %1283 = vmatpush1.msra.mxu0 %v1252
      %1284 = vmatprep.subr.mxu0 0.0
      %1285 = vmatpush1.msra.mxu0 %v1253
      %1286 = vmatprep.subr.mxu0 0.0
      %1287 = vmatpush1.msra.mxu0 0.0
      %1288 = vmatprep.subr.mxu0 0.0
      %1289 = vmatpush1.msra.mxu0 0.0
      %1290 = vmatprep.subr.mxu0 0.0
      %1291 = vmatpush1.msra.mxu0 0.0
      %1292 = vmatprep.subr.mxu0 0.0
      %1293 = vmatpush1.msra.mxu0 0.0
      %1294 = vmatprep.subr.mxu0 0.0
      %1295 = vmatpush1.msra.mxu0 0.0
      %1296 = vmatprep.subr.mxu0 0.0
      %1297 = vmatpush1.msra.mxu0 0.0
      %1298 = vmatprep.subr.mxu0 0.0
      %1299 = vmatpush1.msra.mxu0 0.0
      %1300 = vmatprep.subr.mxu0 0.0
      %1301 = vmatpush1.msra.mxu0 0.0
      %1302 = vmatprep.subr.mxu0 0.0
      %1303 = vmatpush1.msra.mxu0 0.0
      %1304 = vmatprep.subr.mxu0 0.0
      %1305 = vmatpush1.msra.mxu0 0.0
      %1306 = vmatprep.subr.mxu0 0.0
      %1307 = vmatpush1.msra.mxu0 0.0
      %1308 = vmatprep.subr.mxu0 0.0
      %1309 = vmatpush1.msra.mxu0 0.0
      %1310 = vmatprep.subr.mxu0 0.0
      %1311 = vmatpush1.msra.mxu0 0.0
      %1312 = vmatprep.subr.mxu0 0.0
      %1313 = vmatpush1.msra.mxu0 0.0
      %1314 = vmatprep.subr.mxu0 0.0
      %1315 = vmatpush1.msra.mxu0 0.0
      %1316 = vmatprep.subr.mxu0 0.0
      %1317 = vmatpush1.msra.mxu0 0.0
      %1318 = vmatprep.mubr.f32.mxu0 0.0
      %1319 = vmatmul.mubr.f32.gmra.mrb[0].mxu0 %v1187
      %v1320 = vpop.f32.mrb[0].mxu0
      %v1321 = vadd.f32 0.0, %v1320
      %v1322 = vpop.f32.mrb[0].mxu0
      %1323 = vdwg.mxu0
      %v1324 = vld [vmem:[%s3] sm:$0xff]
      %vm1325 = vcmp.eq.s32.totalorder %v1179, %v1204
      %vm1326 = vcmp.eq.s32.totalorder %v1188, %v1204
      %vm1327 = vcmp.eq.s32.totalorder %v1189, %v1204
      %vm1328 = vcmp.eq.s32.totalorder %v1190, %v1204
      %vm1329 = vcmp.eq.s32.totalorder %v1191, %v1204
      %vm1330 = vcmp.eq.s32.totalorder %v1192, %v1204
      %vm1331 = vcmp.eq.s32.totalorder %v1193, %v1204
      %vm1332 = vcmp.eq.s32.totalorder %v1194, %v1204
      %vm1333 = vcmp.eq.s32.totalorder %v1195, %v1204
      %vm1334 = vcmp.eq.s32.totalorder %v1196, %v1204
      %vm1335 = vcmp.eq.s32.totalorder %v1197, %v1204
      %vm1336 = vcmp.eq.s32.totalorder %v1198, %v1204
      %vm1337 = vcmp.eq.s32.totalorder %v1199, %v1204
      %vm1338 = vcmp.eq.s32.totalorder %v1200, %v1204
      %vm1339 = vcmp.eq.s32.totalorder %v1201, %v1204
      %vm1340 = vcmp.eq.s32.totalorder %v1202, %v1204
      %v1341 = vsel %vm1325, 1, 0
      %v1342 = vsel %vm1326, 1, 0
      %v1343 = vsel %vm1327, 1, 0
      %v1344 = vsel %vm1328, 1, 0
      %v1345 = vsel %vm1329, 1, 0
      %v1346 = vsel %vm1330, 1, 0
      %v1347 = vsel %vm1331, 1, 0
      %v1348 = vsel %vm1332, 1, 0
      %v1349 = vsel %vm1333, 1, 0
      %v1350 = vsel %vm1334, 1, 0
      %v1351 = vsel %vm1335, 1, 0
      %v1352 = vsel %vm1336, 1, 0
      %v1353 = vsel %vm1337, 1, 0
      %v1354 = vsel %vm1338, 1, 0
      %v1355 = vsel %vm1339, 1, 0
      %v1356 = vsel %vm1340, 1, 0
      %v1357 = vcvt.s32.f32 %v1341
      %v1358 = vcvt.s32.f32 %v1342
      %v1359 = vcvt.s32.f32 %v1343
      %v1360 = vcvt.s32.f32 %v1344
      %v1361 = vcvt.s32.f32 %v1345
      %v1362 = vcvt.s32.f32 %v1346
      %v1363 = vcvt.s32.f32 %v1347
      %v1364 = vcvt.s32.f32 %v1348
      %v1365 = vcvt.s32.f32 %v1349
      %v1366 = vcvt.s32.f32 %v1350
      %v1367 = vcvt.s32.f32 %v1351
      %v1368 = vcvt.s32.f32 %v1352
      %v1369 = vcvt.s32.f32 %v1353
      %v1370 = vcvt.s32.f32 %v1354
      %v1371 = vcvt.s32.f32 %v1355
      %v1372 = vcvt.s32.f32 %v1356
      %1373 = vmatprep.subr.mxu0 0.0
      %1374 = vmatpush1.msra.mxu0 %v1357
      %1375 = vmatprep.subr.mxu0 0.0
      %1376 = vmatpush1.msra.mxu0 %v1358
      %1377 = vmatprep.subr.mxu0 0.0
      %1378 = vmatpush1.msra.mxu0 %v1359
      %1379 = vmatprep.subr.mxu0 0.0
      %1380 = vmatpush1.msra.mxu0 %v1360
      %1381 = vmatprep.subr.mxu0 0.0
      %1382 = vmatpush1.msra.mxu0 %v1361
      %1383 = vmatprep.subr.mxu0 0.0
      %1384 = vmatpush1.msra.mxu0 %v1362
      %1385 = vmatprep.subr.mxu0 0.0
      %1386 = vmatpush1.msra.mxu0 %v1363
      %1387 = vmatprep.subr.mxu0 0.0
      %1388 = vmatpush1.msra.mxu0 %v1364
      %1389 = vmatprep.subr.mxu0 0.0
      %1390 = vmatpush1.msra.mxu0 %v1365
      %1391 = vmatprep.subr.mxu0 0.0
      %1392 = vmatpush1.msra.mxu0 %v1366
      %1393 = vmatprep.subr.mxu0 0.0
      %1394 = vmatpush1.msra.mxu0 %v1367
      %1395 = vmatprep.subr.mxu0 0.0
      %1396 = vmatpush1.msra.mxu0 %v1368
      %1397 = vmatprep.subr.mxu0 0.0
      %1398 = vmatpush1.msra.mxu0 %v1369
      %1399 = vmatprep.subr.mxu0 0.0
      %1400 = vmatpush1.msra.mxu0 %v1370
      %1401 = vmatprep.subr.mxu0 0.0
      %1402 = vmatpush1.msra.mxu0 %v1371
      %1403 = vmatprep.subr.mxu0 0.0
      %1404 = vmatpush1.msra.mxu0 %v1372
      %1405 = vmatprep.subr.mxu0 0.0
      %1406 = vmatpush1.msra.mxu0 0.0
      %1407 = vmatprep.subr.mxu0 0.0
      %1408 = vmatpush1.msra.mxu0 0.0
      %1409 = vmatprep.subr.mxu0 0.0
      %1410 = vmatpush1.msra.mxu0 0.0
      %1411 = vmatprep.subr.mxu0 0.0
      %1412 = vmatpush1.msra.mxu0 0.0
      %1413 = vmatprep.subr.mxu0 0.0
      %1414 = vmatpush1.msra.mxu0 0.0
      %1415 = vmatprep.subr.mxu0 0.0
      %1416 = vmatpush1.msra.mxu0 0.0
      %1417 = vmatprep.subr.mxu0 0.0
      %1418 = vmatpush1.msra.mxu0 0.0
      %1419 = vmatprep.subr.mxu0 0.0
      %1420 = vmatpush1.msra.mxu0 0.0
      %1421 = vmatprep.subr.mxu0 0.0
      %1422 = vmatpush1.msra.mxu0 0.0
      %1423 = vmatprep.subr.mxu0 0.0
      %1424 = vmatpush1.msra.mxu0 0.0
      %1425 = vmatprep.subr.mxu0 0.0
      %1426 = vmatpush1.msra.mxu0 0.0
      %1427 = vmatprep.subr.mxu0 0.0
      %1428 = vmatpush1.msra.mxu0 0.0
      %1429 = vmatprep.subr.mxu0 0.0
      %1430 = vmatpush1.msra.mxu0 0.0
      %1431 = vmatprep.subr.mxu0 0.0
      %1432 = vmatpush1.msra.mxu0 0.0
      %1433 = vmatprep.subr.mxu0 0.0
      %1434 = vmatpush1.msra.mxu0 0.0
      %1435 = vmatprep.subr.mxu0 0.0
      %1436 = vmatpush1.msra.mxu0 0.0
      %1437 = vmatprep.mubr.f32.mxu0 0.0
      %1438 = vmatmul.mubr.f32.gmra.mrb[0].mxu0 %v1187
      %v1439 = vpop.f32.mrb[0].mxu0
      %v1440 = vadd.f32 0.0, %v1439
      %v1441 = vpop.f32.mrb[0].mxu0
      %1442 = vdwg.mxu0
      %s1443 = scalar_lea.vmem %s3, 8
      %v1444 = vld [vmem:[%s1443] sm:$0xff]
      %vm1445 = vcmask 64512
      %v1447 = vsel %vm1445, %v1444, 0
      %1449 = vmatprep.subr.mxu0 0.0
      %1450 = vmatpush1.msra.mxu0 %v1440
      %1451 = vmatprep.subr.mxu0 0.0
      %1452 = vmatpush1.msra.mxu0 0.0
      %1453 = vmatprep.subr.mxu0 0.0
      %1454 = vmatpush1.msra.mxu0 0.0
      %1455 = vmatprep.subr.mxu0 0.0
      %1456 = vmatpush1.msra.mxu0 0.0
      %1457 = vmatprep.subr.mxu0 0.0
      %1458 = vmatpush1.msra.mxu0 0.0
      %1459 = vmatprep.subr.mxu0 0.0
      %1460 = vmatpush1.msra.mxu0 0.0
      %1461 = vmatprep.subr.mxu0 0.0
      %1462 = vmatpush1.msra.mxu0 0.0
      %1463 = vmatprep.subr.mxu0 0.0
      %1464 = vmatpush1.msra.mxu0 0.0
      %1465 = vmatprep.subr.mxu0 0.0
      %1466 = vmatpush1.msra.mxu0 0.0
      %1467 = vmatprep.subr.mxu0 0.0
      %1468 = vmatpush1.msra.mxu0 0.0
      %1469 = vmatprep.subr.mxu0 0.0
      %1470 = vmatpush1.msra.mxu0 0.0
      %1471 = vmatprep.subr.mxu0 0.0
      %1472 = vmatpush1.msra.mxu0 0.0
      %1473 = vmatprep.subr.mxu0 0.0
      %1474 = vmatpush1.msra.mxu0 0.0
      %1475 = vmatprep.subr.mxu0 0.0
      %1476 = vmatpush1.msra.mxu0 0.0
      %1477 = vmatprep.subr.mxu0 0.0
      %1478 = vmatpush1.msra.mxu0 0.0
      %1479 = vmatprep.subr.mxu0 0.0
      %1480 = vmatpush1.msra.mxu0 0.0
      %1481 = vmatprep.subr.mxu0 0.0
      %1482 = vmatpush1.msra.mxu0 0.0
      %1483 = vmatprep.subr.mxu0 0.0
      %1484 = vmatpush1.msra.mxu0 0.0
      %1485 = vmatprep.subr.mxu0 0.0
      %1486 = vmatpush1.msra.mxu0 0.0
      %1487 = vmatprep.subr.mxu0 0.0
      %1488 = vmatpush1.msra.mxu0 0.0
      %1489 = vmatprep.subr.mxu0 0.0
      %1490 = vmatpush1.msra.mxu0 0.0
      %1491 = vmatprep.subr.mxu0 0.0
      %1492 = vmatpush1.msra.mxu0 0.0
      %1493 = vmatprep.subr.mxu0 0.0
      %1494 = vmatpush1.msra.mxu0 0.0
      %1495 = vmatprep.subr.mxu0 0.0
      %1496 = vmatpush1.msra.mxu0 0.0
      %1497 = vmatprep.subr.mxu0 0.0
      %1498 = vmatpush1.msra.mxu0 0.0
      %1499 = vmatprep.subr.mxu0 0.0
      %1500 = vmatpush1.msra.mxu0 0.0
      %1501 = vmatprep.subr.mxu0 0.0
      %1502 = vmatpush1.msra.mxu0 0.0
      %1503 = vmatprep.subr.mxu0 0.0
      %1504 = vmatpush1.msra.mxu0 0.0
      %1505 = vmatprep.subr.mxu0 0.0
      %1506 = vmatpush1.msra.mxu0 0.0
      %1507 = vmatprep.subr.mxu0 0.0
      %1508 = vmatpush1.msra.mxu0 0.0
      %1509 = vmatprep.subr.mxu0 0.0
      %1510 = vmatpush1.msra.mxu0 0.0
      %1511 = vmatprep.subr.mxu0 0.0
      %1512 = vmatpush1.msra.mxu0 0.0
      %1513 = vmatprep.mubr.f32.mxu0 0.0
      %1514 = vmatmul.mubr.f32.gmra.mrb[0].mxu0 %v1447
      %v1515 = vpop.f32.mrb[0].mxu0
      %v1516 = vadd.f32 0.0, %v1515
      %v1517 = vpop.f32.mrb[0].mxu0
      %1518 = vdwg.mxu0
      %v1520 = vsel %vm1445, %v1324, 0
      %1522 = vmatprep.subr.mxu0 0.0
      %1523 = vmatpush1.msra.mxu0 %v1321
      %1524 = vmatprep.subr.mxu0 0.0
      %1525 = vmatpush1.msra.mxu0 0.0
      %1526 = vmatprep.subr.mxu0 0.0
      %1527 = vmatpush1.msra.mxu0 0.0
      %1528 = vmatprep.subr.mxu0 0.0
      %1529 = vmatpush1.msra.mxu0 0.0
      %1530 = vmatprep.subr.mxu0 0.0
      %1531 = vmatpush1.msra.mxu0 0.0
      %1532 = vmatprep.subr.mxu0 0.0
      %1533 = vmatpush1.msra.mxu0 0.0
      %1534 = vmatprep.subr.mxu0 0.0
      %1535 = vmatpush1.msra.mxu0 0.0
      %1536 = vmatprep.subr.mxu0 0.0
      %1537 = vmatpush1.msra.mxu0 0.0
      %1538 = vmatprep.subr.mxu0 0.0
      %1539 = vmatpush1.msra.mxu0 0.0
      %1540 = vmatprep.subr.mxu0 0.0
      %1541 = vmatpush1.msra.mxu0 0.0
      %1542 = vmatprep.subr.mxu0 0.0
      %1543 = vmatpush1.msra.mxu0 0.0
      %1544 = vmatprep.subr.mxu0 0.0
      %1545 = vmatpush1.msra.mxu0 0.0
      %1546 = vmatprep.subr.mxu0 0.0
      %1547 = vmatpush1.msra.mxu0 0.0
      %1548 = vmatprep.subr.mxu0 0.0
      %1549 = vmatpush1.msra.mxu0 0.0
      %1550 = vmatprep.subr.mxu0 0.0
      %1551 = vmatpush1.msra.mxu0 0.0
      %1552 = vmatprep.subr.mxu0 0.0
      %1553 = vmatpush1.msra.mxu0 0.0
      %1554 = vmatprep.subr.mxu0 0.0
      %1555 = vmatpush1.msra.mxu0 0.0
      %1556 = vmatprep.subr.mxu0 0.0
      %1557 = vmatpush1.msra.mxu0 0.0
      %1558 = vmatprep.subr.mxu0 0.0
      %1559 = vmatpush1.msra.mxu0 0.0
      %1560 = vmatprep.subr.mxu0 0.0
      %1561 = vmatpush1.msra.mxu0 0.0
      %1562 = vmatprep.subr.mxu0 0.0
      %1563 = vmatpush1.msra.mxu0 0.0
      %1564 = vmatprep.subr.mxu0 0.0
      %1565 = vmatpush1.msra.mxu0 0.0
      %1566 = vmatprep.subr.mxu0 0.0
      %1567 = vmatpush1.msra.mxu0 0.0
      %1568 = vmatprep.subr.mxu0 0.0
      %1569 = vmatpush1.msra.mxu0 0.0
      %1570 = vmatprep.subr.mxu0 0.0
      %1571 = vmatpush1.msra.mxu0 0.0
      %1572 = vmatprep.subr.mxu0 0.0
      %1573 = vmatpush1.msra.mxu0 0.0
      %1574 = vmatprep.subr.mxu0 0.0
      %1575 = vmatpush1.msra.mxu0 0.0
      %1576 = vmatprep.subr.mxu0 0.0
      %1577 = vmatpush1.msra.mxu0 0.0
      %1578 = vmatprep.subr.mxu0 0.0
      %1579 = vmatpush1.msra.mxu0 0.0
      %1580 = vmatprep.subr.mxu0 0.0
      %1581 = vmatpush1.msra.mxu0 0.0
      %1582 = vmatprep.subr.mxu0 0.0
      %1583 = vmatpush1.msra.mxu0 0.0
      %1584 = vmatprep.subr.mxu0 0.0
      %1585 = vmatpush1.msra.mxu0 0.0
      %1586 = vmatprep.mubr.f32.mxu0 0.0
      %1587 = vmatmul.mubr.f32.gmra.mrb[0].mxu0 %v1520
      %v1588 = vpop.f32.mrb[0].mxu0
      %v1589 = vadd.f32 %v1516, %v1588
      %v1590 = vpop.f32.mrb[0].mxu0
      %1591 = vdwg.mxu0
      %v1592 = vadd.s32 %v1204, 1
      %vm1593 = vcmp.eq.s32.totalorder %v1179, %v1592
      %vm1594 = vcmp.eq.s32.totalorder %v1188, %v1592
      %vm1595 = vcmp.eq.s32.totalorder %v1189, %v1592
      %vm1596 = vcmp.eq.s32.totalorder %v1190, %v1592
      %vm1597 = vcmp.eq.s32.totalorder %v1191, %v1592
      %vm1598 = vcmp.eq.s32.totalorder %v1192, %v1592
      %vm1599 = vcmp.eq.s32.totalorder %v1193, %v1592
      %vm1600 = vcmp.eq.s32.totalorder %v1194, %v1592
      %vm1601 = vcmp.eq.s32.totalorder %v1195, %v1592
      %vm1602 = vcmp.eq.s32.totalorder %v1196, %v1592
      %vm1603 = vcmp.eq.s32.totalorder %v1197, %v1592
      %vm1604 = vcmp.eq.s32.totalorder %v1198, %v1592
      %vm1605 = vcmp.eq.s32.totalorder %v1199, %v1592
      %vm1606 = vcmp.eq.s32.totalorder %v1200, %v1592
      %vm1607 = vcmp.eq.s32.totalorder %v1201, %v1592
      %vm1608 = vcmp.eq.s32.totalorder %v1202, %v1592
      %v1609 = vsel %vm1593, 1, 0
      %v1610 = vsel %vm1594, 1, 0
      %v1611 = vsel %vm1595, 1, 0
      %v1612 = vsel %vm1596, 1, 0
      %v1613 = vsel %vm1597, 1, 0
      %v1614 = vsel %vm1598, 1, 0
      %v1615 = vsel %vm1599, 1, 0
      %v1616 = vsel %vm1600, 1, 0
      %v1617 = vsel %vm1601, 1, 0
      %v1618 = vsel %vm1602, 1, 0
      %v1619 = vsel %vm1603, 1, 0
      %v1620 = vsel %vm1604, 1, 0
      %v1621 = vsel %vm1605, 1, 0
      %v1622 = vsel %vm1606, 1, 0
      %v1623 = vsel %vm1607, 1, 0
      %v1624 = vsel %vm1608, 1, 0
      %v1625 = vcvt.s32.f32 %v1609
      %v1626 = vcvt.s32.f32 %v1610
      %v1627 = vcvt.s32.f32 %v1611
      %v1628 = vcvt.s32.f32 %v1612
      %v1629 = vcvt.s32.f32 %v1613
      %v1630 = vcvt.s32.f32 %v1614
      %v1631 = vcvt.s32.f32 %v1615
      %v1632 = vcvt.s32.f32 %v1616
      %v1633 = vcvt.s32.f32 %v1617
      %v1634 = vcvt.s32.f32 %v1618
      %v1635 = vcvt.s32.f32 %v1619
      %v1636 = vcvt.s32.f32 %v1620
      %v1637 = vcvt.s32.f32 %v1621
      %v1638 = vcvt.s32.f32 %v1622
      %v1639 = vcvt.s32.f32 %v1623
      %v1640 = vcvt.s32.f32 %v1624
      %1641 = vmatprep.subr.mxu0 0.0
      %1642 = vmatpush1.msra.mxu0 %v1625
      %1643 = vmatprep.subr.mxu0 0.0
      %1644 = vmatpush1.msra.mxu0 %v1626
      %1645 = vmatprep.subr.mxu0 0.0
      %1646 = vmatpush1.msra.mxu0 %v1627
      %1647 = vmatprep.subr.mxu0 0.0
      %1648 = vmatpush1.msra.mxu0 %v1628
      %1649 = vmatprep.subr.mxu0 0.0
      %1650 = vmatpush1.msra.mxu0 %v1629
      %1651 = vmatprep.subr.mxu0 0.0
      %1652 = vmatpush1.msra.mxu0 %v1630
      %1653 = vmatprep.subr.mxu0 0.0
      %1654 = vmatpush1.msra.mxu0 %v1631
      %1655 = vmatprep.subr.mxu0 0.0
      %1656 = vmatpush1.msra.mxu0 %v1632
      %1657 = vmatprep.subr.mxu0 0.0
      %1658 = vmatpush1.msra.mxu0 %v1633
      %1659 = vmatprep.subr.mxu0 0.0
      %1660 = vmatpush1.msra.mxu0 %v1634
      %1661 = vmatprep.subr.mxu0 0.0
      %1662 = vmatpush1.msra.mxu0 %v1635
      %1663 = vmatprep.subr.mxu0 0.0
      %1664 = vmatpush1.msra.mxu0 %v1636
      %1665 = vmatprep.subr.mxu0 0.0
      %1666 = vmatpush1.msra.mxu0 %v1637
      %1667 = vmatprep.subr.mxu0 0.0
      %1668 = vmatpush1.msra.mxu0 %v1638
      %1669 = vmatprep.subr.mxu0 0.0
      %1670 = vmatpush1.msra.mxu0 %v1639
      %1671 = vmatprep.subr.mxu0 0.0
      %1672 = vmatpush1.msra.mxu0 %v1640
      %1673 = vmatprep.subr.mxu0 0.0
      %1674 = vmatpush1.msra.mxu0 0.0
      %1675 = vmatprep.subr.mxu0 0.0
      %1676 = vmatpush1.msra.mxu0 0.0
      %1677 = vmatprep.subr.mxu0 0.0
      %1678 = vmatpush1.msra.mxu0 0.0
      %1679 = vmatprep.subr.mxu0 0.0
      %1680 = vmatpush1.msra.mxu0 0.0
      %1681 = vmatprep.subr.mxu0 0.0
      %1682 = vmatpush1.msra.mxu0 0.0
      %1683 = vmatprep.subr.mxu0 0.0
      %1684 = vmatpush1.msra.mxu0 0.0
      %1685 = vmatprep.subr.mxu0 0.0
      %1686 = vmatpush1.msra.mxu0 0.0
      %1687 = vmatprep.subr.mxu0 0.0
      %1688 = vmatpush1.msra.mxu0 0.0
      %1689 = vmatprep.subr.mxu0 0.0
      %1690 = vmatpush1.msra.mxu0 0.0
      %1691 = vmatprep.subr.mxu0 0.0
      %1692 = vmatpush1.msra.mxu0 0.0
      %1693 = vmatprep.subr.mxu0 0.0
      %1694 = vmatpush1.msra.mxu0 0.0
      %1695 = vmatprep.subr.mxu0 0.0
      %1696 = vmatpush1.msra.mxu0 0.0
      %1697 = vmatprep.subr.mxu0 0.0
      %1698 = vmatpush1.msra.mxu0 0.0
      %1699 = vmatprep.subr.mxu0 0.0
      %1700 = vmatpush1.msra.mxu0 0.0
      %1701 = vmatprep.subr.mxu0 0.0
      %1702 = vmatpush1.msra.mxu0 0.0
      %1703 = vmatprep.subr.mxu0 0.0
      %1704 = vmatpush1.msra.mxu0 0.0
      %1705 = vmatprep.mubr.f32.mxu0 0.0
      %1706 = vmatmul.mubr.f32.gmra.mrb[0].mxu0 %v1187
      %v1707 = vpop.f32.mrb[0].mxu0
      %v1708 = vadd.f32 0.0, %v1707
      %v1709 = vpop.f32.mrb[0].mxu0
      %1710 = vdwg.mxu0
      %s1711 = scalar_lea.vmem %s3, 16
      %v1712 = vld [vmem:[%s1711] sm:$0xff]
      %v1714 = vsel %vm1445, %v1712, 0
      %1716 = vmatprep.subr.mxu0 0.0
      %1717 = vmatpush1.msra.mxu0 %v1708
      %1718 = vmatprep.subr.mxu0 0.0
      %1719 = vmatpush1.msra.mxu0 0.0
      %1720 = vmatprep.subr.mxu0 0.0
      %1721 = vmatpush1.msra.mxu0 0.0
      %1722 = vmatprep.subr.mxu0 0.0
      %1723 = vmatpush1.msra.mxu0 0.0
      %1724 = vmatprep.subr.mxu0 0.0
      %1725 = vmatpush1.msra.mxu0 0.0
      %1726 = vmatprep.subr.mxu0 0.0
      %1727 = vmatpush1.msra.mxu0 0.0
      %1728 = vmatprep.subr.mxu0 0.0
      %1729 = vmatpush1.msra.mxu0 0.0
      %1730 = vmatprep.subr.mxu0 0.0
      %1731 = vmatpush1.msra.mxu0 0.0
      %1732 = vmatprep.subr.mxu0 0.0
      %1733 = vmatpush1.msra.mxu0 0.0
      %1734 = vmatprep.subr.mxu0 0.0
      %1735 = vmatpush1.msra.mxu0 0.0
      %1736 = vmatprep.subr.mxu0 0.0
      %1737 = vmatpush1.msra.mxu0 0.0
      %1738 = vmatprep.subr.mxu0 0.0
      %1739 = vmatpush1.msra.mxu0 0.0
      %1740 = vmatprep.subr.mxu0 0.0
      %1741 = vmatpush1.msra.mxu0 0.0
      %1742 = vmatprep.subr.mxu0 0.0
      %1743 = vmatpush1.msra.mxu0 0.0
      %1744 = vmatprep.subr.mxu0 0.0
      %1745 = vmatpush1.msra.mxu0 0.0
      %1746 = vmatprep.subr.mxu0 0.0
      %1747 = vmatpush1.msra.mxu0 0.0
      %1748 = vmatprep.subr.mxu0 0.0
      %1749 = vmatpush1.msra.mxu0 0.0
      %1750 = vmatprep.subr.mxu0 0.0
      %1751 = vmatpush1.msra.mxu0 0.0
      %1752 = vmatprep.subr.mxu0 0.0
      %1753 = vmatpush1.msra.mxu0 0.0
      %1754 = vmatprep.subr.mxu0 0.0
      %1755 = vmatpush1.msra.mxu0 0.0
      %1756 = vmatprep.subr.mxu0 0.0
      %1757 = vmatpush1.msra.mxu0 0.0
      %1758 = vmatprep.subr.mxu0 0.0
      %1759 = vmatpush1.msra.mxu0 0.0
      %1760 = vmatprep.subr.mxu0 0.0
      %1761 = vmatpush1.msra.mxu0 0.0
      %1762 = vmatprep.subr.mxu0 0.0
      %1763 = vmatpush1.msra.mxu0 0.0
      %1764 = vmatprep.subr.mxu0 0.0
      %1765 = vmatpush1.msra.mxu0 0.0
      %1766 = vmatprep.subr.mxu0 0.0
      %1767 = vmatpush1.msra.mxu0 0.0
      %1768 = vmatprep.subr.mxu0 0.0
      %1769 = vmatpush1.msra.mxu0 0.0
      %1770 = vmatprep.subr.mxu0 0.0
      %1771 = vmatpush1.msra.mxu0 0.0
      %1772 = vmatprep.subr.mxu0 0.0
      %1773 = vmatpush1.msra.mxu0 0.0
      %1774 = vmatprep.subr.mxu0 0.0
      %1775 = vmatpush1.msra.mxu0 0.0
      %1776 = vmatprep.subr.mxu0 0.0
      %1777 = vmatpush1.msra.mxu0 0.0
      %1778 = vmatprep.subr.mxu0 0.0
      %1779 = vmatpush1.msra.mxu0 0.0
      %1780 = vmatprep.mubr.f32.mxu0 0.0
      %1781 = vmatmul.mubr.f32.gmra.mrb[0].mxu0 %v1714
      %v1782 = vpop.f32.mrb[0].mxu0
      %v1783 = vadd.f32 0.0, %v1782
      %v1784 = vpop.f32.mrb[0].mxu0
      %1785 = vdwg.mxu0
      %v1786 = vadd.f32 %v1589, %v1783
      %v1787 = vld [vmem:[%s5] sm:$0xff]
      %1789 = vset.pattern.permute.xlu0 0
      %1790 = vperm.xlu0 %1789, %v1787
      %v1791 = vpop.permute.xlu0 %1790
      %v1793 = vadd.f32 %v1786, %v1791
      %v1794 = vmax.f32 %v1793, 0.0
      %1795 = vmatprep.subr.mxu0 0.0
      %1796 = vmatpush1.msra.mxu0 %v1238
      %1797 = vmatprep.subr.mxu0 0.0
      %1798 = vmatpush1.msra.mxu0 %v1239
      %1799 = vmatprep.subr.mxu0 0.0
      %1800 = vmatpush1.msra.mxu0 %v1240
      %1801 = vmatprep.subr.mxu0 0.0
      %1802 = vmatpush1.msra.mxu0 %v1241
      %1803 = vmatprep.subr.mxu0 0.0
      %1804 = vmatpush1.msra.mxu0 %v1242
      %1805 = vmatprep.subr.mxu0 0.0
      %1806 = vmatpush1.msra.mxu0 %v1243
      %1807 = vmatprep.subr.mxu0 0.0
      %1808 = vmatpush1.msra.mxu0 %v1244
      %1809 = vmatprep.subr.mxu0 0.0
      %1810 = vmatpush1.msra.mxu0 %v1245
      %1811 = vmatprep.subr.mxu0 0.0
      %1812 = vmatpush1.msra.mxu0 %v1246
      %1813 = vmatprep.subr.mxu0 0.0
      %1814 = vmatpush1.msra.mxu0 %v1247
      %1815 = vmatprep.subr.mxu0 0.0
      %1816 = vmatpush1.msra.mxu0 %v1248
      %1817 = vmatprep.subr.mxu0 0.0
      %1818 = vmatpush1.msra.mxu0 %v1249
      %1819 = vmatprep.subr.mxu0 0.0
      %1820 = vmatpush1.msra.mxu0 %v1250
      %1821 = vmatprep.subr.mxu0 0.0
      %1822 = vmatpush1.msra.mxu0 %v1251
      %1823 = vmatprep.subr.mxu0 0.0
      %1824 = vmatpush1.msra.mxu0 %v1252
      %1825 = vmatprep.subr.mxu0 0.0
      %1826 = vmatpush1.msra.mxu0 %v1253
      %1827 = vmatprep.subr.mxu0 0.0
      %1828 = vmatpush1.msra.mxu0 0.0
      %1829 = vmatprep.subr.mxu0 0.0
      %1830 = vmatpush1.msra.mxu0 0.0
      %1831 = vmatprep.subr.mxu0 0.0
      %1832 = vmatpush1.msra.mxu0 0.0
      %1833 = vmatprep.subr.mxu0 0.0
      %1834 = vmatpush1.msra.mxu0 0.0
      %1835 = vmatprep.subr.mxu0 0.0
      %1836 = vmatpush1.msra.mxu0 0.0
      %1837 = vmatprep.subr.mxu0 0.0
      %1838 = vmatpush1.msra.mxu0 0.0
      %1839 = vmatprep.subr.mxu0 0.0
      %1840 = vmatpush1.msra.mxu0 0.0
      %1841 = vmatprep.subr.mxu0 0.0
      %1842 = vmatpush1.msra.mxu0 0.0
      %1843 = vmatprep.subr.mxu0 0.0
      %1844 = vmatpush1.msra.mxu0 0.0
      %1845 = vmatprep.subr.mxu0 0.0
      %1846 = vmatpush1.msra.mxu0 0.0
      %1847 = vmatprep.subr.mxu0 0.0
      %1848 = vmatpush1.msra.mxu0 0.0
      %1849 = vmatprep.subr.mxu0 0.0
      %1850 = vmatpush1.msra.mxu0 0.0
      %1851 = vmatprep.subr.mxu0 0.0
      %1852 = vmatpush1.msra.mxu0 0.0
      %1853 = vmatprep.subr.mxu0 0.0
      %1854 = vmatpush1.msra.mxu0 0.0
      %1855 = vmatprep.subr.mxu0 0.0
      %1856 = vmatpush1.msra.mxu0 0.0
      %1857 = vmatprep.subr.mxu0 0.0
      %1858 = vmatpush1.msra.mxu0 0.0
      %1859 = vmatprep.mubr.f32.mxu0 0.0
      %1860 = vmatmul.mubr.f32.gmra.mrb[0].mxu0 %v1794
      %v1861 = vpop.f32.mrb[0].mxu0
      %v1862 = vadd.f32 0.0, %v1861
      %v1863 = vpop.f32.mrb[0].mxu0
      %1864 = vdwg.mxu0
      %v1865 = vld [vmem:[%s7] sm:$0xff]
      %1866 = vmatprep.subr.mxu0 0.0
      %1867 = vmatpush1.msra.mxu0 %v1357
      %1868 = vmatprep.subr.mxu0 0.0
      %1869 = vmatpush1.msra.mxu0 %v1358
      %1870 = vmatprep.subr.mxu0 0.0
      %1871 = vmatpush1.msra.mxu0 %v1359
      %1872 = vmatprep.subr.mxu0 0.0
      %1873 = vmatpush1.msra.mxu0 %v1360
      %1874 = vmatprep.subr.mxu0 0.0
      %1875 = vmatpush1.msra.mxu0 %v1361
      %1876 = vmatprep.subr.mxu0 0.0
      %1877 = vmatpush1.msra.mxu0 %v1362
      %1878 = vmatprep.subr.mxu0 0.0
      %1879 = vmatpush1.msra.mxu0 %v1363
      %1880 = vmatprep.subr.mxu0 0.0
      %1881 = vmatpush1.msra.mxu0 %v1364
      %1882 = vmatprep.subr.mxu0 0.0
      %1883 = vmatpush1.msra.mxu0 %v1365
      %1884 = vmatprep.subr.mxu0 0.0
      %1885 = vmatpush1.msra.mxu0 %v1366
      %1886 = vmatprep.subr.mxu0 0.0
      %1887 = vmatpush1.msra.mxu0 %v1367
      %1888 = vmatprep.subr.mxu0 0.0
      %1889 = vmatpush1.msra.mxu0 %v1368
      %1890 = vmatprep.subr.mxu0 0.0
      %1891 = vmatpush1.msra.mxu0 %v1369
      %1892 = vmatprep.subr.mxu0 0.0
      %1893 = vmatpush1.msra.mxu0 %v1370
      %1894 = vmatprep.subr.mxu0 0.0
      %1895 = vmatpush1.msra.mxu0 %v1371
      %1896 = vmatprep.subr.mxu0 0.0
      %1897 = vmatpush1.msra.mxu0 %v1372
      %1898 = vmatprep.subr.mxu0 0.0
      %1899 = vmatpush1.msra.mxu0 0.0
      %1900 = vmatprep.subr.mxu0 0.0
      %1901 = vmatpush1.msra.mxu0 0.0
      %1902 = vmatprep.subr.mxu0 0.0
      %1903 = vmatpush1.msra.mxu0 0.0
      %1904 = vmatprep.subr.mxu0 0.0
      %1905 = vmatpush1.msra.mxu0 0.0
      %1906 = vmatprep.subr.mxu0 0.0
      %1907 = vmatpush1.msra.mxu0 0.0
      %1908 = vmatprep.subr.mxu0 0.0
      %1909 = vmatpush1.msra.mxu0 0.0
      %1910 = vmatprep.subr.mxu0 0.0
      %1911 = vmatpush1.msra.mxu0 0.0
      %1912 = vmatprep.subr.mxu0 0.0
      %1913 = vmatpush1.msra.mxu0 0.0
      %1914 = vmatprep.subr.mxu0 0.0
      %1915 = vmatpush1.msra.mxu0 0.0
      %1916 = vmatprep.subr.mxu0 0.0
      %1917 = vmatpush1.msra.mxu0 0.0
      %1918 = vmatprep.subr.mxu0 0.0
      %1919 = vmatpush1.msra.mxu0 0.0
      %1920 = vmatprep.subr.mxu0 0.0
      %1921 = vmatpush1.msra.mxu0 0.0
      %1922 = vmatprep.subr.mxu0 0.0
      %1923 = vmatpush1.msra.mxu0 0.0
      %1924 = vmatprep.subr.mxu0 0.0
      %1925 = vmatpush1.msra.mxu0 0.0
      %1926 = vmatprep.subr.mxu0 0.0
      %1927 = vmatpush1.msra.mxu0 0.0
      %1928 = vmatprep.subr.mxu0 0.0
      %1929 = vmatpush1.msra.mxu0 0.0
      %1930 = vmatprep.mubr.f32.mxu0 0.0
      %1931 = vmatmul.mubr.f32.gmra.mrb[0].mxu0 %v1794
      %v1932 = vpop.f32.mrb[0].mxu0
      %v1933 = vadd.f32 0.0, %v1932
      %v1934 = vpop.f32.mrb[0].mxu0
      %1935 = vdwg.mxu0
      %s1936 = scalar_lea.vmem %s7, 8
      %v1937 = vld [vmem:[%s1936] sm:$0xff]
      %v1939 = vsel %vm1445, %v1937, 0
      %1941 = vmatprep.subr.mxu0 0.0
      %1942 = vmatpush1.msra.mxu0 %v1933
      %1943 = vmatprep.subr.mxu0 0.0
      %1944 = vmatpush1.msra.mxu0 0.0
      %1945 = vmatprep.subr.mxu0 0.0
      %1946 = vmatpush1.msra.mxu0 0.0
      %1947 = vmatprep.subr.mxu0 0.0
      %1948 = vmatpush1.msra.mxu0 0.0
      %1949 = vmatprep.subr.mxu0 0.0
      %1950 = vmatpush1.msra.mxu0 0.0
      %1951 = vmatprep.subr.mxu0 0.0
      %1952 = vmatpush1.msra.mxu0 0.0
      %1953 = vmatprep.subr.mxu0 0.0
      %1954 = vmatpush1.msra.mxu0 0.0
      %1955 = vmatprep.subr.mxu0 0.0
      %1956 = vmatpush1.msra.mxu0 0.0
      %1957 = vmatprep.subr.mxu0 0.0
      %1958 = vmatpush1.msra.mxu0 0.0
      %1959 = vmatprep.subr.mxu0 0.0
      %1960 = vmatpush1.msra.mxu0 0.0
      %1961 = vmatprep.subr.mxu0 0.0
      %1962 = vmatpush1.msra.mxu0 0.0
      %1963 = vmatprep.subr.mxu0 0.0
      %1964 = vmatpush1.msra.mxu0 0.0
      %1965 = vmatprep.subr.mxu0 0.0
      %1966 = vmatpush1.msra.mxu0 0.0
      %1967 = vmatprep.subr.mxu0 0.0
      %1968 = vmatpush1.msra.mxu0 0.0
      %1969 = vmatprep.subr.mxu0 0.0
      %1970 = vmatpush1.msra.mxu0 0.0
      %1971 = vmatprep.subr.mxu0 0.0
      %1972 = vmatpush1.msra.mxu0 0.0
      %1973 = vmatprep.subr.mxu0 0.0
      %1974 = vmatpush1.msra.mxu0 0.0
      %1975 = vmatprep.subr.mxu0 0.0
      %1976 = vmatpush1.msra.mxu0 0.0
      %1977 = vmatprep.subr.mxu0 0.0
      %1978 = vmatpush1.msra.mxu0 0.0
      %1979 = vmatprep.subr.mxu0 0.0
      %1980 = vmatpush1.msra.mxu0 0.0
      %1981 = vmatprep.subr.mxu0 0.0
      %1982 = vmatpush1.msra.mxu0 0.0
      %1983 = vmatprep.subr.mxu0 0.0
      %1984 = vmatpush1.msra.mxu0 0.0
      %1985 = vmatprep.subr.mxu0 0.0
      %1986 = vmatpush1.msra.mxu0 0.0
      %1987 = vmatprep.subr.mxu0 0.0
      %1988 = vmatpush1.msra.mxu0 0.0
      %1989 = vmatprep.subr.mxu0 0.0
      %1990 = vmatpush1.msra.mxu0 0.0
      %1991 = vmatprep.subr.mxu0 0.0
      %1992 = vmatpush1.msra.mxu0 0.0
      %1993 = vmatprep.subr.mxu0 0.0
      %1994 = vmatpush1.msra.mxu0 0.0
      %1995 = vmatprep.subr.mxu0 0.0
      %1996 = vmatpush1.msra.mxu0 0.0
      %1997 = vmatprep.subr.mxu0 0.0
      %1998 = vmatpush1.msra.mxu0 0.0
      %1999 = vmatprep.subr.mxu0 0.0
      %2000 = vmatpush1.msra.mxu0 0.0
      %2001 = vmatprep.subr.mxu0 0.0
      %2002 = vmatpush1.msra.mxu0 0.0
      %2003 = vmatprep.subr.mxu0 0.0
      %2004 = vmatpush1.msra.mxu0 0.0
      %2005 = vmatprep.mubr.f32.mxu0 0.0
      %2006 = vmatmul.mubr.f32.gmra.mrb[0].mxu0 %v1939
      %v2007 = vpop.f32.mrb[0].mxu0
      %v2008 = vadd.f32 0.0, %v2007
      %v2009 = vpop.f32.mrb[0].mxu0
      %2010 = vdwg.mxu0
      %v2012 = vsel %vm1445, %v1865, 0
      %2014 = vmatprep.subr.mxu0 0.0
      %2015 = vmatpush1.msra.mxu0 %v1862
      %2016 = vmatprep.subr.mxu0 0.0
      %2017 = vmatpush1.msra.mxu0 0.0
      %2018 = vmatprep.subr.mxu0 0.0
      %2019 = vmatpush1.msra.mxu0 0.0
      %2020 = vmatprep.subr.mxu0 0.0
      %2021 = vmatpush1.msra.mxu0 0.0
      %2022 = vmatprep.subr.mxu0 0.0
      %2023 = vmatpush1.msra.mxu0 0.0
      %2024 = vmatprep.subr.mxu0 0.0
      %2025 = vmatpush1.msra.mxu0 0.0
      %2026 = vmatprep.subr.mxu0 0.0
      %2027 = vmatpush1.msra.mxu0 0.0
      %2028 = vmatprep.subr.mxu0 0.0
      %2029 = vmatpush1.msra.mxu0 0.0
      %2030 = vmatprep.subr.mxu0 0.0
      %2031 = vmatpush1.msra.mxu0 0.0
      %2032 = vmatprep.subr.mxu0 0.0
      %2033 = vmatpush1.msra.mxu0 0.0
      %2034 = vmatprep.subr.mxu0 0.0
      %2035 = vmatpush1.msra.mxu0 0.0
      %2036 = vmatprep.subr.mxu0 0.0
      %2037 = vmatpush1.msra.mxu0 0.0
      %2038 = vmatprep.subr.mxu0 0.0
      %2039 = vmatpush1.msra.mxu0 0.0
      %2040 = vmatprep.subr.mxu0 0.0
      %2041 = vmatpush1.msra.mxu0 0.0
      %2042 = vmatprep.subr.mxu0 0.0
      %2043 = vmatpush1.msra.mxu0 0.0
      %2044 = vmatprep.subr.mxu0 0.0
      %2045 = vmatpush1.msra.mxu0 0.0
      %2046 = vmatprep.subr.mxu0 0.0
      %2047 = vmatpush1.msra.mxu0 0.0
      %2048 = vmatprep.subr.mxu0 0.0
      %2049 = vmatpush1.msra.mxu0 0.0
      %2050 = vmatprep.subr.mxu0 0.0
      %2051 = vmatpush1.msra.mxu0 0.0
      %2052 = vmatprep.subr.mxu0 0.0
      %2053 = vmatpush1.msra.mxu0 0.0
      %2054 = vmatprep.subr.mxu0 0.0
      %2055 = vmatpush1.msra.mxu0 0.0
      %2056 = vmatprep.subr.mxu0 0.0
      %2057 = vmatpush1.msra.mxu0 0.0
      %2058 = vmatprep.subr.mxu0 0.0
      %2059 = vmatpush1.msra.mxu0 0.0
      %2060 = vmatprep.subr.mxu0 0.0
      %2061 = vmatpush1.msra.mxu0 0.0
      %2062 = vmatprep.subr.mxu0 0.0
      %2063 = vmatpush1.msra.mxu0 0.0
      %2064 = vmatprep.subr.mxu0 0.0
      %2065 = vmatpush1.msra.mxu0 0.0
      %2066 = vmatprep.subr.mxu0 0.0
      %2067 = vmatpush1.msra.mxu0 0.0
      %2068 = vmatprep.subr.mxu0 0.0
      %2069 = vmatpush1.msra.mxu0 0.0
      %2070 = vmatprep.subr.mxu0 0.0
      %2071 = vmatpush1.msra.mxu0 0.0
      %2072 = vmatprep.subr.mxu0 0.0
      %2073 = vmatpush1.msra.mxu0 0.0
      %2074 = vmatprep.subr.mxu0 0.0
      %2075 = vmatpush1.msra.mxu0 0.0
      %2076 = vmatprep.subr.mxu0 0.0
      %2077 = vmatpush1.msra.mxu0 0.0
      %2078 = vmatprep.mubr.f32.mxu0 0.0
      %2079 = vmatmul.mubr.f32.gmra.mrb[0].mxu0 %v2012
      %v2080 = vpop.f32.mrb[0].mxu0
      %v2081 = vadd.f32 %v2008, %v2080
      %v2082 = vpop.f32.mrb[0].mxu0
      %2083 = vdwg.mxu0
      %2084 = vmatprep.subr.mxu0 0.0
      %2085 = vmatpush1.msra.mxu0 %v1625
      %2086 = vmatprep.subr.mxu0 0.0
      %2087 = vmatpush1.msra.mxu0 %v1626
      %2088 = vmatprep.subr.mxu0 0.0
      %2089 = vmatpush1.msra.mxu0 %v1627
      %2090 = vmatprep.subr.mxu0 0.0
      %2091 = vmatpush1.msra.mxu0 %v1628
      %2092 = vmatprep.subr.mxu0 0.0
      %2093 = vmatpush1.msra.mxu0 %v1629
      %2094 = vmatprep.subr.mxu0 0.0
      %2095 = vmatpush1.msra.mxu0 %v1630
      %2096 = vmatprep.subr.mxu0 0.0
      %2097 = vmatpush1.msra.mxu0 %v1631
      %2098 = vmatprep.subr.mxu0 0.0
      %2099 = vmatpush1.msra.mxu0 %v1632
      %2100 = vmatprep.subr.mxu0 0.0
      %2101 = vmatpush1.msra.mxu0 %v1633
      %2102 = vmatprep.subr.mxu0 0.0
      %2103 = vmatpush1.msra.mxu0 %v1634
      %2104 = vmatprep.subr.mxu0 0.0
      %2105 = vmatpush1.msra.mxu0 %v1635
      %2106 = vmatprep.subr.mxu0 0.0
      %2107 = vmatpush1.msra.mxu0 %v1636
      %2108 = vmatprep.subr.mxu0 0.0
      %2109 = vmatpush1.msra.mxu0 %v1637
      %2110 = vmatprep.subr.mxu0 0.0
      %2111 = vmatpush1.msra.mxu0 %v1638
      %2112 = vmatprep.subr.mxu0 0.0
      %2113 = vmatpush1.msra.mxu0 %v1639
      %2114 = vmatprep.subr.mxu0 0.0
      %2115 = vmatpush1.msra.mxu0 %v1640
      %2116 = vmatprep.subr.mxu0 0.0
      %2117 = vmatpush1.msra.mxu0 0.0
      %2118 = vmatprep.subr.mxu0 0.0
      %2119 = vmatpush1.msra.mxu0 0.0
      %2120 = vmatprep.subr.mxu0 0.0
      %2121 = vmatpush1.msra.mxu0 0.0
      %2122 = vmatprep.subr.mxu0 0.0
      %2123 = vmatpush1.msra.mxu0 0.0
      %2124 = vmatprep.subr.mxu0 0.0
      %2125 = vmatpush1.msra.mxu0 0.0
      %2126 = vmatprep.subr.mxu0 0.0
      %2127 = vmatpush1.msra.mxu0 0.0
      %2128 = vmatprep.subr.mxu0 0.0
      %2129 = vmatpush1.msra.mxu0 0.0
      %2130 = vmatprep.subr.mxu0 0.0
      %2131 = vmatpush1.msra.mxu0 0.0
      %2132 = vmatprep.subr.mxu0 0.0
      %2133 = vmatpush1.msra.mxu0 0.0
      %2134 = vmatprep.subr.mxu0 0.0
      %2135 = vmatpush1.msra.mxu0 0.0
      %2136 = vmatprep.subr.mxu0 0.0
      %2137 = vmatpush1.msra.mxu0 0.0
      %2138 = vmatprep.subr.mxu0 0.0
      %2139 = vmatpush1.msra.mxu0 0.0
      %2140 = vmatprep.subr.mxu0 0.0
      %2141 = vmatpush1.msra.mxu0 0.0
      %2142 = vmatprep.subr.mxu0 0.0
      %2143 = vmatpush1.msra.mxu0 0.0
      %2144 = vmatprep.subr.mxu0 0.0
      %2145 = vmatpush1.msra.mxu0 0.0
      %2146 = vmatprep.subr.mxu0 0.0
      %2147 = vmatpush1.msra.mxu0 0.0
      %2148 = vmatprep.mubr.f32.mxu0 0.0
      %2149 = vmatmul.mubr.f32.gmra.mrb[0].mxu0 %v1794
      %v2150 = vpop.f32.mrb[0].mxu0
      %v2151 = vadd.f32 0.0, %v2150
      %v2152 = vpop.f32.mrb[0].mxu0
      %2153 = vdwg.mxu0
      %s2154 = scalar_lea.vmem %s7, 16
      %v2155 = vld [vmem:[%s2154] sm:$0xff]
      %v2157 = vsel %vm1445, %v2155, 0
      %2159 = vmatprep.subr.mxu0 0.0
      %2160 = vmatpush1.msra.mxu0 %v2151
      %2161 = vmatprep.subr.mxu0 0.0
      %2162 = vmatpush1.msra.mxu0 0.0
      %2163 = vmatprep.subr.mxu0 0.0
      %2164 = vmatpush1.msra.mxu0 0.0
      %2165 = vmatprep.subr.mxu0 0.0
      %2166 = vmatpush1.msra.mxu0 0.0
      %2167 = vmatprep.subr.mxu0 0.0
      %2168 = vmatpush1.msra.mxu0 0.0
      %2169 = vmatprep.subr.mxu0 0.0
      %2170 = vmatpush1.msra.mxu0 0.0
      %2171 = vmatprep.subr.mxu0 0.0
      %2172 = vmatpush1.msra.mxu0 0.0
      %2173 = vmatprep.subr.mxu0 0.0
      %2174 = vmatpush1.msra.mxu0 0.0
      %2175 = vmatprep.subr.mxu0 0.0
      %2176 = vmatpush1.msra.mxu0 0.0
      %2177 = vmatprep.subr.mxu0 0.0
      %2178 = vmatpush1.msra.mxu0 0.0
      %2179 = vmatprep.subr.mxu0 0.0
      %2180 = vmatpush1.msra.mxu0 0.0
      %2181 = vmatprep.subr.mxu0 0.0
      %2182 = vmatpush1.msra.mxu0 0.0
      %2183 = vmatprep.subr.mxu0 0.0
      %2184 = vmatpush1.msra.mxu0 0.0
      %2185 = vmatprep.subr.mxu0 0.0
      %2186 = vmatpush1.msra.mxu0 0.0
      %2187 = vmatprep.subr.mxu0 0.0
      %2188 = vmatpush1.msra.mxu0 0.0
      %2189 = vmatprep.subr.mxu0 0.0
      %2190 = vmatpush1.msra.mxu0 0.0
      %2191 = vmatprep.subr.mxu0 0.0
      %2192 = vmatpush1.msra.mxu0 0.0
      %2193 = vmatprep.subr.mxu0 0.0
      %2194 = vmatpush1.msra.mxu0 0.0
      %2195 = vmatprep.subr.mxu0 0.0
      %2196 = vmatpush1.msra.mxu0 0.0
      %2197 = vmatprep.subr.mxu0 0.0
      %2198 = vmatpush1.msra.mxu0 0.0
      %2199 = vmatprep.subr.mxu0 0.0
      %2200 = vmatpush1.msra.mxu0 0.0
      %2201 = vmatprep.subr.mxu0 0.0
      %2202 = vmatpush1.msra.mxu0 0.0
      %2203 = vmatprep.subr.mxu0 0.0
      %2204 = vmatpush1.msra.mxu0 0.0
      %2205 = vmatprep.subr.mxu0 0.0
      %2206 = vmatpush1.msra.mxu0 0.0
      %2207 = vmatprep.subr.mxu0 0.0
      %2208 = vmatpush1.msra.mxu0 0.0
      %2209 = vmatprep.subr.mxu0 0.0
      %2210 = vmatpush1.msra.mxu0 0.0
      %2211 = vmatprep.subr.mxu0 0.0
      %2212 = vmatpush1.msra.mxu0 0.0
      %2213 = vmatprep.subr.mxu0 0.0
      %2214 = vmatpush1.msra.mxu0 0.0
      %2215 = vmatprep.subr.mxu0 0.0
      %2216 = vmatpush1.msra.mxu0 0.0
      %2217 = vmatprep.subr.mxu0 0.0
      %2218 = vmatpush1.msra.mxu0 0.0
      %2219 = vmatprep.subr.mxu0 0.0
      %2220 = vmatpush1.msra.mxu0 0.0
      %2221 = vmatprep.subr.mxu0 0.0
      %2222 = vmatpush1.msra.mxu0 0.0
      %2223 = vmatprep.mubr.f32.mxu0 0.0
      %2224 = vmatmul.mubr.f32.gmra.mrb[0].mxu0 %v2157
      %v2225 = vpop.f32.mrb[0].mxu0
      %v2226 = vadd.f32 0.0, %v2225
      %v2227 = vpop.f32.mrb[0].mxu0
      %2228 = vdwg.mxu0
      %v2229 = vadd.f32 %v2081, %v2226
      %v2230 = vld [vmem:[%s9] sm:$0xff]
      %2232 = vset.pattern.permute.xlu0 0
      %2233 = vperm.xlu0 %2232, %v2230
      %v2234 = vpop.permute.xlu0 %2233
      %v2236 = vadd.f32 %v2229, %v2234
      %v2237 = vadd.f32 %v2236, %v1187
      %v2238 = vmax.f32 %v2237, 0.0
      %v2239 = vmul.u32 %v1204, 2
      %v2240 = vadd.s32 %v2239, 4294967295
      %vm2241 = vcmp.eq.s32.totalorder %v1179, %v2240
      %vm2242 = vcmp.eq.s32.totalorder %v1188, %v2240
      %vm2243 = vcmp.eq.s32.totalorder %v1189, %v2240
      %vm2244 = vcmp.eq.s32.totalorder %v1190, %v2240
      %vm2245 = vcmp.eq.s32.totalorder %v1191, %v2240
      %vm2246 = vcmp.eq.s32.totalorder %v1192, %v2240
      %vm2247 = vcmp.eq.s32.totalorder %v1193, %v2240
      %vm2248 = vcmp.eq.s32.totalorder %v1194, %v2240
      %vm2249 = vcmp.eq.s32.totalorder %v1195, %v2240
      %vm2250 = vcmp.eq.s32.totalorder %v1196, %v2240
      %vm2251 = vcmp.eq.s32.totalorder %v1197, %v2240
      %vm2252 = vcmp.eq.s32.totalorder %v1198, %v2240
      %vm2253 = vcmp.eq.s32.totalorder %v1199, %v2240
      %vm2254 = vcmp.eq.s32.totalorder %v1200, %v2240
      %vm2255 = vcmp.eq.s32.totalorder %v1201, %v2240
      %vm2256 = vcmp.eq.s32.totalorder %v1202, %v2240
      %v2257 = vsel %vm2241, 1, 0
      %v2258 = vsel %vm2242, 1, 0
      %v2259 = vsel %vm2243, 1, 0
      %v2260 = vsel %vm2244, 1, 0
      %v2261 = vsel %vm2245, 1, 0
      %v2262 = vsel %vm2246, 1, 0
      %v2263 = vsel %vm2247, 1, 0
      %v2264 = vsel %vm2248, 1, 0
      %v2265 = vsel %vm2249, 1, 0
      %v2266 = vsel %vm2250, 1, 0
      %v2267 = vsel %vm2251, 1, 0
      %v2268 = vsel %vm2252, 1, 0
      %v2269 = vsel %vm2253, 1, 0
      %v2270 = vsel %vm2254, 1, 0
      %v2271 = vsel %vm2255, 1, 0
      %v2272 = vsel %vm2256, 1, 0
      %v2273 = vcvt.s32.f32 %v2257
      %v2274 = vcvt.s32.f32 %v2258
      %v2275 = vcvt.s32.f32 %v2259
      %v2276 = vcvt.s32.f32 %v2260
      %v2277 = vcvt.s32.f32 %v2261
      %v2278 = vcvt.s32.f32 %v2262
      %v2279 = vcvt.s32.f32 %v2263
      %v2280 = vcvt.s32.f32 %v2264
      %v2281 = vcvt.s32.f32 %v2265
      %v2282 = vcvt.s32.f32 %v2266
      %v2283 = vcvt.s32.f32 %v2267
      %v2284 = vcvt.s32.f32 %v2268
      %v2285 = vcvt.s32.f32 %v2269
      %v2286 = vcvt.s32.f32 %v2270
      %v2287 = vcvt.s32.f32 %v2271
      %v2288 = vcvt.s32.f32 %v2272
      %2289 = vmatprep.subr.mxu0 0.0
      %2290 = vmatpush1.msra.mxu0 %v2273
      %2291 = vmatprep.subr.mxu0 0.0
      %2292 = vmatpush1.msra.mxu0 %v2274
      %2293 = vmatprep.subr.mxu0 0.0
      %2294 = vmatpush1.msra.mxu0 %v2275
      %2295 = vmatprep.subr.mxu0 0.0
      %2296 = vmatpush1.msra.mxu0 %v2276
      %2297 = vmatprep.subr.mxu0 0.0
      %2298 = vmatpush1.msra.mxu0 %v2277
      %2299 = vmatprep.subr.mxu0 0.0
      %2300 = vmatpush1.msra.mxu0 %v2278
      %2301 = vmatprep.subr.mxu0 0.0
      %2302 = vmatpush1.msra.mxu0 %v2279
      %2303 = vmatprep.subr.mxu0 0.0
      %2304 = vmatpush1.msra.mxu0 %v2280
      %2305 = vmatprep.subr.mxu0 0.0
      %2306 = vmatpush1.msra.mxu0 %v2281
      %2307 = vmatprep.subr.mxu0 0.0
      %2308 = vmatpush1.msra.mxu0 %v2282
      %2309 = vmatprep.subr.mxu0 0.0
      %2310 = vmatpush1.msra.mxu0 %v2283
      %2311 = vmatprep.subr.mxu0 0.0
      %2312 = vmatpush1.msra.mxu0 %v2284
      %2313 = vmatprep.subr.mxu0 0.0
      %2314 = vmatpush1.msra.mxu0 %v2285
      %2315 = vmatprep.subr.mxu0 0.0
      %2316 = vmatpush1.msra.mxu0 %v2286
      %2317 = vmatprep.subr.mxu0 0.0
      %2318 = vmatpush1.msra.mxu0 %v2287
      %2319 = vmatprep.subr.mxu0 0.0
      %2320 = vmatpush1.msra.mxu0 %v2288
      %2321 = vmatprep.subr.mxu0 0.0
      %2322 = vmatpush1.msra.mxu0 0.0
      %2323 = vmatprep.subr.mxu0 0.0
      %2324 = vmatpush1.msra.mxu0 0.0
      %2325 = vmatprep.subr.mxu0 0.0
      %2326 = vmatpush1.msra.mxu0 0.0
      %2327 = vmatprep.subr.mxu0 0.0
      %2328 = vmatpush1.msra.mxu0 0.0
      %2329 = vmatprep.subr.mxu0 0.0
      %2330 = vmatpush1.msra.mxu0 0.0
      %2331 = vmatprep.subr.mxu0 0.0
      %2332 = vmatpush1.msra.mxu0 0.0
      %2333 = vmatprep.subr.mxu0 0.0
      %2334 = vmatpush1.msra.mxu0 0.0
      %2335 = vmatprep.subr.mxu0 0.0
      %2336 = vmatpush1.msra.mxu0 0.0
      %2337 = vmatprep.subr.mxu0 0.0
      %2338 = vmatpush1.msra.mxu0 0.0
      %2339 = vmatprep.subr.mxu0 0.0
      %2340 = vmatpush1.msra.mxu0 0.0
      %2341 = vmatprep.subr.mxu0 0.0
      %2342 = vmatpush1.msra.mxu0 0.0
      %2343 = vmatprep.subr.mxu0 0.0
      %2344 = vmatpush1.msra.mxu0 0.0
      %2345 = vmatprep.subr.mxu0 0.0
      %2346 = vmatpush1.msra.mxu0 0.0
      %2347 = vmatprep.subr.mxu0 0.0
      %2348 = vmatpush1.msra.mxu0 0.0
      %2349 = vmatprep.subr.mxu0 0.0
      %2350 = vmatpush1.msra.mxu0 0.0
      %2351 = vmatprep.subr.mxu0 0.0
      %2352 = vmatpush1.msra.mxu0 0.0
      %2353 = vmatprep.mubr.f32.mxu0 0.0
      %2354 = vmatmul.mubr.f32.gmra.mrb[0].mxu0 %v2238
      %v2355 = vpop.f32.mrb[0].mxu0
      %v2356 = vadd.f32 0.0, %v2355
      %v2357 = vpop.f32.mrb[0].mxu0
      %2358 = vdwg.mxu0
      %v2359 = vld [vmem:[%s11] sm:$0xff]
      %vm2360 = vcmp.eq.s32.totalorder %v1179, %v2239
      %vm2361 = vcmp.eq.s32.totalorder %v1188, %v2239
      %vm2362 = vcmp.eq.s32.totalorder %v1189, %v2239
      %vm2363 = vcmp.eq.s32.totalorder %v1190, %v2239
      %vm2364 = vcmp.eq.s32.totalorder %v1191, %v2239
      %vm2365 = vcmp.eq.s32.totalorder %v1192, %v2239
      %vm2366 = vcmp.eq.s32.totalorder %v1193, %v2239
      %vm2367 = vcmp.eq.s32.totalorder %v1194, %v2239
      %vm2368 = vcmp.eq.s32.totalorder %v1195, %v2239
      %vm2369 = vcmp.eq.s32.totalorder %v1196, %v2239
      %vm2370 = vcmp.eq.s32.totalorder %v1197, %v2239
      %vm2371 = vcmp.eq.s32.totalorder %v1198, %v2239
      %vm2372 = vcmp.eq.s32.totalorder %v1199, %v2239
      %vm2373 = vcmp.eq.s32.totalorder %v1200, %v2239
      %vm2374 = vcmp.eq.s32.totalorder %v1201, %v2239
      %vm2375 = vcmp.eq.s32.totalorder %v1202, %v2239
      %v2376 = vsel %vm2360, 1, 0
      %v2377 = vsel %vm2361, 1, 0
      %v2378 = vsel %vm2362, 1, 0
      %v2379 = vsel %vm2363, 1, 0
      %v2380 = vsel %vm2364, 1, 0
      %v2381 = vsel %vm2365, 1, 0
      %v2382 = vsel %vm2366, 1, 0
      %v2383 = vsel %vm2367, 1, 0
      %v2384 = vsel %vm2368, 1, 0
      %v2385 = vsel %vm2369, 1, 0
      %v2386 = vsel %vm2370, 1, 0
      %v2387 = vsel %vm2371, 1, 0
      %v2388 = vsel %vm2372, 1, 0
      %v2389 = vsel %vm2373, 1, 0
      %v2390 = vsel %vm2374, 1, 0
      %v2391 = vsel %vm2375, 1, 0
      %v2392 = vcvt.s32.f32 %v2376
      %v2393 = vcvt.s32.f32 %v2377
      %v2394 = vcvt.s32.f32 %v2378
      %v2395 = vcvt.s32.f32 %v2379
      %v2396 = vcvt.s32.f32 %v2380
      %v2397 = vcvt.s32.f32 %v2381
      %v2398 = vcvt.s32.f32 %v2382
      %v2399 = vcvt.s32.f32 %v2383
      %v2400 = vcvt.s32.f32 %v2384
      %v2401 = vcvt.s32.f32 %v2385
      %v2402 = vcvt.s32.f32 %v2386
      %v2403 = vcvt.s32.f32 %v2387
      %v2404 = vcvt.s32.f32 %v2388
      %v2405 = vcvt.s32.f32 %v2389
      %v2406 = vcvt.s32.f32 %v2390
      %v2407 = vcvt.s32.f32 %v2391
      %2408 = vmatprep.subr.mxu0 0.0
      %2409 = vmatpush1.msra.mxu0 %v2392
      %2410 = vmatprep.subr.mxu0 0.0
      %2411 = vmatpush1.msra.mxu0 %v2393
      %2412 = vmatprep.subr.mxu0 0.0
      %2413 = vmatpush1.msra.mxu0 %v2394
      %2414 = vmatprep.subr.mxu0 0.0
      %2415 = vmatpush1.msra.mxu0 %v2395
      %2416 = vmatprep.subr.mxu0 0.0
      %2417 = vmatpush1.msra.mxu0 %v2396
      %2418 = vmatprep.subr.mxu0 0.0
      %2419 = vmatpush1.msra.mxu0 %v2397
      %2420 = vmatprep.subr.mxu0 0.0
      %2421 = vmatpush1.msra.mxu0 %v2398
      %2422 = vmatprep.subr.mxu0 0.0
      %2423 = vmatpush1.msra.mxu0 %v2399
      %2424 = vmatprep.subr.mxu0 0.0
      %2425 = vmatpush1.msra.mxu0 %v2400
      %2426 = vmatprep.subr.mxu0 0.0
      %2427 = vmatpush1.msra.mxu0 %v2401
      %2428 = vmatprep.subr.mxu0 0.0
      %2429 = vmatpush1.msra.mxu0 %v2402
      %2430 = vmatprep.subr.mxu0 0.0
      %2431 = vmatpush1.msra.mxu0 %v2403
      %2432 = vmatprep.subr.mxu0 0.0
      %2433 = vmatpush1.msra.mxu0 %v2404
      %2434 = vmatprep.subr.mxu0 0.0
      %2435 = vmatpush1.msra.mxu0 %v2405
      %2436 = vmatprep.subr.mxu0 0.0
      %2437 = vmatpush1.msra.mxu0 %v2406
      %2438 = vmatprep.subr.mxu0 0.0
      %2439 = vmatpush1.msra.mxu0 %v2407
      %2440 = vmatprep.subr.mxu0 0.0
      %2441 = vmatpush1.msra.mxu0 0.0
      %2442 = vmatprep.subr.mxu0 0.0
      %2443 = vmatpush1.msra.mxu0 0.0
      %2444 = vmatprep.subr.mxu0 0.0
      %2445 = vmatpush1.msra.mxu0 0.0
      %2446 = vmatprep.subr.mxu0 0.0
      %2447 = vmatpush1.msra.mxu0 0.0
      %2448 = vmatprep.subr.mxu0 0.0
      %2449 = vmatpush1.msra.mxu0 0.0
      %2450 = vmatprep.subr.mxu0 0.0
      %2451 = vmatpush1.msra.mxu0 0.0
      %2452 = vmatprep.subr.mxu0 0.0
      %2453 = vmatpush1.msra.mxu0 0.0
      %2454 = vmatprep.subr.mxu0 0.0
      %2455 = vmatpush1.msra.mxu0 0.0
      %2456 = vmatprep.subr.mxu0 0.0
      %2457 = vmatpush1.msra.mxu0 0.0
      %2458 = vmatprep.subr.mxu0 0.0
      %2459 = vmatpush1.msra.mxu0 0.0
      %2460 = vmatprep.subr.mxu0 0.0
      %2461 = vmatpush1.msra.mxu0 0.0
      %2462 = vmatprep.subr.mxu0 0.0
      %2463 = vmatpush1.msra.mxu0 0.0
      %2464 = vmatprep.subr.mxu0 0.0
      %2465 = vmatpush1.msra.mxu0 0.0
      %2466 = vmatprep.subr.mxu0 0.0
      %2467 = vmatpush1.msra.mxu0 0.0
      %2468 = vmatprep.subr.mxu0 0.0
      %2469 = vmatpush1.msra.mxu0 0.0
      %2470 = vmatprep.subr.mxu0 0.0
      %2471 = vmatpush1.msra.mxu0 0.0
      %2472 = vmatprep.mubr.f32.mxu0 0.0
      %2473 = vmatmul.mubr.f32.gmra.mrb[0].mxu0 %v2238
      %v2474 = vpop.f32.mrb[0].mxu0
      %v2475 = vadd.f32 0.0, %v2474
      %v2476 = vpop.f32.mrb[0].mxu0
      %2477 = vdwg.mxu0
      %s2478 = scalar_lea.vmem %s11, 8
      %v2479 = vld [vmem:[%s2478] sm:$0xff]
      %v2481 = vsel %vm1445, %v2479, 0
      %2483 = vmatprep.subr.mxu0 0.0
      %2484 = vmatpush1.msra.mxu0 %v2475
      %2485 = vmatprep.subr.mxu0 0.0
      %2486 = vmatpush1.msra.mxu0 0.0
      %2487 = vmatprep.subr.mxu0 0.0
      %2488 = vmatpush1.msra.mxu0 0.0
      %2489 = vmatprep.subr.mxu0 0.0
      %2490 = vmatpush1.msra.mxu0 0.0
      %2491 = vmatprep.subr.mxu0 0.0
      %2492 = vmatpush1.msra.mxu0 0.0
      %2493 = vmatprep.subr.mxu0 0.0
      %2494 = vmatpush1.msra.mxu0 0.0
      %2495 = vmatprep.subr.mxu0 0.0
      %2496 = vmatpush1.msra.mxu0 0.0
      %2497 = vmatprep.subr.mxu0 0.0
      %2498 = vmatpush1.msra.mxu0 0.0
      %2499 = vmatprep.subr.mxu0 0.0
      %2500 = vmatpush1.msra.mxu0 0.0
      %2501 = vmatprep.subr.mxu0 0.0
      %2502 = vmatpush1.msra.mxu0 0.0
      %2503 = vmatprep.subr.mxu0 0.0
      %2504 = vmatpush1.msra.mxu0 0.0
      %2505 = vmatprep.subr.mxu0 0.0
      %2506 = vmatpush1.msra.mxu0 0.0
      %2507 = vmatprep.subr.mxu0 0.0
      %2508 = vmatpush1.msra.mxu0 0.0
      %2509 = vmatprep.subr.mxu0 0.0
      %2510 = vmatpush1.msra.mxu0 0.0
      %2511 = vmatprep.subr.mxu0 0.0
      %2512 = vmatpush1.msra.mxu0 0.0
      %2513 = vmatprep.subr.mxu0 0.0
      %2514 = vmatpush1.msra.mxu0 0.0
      %2515 = vmatprep.subr.mxu0 0.0
      %2516 = vmatpush1.msra.mxu0 0.0
      %2517 = vmatprep.subr.mxu0 0.0
      %2518 = vmatpush1.msra.mxu0 0.0
      %2519 = vmatprep.subr.mxu0 0.0
      %2520 = vmatpush1.msra.mxu0 0.0
      %2521 = vmatprep.subr.mxu0 0.0
      %2522 = vmatpush1.msra.mxu0 0.0
      %2523 = vmatprep.subr.mxu0 0.0
      %2524 = vmatpush1.msra.mxu0 0.0
      %2525 = vmatprep.subr.mxu0 0.0
      %2526 = vmatpush1.msra.mxu0 0.0
      %2527 = vmatprep.subr.mxu0 0.0
      %2528 = vmatpush1.msra.mxu0 0.0
      %2529 = vmatprep.subr.mxu0 0.0
      %2530 = vmatpush1.msra.mxu0 0.0
      %2531 = vmatprep.subr.mxu0 0.0
      %2532 = vmatpush1.msra.mxu0 0.0
      %2533 = vmatprep.subr.mxu0 0.0
      %2534 = vmatpush1.msra.mxu0 0.0
      %2535 = vmatprep.subr.mxu0 0.0
      %2536 = vmatpush1.msra.mxu0 0.0
      %2537 = vmatprep.subr.mxu0 0.0
      %2538 = vmatpush1.msra.mxu0 0.0
      %2539 = vmatprep.subr.mxu0 0.0
      %2540 = vmatpush1.msra.mxu0 0.0
      %2541 = vmatprep.subr.mxu0 0.0
      %2542 = vmatpush1.msra.mxu0 0.0
      %2543 = vmatprep.subr.mxu0 0.0
      %2544 = vmatpush1.msra.mxu0 0.0
      %2545 = vmatprep.subr.mxu0 0.0
      %2546 = vmatpush1.msra.mxu0 0.0
      %2547 = vmatprep.mubr.f32.mxu0 0.0
      %2548 = vmatmul.mubr.f32.gmra.mrb[0].mxu0 %v2481
      %v2549 = vpop.f32.mrb[0].mxu0
      %v2550 = vadd.f32 0.0, %v2549
      %v2551 = vpop.f32.mrb[0].mxu0
      %2552 = vdwg.mxu0
      %v2554 = vsel %vm1445, %v2359, 0
      %2556 = vmatprep.subr.mxu0 0.0
      %2557 = vmatpush1.msra.mxu0 %v2356
      %2558 = vmatprep.subr.mxu0 0.0
      %2559 = vmatpush1.msra.mxu0 0.0
      %2560 = vmatprep.subr.mxu0 0.0
      %2561 = vmatpush1.msra.mxu0 0.0
      %2562 = vmatprep.subr.mxu0 0.0
      %2563 = vmatpush1.msra.mxu0 0.0
      %2564 = vmatprep.subr.mxu0 0.0
      %2565 = vmatpush1.msra.mxu0 0.0
      %2566 = vmatprep.subr.mxu0 0.0
      %2567 = vmatpush1.msra.mxu0 0.0
      %2568 = vmatprep.subr.mxu0 0.0
      %2569 = vmatpush1.msra.mxu0 0.0
      %2570 = vmatprep.subr.mxu0 0.0
      %2571 = vmatpush1.msra.mxu0 0.0
      %2572 = vmatprep.subr.mxu0 0.0
      %2573 = vmatpush1.msra.mxu0 0.0
      %2574 = vmatprep.subr.mxu0 0.0
      %2575 = vmatpush1.msra.mxu0 0.0
      %2576 = vmatprep.subr.mxu0 0.0
      %2577 = vmatpush1.msra.mxu0 0.0
      %2578 = vmatprep.subr.mxu0 0.0
      %2579 = vmatpush1.msra.mxu0 0.0
      %2580 = vmatprep.subr.mxu0 0.0
      %2581 = vmatpush1.msra.mxu0 0.0
      %2582 = vmatprep.subr.mxu0 0.0
      %2583 = vmatpush1.msra.mxu0 0.0
      %2584 = vmatprep.subr.mxu0 0.0
      %2585 = vmatpush1.msra.mxu0 0.0
      %2586 = vmatprep.subr.mxu0 0.0
      %2587 = vmatpush1.msra.mxu0 0.0
      %2588 = vmatprep.subr.mxu0 0.0
      %2589 = vmatpush1.msra.mxu0 0.0
      %2590 = vmatprep.subr.mxu0 0.0
      %2591 = vmatpush1.msra.mxu0 0.0
      %2592 = vmatprep.subr.mxu0 0.0
      %2593 = vmatpush1.msra.mxu0 0.0
      %2594 = vmatprep.subr.mxu0 0.0
      %2595 = vmatpush1.msra.mxu0 0.0
      %2596 = vmatprep.subr.mxu0 0.0
      %2597 = vmatpush1.msra.mxu0 0.0
      %2598 = vmatprep.subr.mxu0 0.0
      %2599 = vmatpush1.msra.mxu0 0.0
      %2600 = vmatprep.subr.mxu0 0.0
      %2601 = vmatpush1.msra.mxu0 0.0
      %2602 = vmatprep.subr.mxu0 0.0
      %2603 = vmatpush1.msra.mxu0 0.0
      %2604 = vmatprep.subr.mxu0 0.0
      %2605 = vmatpush1.msra.mxu0 0.0
      %2606 = vmatprep.subr.mxu0 0.0
      %2607 = vmatpush1.msra.mxu0 0.0
      %2608 = vmatprep.subr.mxu0 0.0
      %2609 = vmatpush1.msra.mxu0 0.0
      %2610 = vmatprep.subr.mxu0 0.0
      %2611 = vmatpush1.msra.mxu0 0.0
      %2612 = vmatprep.subr.mxu0 0.0
      %2613 = vmatpush1.msra.mxu0 0.0
      %2614 = vmatprep.subr.mxu0 0.0
      %2615 = vmatpush1.msra.mxu0 0.0
      %2616 = vmatprep.subr.mxu0 0.0
      %2617 = vmatpush1.msra.mxu0 0.0
      %2618 = vmatprep.subr.mxu0 0.0
      %2619 = vmatpush1.msra.mxu0 0.0
      %2620 = vmatprep.mubr.f32.mxu0 0.0
      %2621 = vmatmul.mubr.f32.gmra.mrb[0].mxu0 %v2554
      %v2622 = vpop.f32.mrb[0].mxu0
      %v2623 = vadd.f32 %v2550, %v2622
      %v2624 = vpop.f32.mrb[0].mxu0
      %2625 = vdwg.mxu0
      %v2626 = vadd.s32 %v2239, 1
      %vm2627 = vcmp.eq.s32.totalorder %v1179, %v2626
      %vm2628 = vcmp.eq.s32.totalorder %v1188, %v2626
      %vm2629 = vcmp.eq.s32.totalorder %v1189, %v2626
      %vm2630 = vcmp.eq.s32.totalorder %v1190, %v2626
      %vm2631 = vcmp.eq.s32.totalorder %v1191, %v2626
      %vm2632 = vcmp.eq.s32.totalorder %v1192, %v2626
      %vm2633 = vcmp.eq.s32.totalorder %v1193, %v2626
      %vm2634 = vcmp.eq.s32.totalorder %v1194, %v2626
      %vm2635 = vcmp.eq.s32.totalorder %v1195, %v2626
      %vm2636 = vcmp.eq.s32.totalorder %v1196, %v2626
      %vm2637 = vcmp.eq.s32.totalorder %v1197, %v2626
      %vm2638 = vcmp.eq.s32.totalorder %v1198, %v2626
      %vm2639 = vcmp.eq.s32.totalorder %v1199, %v2626
      %vm2640 = vcmp.eq.s32.totalorder %v1200, %v2626
      %vm2641 = vcmp.eq.s32.totalorder %v1201, %v2626
      %vm2642 = vcmp.eq.s32.totalorder %v1202, %v2626
      %v2643 = vsel %vm2627, 1, 0
      %v2644 = vsel %vm2628, 1, 0
      %v2645 = vsel %vm2629, 1, 0
      %v2646 = vsel %vm2630, 1, 0
      %v2647 = vsel %vm2631, 1, 0
      %v2648 = vsel %vm2632, 1, 0
      %v2649 = vsel %vm2633, 1, 0
      %v2650 = vsel %vm2634, 1, 0
      %v2651 = vsel %vm2635, 1, 0
      %v2652 = vsel %vm2636, 1, 0
      %v2653 = vsel %vm2637, 1, 0
      %v2654 = vsel %vm2638, 1, 0
      %v2655 = vsel %vm2639, 1, 0
      %v2656 = vsel %vm2640, 1, 0
      %v2657 = vsel %vm2641, 1, 0
      %v2658 = vsel %vm2642, 1, 0
      %v2659 = vcvt.s32.f32 %v2643
      %v2660 = vcvt.s32.f32 %v2644
      %v2661 = vcvt.s32.f32 %v2645
      %v2662 = vcvt.s32.f32 %v2646
      %v2663 = vcvt.s32.f32 %v2647
      %v2664 = vcvt.s32.f32 %v2648
      %v2665 = vcvt.s32.f32 %v2649
      %v2666 = vcvt.s32.f32 %v2650
      %v2667 = vcvt.s32.f32 %v2651
      %v2668 = vcvt.s32.f32 %v2652
      %v2669 = vcvt.s32.f32 %v2653
      %v2670 = vcvt.s32.f32 %v2654
      %v2671 = vcvt.s32.f32 %v2655
      %v2672 = vcvt.s32.f32 %v2656
      %v2673 = vcvt.s32.f32 %v2657
      %v2674 = vcvt.s32.f32 %v2658
      %2675 = vmatprep.subr.mxu0 0.0
      %2676 = vmatpush1.msra.mxu0 %v2659
      %2677 = vmatprep.subr.mxu0 0.0
      %2678 = vmatpush1.msra.mxu0 %v2660
      %2679 = vmatprep.subr.mxu0 0.0
      %2680 = vmatpush1.msra.mxu0 %v2661
      %2681 = vmatprep.subr.mxu0 0.0
      %2682 = vmatpush1.msra.mxu0 %v2662
      %2683 = vmatprep.subr.mxu0 0.0
      %2684 = vmatpush1.msra.mxu0 %v2663
      %2685 = vmatprep.subr.mxu0 0.0
      %2686 = vmatpush1.msra.mxu0 %v2664
      %2687 = vmatprep.subr.mxu0 0.0
      %2688 = vmatpush1.msra.mxu0 %v2665
      %2689 = vmatprep.subr.mxu0 0.0
      %2690 = vmatpush1.msra.mxu0 %v2666
      %2691 = vmatprep.subr.mxu0 0.0
      %2692 = vmatpush1.msra.mxu0 %v2667
      %2693 = vmatprep.subr.mxu0 0.0
      %2694 = vmatpush1.msra.mxu0 %v2668
      %2695 = vmatprep.subr.mxu0 0.0
      %2696 = vmatpush1.msra.mxu0 %v2669
      %2697 = vmatprep.subr.mxu0 0.0
      %2698 = vmatpush1.msra.mxu0 %v2670
      %2699 = vmatprep.subr.mxu0 0.0
      %2700 = vmatpush1.msra.mxu0 %v2671
      %2701 = vmatprep.subr.mxu0 0.0
      %2702 = vmatpush1.msra.mxu0 %v2672
      %2703 = vmatprep.subr.mxu0 0.0
      %2704 = vmatpush1.msra.mxu0 %v2673
      %2705 = vmatprep.subr.mxu0 0.0
      %2706 = vmatpush1.msra.mxu0 %v2674
      %2707 = vmatprep.subr.mxu0 0.0
      %2708 = vmatpush1.msra.mxu0 0.0
      %2709 = vmatprep.subr.mxu0 0.0
      %2710 = vmatpush1.msra.mxu0 0.0
      %2711 = vmatprep.subr.mxu0 0.0
      %2712 = vmatpush1.msra.mxu0 0.0
      %2713 = vmatprep.subr.mxu0 0.0
      %2714 = vmatpush1.msra.mxu0 0.0
      %2715 = vmatprep.subr.mxu0 0.0
      %2716 = vmatpush1.msra.mxu0 0.0
      %2717 = vmatprep.subr.mxu0 0.0
      %2718 = vmatpush1.msra.mxu0 0.0
      %2719 = vmatprep.subr.mxu0 0.0
      %2720 = vmatpush1.msra.mxu0 0.0
      %2721 = vmatprep.subr.mxu0 0.0
      %2722 = vmatpush1.msra.mxu0 0.0
      %2723 = vmatprep.subr.mxu0 0.0
      %2724 = vmatpush1.msra.mxu0 0.0
      %2725 = vmatprep.subr.mxu0 0.0
      %2726 = vmatpush1.msra.mxu0 0.0
      %2727 = vmatprep.subr.mxu0 0.0
      %2728 = vmatpush1.msra.mxu0 0.0
      %2729 = vmatprep.subr.mxu0 0.0
      %2730 = vmatpush1.msra.mxu0 0.0
      %2731 = vmatprep.subr.mxu0 0.0
      %2732 = vmatpush1.msra.mxu0 0.0
      %2733 = vmatprep.subr.mxu0 0.0
      %2734 = vmatpush1.msra.mxu0 0.0
      %2735 = vmatprep.subr.mxu0 0.0
      %2736 = vmatpush1.msra.mxu0 0.0
      %2737 = vmatprep.subr.mxu0 0.0
      %2738 = vmatpush1.msra.mxu0 0.0
      %2739 = vmatprep.mubr.f32.mxu0 0.0
      %2740 = vmatmul.mubr.f32.gmra.mrb[0].mxu0 %v2238
      %v2741 = vpop.f32.mrb[0].mxu0
      %v2742 = vadd.f32 0.0, %v2741
      %v2743 = vpop.f32.mrb[0].mxu0
      %2744 = vdwg.mxu0
      %s2745 = scalar_lea.vmem %s11, 16
      %v2746 = vld [vmem:[%s2745] sm:$0xff]
      %v2748 = vsel %vm1445, %v2746, 0
      %2750 = vmatprep.subr.mxu0 0.0
      %2751 = vmatpush1.msra.mxu0 %v2742
      %2752 = vmatprep.subr.mxu0 0.0
      %2753 = vmatpush1.msra.mxu0 0.0
      %2754 = vmatprep.subr.mxu0 0.0
      %2755 = vmatpush1.msra.mxu0 0.0
      %2756 = vmatprep.subr.mxu0 0.0
      %2757 = vmatpush1.msra.mxu0 0.0
      %2758 = vmatprep.subr.mxu0 0.0
      %2759 = vmatpush1.msra.mxu0 0.0
      %2760 = vmatprep.subr.mxu0 0.0
      %2761 = vmatpush1.msra.mxu0 0.0
      %2762 = vmatprep.subr.mxu0 0.0
      %2763 = vmatpush1.msra.mxu0 0.0
      %2764 = vmatprep.subr.mxu0 0.0
      %2765 = vmatpush1.msra.mxu0 0.0
      %2766 = vmatprep.subr.mxu0 0.0
      %2767 = vmatpush1.msra.mxu0 0.0
      %2768 = vmatprep.subr.mxu0 0.0
      %2769 = vmatpush1.msra.mxu0 0.0
      %2770 = vmatprep.subr.mxu0 0.0
      %2771 = vmatpush1.msra.mxu0 0.0
      %2772 = vmatprep.subr.mxu0 0.0
      %2773 = vmatpush1.msra.mxu0 0.0
      %2774 = vmatprep.subr.mxu0 0.0
      %2775 = vmatpush1.msra.mxu0 0.0
      %2776 = vmatprep.subr.mxu0 0.0
      %2777 = vmatpush1.msra.mxu0 0.0
      %2778 = vmatprep.subr.mxu0 0.0
      %2779 = vmatpush1.msra.mxu0 0.0
      %2780 = vmatprep.subr.mxu0 0.0
      %2781 = vmatpush1.msra.mxu0 0.0
      %2782 = vmatprep.subr.mxu0 0.0
      %2783 = vmatpush1.msra.mxu0 0.0
      %2784 = vmatprep.subr.mxu0 0.0
      %2785 = vmatpush1.msra.mxu0 0.0
      %2786 = vmatprep.subr.mxu0 0.0
      %2787 = vmatpush1.msra.mxu0 0.0
      %2788 = vmatprep.subr.mxu0 0.0
      %2789 = vmatpush1.msra.mxu0 0.0
      %2790 = vmatprep.subr.mxu0 0.0
      %2791 = vmatpush1.msra.mxu0 0.0
      %2792 = vmatprep.subr.mxu0 0.0
      %2793 = vmatpush1.msra.mxu0 0.0
      %2794 = vmatprep.subr.mxu0 0.0
      %2795 = vmatpush1.msra.mxu0 0.0
      %2796 = vmatprep.subr.mxu0 0.0
      %2797 = vmatpush1.msra.mxu0 0.0
      %2798 = vmatprep.subr.mxu0 0.0
      %2799 = vmatpush1.msra.mxu0 0.0
      %2800 = vmatprep.subr.mxu0 0.0
      %2801 = vmatpush1.msra.mxu0 0.0
      %2802 = vmatprep.subr.mxu0 0.0
      %2803 = vmatpush1.msra.mxu0 0.0
      %2804 = vmatprep.subr.mxu0 0.0
      %2805 = vmatpush1.msra.mxu0 0.0
      %2806 = vmatprep.subr.mxu0 0.0
      %2807 = vmatpush1.msra.mxu0 0.0
      %2808 = vmatprep.subr.mxu0 0.0
      %2809 = vmatpush1.msra.mxu0 0.0
      %2810 = vmatprep.subr.mxu0 0.0
      %2811 = vmatpush1.msra.mxu0 0.0
      %2812 = vmatprep.subr.mxu0 0.0
      %2813 = vmatpush1.msra.mxu0 0.0
      %2814 = vmatprep.mubr.f32.mxu0 0.0
      %2815 = vmatmul.mubr.f32.gmra.mrb[0].mxu0 %v2748
      %v2816 = vpop.f32.mrb[0].mxu0
      %v2817 = vadd.f32 0.0, %v2816
      %v2818 = vpop.f32.mrb[0].mxu0
      %2819 = vdwg.mxu0
      %v2820 = vadd.f32 %v2623, %v2817
      %v2821 = vld [vmem:[%s13] sm:$0xff]
      %2823 = vset.pattern.permute.xlu0 0
      %2824 = vperm.xlu0 %2823, %v2821
      %v2825 = vpop.permute.xlu0 %2824
      %v2827 = vadd.f32 %v2820, %v2825
      %vm2828 = vcmask 523264
      %v2830 = vsel %vm2828, %v2827, 0
      %2832 = vmatprep.subr.mxu0 0.0
      %2833 = vmatpush1.msra.mxu0 %v1238
      %2834 = vmatprep.subr.mxu0 0.0
      %2835 = vmatpush1.msra.mxu0 %v1239
      %2836 = vmatprep.subr.mxu0 0.0
      %2837 = vmatpush1.msra.mxu0 %v1240
      %2838 = vmatprep.subr.mxu0 0.0
      %2839 = vmatpush1.msra.mxu0 %v1241
      %2840 = vmatprep.subr.mxu0 0.0
      %2841 = vmatpush1.msra.mxu0 %v1242
      %2842 = vmatprep.subr.mxu0 0.0
      %2843 = vmatpush1.msra.mxu0 %v1243
      %2844 = vmatprep.subr.mxu0 0.0
      %2845 = vmatpush1.msra.mxu0 %v1244
      %2846 = vmatprep.subr.mxu0 0.0
      %2847 = vmatpush1.msra.mxu0 %v1245
      %2848 = vmatprep.subr.mxu0 0.0
      %2849 = vmatpush1.msra.mxu0 0.0
      %2850 = vmatprep.subr.mxu0 0.0
      %2851 = vmatpush1.msra.mxu0 0.0
      %2852 = vmatprep.subr.mxu0 0.0
      %2853 = vmatpush1.msra.mxu0 0.0
      %2854 = vmatprep.subr.mxu0 0.0
      %2855 = vmatpush1.msra.mxu0 0.0
      %2856 = vmatprep.subr.mxu0 0.0
      %2857 = vmatpush1.msra.mxu0 0.0
      %2858 = vmatprep.subr.mxu0 0.0
      %2859 = vmatpush1.msra.mxu0 0.0
      %2860 = vmatprep.subr.mxu0 0.0
      %2861 = vmatpush1.msra.mxu0 0.0
      %2862 = vmatprep.subr.mxu0 0.0
      %2863 = vmatpush1.msra.mxu0 0.0
      %2864 = vmatprep.subr.mxu0 0.0
      %2865 = vmatpush1.msra.mxu0 0.0
      %2866 = vmatprep.subr.mxu0 0.0
      %2867 = vmatpush1.msra.mxu0 0.0
      %2868 = vmatprep.subr.mxu0 0.0
      %2869 = vmatpush1.msra.mxu0 0.0
      %2870 = vmatprep.subr.mxu0 0.0
      %2871 = vmatpush1.msra.mxu0 0.0
      %2872 = vmatprep.subr.mxu0 0.0
      %2873 = vmatpush1.msra.mxu0 0.0
      %2874 = vmatprep.subr.mxu0 0.0
      %2875 = vmatpush1.msra.mxu0 0.0
      %2876 = vmatprep.subr.mxu0 0.0
      %2877 = vmatpush1.msra.mxu0 0.0
      %2878 = vmatprep.subr.mxu0 0.0
      %2879 = vmatpush1.msra.mxu0 0.0
      %2880 = vmatprep.subr.mxu0 0.0
      %2881 = vmatpush1.msra.mxu0 0.0
      %2882 = vmatprep.subr.mxu0 0.0
      %2883 = vmatpush1.msra.mxu0 0.0
      %2884 = vmatprep.subr.mxu0 0.0
      %2885 = vmatpush1.msra.mxu0 0.0
      %2886 = vmatprep.subr.mxu0 0.0
      %2887 = vmatpush1.msra.mxu0 0.0
      %2888 = vmatprep.subr.mxu0 0.0
      %2889 = vmatpush1.msra.mxu0 0.0
      %2890 = vmatprep.subr.mxu0 0.0
      %2891 = vmatpush1.msra.mxu0 0.0
      %2892 = vmatprep.subr.mxu0 0.0
      %2893 = vmatpush1.msra.mxu0 0.0
      %2894 = vmatprep.subr.mxu0 0.0
      %2895 = vmatpush1.msra.mxu0 0.0
      %2896 = vmatprep.mubr.f32.mxu0 0.0
      %2897 = vmatmul.mubr.f32.gmra.mrb[0].mxu0 %v2830
      %v2898 = vpop.f32.mrb[0].mxu0
      %v2899 = vadd.f32 0.0, %v2898
      %v2900 = vpop.f32.mrb[0].mxu0
      %2901 = vdwg.mxu0
      %v2902 = vld [vmem:[%s15] sm:$0xff]
      %2903 = vmatprep.subr.mxu0 0.0
      %2904 = vmatpush1.msra.mxu0 %v1357
      %2905 = vmatprep.subr.mxu0 0.0
      %2906 = vmatpush1.msra.mxu0 %v1358
      %2907 = vmatprep.subr.mxu0 0.0
      %2908 = vmatpush1.msra.mxu0 %v1359
      %2909 = vmatprep.subr.mxu0 0.0
      %2910 = vmatpush1.msra.mxu0 %v1360
      %2911 = vmatprep.subr.mxu0 0.0
      %2912 = vmatpush1.msra.mxu0 %v1361
      %2913 = vmatprep.subr.mxu0 0.0
      %2914 = vmatpush1.msra.mxu0 %v1362
      %2915 = vmatprep.subr.mxu0 0.0
      %2916 = vmatpush1.msra.mxu0 %v1363
      %2917 = vmatprep.subr.mxu0 0.0
      %2918 = vmatpush1.msra.mxu0 %v1364
      %2919 = vmatprep.subr.mxu0 0.0
      %2920 = vmatpush1.msra.mxu0 0.0
      %2921 = vmatprep.subr.mxu0 0.0
      %2922 = vmatpush1.msra.mxu0 0.0
      %2923 = vmatprep.subr.mxu0 0.0
      %2924 = vmatpush1.msra.mxu0 0.0
      %2925 = vmatprep.subr.mxu0 0.0
      %2926 = vmatpush1.msra.mxu0 0.0
      %2927 = vmatprep.subr.mxu0 0.0
      %2928 = vmatpush1.msra.mxu0 0.0
      %2929 = vmatprep.subr.mxu0 0.0
      %2930 = vmatpush1.msra.mxu0 0.0
      %2931 = vmatprep.subr.mxu0 0.0
      %2932 = vmatpush1.msra.mxu0 0.0
      %2933 = vmatprep.subr.mxu0 0.0
      %2934 = vmatpush1.msra.mxu0 0.0
      %2935 = vmatprep.subr.mxu0 0.0
      %2936 = vmatpush1.msra.mxu0 0.0
      %2937 = vmatprep.subr.mxu0 0.0
      %2938 = vmatpush1.msra.mxu0 0.0
      %2939 = vmatprep.subr.mxu0 0.0
      %2940 = vmatpush1.msra.mxu0 0.0
      %2941 = vmatprep.subr.mxu0 0.0
      %2942 = vmatpush1.msra.mxu0 0.0
      %2943 = vmatprep.subr.mxu0 0.0
      %2944 = vmatpush1.msra.mxu0 0.0
      %2945 = vmatprep.subr.mxu0 0.0
      %2946 = vmatpush1.msra.mxu0 0.0
      %2947 = vmatprep.subr.mxu0 0.0
      %2948 = vmatpush1.msra.mxu0 0.0
      %2949 = vmatprep.subr.mxu0 0.0
      %2950 = vmatpush1.msra.mxu0 0.0
      %2951 = vmatprep.subr.mxu0 0.0
      %2952 = vmatpush1.msra.mxu0 0.0
      %2953 = vmatprep.subr.mxu0 0.0
      %2954 = vmatpush1.msra.mxu0 0.0
      %2955 = vmatprep.subr.mxu0 0.0
      %2956 = vmatpush1.msra.mxu0 0.0
      %2957 = vmatprep.subr.mxu0 0.0
      %2958 = vmatpush1.msra.mxu0 0.0
      %2959 = vmatprep.subr.mxu0 0.0
      %2960 = vmatpush1.msra.mxu0 0.0
      %2961 = vmatprep.subr.mxu0 0.0
      %2962 = vmatpush1.msra.mxu0 0.0
      %2963 = vmatprep.subr.mxu0 0.0
      %2964 = vmatpush1.msra.mxu0 0.0
      %2965 = vmatprep.subr.mxu0 0.0
      %2966 = vmatpush1.msra.mxu0 0.0
      %2967 = vmatprep.mubr.f32.mxu0 0.0
      %2968 = vmatmul.mubr.f32.gmra.mrb[0].mxu0 %v2830
      %v2969 = vpop.f32.mrb[0].mxu0
      %v2970 = vadd.f32 0.0, %v2969
      %v2971 = vpop.f32.mrb[0].mxu0
      %2972 = vdwg.mxu0
      %s2973 = scalar_lea.vmem %s15, 8
      %v2974 = vld [vmem:[%s2973] sm:$0xff]
      %v2976 = vsel %vm1445, %v2974, 0
      %2978 = vmatprep.subr.mxu0 0.0
      %2979 = vmatpush1.msra.mxu0 %v2970
      %2980 = vmatprep.subr.mxu0 0.0
      %2981 = vmatpush1.msra.mxu0 0.0
      %2982 = vmatprep.subr.mxu0 0.0
      %2983 = vmatpush1.msra.mxu0 0.0
      %2984 = vmatprep.subr.mxu0 0.0
      %2985 = vmatpush1.msra.mxu0 0.0
      %2986 = vmatprep.subr.mxu0 0.0
      %2987 = vmatpush1.msra.mxu0 0.0
      %2988 = vmatprep.subr.mxu0 0.0
      %2989 = vmatpush1.msra.mxu0 0.0
      %2990 = vmatprep.subr.mxu0 0.0
      %2991 = vmatpush1.msra.mxu0 0.0
      %2992 = vmatprep.subr.mxu0 0.0
      %2993 = vmatpush1.msra.mxu0 0.0
      %2994 = vmatprep.subr.mxu0 0.0
      %2995 = vmatpush1.msra.mxu0 0.0
      %2996 = vmatprep.subr.mxu0 0.0
      %2997 = vmatpush1.msra.mxu0 0.0
      %2998 = vmatprep.subr.mxu0 0.0
      %2999 = vmatpush1.msra.mxu0 0.0
      %3000 = vmatprep.subr.mxu0 0.0
      %3001 = vmatpush1.msra.mxu0 0.0
      %3002 = vmatprep.subr.mxu0 0.0
      %3003 = vmatpush1.msra.mxu0 0.0
      %3004 = vmatprep.subr.mxu0 0.0
      %3005 = vmatpush1.msra.mxu0 0.0
      %3006 = vmatprep.subr.mxu0 0.0
      %3007 = vmatpush1.msra.mxu0 0.0
      %3008 = vmatprep.subr.mxu0 0.0
      %3009 = vmatpush1.msra.mxu0 0.0
      %3010 = vmatprep.subr.mxu0 0.0
      %3011 = vmatpush1.msra.mxu0 0.0
      %3012 = vmatprep.subr.mxu0 0.0
      %3013 = vmatpush1.msra.mxu0 0.0
      %3014 = vmatprep.subr.mxu0 0.0
      %3015 = vmatpush1.msra.mxu0 0.0
      %3016 = vmatprep.subr.mxu0 0.0
      %3017 = vmatpush1.msra.mxu0 0.0
      %3018 = vmatprep.subr.mxu0 0.0
      %3019 = vmatpush1.msra.mxu0 0.0
      %3020 = vmatprep.subr.mxu0 0.0
      %3021 = vmatpush1.msra.mxu0 0.0
      %3022 = vmatprep.subr.mxu0 0.0
      %3023 = vmatpush1.msra.mxu0 0.0
      %3024 = vmatprep.subr.mxu0 0.0
      %3025 = vmatpush1.msra.mxu0 0.0
      %3026 = vmatprep.subr.mxu0 0.0
      %3027 = vmatpush1.msra.mxu0 0.0
      %3028 = vmatprep.subr.mxu0 0.0
      %3029 = vmatpush1.msra.mxu0 0.0
      %3030 = vmatprep.subr.mxu0 0.0
      %3031 = vmatpush1.msra.mxu0 0.0
      %3032 = vmatprep.subr.mxu0 0.0
      %3033 = vmatpush1.msra.mxu0 0.0
      %3034 = vmatprep.subr.mxu0 0.0
      %3035 = vmatpush1.msra.mxu0 0.0
      %3036 = vmatprep.subr.mxu0 0.0
      %3037 = vmatpush1.msra.mxu0 0.0
      %3038 = vmatprep.subr.mxu0 0.0
      %3039 = vmatpush1.msra.mxu0 0.0
      %3040 = vmatprep.subr.mxu0 0.0
      %3041 = vmatpush1.msra.mxu0 0.0
      %3042 = vmatprep.mubr.f32.mxu0 0.0
      %3043 = vmatmul.mubr.f32.gmra.mrb[0].mxu0 %v2976
      %v3044 = vpop.f32.mrb[0].mxu0
      %v3045 = vadd.f32 0.0, %v3044
      %v3046 = vpop.f32.mrb[0].mxu0
      %3047 = vdwg.mxu0
      %v3049 = vsel %vm1445, %v2902, 0
      %3051 = vmatprep.subr.mxu0 0.0
      %3052 = vmatpush1.msra.mxu0 %v2899
      %3053 = vmatprep.subr.mxu0 0.0
      %3054 = vmatpush1.msra.mxu0 0.0
      %3055 = vmatprep.subr.mxu0 0.0
      %3056 = vmatpush1.msra.mxu0 0.0
      %3057 = vmatprep.subr.mxu0 0.0
      %3058 = vmatpush1.msra.mxu0 0.0
      %3059 = vmatprep.subr.mxu0 0.0
      %3060 = vmatpush1.msra.mxu0 0.0
      %3061 = vmatprep.subr.mxu0 0.0
      %3062 = vmatpush1.msra.mxu0 0.0
      %3063 = vmatprep.subr.mxu0 0.0
      %3064 = vmatpush1.msra.mxu0 0.0
      %3065 = vmatprep.subr.mxu0 0.0
      %3066 = vmatpush1.msra.mxu0 0.0
      %3067 = vmatprep.subr.mxu0 0.0
      %3068 = vmatpush1.msra.mxu0 0.0
      %3069 = vmatprep.subr.mxu0 0.0
      %3070 = vmatpush1.msra.mxu0 0.0
      %3071 = vmatprep.subr.mxu0 0.0
      %3072 = vmatpush1.msra.mxu0 0.0
      %3073 = vmatprep.subr.mxu0 0.0
      %3074 = vmatpush1.msra.mxu0 0.0
      %3075 = vmatprep.subr.mxu0 0.0
      %3076 = vmatpush1.msra.mxu0 0.0
      %3077 = vmatprep.subr.mxu0 0.0
      %3078 = vmatpush1.msra.mxu0 0.0
      %3079 = vmatprep.subr.mxu0 0.0
      %3080 = vmatpush1.msra.mxu0 0.0
      %3081 = vmatprep.subr.mxu0 0.0
      %3082 = vmatpush1.msra.mxu0 0.0
      %3083 = vmatprep.subr.mxu0 0.0
      %3084 = vmatpush1.msra.mxu0 0.0
      %3085 = vmatprep.subr.mxu0 0.0
      %3086 = vmatpush1.msra.mxu0 0.0
      %3087 = vmatprep.subr.mxu0 0.0
      %3088 = vmatpush1.msra.mxu0 0.0
      %3089 = vmatprep.subr.mxu0 0.0
      %3090 = vmatpush1.msra.mxu0 0.0
      %3091 = vmatprep.subr.mxu0 0.0
      %3092 = vmatpush1.msra.mxu0 0.0
      %3093 = vmatprep.subr.mxu0 0.0
      %3094 = vmatpush1.msra.mxu0 0.0
      %3095 = vmatprep.subr.mxu0 0.0
      %3096 = vmatpush1.msra.mxu0 0.0
      %3097 = vmatprep.subr.mxu0 0.0
      %3098 = vmatpush1.msra.mxu0 0.0
      %3099 = vmatprep.subr.mxu0 0.0
      %3100 = vmatpush1.msra.mxu0 0.0
      %3101 = vmatprep.subr.mxu0 0.0
      %3102 = vmatpush1.msra.mxu0 0.0
      %3103 = vmatprep.subr.mxu0 0.0
      %3104 = vmatpush1.msra.mxu0 0.0
      %3105 = vmatprep.subr.mxu0 0.0
      %3106 = vmatpush1.msra.mxu0 0.0
      %3107 = vmatprep.subr.mxu0 0.0
      %3108 = vmatpush1.msra.mxu0 0.0
      %3109 = vmatprep.subr.mxu0 0.0
      %3110 = vmatpush1.msra.mxu0 0.0
      %3111 = vmatprep.subr.mxu0 0.0
      %3112 = vmatpush1.msra.mxu0 0.0
      %3113 = vmatprep.subr.mxu0 0.0
      %3114 = vmatpush1.msra.mxu0 0.0
      %3115 = vmatprep.mubr.f32.mxu0 0.0
      %3116 = vmatmul.mubr.f32.gmra.mrb[0].mxu0 %v3049
      %v3117 = vpop.f32.mrb[0].mxu0
      %v3118 = vadd.f32 %v3045, %v3117
      %v3119 = vpop.f32.mrb[0].mxu0
      %3120 = vdwg.mxu0
      %3121 = vmatprep.subr.mxu0 0.0
      %3122 = vmatpush1.msra.mxu0 %v1625
      %3123 = vmatprep.subr.mxu0 0.0
      %3124 = vmatpush1.msra.mxu0 %v1626
      %3125 = vmatprep.subr.mxu0 0.0
      %3126 = vmatpush1.msra.mxu0 %v1627
      %3127 = vmatprep.subr.mxu0 0.0
      %3128 = vmatpush1.msra.mxu0 %v1628
      %3129 = vmatprep.subr.mxu0 0.0
      %3130 = vmatpush1.msra.mxu0 %v1629
      %3131 = vmatprep.subr.mxu0 0.0
      %3132 = vmatpush1.msra.mxu0 %v1630
      %3133 = vmatprep.subr.mxu0 0.0
      %3134 = vmatpush1.msra.mxu0 %v1631
      %3135 = vmatprep.subr.mxu0 0.0
      %3136 = vmatpush1.msra.mxu0 %v1632
      %3137 = vmatprep.subr.mxu0 0.0
      %3138 = vmatpush1.msra.mxu0 0.0
      %3139 = vmatprep.subr.mxu0 0.0
      %3140 = vmatpush1.msra.mxu0 0.0
      %3141 = vmatprep.subr.mxu0 0.0
      %3142 = vmatpush1.msra.mxu0 0.0
      %3143 = vmatprep.subr.mxu0 0.0
      %3144 = vmatpush1.msra.mxu0 0.0
      %3145 = vmatprep.subr.mxu0 0.0
      %3146 = vmatpush1.msra.mxu0 0.0
      %3147 = vmatprep.subr.mxu0 0.0
      %3148 = vmatpush1.msra.mxu0 0.0
      %3149 = vmatprep.subr.mxu0 0.0
      %3150 = vmatpush1.msra.mxu0 0.0
      %3151 = vmatprep.subr.mxu0 0.0
      %3152 = vmatpush1.msra.mxu0 0.0
      %3153 = vmatprep.subr.mxu0 0.0
      %3154 = vmatpush1.msra.mxu0 0.0
      %3155 = vmatprep.subr.mxu0 0.0
      %3156 = vmatpush1.msra.mxu0 0.0
      %3157 = vmatprep.subr.mxu0 0.0
      %3158 = vmatpush1.msra.mxu0 0.0
      %3159 = vmatprep.subr.mxu0 0.0
      %3160 = vmatpush1.msra.mxu0 0.0
      %3161 = vmatprep.subr.mxu0 0.0
      %3162 = vmatpush1.msra.mxu0 0.0
      %3163 = vmatprep.subr.mxu0 0.0
      %3164 = vmatpush1.msra.mxu0 0.0
      %3165 = vmatprep.subr.mxu0 0.0
      %3166 = vmatpush1.msra.mxu0 0.0
      %3167 = vmatprep.subr.mxu0 0.0
      %3168 = vmatpush1.msra.mxu0 0.0
      %3169 = vmatprep.subr.mxu0 0.0
      %3170 = vmatpush1.msra.mxu0 0.0
      %3171 = vmatprep.subr.mxu0 0.0
      %3172 = vmatpush1.msra.mxu0 0.0
      %3173 = vmatprep.subr.mxu0 0.0
      %3174 = vmatpush1.msra.mxu0 0.0
      %3175 = vmatprep.subr.mxu0 0.0
      %3176 = vmatpush1.msra.mxu0 0.0
      %3177 = vmatprep.subr.mxu0 0.0
      %3178 = vmatpush1.msra.mxu0 0.0
      %3179 = vmatprep.subr.mxu0 0.0
      %3180 = vmatpush1.msra.mxu0 0.0
      %3181 = vmatprep.subr.mxu0 0.0
      %3182 = vmatpush1.msra.mxu0 0.0
      %3183 = vmatprep.subr.mxu0 0.0
      %3184 = vmatpush1.msra.mxu0 0.0
      %3185 = vmatprep.mubr.f32.mxu0 0.0
      %3186 = vmatmul.mubr.f32.gmra.mrb[0].mxu0 %v2830
      %v3187 = vpop.f32.mrb[0].mxu0
      %v3188 = vadd.f32 0.0, %v3187
      %v3189 = vpop.f32.mrb[0].mxu0
      %3190 = vdwg.mxu0
      %s3191 = scalar_lea.vmem %s15, 16
      %v3192 = vld [vmem:[%s3191] sm:$0xff]
      %v3194 = vsel %vm1445, %v3192, 0
      %3196 = vmatprep.subr.mxu0 0.0
      %3197 = vmatpush1.msra.mxu0 %v3188
      %3198 = vmatprep.subr.mxu0 0.0
      %3199 = vmatpush1.msra.mxu0 0.0
      %3200 = vmatprep.subr.mxu0 0.0
      %3201 = vmatpush1.msra.mxu0 0.0
      %3202 = vmatprep.subr.mxu0 0.0
      %3203 = vmatpush1.msra.mxu0 0.0
      %3204 = vmatprep.subr.mxu0 0.0
      %3205 = vmatpush1.msra.mxu0 0.0
      %3206 = vmatprep.subr.mxu0 0.0
      %3207 = vmatpush1.msra.mxu0 0.0
      %3208 = vmatprep.subr.mxu0 0.0
      %3209 = vmatpush1.msra.mxu0 0.0
      %3210 = vmatprep.subr.mxu0 0.0
      %3211 = vmatpush1.msra.mxu0 0.0
      %3212 = vmatprep.subr.mxu0 0.0
      %3213 = vmatpush1.msra.mxu0 0.0
      %3214 = vmatprep.subr.mxu0 0.0
      %3215 = vmatpush1.msra.mxu0 0.0
      %3216 = vmatprep.subr.mxu0 0.0
      %3217 = vmatpush1.msra.mxu0 0.0
      %3218 = vmatprep.subr.mxu0 0.0
      %3219 = vmatpush1.msra.mxu0 0.0
      %3220 = vmatprep.subr.mxu0 0.0
      %3221 = vmatpush1.msra.mxu0 0.0
      %3222 = vmatprep.subr.mxu0 0.0
      %3223 = vmatpush1.msra.mxu0 0.0
      %3224 = vmatprep.subr.mxu0 0.0
      %3225 = vmatpush1.msra.mxu0 0.0
      %3226 = vmatprep.subr.mxu0 0.0
      %3227 = vmatpush1.msra.mxu0 0.0
      %3228 = vmatprep.subr.mxu0 0.0
      %3229 = vmatpush1.msra.mxu0 0.0
      %3230 = vmatprep.subr.mxu0 0.0
      %3231 = vmatpush1.msra.mxu0 0.0
      %3232 = vmatprep.subr.mxu0 0.0
      %3233 = vmatpush1.msra.mxu0 0.0
      %3234 = vmatprep.subr.mxu0 0.0
      %3235 = vmatpush1.msra.mxu0 0.0
      %3236 = vmatprep.subr.mxu0 0.0
      %3237 = vmatpush1.msra.mxu0 0.0
      %3238 = vmatprep.subr.mxu0 0.0
      %3239 = vmatpush1.msra.mxu0 0.0
      %3240 = vmatprep.subr.mxu0 0.0
      %3241 = vmatpush1.msra.mxu0 0.0
      %3242 = vmatprep.subr.mxu0 0.0
      %3243 = vmatpush1.msra.mxu0 0.0
      %3244 = vmatprep.subr.mxu0 0.0
      %3245 = vmatpush1.msra.mxu0 0.0
      %3246 = vmatprep.subr.mxu0 0.0
      %3247 = vmatpush1.msra.mxu0 0.0
      %3248 = vmatprep.subr.mxu0 0.0
      %3249 = vmatpush1.msra.mxu0 0.0
      %3250 = vmatprep.subr.mxu0 0.0
      %3251 = vmatpush1.msra.mxu0 0.0
      %3252 = vmatprep.subr.mxu0 0.0
      %3253 = vmatpush1.msra.mxu0 0.0
      %3254 = vmatprep.subr.mxu0 0.0
      %3255 = vmatpush1.msra.mxu0 0.0
      %3256 = vmatprep.subr.mxu0 0.0
      %3257 = vmatpush1.msra.mxu0 0.0
      %3258 = vmatprep.subr.mxu0 0.0
      %3259 = vmatpush1.msra.mxu0 0.0
      %3260 = vmatprep.mubr.f32.mxu0 0.0
      %3261 = vmatmul.mubr.f32.gmra.mrb[0].mxu0 %v3194
      %v3262 = vpop.f32.mrb[0].mxu0
      %v3263 = vadd.f32 0.0, %v3262
      %v3264 = vpop.f32.mrb[0].mxu0
      %3265 = vdwg.mxu0
      %v3266 = vadd.f32 %v3118, %v3263
      %v3267 = vld [vmem:[%s17] sm:$0xff]
      %3269 = vset.pattern.permute.xlu0 0
      %3270 = vperm.xlu0 %3269, %v3267
      %v3271 = vpop.permute.xlu0 %3270
      %v3273 = vadd.f32 %v3266, %v3271
      %v3274 = vmax.f32 %v3273, 0.0
      %v3276 = vsel %vm2828, %v3274, 0
      %3278 = vmatprep.subr.mxu0 0.0
      %3279 = vmatpush1.msra.mxu0 %v1238
      %3280 = vmatprep.subr.mxu0 0.0
      %3281 = vmatpush1.msra.mxu0 %v1239
      %3282 = vmatprep.subr.mxu0 0.0
      %3283 = vmatpush1.msra.mxu0 %v1240
      %3284 = vmatprep.subr.mxu0 0.0
      %3285 = vmatpush1.msra.mxu0 %v1241
      %3286 = vmatprep.subr.mxu0 0.0
      %3287 = vmatpush1.msra.mxu0 %v1242
      %3288 = vmatprep.subr.mxu0 0.0
      %3289 = vmatpush1.msra.mxu0 %v1243
      %3290 = vmatprep.subr.mxu0 0.0
      %3291 = vmatpush1.msra.mxu0 %v1244
      %3292 = vmatprep.subr.mxu0 0.0
      %3293 = vmatpush1.msra.mxu0 %v1245
      %3294 = vmatprep.subr.mxu0 0.0
      %3295 = vmatpush1.msra.mxu0 0.0
      %3296 = vmatprep.subr.mxu0 0.0
      %3297 = vmatpush1.msra.mxu0 0.0
      %3298 = vmatprep.subr.mxu0 0.0
      %3299 = vmatpush1.msra.mxu0 0.0
      %3300 = vmatprep.subr.mxu0 0.0
      %3301 = vmatpush1.msra.mxu0 0.0
      %3302 = vmatprep.subr.mxu0 0.0
      %3303 = vmatpush1.msra.mxu0 0.0
      %3304 = vmatprep.subr.mxu0 0.0
      %3305 = vmatpush1.msra.mxu0 0.0
      %3306 = vmatprep.subr.mxu0 0.0
      %3307 = vmatpush1.msra.mxu0 0.0
      %3308 = vmatprep.subr.mxu0 0.0
      %3309 = vmatpush1.msra.mxu0 0.0
      %3310 = vmatprep.subr.mxu0 0.0
      %3311 = vmatpush1.msra.mxu0 0.0
      %3312 = vmatprep.subr.mxu0 0.0
      %3313 = vmatpush1.msra.mxu0 0.0
      %3314 = vmatprep.subr.mxu0 0.0
      %3315 = vmatpush1.msra.mxu0 0.0
      %3316 = vmatprep.subr.mxu0 0.0
      %3317 = vmatpush1.msra.mxu0 0.0
      %3318 = vmatprep.subr.mxu0 0.0
      %3319 = vmatpush1.msra.mxu0 0.0
      %3320 = vmatprep.subr.mxu0 0.0
      %3321 = vmatpush1.msra.mxu0 0.0
      %3322 = vmatprep.subr.mxu0 0.0
      %3323 = vmatpush1.msra.mxu0 0.0
      %3324 = vmatprep.subr.mxu0 0.0
      %3325 = vmatpush1.msra.mxu0 0.0
      %3326 = vmatprep.subr.mxu0 0.0
      %3327 = vmatpush1.msra.mxu0 0.0
      %3328 = vmatprep.subr.mxu0 0.0
      %3329 = vmatpush1.msra.mxu0 0.0
      %3330 = vmatprep.subr.mxu0 0.0
      %3331 = vmatpush1.msra.mxu0 0.0
      %3332 = vmatprep.subr.mxu0 0.0
      %3333 = vmatpush1.msra.mxu0 0.0
      %3334 = vmatprep.subr.mxu0 0.0
      %3335 = vmatpush1.msra.mxu0 0.0
      %3336 = vmatprep.subr.mxu0 0.0
      %3337 = vmatpush1.msra.mxu0 0.0
      %3338 = vmatprep.subr.mxu0 0.0
      %3339 = vmatpush1.msra.mxu0 0.0
      %3340 = vmatprep.subr.mxu0 0.0
      %3341 = vmatpush1.msra.mxu0 0.0
      %3342 = vmatprep.mubr.f32.mxu0 0.0
      %3343 = vmatmul.mubr.f32.gmra.mrb[0].mxu0 %v3276
      %v3344 = vpop.f32.mrb[0].mxu0
      %v3345 = vadd.f32 0.0, %v3344
      %v3346 = vpop.f32.mrb[0].mxu0
      %3347 = vdwg.mxu0
      %v3348 = vld [vmem:[%s19] sm:$0xff]
      %3349 = vmatprep.subr.mxu0 0.0
      %3350 = vmatpush1.msra.mxu0 %v1357
      %3351 = vmatprep.subr.mxu0 0.0
      %3352 = vmatpush1.msra.mxu0 %v1358
      %3353 = vmatprep.subr.mxu0 0.0
      %3354 = vmatpush1.msra.mxu0 %v1359
      %3355 = vmatprep.subr.mxu0 0.0
      %3356 = vmatpush1.msra.mxu0 %v1360
      %3357 = vmatprep.subr.mxu0 0.0
      %3358 = vmatpush1.msra.mxu0 %v1361
      %3359 = vmatprep.subr.mxu0 0.0
      %3360 = vmatpush1.msra.mxu0 %v1362
      %3361 = vmatprep.subr.mxu0 0.0
      %3362 = vmatpush1.msra.mxu0 %v1363
      %3363 = vmatprep.subr.mxu0 0.0
      %3364 = vmatpush1.msra.mxu0 %v1364
      %3365 = vmatprep.subr.mxu0 0.0
      %3366 = vmatpush1.msra.mxu0 0.0
      %3367 = vmatprep.subr.mxu0 0.0
      %3368 = vmatpush1.msra.mxu0 0.0
      %3369 = vmatprep.subr.mxu0 0.0
      %3370 = vmatpush1.msra.mxu0 0.0
      %3371 = vmatprep.subr.mxu0 0.0
      %3372 = vmatpush1.msra.mxu0 0.0
      %3373 = vmatprep.subr.mxu0 0.0
      %3374 = vmatpush1.msra.mxu0 0.0
      %3375 = vmatprep.subr.mxu0 0.0
      %3376 = vmatpush1.msra.mxu0 0.0
      %3377 = vmatprep.subr.mxu0 0.0
      %3378 = vmatpush1.msra.mxu0 0.0
      %3379 = vmatprep.subr.mxu0 0.0
      %3380 = vmatpush1.msra.mxu0 0.0
      %3381 = vmatprep.subr.mxu0 0.0
      %3382 = vmatpush1.msra.mxu0 0.0
      %3383 = vmatprep.subr.mxu0 0.0
      %3384 = vmatpush1.msra.mxu0 0.0
      %3385 = vmatprep.subr.mxu0 0.0
      %3386 = vmatpush1.msra.mxu0 0.0
      %3387 = vmatprep.subr.mxu0 0.0
      %3388 = vmatpush1.msra.mxu0 0.0
      %3389 = vmatprep.subr.mxu0 0.0
      %3390 = vmatpush1.msra.mxu0 0.0
      %3391 = vmatprep.subr.mxu0 0.0
      %3392 = vmatpush1.msra.mxu0 0.0
      %3393 = vmatprep.subr.mxu0 0.0
      %3394 = vmatpush1.msra.mxu0 0.0
      %3395 = vmatprep.subr.mxu0 0.0
      %3396 = vmatpush1.msra.mxu0 0.0
      %3397 = vmatprep.subr.mxu0 0.0
      %3398 = vmatpush1.msra.mxu0 0.0
      %3399 = vmatprep.subr.mxu0 0.0
      %3400 = vmatpush1.msra.mxu0 0.0
      %3401 = vmatprep.subr.mxu0 0.0
      %3402 = vmatpush1.msra.mxu0 0.0
      %3403 = vmatprep.subr.mxu0 0.0
      %3404 = vmatpush1.msra.mxu0 0.0
      %3405 = vmatprep.subr.mxu0 0.0
      %3406 = vmatpush1.msra.mxu0 0.0
      %3407 = vmatprep.subr.mxu0 0.0
      %3408 = vmatpush1.msra.mxu0 0.0
      %3409 = vmatprep.subr.mxu0 0.0
      %3410 = vmatpush1.msra.mxu0 0.0
      %3411 = vmatprep.subr.mxu0 0.0
      %3412 = vmatpush1.msra.mxu0 0.0
      %3413 = vmatprep.mubr.f32.mxu0 0.0
      %3414 = vmatmul.mubr.f32.gmra.mrb[0].mxu0 %v3276
      %v3415 = vpop.f32.mrb[0].mxu0
      %v3416 = vadd.f32 0.0, %v3415
      %v3417 = vpop.f32.mrb[0].mxu0
      %3418 = vdwg.mxu0
      %s3419 = scalar_lea.vmem %s19, 8
      %v3420 = vld [vmem:[%s3419] sm:$0xff]
      %v3422 = vsel %vm1445, %v3420, 0
      %3424 = vmatprep.subr.mxu0 0.0
      %3425 = vmatpush1.msra.mxu0 %v3416
      %3426 = vmatprep.subr.mxu0 0.0
      %3427 = vmatpush1.msra.mxu0 0.0
      %3428 = vmatprep.subr.mxu0 0.0
      %3429 = vmatpush1.msra.mxu0 0.0
      %3430 = vmatprep.subr.mxu0 0.0
      %3431 = vmatpush1.msra.mxu0 0.0
      %3432 = vmatprep.subr.mxu0 0.0
      %3433 = vmatpush1.msra.mxu0 0.0
      %3434 = vmatprep.subr.mxu0 0.0
      %3435 = vmatpush1.msra.mxu0 0.0
      %3436 = vmatprep.subr.mxu0 0.0
      %3437 = vmatpush1.msra.mxu0 0.0
      %3438 = vmatprep.subr.mxu0 0.0
      %3439 = vmatpush1.msra.mxu0 0.0
      %3440 = vmatprep.subr.mxu0 0.0
      %3441 = vmatpush1.msra.mxu0 0.0
      %3442 = vmatprep.subr.mxu0 0.0
      %3443 = vmatpush1.msra.mxu0 0.0
      %3444 = vmatprep.subr.mxu0 0.0
      %3445 = vmatpush1.msra.mxu0 0.0
      %3446 = vmatprep.subr.mxu0 0.0
      %3447 = vmatpush1.msra.mxu0 0.0
      %3448 = vmatprep.subr.mxu0 0.0
      %3449 = vmatpush1.msra.mxu0 0.0
      %3450 = vmatprep.subr.mxu0 0.0
      %3451 = vmatpush1.msra.mxu0 0.0
      %3452 = vmatprep.subr.mxu0 0.0
      %3453 = vmatpush1.msra.mxu0 0.0
      %3454 = vmatprep.subr.mxu0 0.0
      %3455 = vmatpush1.msra.mxu0 0.0
      %3456 = vmatprep.subr.mxu0 0.0
      %3457 = vmatpush1.msra.mxu0 0.0
      %3458 = vmatprep.subr.mxu0 0.0
      %3459 = vmatpush1.msra.mxu0 0.0
      %3460 = vmatprep.subr.mxu0 0.0
      %3461 = vmatpush1.msra.mxu0 0.0
      %3462 = vmatprep.subr.mxu0 0.0
      %3463 = vmatpush1.msra.mxu0 0.0
      %3464 = vmatprep.subr.mxu0 0.0
      %3465 = vmatpush1.msra.mxu0 0.0
      %3466 = vmatprep.subr.mxu0 0.0
      %3467 = vmatpush1.msra.mxu0 0.0
      %3468 = vmatprep.subr.mxu0 0.0
      %3469 = vmatpush1.msra.mxu0 0.0
      %3470 = vmatprep.subr.mxu0 0.0
      %3471 = vmatpush1.msra.mxu0 0.0
      %3472 = vmatprep.subr.mxu0 0.0
      %3473 = vmatpush1.msra.mxu0 0.0
      %3474 = vmatprep.subr.mxu0 0.0
      %3475 = vmatpush1.msra.mxu0 0.0
      %3476 = vmatprep.subr.mxu0 0.0
      %3477 = vmatpush1.msra.mxu0 0.0
      %3478 = vmatprep.subr.mxu0 0.0
      %3479 = vmatpush1.msra.mxu0 0.0
      %3480 = vmatprep.subr.mxu0 0.0
      %3481 = vmatpush1.msra.mxu0 0.0
      %3482 = vmatprep.subr.mxu0 0.0
      %3483 = vmatpush1.msra.mxu0 0.0
      %3484 = vmatprep.subr.mxu0 0.0
      %3485 = vmatpush1.msra.mxu0 0.0
      %3486 = vmatprep.subr.mxu0 0.0
      %3487 = vmatpush1.msra.mxu0 0.0
      %3488 = vmatprep.mubr.f32.mxu0 0.0
      %3489 = vmatmul.mubr.f32.gmra.mrb[0].mxu0 %v3422
      %v3490 = vpop.f32.mrb[0].mxu0
      %v3491 = vadd.f32 0.0, %v3490
      %v3492 = vpop.f32.mrb[0].mxu0
      %3493 = vdwg.mxu0
      %v3495 = vsel %vm1445, %v3348, 0
      %3497 = vmatprep.subr.mxu0 0.0
      %3498 = vmatpush1.msra.mxu0 %v3345
      %3499 = vmatprep.subr.mxu0 0.0
      %3500 = vmatpush1.msra.mxu0 0.0
      %3501 = vmatprep.subr.mxu0 0.0
      %3502 = vmatpush1.msra.mxu0 0.0
      %3503 = vmatprep.subr.mxu0 0.0
      %3504 = vmatpush1.msra.mxu0 0.0
      %3505 = vmatprep.subr.mxu0 0.0
      %3506 = vmatpush1.msra.mxu0 0.0
      %3507 = vmatprep.subr.mxu0 0.0
      %3508 = vmatpush1.msra.mxu0 0.0
      %3509 = vmatprep.subr.mxu0 0.0
      %3510 = vmatpush1.msra.mxu0 0.0
      %3511 = vmatprep.subr.mxu0 0.0
      %3512 = vmatpush1.msra.mxu0 0.0
      %3513 = vmatprep.subr.mxu0 0.0
      %3514 = vmatpush1.msra.mxu0 0.0
      %3515 = vmatprep.subr.mxu0 0.0
      %3516 = vmatpush1.msra.mxu0 0.0
      %3517 = vmatprep.subr.mxu0 0.0
      %3518 = vmatpush1.msra.mxu0 0.0
      %3519 = vmatprep.subr.mxu0 0.0
      %3520 = vmatpush1.msra.mxu0 0.0
      %3521 = vmatprep.subr.mxu0 0.0
      %3522 = vmatpush1.msra.mxu0 0.0
      %3523 = vmatprep.subr.mxu0 0.0
      %3524 = vmatpush1.msra.mxu0 0.0
      %3525 = vmatprep.subr.mxu0 0.0
      %3526 = vmatpush1.msra.mxu0 0.0
      %3527 = vmatprep.subr.mxu0 0.0
      %3528 = vmatpush1.msra.mxu0 0.0
      %3529 = vmatprep.subr.mxu0 0.0
      %3530 = vmatpush1.msra.mxu0 0.0
      %3531 = vmatprep.subr.mxu0 0.0
      %3532 = vmatpush1.msra.mxu0 0.0
      %3533 = vmatprep.subr.mxu0 0.0
      %3534 = vmatpush1.msra.mxu0 0.0
      %3535 = vmatprep.subr.mxu0 0.0
      %3536 = vmatpush1.msra.mxu0 0.0
      %3537 = vmatprep.subr.mxu0 0.0
      %3538 = vmatpush1.msra.mxu0 0.0
      %3539 = vmatprep.subr.mxu0 0.0
      %3540 = vmatpush1.msra.mxu0 0.0
      %3541 = vmatprep.subr.mxu0 0.0
      %3542 = vmatpush1.msra.mxu0 0.0
      %3543 = vmatprep.subr.mxu0 0.0
      %3544 = vmatpush1.msra.mxu0 0.0
      %3545 = vmatprep.subr.mxu0 0.0
      %3546 = vmatpush1.msra.mxu0 0.0
      %3547 = vmatprep.subr.mxu0 0.0
      %3548 = vmatpush1.msra.mxu0 0.0
      %3549 = vmatprep.subr.mxu0 0.0
      %3550 = vmatpush1.msra.mxu0 0.0
      %3551 = vmatprep.subr.mxu0 0.0
      %3552 = vmatpush1.msra.mxu0 0.0
      %3553 = vmatprep.subr.mxu0 0.0
      %3554 = vmatpush1.msra.mxu0 0.0
      %3555 = vmatprep.subr.mxu0 0.0
      %3556 = vmatpush1.msra.mxu0 0.0
      %3557 = vmatprep.subr.mxu0 0.0
      %3558 = vmatpush1.msra.mxu0 0.0
      %3559 = vmatprep.subr.mxu0 0.0
      %3560 = vmatpush1.msra.mxu0 0.0
      %3561 = vmatprep.mubr.f32.mxu0 0.0
      %3562 = vmatmul.mubr.f32.gmra.mrb[0].mxu0 %v3495
      %v3563 = vpop.f32.mrb[0].mxu0
      %v3564 = vadd.f32 %v3491, %v3563
      %v3565 = vpop.f32.mrb[0].mxu0
      %3566 = vdwg.mxu0
      %3567 = vmatprep.subr.mxu0 0.0
      %3568 = vmatpush1.msra.mxu0 %v1625
      %3569 = vmatprep.subr.mxu0 0.0
      %3570 = vmatpush1.msra.mxu0 %v1626
      %3571 = vmatprep.subr.mxu0 0.0
      %3572 = vmatpush1.msra.mxu0 %v1627
      %3573 = vmatprep.subr.mxu0 0.0
      %3574 = vmatpush1.msra.mxu0 %v1628
      %3575 = vmatprep.subr.mxu0 0.0
      %3576 = vmatpush1.msra.mxu0 %v1629
      %3577 = vmatprep.subr.mxu0 0.0
      %3578 = vmatpush1.msra.mxu0 %v1630
      %3579 = vmatprep.subr.mxu0 0.0
      %3580 = vmatpush1.msra.mxu0 %v1631
      %3581 = vmatprep.subr.mxu0 0.0
      %3582 = vmatpush1.msra.mxu0 %v1632
      %3583 = vmatprep.subr.mxu0 0.0
      %3584 = vmatpush1.msra.mxu0 0.0
      %3585 = vmatprep.subr.mxu0 0.0
      %3586 = vmatpush1.msra.mxu0 0.0
      %3587 = vmatprep.subr.mxu0 0.0
      %3588 = vmatpush1.msra.mxu0 0.0
      %3589 = vmatprep.subr.mxu0 0.0
      %3590 = vmatpush1.msra.mxu0 0.0
      %3591 = vmatprep.subr.mxu0 0.0
      %3592 = vmatpush1.msra.mxu0 0.0
      %3593 = vmatprep.subr.mxu0 0.0
      %3594 = vmatpush1.msra.mxu0 0.0
      %3595 = vmatprep.subr.mxu0 0.0
      %3596 = vmatpush1.msra.mxu0 0.0
      %3597 = vmatprep.subr.mxu0 0.0
      %3598 = vmatpush1.msra.mxu0 0.0
      %3599 = vmatprep.subr.mxu0 0.0
      %3600 = vmatpush1.msra.mxu0 0.0
      %3601 = vmatprep.subr.mxu0 0.0
      %3602 = vmatpush1.msra.mxu0 0.0
      %3603 = vmatprep.subr.mxu0 0.0
      %3604 = vmatpush1.msra.mxu0 0.0
      %3605 = vmatprep.subr.mxu0 0.0
      %3606 = vmatpush1.msra.mxu0 0.0
      %3607 = vmatprep.subr.mxu0 0.0
      %3608 = vmatpush1.msra.mxu0 0.0
      %3609 = vmatprep.subr.mxu0 0.0
      %3610 = vmatpush1.msra.mxu0 0.0
      %3611 = vmatprep.subr.mxu0 0.0
      %3612 = vmatpush1.msra.mxu0 0.0
      %3613 = vmatprep.subr.mxu0 0.0
      %3614 = vmatpush1.msra.mxu0 0.0
      %3615 = vmatprep.subr.mxu0 0.0
      %3616 = vmatpush1.msra.mxu0 0.0
      %3617 = vmatprep.subr.mxu0 0.0
      %3618 = vmatpush1.msra.mxu0 0.0
      %3619 = vmatprep.subr.mxu0 0.0
      %3620 = vmatpush1.msra.mxu0 0.0
      %3621 = vmatprep.subr.mxu0 0.0
      %3622 = vmatpush1.msra.mxu0 0.0
      %3623 = vmatprep.subr.mxu0 0.0
      %3624 = vmatpush1.msra.mxu0 0.0
      %3625 = vmatprep.subr.mxu0 0.0
      %3626 = vmatpush1.msra.mxu0 0.0
      %3627 = vmatprep.subr.mxu0 0.0
      %3628 = vmatpush1.msra.mxu0 0.0
      %3629 = vmatprep.subr.mxu0 0.0
      %3630 = vmatpush1.msra.mxu0 0.0
      %3631 = vmatprep.mubr.f32.mxu0 0.0
      %3632 = vmatmul.mubr.f32.gmra.mrb[0].mxu0 %v3276
      %v3633 = vpop.f32.mrb[0].mxu0
      %v3634 = vadd.f32 0.0, %v3633
      %v3635 = vpop.f32.mrb[0].mxu0
      %3636 = vdwg.mxu0
      %s3637 = scalar_lea.vmem %s19, 16
      %v3638 = vld [vmem:[%s3637] sm:$0xff]
      %v3640 = vsel %vm1445, %v3638, 0
      %3642 = vmatprep.subr.mxu0 0.0
      %3643 = vmatpush1.msra.mxu0 %v3634
      %3644 = vmatprep.subr.mxu0 0.0
      %3645 = vmatpush1.msra.mxu0 0.0
      %3646 = vmatprep.subr.mxu0 0.0
      %3647 = vmatpush1.msra.mxu0 0.0
      %3648 = vmatprep.subr.mxu0 0.0
      %3649 = vmatpush1.msra.mxu0 0.0
      %3650 = vmatprep.subr.mxu0 0.0
      %3651 = vmatpush1.msra.mxu0 0.0
      %3652 = vmatprep.subr.mxu0 0.0
      %3653 = vmatpush1.msra.mxu0 0.0
      %3654 = vmatprep.subr.mxu0 0.0
      %3655 = vmatpush1.msra.mxu0 0.0
      %3656 = vmatprep.subr.mxu0 0.0
      %3657 = vmatpush1.msra.mxu0 0.0
      %3658 = vmatprep.subr.mxu0 0.0
      %3659 = vmatpush1.msra.mxu0 0.0
      %3660 = vmatprep.subr.mxu0 0.0
      %3661 = vmatpush1.msra.mxu0 0.0
      %3662 = vmatprep.subr.mxu0 0.0
      %3663 = vmatpush1.msra.mxu0 0.0
      %3664 = vmatprep.subr.mxu0 0.0
      %3665 = vmatpush1.msra.mxu0 0.0
      %3666 = vmatprep.subr.mxu0 0.0
      %3667 = vmatpush1.msra.mxu0 0.0
      %3668 = vmatprep.subr.mxu0 0.0
      %3669 = vmatpush1.msra.mxu0 0.0
      %3670 = vmatprep.subr.mxu0 0.0
      %3671 = vmatpush1.msra.mxu0 0.0
      %3672 = vmatprep.subr.mxu0 0.0
      %3673 = vmatpush1.msra.mxu0 0.0
      %3674 = vmatprep.subr.mxu0 0.0
      %3675 = vmatpush1.msra.mxu0 0.0
      %3676 = vmatprep.subr.mxu0 0.0
      %3677 = vmatpush1.msra.mxu0 0.0
      %3678 = vmatprep.subr.mxu0 0.0
      %3679 = vmatpush1.msra.mxu0 0.0
      %3680 = vmatprep.subr.mxu0 0.0
      %3681 = vmatpush1.msra.mxu0 0.0
      %3682 = vmatprep.subr.mxu0 0.0
      %3683 = vmatpush1.msra.mxu0 0.0
      %3684 = vmatprep.subr.mxu0 0.0
      %3685 = vmatpush1.msra.mxu0 0.0
      %3686 = vmatprep.subr.mxu0 0.0
      %3687 = vmatpush1.msra.mxu0 0.0
      %3688 = vmatprep.subr.mxu0 0.0
      %3689 = vmatpush1.msra.mxu0 0.0
      %3690 = vmatprep.subr.mxu0 0.0
      %3691 = vmatpush1.msra.mxu0 0.0
      %3692 = vmatprep.subr.mxu0 0.0
      %3693 = vmatpush1.msra.mxu0 0.0
      %3694 = vmatprep.subr.mxu0 0.0
      %3695 = vmatpush1.msra.mxu0 0.0
      %3696 = vmatprep.subr.mxu0 0.0
      %3697 = vmatpush1.msra.mxu0 0.0
      %3698 = vmatprep.subr.mxu0 0.0
      %3699 = vmatpush1.msra.mxu0 0.0
      %3700 = vmatprep.subr.mxu0 0.0
      %3701 = vmatpush1.msra.mxu0 0.0
      %3702 = vmatprep.subr.mxu0 0.0
      %3703 = vmatpush1.msra.mxu0 0.0
      %3704 = vmatprep.subr.mxu0 0.0
      %3705 = vmatpush1.msra.mxu0 0.0
      %3706 = vmatprep.mubr.f32.mxu0 0.0
      %3707 = vmatmul.mubr.f32.gmra.mrb[0].mxu0 %v3640
      %v3708 = vpop.f32.mrb[0].mxu0
      %v3709 = vadd.f32 0.0, %v3708
      %v3710 = vpop.f32.mrb[0].mxu0
      %3711 = vdwg.mxu0
      %v3712 = vadd.f32 %v3564, %v3709
      %v3713 = vld [vmem:[%s21] sm:$0xff]
      %3715 = vset.pattern.permute.xlu0 0
      %3716 = vperm.xlu0 %3715, %v3713
      %v3717 = vpop.permute.xlu0 %3716
      %v3719 = vadd.f32 %v3712, %v3717
      %v3720 = vadd.f32 %v3719, %v2827
      %v3721 = vmax.f32 %v3720, 0.0
      %v3723 = vsel %vm2828, %v3721, 0
      %3725 = vmatprep.subr.mxu0 0.0
      %3726 = vmatpush1.msra.mxu0 %v2273
      %3727 = vmatprep.subr.mxu0 0.0
      %3728 = vmatpush1.msra.mxu0 %v2274
      %3729 = vmatprep.subr.mxu0 0.0
      %3730 = vmatpush1.msra.mxu0 %v2275
      %3731 = vmatprep.subr.mxu0 0.0
      %3732 = vmatpush1.msra.mxu0 %v2276
      %3733 = vmatprep.subr.mxu0 0.0
      %3734 = vmatpush1.msra.mxu0 %v2277
      %3735 = vmatprep.subr.mxu0 0.0
      %3736 = vmatpush1.msra.mxu0 %v2278
      %3737 = vmatprep.subr.mxu0 0.0
      %3738 = vmatpush1.msra.mxu0 %v2279
      %3739 = vmatprep.subr.mxu0 0.0
      %3740 = vmatpush1.msra.mxu0 %v2280
      %3741 = vmatprep.subr.mxu0 0.0
      %3742 = vmatpush1.msra.mxu0 0.0
      %3743 = vmatprep.subr.mxu0 0.0
      %3744 = vmatpush1.msra.mxu0 0.0
      %3745 = vmatprep.subr.mxu0 0.0
      %3746 = vmatpush1.msra.mxu0 0.0
      %3747 = vmatprep.subr.mxu0 0.0
      %3748 = vmatpush1.msra.mxu0 0.0
      %3749 = vmatprep.subr.mxu0 0.0
      %3750 = vmatpush1.msra.mxu0 0.0
      %3751 = vmatprep.subr.mxu0 0.0
      %3752 = vmatpush1.msra.mxu0 0.0
      %3753 = vmatprep.subr.mxu0 0.0
      %3754 = vmatpush1.msra.mxu0 0.0
      %3755 = vmatprep.subr.mxu0 0.0
      %3756 = vmatpush1.msra.mxu0 0.0
      %3757 = vmatprep.subr.mxu0 0.0
      %3758 = vmatpush1.msra.mxu0 0.0
      %3759 = vmatprep.subr.mxu0 0.0
      %3760 = vmatpush1.msra.mxu0 0.0
      %3761 = vmatprep.subr.mxu0 0.0
      %3762 = vmatpush1.msra.mxu0 0.0
      %3763 = vmatprep.subr.mxu0 0.0
      %3764 = vmatpush1.msra.mxu0 0.0
      %3765 = vmatprep.subr.mxu0 0.0
      %3766 = vmatpush1.msra.mxu0 0.0
      %3767 = vmatprep.subr.mxu0 0.0
      %3768 = vmatpush1.msra.mxu0 0.0
      %3769 = vmatprep.subr.mxu0 0.0
      %3770 = vmatpush1.msra.mxu0 0.0
      %3771 = vmatprep.subr.mxu0 0.0
      %3772 = vmatpush1.msra.mxu0 0.0
      %3773 = vmatprep.subr.mxu0 0.0
      %3774 = vmatpush1.msra.mxu0 0.0
      %3775 = vmatprep.subr.mxu0 0.0
      %3776 = vmatpush1.msra.mxu0 0.0
      %3777 = vmatprep.subr.mxu0 0.0
      %3778 = vmatpush1.msra.mxu0 0.0
      %3779 = vmatprep.subr.mxu0 0.0
      %3780 = vmatpush1.msra.mxu0 0.0
      %3781 = vmatprep.subr.mxu0 0.0
      %3782 = vmatpush1.msra.mxu0 0.0
      %3783 = vmatprep.subr.mxu0 0.0
      %3784 = vmatpush1.msra.mxu0 0.0
      %3785 = vmatprep.subr.mxu0 0.0
      %3786 = vmatpush1.msra.mxu0 0.0
      %3787 = vmatprep.subr.mxu0 0.0
      %3788 = vmatpush1.msra.mxu0 0.0
      %3789 = vmatprep.mubr.f32.mxu0 0.0
      %3790 = vmatmul.mubr.f32.gmra.mrb[0].mxu0 %v3723
      %v3791 = vpop.f32.mrb[0].mxu0
      %v3792 = vadd.f32 0.0, %v3791
      %v3793 = vpop.f32.mrb[0].mxu0
      %3794 = vdwg.mxu0
      %v3795 = vld [vmem:[%s23] sm:$0xff]
      %3796 = vmatprep.subr.mxu0 0.0
      %3797 = vmatpush1.msra.mxu0 %v2392
      %3798 = vmatprep.subr.mxu0 0.0
      %3799 = vmatpush1.msra.mxu0 %v2393
      %3800 = vmatprep.subr.mxu0 0.0
      %3801 = vmatpush1.msra.mxu0 %v2394
      %3802 = vmatprep.subr.mxu0 0.0
      %3803 = vmatpush1.msra.mxu0 %v2395
      %3804 = vmatprep.subr.mxu0 0.0
      %3805 = vmatpush1.msra.mxu0 %v2396
      %3806 = vmatprep.subr.mxu0 0.0
      %3807 = vmatpush1.msra.mxu0 %v2397
      %3808 = vmatprep.subr.mxu0 0.0
      %3809 = vmatpush1.msra.mxu0 %v2398
      %3810 = vmatprep.subr.mxu0 0.0
      %3811 = vmatpush1.msra.mxu0 %v2399
      %3812 = vmatprep.subr.mxu0 0.0
      %3813 = vmatpush1.msra.mxu0 0.0
      %3814 = vmatprep.subr.mxu0 0.0
      %3815 = vmatpush1.msra.mxu0 0.0
      %3816 = vmatprep.subr.mxu0 0.0
      %3817 = vmatpush1.msra.mxu0 0.0
      %3818 = vmatprep.subr.mxu0 0.0
      %3819 = vmatpush1.msra.mxu0 0.0
      %3820 = vmatprep.subr.mxu0 0.0
      %3821 = vmatpush1.msra.mxu0 0.0
      %3822 = vmatprep.subr.mxu0 0.0
      %3823 = vmatpush1.msra.mxu0 0.0
      %3824 = vmatprep.subr.mxu0 0.0
      %3825 = vmatpush1.msra.mxu0 0.0
      %3826 = vmatprep.subr.mxu0 0.0
      %3827 = vmatpush1.msra.mxu0 0.0
      %3828 = vmatprep.subr.mxu0 0.0
      %3829 = vmatpush1.msra.mxu0 0.0
      %3830 = vmatprep.subr.mxu0 0.0
      %3831 = vmatpush1.msra.mxu0 0.0
      %3832 = vmatprep.subr.mxu0 0.0
      %3833 = vmatpush1.msra.mxu0 0.0
      %3834 = vmatprep.subr.mxu0 0.0
      %3835 = vmatpush1.msra.mxu0 0.0
      %3836 = vmatprep.subr.mxu0 0.0
      %3837 = vmatpush1.msra.mxu0 0.0
      %3838 = vmatprep.subr.mxu0 0.0
      %3839 = vmatpush1.msra.mxu0 0.0
      %3840 = vmatprep.subr.mxu0 0.0
      %3841 = vmatpush1.msra.mxu0 0.0
      %3842 = vmatprep.subr.mxu0 0.0
      %3843 = vmatpush1.msra.mxu0 0.0
      %3844 = vmatprep.subr.mxu0 0.0
      %3845 = vmatpush1.msra.mxu0 0.0
      %3846 = vmatprep.subr.mxu0 0.0
      %3847 = vmatpush1.msra.mxu0 0.0
      %3848 = vmatprep.subr.mxu0 0.0
      %3849 = vmatpush1.msra.mxu0 0.0
      %3850 = vmatprep.subr.mxu0 0.0
      %3851 = vmatpush1.msra.mxu0 0.0
      %3852 = vmatprep.subr.mxu0 0.0
      %3853 = vmatpush1.msra.mxu0 0.0
      %3854 = vmatprep.subr.mxu0 0.0
      %3855 = vmatpush1.msra.mxu0 0.0
      %3856 = vmatprep.subr.mxu0 0.0
      %3857 = vmatpush1.msra.mxu0 0.0
      %3858 = vmatprep.subr.mxu0 0.0
      %3859 = vmatpush1.msra.mxu0 0.0
      %3860 = vmatprep.mubr.f32.mxu0 0.0
      %3861 = vmatmul.mubr.f32.gmra.mrb[0].mxu0 %v3723
      %v3862 = vpop.f32.mrb[0].mxu0
      %v3863 = vadd.f32 0.0, %v3862
      %v3864 = vpop.f32.mrb[0].mxu0
      %3865 = vdwg.mxu0
      %s3866 = scalar_lea.vmem %s23, 8
      %v3867 = vld [vmem:[%s3866] sm:$0xff]
      %v3869 = vsel %vm1445, %v3867, 0
      %3871 = vmatprep.subr.mxu0 0.0
      %3872 = vmatpush1.msra.mxu0 %v3863
      %3873 = vmatprep.subr.mxu0 0.0
      %3874 = vmatpush1.msra.mxu0 0.0
      %3875 = vmatprep.subr.mxu0 0.0
      %3876 = vmatpush1.msra.mxu0 0.0
      %3877 = vmatprep.subr.mxu0 0.0
      %3878 = vmatpush1.msra.mxu0 0.0
      %3879 = vmatprep.subr.mxu0 0.0
      %3880 = vmatpush1.msra.mxu0 0.0
      %3881 = vmatprep.subr.mxu0 0.0
      %3882 = vmatpush1.msra.mxu0 0.0
      %3883 = vmatprep.subr.mxu0 0.0
      %3884 = vmatpush1.msra.mxu0 0.0
      %3885 = vmatprep.subr.mxu0 0.0
      %3886 = vmatpush1.msra.mxu0 0.0
      %3887 = vmatprep.subr.mxu0 0.0
      %3888 = vmatpush1.msra.mxu0 0.0
      %3889 = vmatprep.subr.mxu0 0.0
      %3890 = vmatpush1.msra.mxu0 0.0
      %3891 = vmatprep.subr.mxu0 0.0
      %3892 = vmatpush1.msra.mxu0 0.0
      %3893 = vmatprep.subr.mxu0 0.0
      %3894 = vmatpush1.msra.mxu0 0.0
      %3895 = vmatprep.subr.mxu0 0.0
      %3896 = vmatpush1.msra.mxu0 0.0
      %3897 = vmatprep.subr.mxu0 0.0
      %3898 = vmatpush1.msra.mxu0 0.0
      %3899 = vmatprep.subr.mxu0 0.0
      %3900 = vmatpush1.msra.mxu0 0.0
      %3901 = vmatprep.subr.mxu0 0.0
      %3902 = vmatpush1.msra.mxu0 0.0
      %3903 = vmatprep.subr.mxu0 0.0
      %3904 = vmatpush1.msra.mxu0 0.0
      %3905 = vmatprep.subr.mxu0 0.0
      %3906 = vmatpush1.msra.mxu0 0.0
      %3907 = vmatprep.subr.mxu0 0.0
      %3908 = vmatpush1.msra.mxu0 0.0
      %3909 = vmatprep.subr.mxu0 0.0
      %3910 = vmatpush1.msra.mxu0 0.0
      %3911 = vmatprep.subr.mxu0 0.0
      %3912 = vmatpush1.msra.mxu0 0.0
      %3913 = vmatprep.subr.mxu0 0.0
      %3914 = vmatpush1.msra.mxu0 0.0
      %3915 = vmatprep.subr.mxu0 0.0
      %3916 = vmatpush1.msra.mxu0 0.0
      %3917 = vmatprep.subr.mxu0 0.0
      %3918 = vmatpush1.msra.mxu0 0.0
      %3919 = vmatprep.subr.mxu0 0.0
      %3920 = vmatpush1.msra.mxu0 0.0
      %3921 = vmatprep.subr.mxu0 0.0
      %3922 = vmatpush1.msra.mxu0 0.0
      %3923 = vmatprep.subr.mxu0 0.0
      %3924 = vmatpush1.msra.mxu0 0.0
      %3925 = vmatprep.subr.mxu0 0.0
      %3926 = vmatpush1.msra.mxu0 0.0
      %3927 = vmatprep.subr.mxu0 0.0
      %3928 = vmatpush1.msra.mxu0 0.0
      %3929 = vmatprep.subr.mxu0 0.0
      %3930 = vmatpush1.msra.mxu0 0.0
      %3931 = vmatprep.subr.mxu0 0.0
      %3932 = vmatpush1.msra.mxu0 0.0
      %3933 = vmatprep.subr.mxu0 0.0
      %3934 = vmatpush1.msra.mxu0 0.0
      %3935 = vmatprep.mubr.f32.mxu0 0.0
      %3936 = vmatmul.mubr.f32.gmra.mrb[0].mxu0 %v3869
      %v3937 = vpop.f32.mrb[0].mxu0
      %v3938 = vadd.f32 0.0, %v3937
      %v3939 = vpop.f32.mrb[0].mxu0
      %3940 = vdwg.mxu0
      %v3942 = vsel %vm1445, %v3795, 0
      %3944 = vmatprep.subr.mxu0 0.0
      %3945 = vmatpush1.msra.mxu0 %v3792
      %3946 = vmatprep.subr.mxu0 0.0
      %3947 = vmatpush1.msra.mxu0 0.0
      %3948 = vmatprep.subr.mxu0 0.0
      %3949 = vmatpush1.msra.mxu0 0.0
      %3950 = vmatprep.subr.mxu0 0.0
      %3951 = vmatpush1.msra.mxu0 0.0
      %3952 = vmatprep.subr.mxu0 0.0
      %3953 = vmatpush1.msra.mxu0 0.0
      %3954 = vmatprep.subr.mxu0 0.0
      %3955 = vmatpush1.msra.mxu0 0.0
      %3956 = vmatprep.subr.mxu0 0.0
      %3957 = vmatpush1.msra.mxu0 0.0
      %3958 = vmatprep.subr.mxu0 0.0
      %3959 = vmatpush1.msra.mxu0 0.0
      %3960 = vmatprep.subr.mxu0 0.0
      %3961 = vmatpush1.msra.mxu0 0.0
      %3962 = vmatprep.subr.mxu0 0.0
      %3963 = vmatpush1.msra.mxu0 0.0
      %3964 = vmatprep.subr.mxu0 0.0
      %3965 = vmatpush1.msra.mxu0 0.0
      %3966 = vmatprep.subr.mxu0 0.0
      %3967 = vmatpush1.msra.mxu0 0.0
      %3968 = vmatprep.subr.mxu0 0.0
      %3969 = vmatpush1.msra.mxu0 0.0
      %3970 = vmatprep.subr.mxu0 0.0
      %3971 = vmatpush1.msra.mxu0 0.0
      %3972 = vmatprep.subr.mxu0 0.0
      %3973 = vmatpush1.msra.mxu0 0.0
      %3974 = vmatprep.subr.mxu0 0.0
      %3975 = vmatpush1.msra.mxu0 0.0
      %3976 = vmatprep.subr.mxu0 0.0
      %3977 = vmatpush1.msra.mxu0 0.0
      %3978 = vmatprep.subr.mxu0 0.0
      %3979 = vmatpush1.msra.mxu0 0.0
      %3980 = vmatprep.subr.mxu0 0.0
      %3981 = vmatpush1.msra.mxu0 0.0
      %3982 = vmatprep.subr.mxu0 0.0
      %3983 = vmatpush1.msra.mxu0 0.0
      %3984 = vmatprep.subr.mxu0 0.0
      %3985 = vmatpush1.msra.mxu0 0.0
      %3986 = vmatprep.subr.mxu0 0.0
      %3987 = vmatpush1.msra.mxu0 0.0
      %3988 = vmatprep.subr.mxu0 0.0
      %3989 = vmatpush1.msra.mxu0 0.0
      %3990 = vmatprep.subr.mxu0 0.0
      %3991 = vmatpush1.msra.mxu0 0.0
      %3992 = vmatprep.subr.mxu0 0.0
      %3993 = vmatpush1.msra.mxu0 0.0
      %3994 = vmatprep.subr.mxu0 0.0
      %3995 = vmatpush1.msra.mxu0 0.0
      %3996 = vmatprep.subr.mxu0 0.0
      %3997 = vmatpush1.msra.mxu0 0.0
      %3998 = vmatprep.subr.mxu0 0.0
      %3999 = vmatpush1.msra.mxu0 0.0
      %4000 = vmatprep.subr.mxu0 0.0
      %4001 = vmatpush1.msra.mxu0 0.0
      %4002 = vmatprep.subr.mxu0 0.0
      %4003 = vmatpush1.msra.mxu0 0.0
      %4004 = vmatprep.subr.mxu0 0.0
      %4005 = vmatpush1.msra.mxu0 0.0
      %4006 = vmatprep.subr.mxu0 0.0
      %4007 = vmatpush1.msra.mxu0 0.0
      %4008 = vmatprep.mubr.f32.mxu0 0.0
      %4009 = vmatmul.mubr.f32.gmra.mrb[0].mxu0 %v3942
      %v4010 = vpop.f32.mrb[0].mxu0
      %v4011 = vadd.f32 %v3938, %v4010
      %v4012 = vpop.f32.mrb[0].mxu0
      %4013 = vdwg.mxu0
      %4014 = vmatprep.subr.mxu0 0.0
      %4015 = vmatpush1.msra.mxu0 %v2659
      %4016 = vmatprep.subr.mxu0 0.0
      %4017 = vmatpush1.msra.mxu0 %v2660
      %4018 = vmatprep.subr.mxu0 0.0
      %4019 = vmatpush1.msra.mxu0 %v2661
      %4020 = vmatprep.subr.mxu0 0.0
      %4021 = vmatpush1.msra.mxu0 %v2662
      %4022 = vmatprep.subr.mxu0 0.0
      %4023 = vmatpush1.msra.mxu0 %v2663
      %4024 = vmatprep.subr.mxu0 0.0
      %4025 = vmatpush1.msra.mxu0 %v2664
      %4026 = vmatprep.subr.mxu0 0.0
      %4027 = vmatpush1.msra.mxu0 %v2665
      %4028 = vmatprep.subr.mxu0 0.0
      %4029 = vmatpush1.msra.mxu0 %v2666
      %4030 = vmatprep.subr.mxu0 0.0
      %4031 = vmatpush1.msra.mxu0 0.0
      %4032 = vmatprep.subr.mxu0 0.0
      %4033 = vmatpush1.msra.mxu0 0.0
      %4034 = vmatprep.subr.mxu0 0.0
      %4035 = vmatpush1.msra.mxu0 0.0
      %4036 = vmatprep.subr.mxu0 0.0
      %4037 = vmatpush1.msra.mxu0 0.0
      %4038 = vmatprep.subr.mxu0 0.0
      %4039 = vmatpush1.msra.mxu0 0.0
      %4040 = vmatprep.subr.mxu0 0.0
      %4041 = vmatpush1.msra.mxu0 0.0
      %4042 = vmatprep.subr.mxu0 0.0
      %4043 = vmatpush1.msra.mxu0 0.0
      %4044 = vmatprep.subr.mxu0 0.0
      %4045 = vmatpush1.msra.mxu0 0.0
      %4046 = vmatprep.subr.mxu0 0.0
      %4047 = vmatpush1.msra.mxu0 0.0
      %4048 = vmatprep.subr.mxu0 0.0
      %4049 = vmatpush1.msra.mxu0 0.0
      %4050 = vmatprep.subr.mxu0 0.0
      %4051 = vmatpush1.msra.mxu0 0.0
      %4052 = vmatprep.subr.mxu0 0.0
      %4053 = vmatpush1.msra.mxu0 0.0
      %4054 = vmatprep.subr.mxu0 0.0
      %4055 = vmatpush1.msra.mxu0 0.0
      %4056 = vmatprep.subr.mxu0 0.0
      %4057 = vmatpush1.msra.mxu0 0.0
      %4058 = vmatprep.subr.mxu0 0.0
      %4059 = vmatpush1.msra.mxu0 0.0
      %4060 = vmatprep.subr.mxu0 0.0
      %4061 = vmatpush1.msra.mxu0 0.0
      %4062 = vmatprep.subr.mxu0 0.0
      %4063 = vmatpush1.msra.mxu0 0.0
      %4064 = vmatprep.subr.mxu0 0.0
      %4065 = vmatpush1.msra.mxu0 0.0
      %4066 = vmatprep.subr.mxu0 0.0
      %4067 = vmatpush1.msra.mxu0 0.0
      %4068 = vmatprep.subr.mxu0 0.0
      %4069 = vmatpush1.msra.mxu0 0.0
      %4070 = vmatprep.subr.mxu0 0.0
      %4071 = vmatpush1.msra.mxu0 0.0
      %4072 = vmatprep.subr.mxu0 0.0
      %4073 = vmatpush1.msra.mxu0 0.0
      %4074 = vmatprep.subr.mxu0 0.0
      %4075 = vmatpush1.msra.mxu0 0.0
      %4076 = vmatprep.subr.mxu0 0.0
      %4077 = vmatpush1.msra.mxu0 0.0
      %4078 = vmatprep.mubr.f32.mxu0 0.0
      %4079 = vmatmul.mubr.f32.gmra.mrb[0].mxu0 %v3723
      %v4080 = vpop.f32.mrb[0].mxu0
      %v4081 = vadd.f32 0.0, %v4080
      %v4082 = vpop.f32.mrb[0].mxu0
      %4083 = vdwg.mxu0
      %s4084 = scalar_lea.vmem %s23, 16
      %v4085 = vld [vmem:[%s4084] sm:$0xff]
      %v4087 = vsel %vm1445, %v4085, 0
      %4089 = vmatprep.subr.mxu0 0.0
      %4090 = vmatpush1.msra.mxu0 %v4081
      %4091 = vmatprep.subr.mxu0 0.0
      %4092 = vmatpush1.msra.mxu0 0.0
      %4093 = vmatprep.subr.mxu0 0.0
      %4094 = vmatpush1.msra.mxu0 0.0
      %4095 = vmatprep.subr.mxu0 0.0
      %4096 = vmatpush1.msra.mxu0 0.0
      %4097 = vmatprep.subr.mxu0 0.0
      %4098 = vmatpush1.msra.mxu0 0.0
      %4099 = vmatprep.subr.mxu0 0.0
      %4100 = vmatpush1.msra.mxu0 0.0
      %4101 = vmatprep.subr.mxu0 0.0
      %4102 = vmatpush1.msra.mxu0 0.0
      %4103 = vmatprep.subr.mxu0 0.0
      %4104 = vmatpush1.msra.mxu0 0.0
      %4105 = vmatprep.subr.mxu0 0.0
      %4106 = vmatpush1.msra.mxu0 0.0
      %4107 = vmatprep.subr.mxu0 0.0
      %4108 = vmatpush1.msra.mxu0 0.0
      %4109 = vmatprep.subr.mxu0 0.0
      %4110 = vmatpush1.msra.mxu0 0.0
      %4111 = vmatprep.subr.mxu0 0.0
      %4112 = vmatpush1.msra.mxu0 0.0
      %4113 = vmatprep.subr.mxu0 0.0
      %4114 = vmatpush1.msra.mxu0 0.0
      %4115 = vmatprep.subr.mxu0 0.0
      %4116 = vmatpush1.msra.mxu0 0.0
      %4117 = vmatprep.subr.mxu0 0.0
      %4118 = vmatpush1.msra.mxu0 0.0
      %4119 = vmatprep.subr.mxu0 0.0
      %4120 = vmatpush1.msra.mxu0 0.0
      %4121 = vmatprep.subr.mxu0 0.0
      %4122 = vmatpush1.msra.mxu0 0.0
      %4123 = vmatprep.subr.mxu0 0.0
      %4124 = vmatpush1.msra.mxu0 0.0
      %4125 = vmatprep.subr.mxu0 0.0
      %4126 = vmatpush1.msra.mxu0 0.0
      %4127 = vmatprep.subr.mxu0 0.0
      %4128 = vmatpush1.msra.mxu0 0.0
      %4129 = vmatprep.subr.mxu0 0.0
      %4130 = vmatpush1.msra.mxu0 0.0
      %4131 = vmatprep.subr.mxu0 0.0
      %4132 = vmatpush1.msra.mxu0 0.0
      %4133 = vmatprep.subr.mxu0 0.0
      %4134 = vmatpush1.msra.mxu0 0.0
      %4135 = vmatprep.subr.mxu0 0.0
      %4136 = vmatpush1.msra.mxu0 0.0
      %4137 = vmatprep.subr.mxu0 0.0
      %4138 = vmatpush1.msra.mxu0 0.0
      %4139 = vmatprep.subr.mxu0 0.0
      %4140 = vmatpush1.msra.mxu0 0.0
      %4141 = vmatprep.subr.mxu0 0.0
      %4142 = vmatpush1.msra.mxu0 0.0
      %4143 = vmatprep.subr.mxu0 0.0
      %4144 = vmatpush1.msra.mxu0 0.0
      %4145 = vmatprep.subr.mxu0 0.0
      %4146 = vmatpush1.msra.mxu0 0.0
      %4147 = vmatprep.subr.mxu0 0.0
      %4148 = vmatpush1.msra.mxu0 0.0
      %4149 = vmatprep.subr.mxu0 0.0
      %4150 = vmatpush1.msra.mxu0 0.0
      %4151 = vmatprep.subr.mxu0 0.0
      %4152 = vmatpush1.msra.mxu0 0.0
      %4153 = vmatprep.mubr.f32.mxu0 0.0
      %4154 = vmatmul.mubr.f32.gmra.mrb[0].mxu0 %v4087
      %v4155 = vpop.f32.mrb[0].mxu0
      %v4156 = vadd.f32 0.0, %v4155
      %v4157 = vpop.f32.mrb[0].mxu0
      %4158 = vdwg.mxu0
      %v4159 = vadd.f32 %v4011, %v4156
      %v4160 = vld [vmem:[%s25] sm:$0xff]
      %4162 = vset.pattern.permute.xlu0 0
      %4163 = vperm.xlu0 %4162, %v4160
      %v4164 = vpop.permute.xlu0 %4163
      %v4166 = vadd.f32 %v4159, %v4164
      %vm4167 = vcmask 261120
      %v4169 = vsel %vm4167, %v4166, 0
      %4171 = vmatprep.subr.mxu0 0.0
      %4172 = vmatpush1.msra.mxu0 %v1238
      %4173 = vmatprep.subr.mxu0 0.0
      %4174 = vmatpush1.msra.mxu0 %v1239
      %4175 = vmatprep.subr.mxu0 0.0
      %4176 = vmatpush1.msra.mxu0 %v1240
      %4177 = vmatprep.subr.mxu0 0.0
      %4178 = vmatpush1.msra.mxu0 %v1241
      %4179 = vmatprep.subr.mxu0 0.0
      %4180 = vmatpush1.msra.mxu0 0.0
      %4181 = vmatprep.subr.mxu0 0.0
      %4182 = vmatpush1.msra.mxu0 0.0
      %4183 = vmatprep.subr.mxu0 0.0
      %4184 = vmatpush1.msra.mxu0 0.0
      %4185 = vmatprep.subr.mxu0 0.0
      %4186 = vmatpush1.msra.mxu0 0.0
      %4187 = vmatprep.subr.mxu0 0.0
      %4188 = vmatpush1.msra.mxu0 0.0
      %4189 = vmatprep.subr.mxu0 0.0
      %4190 = vmatpush1.msra.mxu0 0.0
      %4191 = vmatprep.subr.mxu0 0.0
      %4192 = vmatpush1.msra.mxu0 0.0
      %4193 = vmatprep.subr.mxu0 0.0
      %4194 = vmatpush1.msra.mxu0 0.0
      %4195 = vmatprep.subr.mxu0 0.0
      %4196 = vmatpush1.msra.mxu0 0.0
      %4197 = vmatprep.subr.mxu0 0.0
      %4198 = vmatpush1.msra.mxu0 0.0
      %4199 = vmatprep.subr.mxu0 0.0
      %4200 = vmatpush1.msra.mxu0 0.0
      %4201 = vmatprep.subr.mxu0 0.0
      %4202 = vmatpush1.msra.mxu0 0.0
      %4203 = vmatprep.subr.mxu0 0.0
      %4204 = vmatpush1.msra.mxu0 0.0
      %4205 = vmatprep.subr.mxu0 0.0
      %4206 = vmatpush1.msra.mxu0 0.0
      %4207 = vmatprep.subr.mxu0 0.0
      %4208 = vmatpush1.msra.mxu0 0.0
      %4209 = vmatprep.subr.mxu0 0.0
      %4210 = vmatpush1.msra.mxu0 0.0
      %4211 = vmatprep.subr.mxu0 0.0
      %4212 = vmatpush1.msra.mxu0 0.0
      %4213 = vmatprep.subr.mxu0 0.0
      %4214 = vmatpush1.msra.mxu0 0.0
      %4215 = vmatprep.subr.mxu0 0.0
      %4216 = vmatpush1.msra.mxu0 0.0
      %4217 = vmatprep.subr.mxu0 0.0
      %4218 = vmatpush1.msra.mxu0 0.0
      %4219 = vmatprep.subr.mxu0 0.0
      %4220 = vmatpush1.msra.mxu0 0.0
      %4221 = vmatprep.subr.mxu0 0.0
      %4222 = vmatpush1.msra.mxu0 0.0
      %4223 = vmatprep.subr.mxu0 0.0
      %4224 = vmatpush1.msra.mxu0 0.0
      %4225 = vmatprep.subr.mxu0 0.0
      %4226 = vmatpush1.msra.mxu0 0.0
      %4227 = vmatprep.subr.mxu0 0.0
      %4228 = vmatpush1.msra.mxu0 0.0
      %4229 = vmatprep.subr.mxu0 0.0
      %4230 = vmatpush1.msra.mxu0 0.0
      %4231 = vmatprep.subr.mxu0 0.0
      %4232 = vmatpush1.msra.mxu0 0.0
      %4233 = vmatprep.subr.mxu0 0.0
      %4234 = vmatpush1.msra.mxu0 0.0
      %4235 = vmatprep.mubr.f32.mxu0 0.0
      %4236 = vmatmul.mubr.f32.gmra.mrb[0].mxu0 %v4169
      %v4237 = vpop.f32.mrb[0].mxu0
      %v4238 = vadd.f32 0.0, %v4237
      %v4239 = vpop.f32.mrb[0].mxu0
      %4240 = vdwg.mxu0
      %v4241 = vld [vmem:[%s27] sm:$0xff]
      %4242 = vmatprep.subr.mxu0 0.0
      %4243 = vmatpush1.msra.mxu0 %v1357
      %4244 = vmatprep.subr.mxu0 0.0
      %4245 = vmatpush1.msra.mxu0 %v1358
      %4246 = vmatprep.subr.mxu0 0.0
      %4247 = vmatpush1.msra.mxu0 %v1359
      %4248 = vmatprep.subr.mxu0 0.0
      %4249 = vmatpush1.msra.mxu0 %v1360
      %4250 = vmatprep.subr.mxu0 0.0
      %4251 = vmatpush1.msra.mxu0 0.0
      %4252 = vmatprep.subr.mxu0 0.0
      %4253 = vmatpush1.msra.mxu0 0.0
      %4254 = vmatprep.subr.mxu0 0.0
      %4255 = vmatpush1.msra.mxu0 0.0
      %4256 = vmatprep.subr.mxu0 0.0
      %4257 = vmatpush1.msra.mxu0 0.0
      %4258 = vmatprep.subr.mxu0 0.0
      %4259 = vmatpush1.msra.mxu0 0.0
      %4260 = vmatprep.subr.mxu0 0.0
      %4261 = vmatpush1.msra.mxu0 0.0
      %4262 = vmatprep.subr.mxu0 0.0
      %4263 = vmatpush1.msra.mxu0 0.0
      %4264 = vmatprep.subr.mxu0 0.0
      %4265 = vmatpush1.msra.mxu0 0.0
      %4266 = vmatprep.subr.mxu0 0.0
      %4267 = vmatpush1.msra.mxu0 0.0
      %4268 = vmatprep.subr.mxu0 0.0
      %4269 = vmatpush1.msra.mxu0 0.0
      %4270 = vmatprep.subr.mxu0 0.0
      %4271 = vmatpush1.msra.mxu0 0.0
      %4272 = vmatprep.subr.mxu0 0.0
      %4273 = vmatpush1.msra.mxu0 0.0
      %4274 = vmatprep.subr.mxu0 0.0
      %4275 = vmatpush1.msra.mxu0 0.0
      %4276 = vmatprep.subr.mxu0 0.0
      %4277 = vmatpush1.msra.mxu0 0.0
      %4278 = vmatprep.subr.mxu0 0.0
      %4279 = vmatpush1.msra.mxu0 0.0
      %4280 = vmatprep.subr.mxu0 0.0
      %4281 = vmatpush1.msra.mxu0 0.0
      %4282 = vmatprep.subr.mxu0 0.0
      %4283 = vmatpush1.msra.mxu0 0.0
      %4284 = vmatprep.subr.mxu0 0.0
      %4285 = vmatpush1.msra.mxu0 0.0
      %4286 = vmatprep.subr.mxu0 0.0
      %4287 = vmatpush1.msra.mxu0 0.0
      %4288 = vmatprep.subr.mxu0 0.0
      %4289 = vmatpush1.msra.mxu0 0.0
      %4290 = vmatprep.subr.mxu0 0.0
      %4291 = vmatpush1.msra.mxu0 0.0
      %4292 = vmatprep.subr.mxu0 0.0
      %4293 = vmatpush1.msra.mxu0 0.0
      %4294 = vmatprep.subr.mxu0 0.0
      %4295 = vmatpush1.msra.mxu0 0.0
      %4296 = vmatprep.subr.mxu0 0.0
      %4297 = vmatpush1.msra.mxu0 0.0
      %4298 = vmatprep.subr.mxu0 0.0
      %4299 = vmatpush1.msra.mxu0 0.0
      %4300 = vmatprep.subr.mxu0 0.0
      %4301 = vmatpush1.msra.mxu0 0.0
      %4302 = vmatprep.subr.mxu0 0.0
      %4303 = vmatpush1.msra.mxu0 0.0
      %4304 = vmatprep.subr.mxu0 0.0
      %4305 = vmatpush1.msra.mxu0 0.0
      %4306 = vmatprep.mubr.f32.mxu0 0.0
      %4307 = vmatmul.mubr.f32.gmra.mrb[0].mxu0 %v4169
      %v4308 = vpop.f32.mrb[0].mxu0
      %v4309 = vadd.f32 0.0, %v4308
      %v4310 = vpop.f32.mrb[0].mxu0
      %4311 = vdwg.mxu0
      %s4312 = scalar_lea.vmem %s27, 8
      %v4313 = vld [vmem:[%s4312] sm:$0xff]
      %v4315 = vsel %vm1445, %v4313, 0
      %4317 = vmatprep.subr.mxu0 0.0
      %4318 = vmatpush1.msra.mxu0 %v4309
      %4319 = vmatprep.subr.mxu0 0.0
      %4320 = vmatpush1.msra.mxu0 0.0
      %4321 = vmatprep.subr.mxu0 0.0
      %4322 = vmatpush1.msra.mxu0 0.0
      %4323 = vmatprep.subr.mxu0 0.0
      %4324 = vmatpush1.msra.mxu0 0.0
      %4325 = vmatprep.subr.mxu0 0.0
      %4326 = vmatpush1.msra.mxu0 0.0
      %4327 = vmatprep.subr.mxu0 0.0
      %4328 = vmatpush1.msra.mxu0 0.0
      %4329 = vmatprep.subr.mxu0 0.0
      %4330 = vmatpush1.msra.mxu0 0.0
      %4331 = vmatprep.subr.mxu0 0.0
      %4332 = vmatpush1.msra.mxu0 0.0
      %4333 = vmatprep.subr.mxu0 0.0
      %4334 = vmatpush1.msra.mxu0 0.0
      %4335 = vmatprep.subr.mxu0 0.0
      %4336 = vmatpush1.msra.mxu0 0.0
      %4337 = vmatprep.subr.mxu0 0.0
      %4338 = vmatpush1.msra.mxu0 0.0
      %4339 = vmatprep.subr.mxu0 0.0
      %4340 = vmatpush1.msra.mxu0 0.0
      %4341 = vmatprep.subr.mxu0 0.0
      %4342 = vmatpush1.msra.mxu0 0.0
      %4343 = vmatprep.subr.mxu0 0.0
      %4344 = vmatpush1.msra.mxu0 0.0
      %4345 = vmatprep.subr.mxu0 0.0
      %4346 = vmatpush1.msra.mxu0 0.0
      %4347 = vmatprep.subr.mxu0 0.0
      %4348 = vmatpush1.msra.mxu0 0.0
      %4349 = vmatprep.subr.mxu0 0.0
      %4350 = vmatpush1.msra.mxu0 0.0
      %4351 = vmatprep.subr.mxu0 0.0
      %4352 = vmatpush1.msra.mxu0 0.0
      %4353 = vmatprep.subr.mxu0 0.0
      %4354 = vmatpush1.msra.mxu0 0.0
      %4355 = vmatprep.subr.mxu0 0.0
      %4356 = vmatpush1.msra.mxu0 0.0
      %4357 = vmatprep.subr.mxu0 0.0
      %4358 = vmatpush1.msra.mxu0 0.0
      %4359 = vmatprep.subr.mxu0 0.0
      %4360 = vmatpush1.msra.mxu0 0.0
      %4361 = vmatprep.subr.mxu0 0.0
      %4362 = vmatpush1.msra.mxu0 0.0
      %4363 = vmatprep.subr.mxu0 0.0
      %4364 = vmatpush1.msra.mxu0 0.0
      %4365 = vmatprep.subr.mxu0 0.0
      %4366 = vmatpush1.msra.mxu0 0.0
      %4367 = vmatprep.subr.mxu0 0.0
      %4368 = vmatpush1.msra.mxu0 0.0
      %4369 = vmatprep.subr.mxu0 0.0
      %4370 = vmatpush1.msra.mxu0 0.0
      %4371 = vmatprep.subr.mxu0 0.0
      %4372 = vmatpush1.msra.mxu0 0.0
      %4373 = vmatprep.subr.mxu0 0.0
      %4374 = vmatpush1.msra.mxu0 0.0
      %4375 = vmatprep.subr.mxu0 0.0
      %4376 = vmatpush1.msra.mxu0 0.0
      %4377 = vmatprep.subr.mxu0 0.0
      %4378 = vmatpush1.msra.mxu0 0.0
      %4379 = vmatprep.subr.mxu0 0.0
      %4380 = vmatpush1.msra.mxu0 0.0
      %4381 = vmatprep.mubr.f32.mxu0 0.0
      %4382 = vmatmul.mubr.f32.gmra.mrb[0].mxu0 %v4315
      %v4383 = vpop.f32.mrb[0].mxu0
      %v4384 = vadd.f32 0.0, %v4383
      %v4385 = vpop.f32.mrb[0].mxu0
      %4386 = vdwg.mxu0
      %v4388 = vsel %vm1445, %v4241, 0
      %4390 = vmatprep.subr.mxu0 0.0
      %4391 = vmatpush1.msra.mxu0 %v4238
      %4392 = vmatprep.subr.mxu0 0.0
      %4393 = vmatpush1.msra.mxu0 0.0
      %4394 = vmatprep.subr.mxu0 0.0
      %4395 = vmatpush1.msra.mxu0 0.0
      %4396 = vmatprep.subr.mxu0 0.0
      %4397 = vmatpush1.msra.mxu0 0.0
      %4398 = vmatprep.subr.mxu0 0.0
      %4399 = vmatpush1.msra.mxu0 0.0
      %4400 = vmatprep.subr.mxu0 0.0
      %4401 = vmatpush1.msra.mxu0 0.0
      %4402 = vmatprep.subr.mxu0 0.0
      %4403 = vmatpush1.msra.mxu0 0.0
      %4404 = vmatprep.subr.mxu0 0.0
      %4405 = vmatpush1.msra.mxu0 0.0
      %4406 = vmatprep.subr.mxu0 0.0
      %4407 = vmatpush1.msra.mxu0 0.0
      %4408 = vmatprep.subr.mxu0 0.0
      %4409 = vmatpush1.msra.mxu0 0.0
      %4410 = vmatprep.subr.mxu0 0.0
      %4411 = vmatpush1.msra.mxu0 0.0
      %4412 = vmatprep.subr.mxu0 0.0
      %4413 = vmatpush1.msra.mxu0 0.0
      %4414 = vmatprep.subr.mxu0 0.0
      %4415 = vmatpush1.msra.mxu0 0.0
      %4416 = vmatprep.subr.mxu0 0.0
      %4417 = vmatpush1.msra.mxu0 0.0
      %4418 = vmatprep.subr.mxu0 0.0
      %4419 = vmatpush1.msra.mxu0 0.0
      %4420 = vmatprep.subr.mxu0 0.0
      %4421 = vmatpush1.msra.mxu0 0.0
      %4422 = vmatprep.subr.mxu0 0.0
      %4423 = vmatpush1.msra.mxu0 0.0
      %4424 = vmatprep.subr.mxu0 0.0
      %4425 = vmatpush1.msra.mxu0 0.0
      %4426 = vmatprep.subr.mxu0 0.0
      %4427 = vmatpush1.msra.mxu0 0.0
      %4428 = vmatprep.subr.mxu0 0.0
      %4429 = vmatpush1.msra.mxu0 0.0
      %4430 = vmatprep.subr.mxu0 0.0
      %4431 = vmatpush1.msra.mxu0 0.0
      %4432 = vmatprep.subr.mxu0 0.0
      %4433 = vmatpush1.msra.mxu0 0.0
      %4434 = vmatprep.subr.mxu0 0.0
      %4435 = vmatpush1.msra.mxu0 0.0
      %4436 = vmatprep.subr.mxu0 0.0
      %4437 = vmatpush1.msra.mxu0 0.0
      %4438 = vmatprep.subr.mxu0 0.0
      %4439 = vmatpush1.msra.mxu0 0.0
      %4440 = vmatprep.subr.mxu0 0.0
      %4441 = vmatpush1.msra.mxu0 0.0
      %4442 = vmatprep.subr.mxu0 0.0
      %4443 = vmatpush1.msra.mxu0 0.0
      %4444 = vmatprep.subr.mxu0 0.0
      %4445 = vmatpush1.msra.mxu0 0.0
      %4446 = vmatprep.subr.mxu0 0.0
      %4447 = vmatpush1.msra.mxu0 0.0
      %4448 = vmatprep.subr.mxu0 0.0
      %4449 = vmatpush1.msra.mxu0 0.0
      %4450 = vmatprep.subr.mxu0 0.0
      %4451 = vmatpush1.msra.mxu0 0.0
      %4452 = vmatprep.subr.mxu0 0.0
      %4453 = vmatpush1.msra.mxu0 0.0
      %4454 = vmatprep.mubr.f32.mxu0 0.0
      %4455 = vmatmul.mubr.f32.gmra.mrb[0].mxu0 %v4388
      %v4456 = vpop.f32.mrb[0].mxu0
      %v4457 = vadd.f32 %v4384, %v4456
      %v4458 = vpop.f32.mrb[0].mxu0
      %4459 = vdwg.mxu0
      %4460 = vmatprep.subr.mxu0 0.0
      %4461 = vmatpush1.msra.mxu0 %v1625
      %4462 = vmatprep.subr.mxu0 0.0
      %4463 = vmatpush1.msra.mxu0 %v1626
      %4464 = vmatprep.subr.mxu0 0.0
      %4465 = vmatpush1.msra.mxu0 %v1627
      %4466 = vmatprep.subr.mxu0 0.0
      %4467 = vmatpush1.msra.mxu0 %v1628
      %4468 = vmatprep.subr.mxu0 0.0
      %4469 = vmatpush1.msra.mxu0 0.0
      %4470 = vmatprep.subr.mxu0 0.0
      %4471 = vmatpush1.msra.mxu0 0.0
      %4472 = vmatprep.subr.mxu0 0.0
      %4473 = vmatpush1.msra.mxu0 0.0
      %4474 = vmatprep.subr.mxu0 0.0
      %4475 = vmatpush1.msra.mxu0 0.0
      %4476 = vmatprep.subr.mxu0 0.0
      %4477 = vmatpush1.msra.mxu0 0.0
      %4478 = vmatprep.subr.mxu0 0.0
      %4479 = vmatpush1.msra.mxu0 0.0
      %4480 = vmatprep.subr.mxu0 0.0
      %4481 = vmatpush1.msra.mxu0 0.0
      %4482 = vmatprep.subr.mxu0 0.0
      %4483 = vmatpush1.msra.mxu0 0.0
      %4484 = vmatprep.subr.mxu0 0.0
      %4485 = vmatpush1.msra.mxu0 0.0
      %4486 = vmatprep.subr.mxu0 0.0
      %4487 = vmatpush1.msra.mxu0 0.0
      %4488 = vmatprep.subr.mxu0 0.0
      %4489 = vmatpush1.msra.mxu0 0.0
      %4490 = vmatprep.subr.mxu0 0.0
      %4491 = vmatpush1.msra.mxu0 0.0
      %4492 = vmatprep.subr.mxu0 0.0
      %4493 = vmatpush1.msra.mxu0 0.0
      %4494 = vmatprep.subr.mxu0 0.0
      %4495 = vmatpush1.msra.mxu0 0.0
      %4496 = vmatprep.subr.mxu0 0.0
      %4497 = vmatpush1.msra.mxu0 0.0
      %4498 = vmatprep.subr.mxu0 0.0
      %4499 = vmatpush1.msra.mxu0 0.0
      %4500 = vmatprep.subr.mxu0 0.0
      %4501 = vmatpush1.msra.mxu0 0.0
      %4502 = vmatprep.subr.mxu0 0.0
      %4503 = vmatpush1.msra.mxu0 0.0
      %4504 = vmatprep.subr.mxu0 0.0
      %4505 = vmatpush1.msra.mxu0 0.0
      %4506 = vmatprep.subr.mxu0 0.0
      %4507 = vmatpush1.msra.mxu0 0.0
      %4508 = vmatprep.subr.mxu0 0.0
      %4509 = vmatpush1.msra.mxu0 0.0
      %4510 = vmatprep.subr.mxu0 0.0
      %4511 = vmatpush1.msra.mxu0 0.0
      %4512 = vmatprep.subr.mxu0 0.0
      %4513 = vmatpush1.msra.mxu0 0.0
      %4514 = vmatprep.subr.mxu0 0.0
      %4515 = vmatpush1.msra.mxu0 0.0
      %4516 = vmatprep.subr.mxu0 0.0
      %4517 = vmatpush1.msra.mxu0 0.0
      %4518 = vmatprep.subr.mxu0 0.0
      %4519 = vmatpush1.msra.mxu0 0.0
      %4520 = vmatprep.subr.mxu0 0.0
      %4521 = vmatpush1.msra.mxu0 0.0
      %4522 = vmatprep.subr.mxu0 0.0
      %4523 = vmatpush1.msra.mxu0 0.0
      %4524 = vmatprep.mubr.f32.mxu0 0.0
      %4525 = vmatmul.mubr.f32.gmra.mrb[0].mxu0 %v4169
      %v4526 = vpop.f32.mrb[0].mxu0
      %v4527 = vadd.f32 0.0, %v4526
      %v4528 = vpop.f32.mrb[0].mxu0
      %4529 = vdwg.mxu0
      %s4530 = scalar_lea.vmem %s27, 16
      %v4531 = vld [vmem:[%s4530] sm:$0xff]
      %v4533 = vsel %vm1445, %v4531, 0
      %4535 = vmatprep.subr.mxu0 0.0
      %4536 = vmatpush1.msra.mxu0 %v4527
      %4537 = vmatprep.subr.mxu0 0.0
      %4538 = vmatpush1.msra.mxu0 0.0
      %4539 = vmatprep.subr.mxu0 0.0
      %4540 = vmatpush1.msra.mxu0 0.0
      %4541 = vmatprep.subr.mxu0 0.0
      %4542 = vmatpush1.msra.mxu0 0.0
      %4543 = vmatprep.subr.mxu0 0.0
      %4544 = vmatpush1.msra.mxu0 0.0
      %4545 = vmatprep.subr.mxu0 0.0
      %4546 = vmatpush1.msra.mxu0 0.0
      %4547 = vmatprep.subr.mxu0 0.0
      %4548 = vmatpush1.msra.mxu0 0.0
      %4549 = vmatprep.subr.mxu0 0.0
      %4550 = vmatpush1.msra.mxu0 0.0
      %4551 = vmatprep.subr.mxu0 0.0
      %4552 = vmatpush1.msra.mxu0 0.0
      %4553 = vmatprep.subr.mxu0 0.0
      %4554 = vmatpush1.msra.mxu0 0.0
      %4555 = vmatprep.subr.mxu0 0.0
      %4556 = vmatpush1.msra.mxu0 0.0
      %4557 = vmatprep.subr.mxu0 0.0
      %4558 = vmatpush1.msra.mxu0 0.0
      %4559 = vmatprep.subr.mxu0 0.0
      %4560 = vmatpush1.msra.mxu0 0.0
      %4561 = vmatprep.subr.mxu0 0.0
      %4562 = vmatpush1.msra.mxu0 0.0
      %4563 = vmatprep.subr.mxu0 0.0
      %4564 = vmatpush1.msra.mxu0 0.0
      %4565 = vmatprep.subr.mxu0 0.0
      %4566 = vmatpush1.msra.mxu0 0.0
      %4567 = vmatprep.subr.mxu0 0.0
      %4568 = vmatpush1.msra.mxu0 0.0
      %4569 = vmatprep.subr.mxu0 0.0
      %4570 = vmatpush1.msra.mxu0 0.0
      %4571 = vmatprep.subr.mxu0 0.0
      %4572 = vmatpush1.msra.mxu0 0.0
      %4573 = vmatprep.subr.mxu0 0.0
      %4574 = vmatpush1.msra.mxu0 0.0
      %4575 = vmatprep.subr.mxu0 0.0
      %4576 = vmatpush1.msra.mxu0 0.0
      %4577 = vmatprep.subr.mxu0 0.0
      %4578 = vmatpush1.msra.mxu0 0.0
      %4579 = vmatprep.subr.mxu0 0.0
      %4580 = vmatpush1.msra.mxu0 0.0
      %4581 = vmatprep.subr.mxu0 0.0
      %4582 = vmatpush1.msra.mxu0 0.0
      %4583 = vmatprep.subr.mxu0 0.0
      %4584 = vmatpush1.msra.mxu0 0.0
      %4585 = vmatprep.subr.mxu0 0.0
      %4586 = vmatpush1.msra.mxu0 0.0
      %4587 = vmatprep.subr.mxu0 0.0
      %4588 = vmatpush1.msra.mxu0 0.0
      %4589 = vmatprep.subr.mxu0 0.0
      %4590 = vmatpush1.msra.mxu0 0.0
      %4591 = vmatprep.subr.mxu0 0.0
      %4592 = vmatpush1.msra.mxu0 0.0
      %4593 = vmatprep.subr.mxu0 0.0
      %4594 = vmatpush1.msra.mxu0 0.0
      %4595 = vmatprep.subr.mxu0 0.0
      %4596 = vmatpush1.msra.mxu0 0.0
      %4597 = vmatprep.subr.mxu0 0.0
      %4598 = vmatpush1.msra.mxu0 0.0
      %4599 = vmatprep.mubr.f32.mxu0 0.0
      %4600 = vmatmul.mubr.f32.gmra.mrb[0].mxu0 %v4533
      %v4601 = vpop.f32.mrb[0].mxu0
      %v4602 = vadd.f32 0.0, %v4601
      %v4603 = vpop.f32.mrb[0].mxu0
      %4604 = vdwg.mxu0
      %v4605 = vadd.f32 %v4457, %v4602
      %v4606 = vld [vmem:[%s29] sm:$0xff]
      %4608 = vset.pattern.permute.xlu0 0
      %4609 = vperm.xlu0 %4608, %v4606
      %v4610 = vpop.permute.xlu0 %4609
      %v4612 = vadd.f32 %v4605, %v4610
      %v4613 = vmax.f32 %v4612, 0.0
      %v4615 = vsel %vm4167, %v4613, 0
      %4617 = vmatprep.subr.mxu0 0.0
      %4618 = vmatpush1.msra.mxu0 %v1238
      %4619 = vmatprep.subr.mxu0 0.0
      %4620 = vmatpush1.msra.mxu0 %v1239
      %4621 = vmatprep.subr.mxu0 0.0
      %4622 = vmatpush1.msra.mxu0 %v1240
      %4623 = vmatprep.subr.mxu0 0.0
      %4624 = vmatpush1.msra.mxu0 %v1241
      %4625 = vmatprep.subr.mxu0 0.0
      %4626 = vmatpush1.msra.mxu0 0.0
      %4627 = vmatprep.subr.mxu0 0.0
      %4628 = vmatpush1.msra.mxu0 0.0
      %4629 = vmatprep.subr.mxu0 0.0
      %4630 = vmatpush1.msra.mxu0 0.0
      %4631 = vmatprep.subr.mxu0 0.0
      %4632 = vmatpush1.msra.mxu0 0.0
      %4633 = vmatprep.subr.mxu0 0.0
      %4634 = vmatpush1.msra.mxu0 0.0
      %4635 = vmatprep.subr.mxu0 0.0
      %4636 = vmatpush1.msra.mxu0 0.0
      %4637 = vmatprep.subr.mxu0 0.0
      %4638 = vmatpush1.msra.mxu0 0.0
      %4639 = vmatprep.subr.mxu0 0.0
      %4640 = vmatpush1.msra.mxu0 0.0
      %4641 = vmatprep.subr.mxu0 0.0
      %4642 = vmatpush1.msra.mxu0 0.0
      %4643 = vmatprep.subr.mxu0 0.0
      %4644 = vmatpush1.msra.mxu0 0.0
      %4645 = vmatprep.subr.mxu0 0.0
      %4646 = vmatpush1.msra.mxu0 0.0
      %4647 = vmatprep.subr.mxu0 0.0
      %4648 = vmatpush1.msra.mxu0 0.0
      %4649 = vmatprep.subr.mxu0 0.0
      %4650 = vmatpush1.msra.mxu0 0.0
      %4651 = vmatprep.subr.mxu0 0.0
      %4652 = vmatpush1.msra.mxu0 0.0
      %4653 = vmatprep.subr.mxu0 0.0
      %4654 = vmatpush1.msra.mxu0 0.0
      %4655 = vmatprep.subr.mxu0 0.0
      %4656 = vmatpush1.msra.mxu0 0.0
      %4657 = vmatprep.subr.mxu0 0.0
      %4658 = vmatpush1.msra.mxu0 0.0
      %4659 = vmatprep.subr.mxu0 0.0
      %4660 = vmatpush1.msra.mxu0 0.0
      %4661 = vmatprep.subr.mxu0 0.0
      %4662 = vmatpush1.msra.mxu0 0.0
      %4663 = vmatprep.subr.mxu0 0.0
      %4664 = vmatpush1.msra.mxu0 0.0
      %4665 = vmatprep.subr.mxu0 0.0
      %4666 = vmatpush1.msra.mxu0 0.0
      %4667 = vmatprep.subr.mxu0 0.0
      %4668 = vmatpush1.msra.mxu0 0.0
      %4669 = vmatprep.subr.mxu0 0.0
      %4670 = vmatpush1.msra.mxu0 0.0
      %4671 = vmatprep.subr.mxu0 0.0
      %4672 = vmatpush1.msra.mxu0 0.0
      %4673 = vmatprep.subr.mxu0 0.0
      %4674 = vmatpush1.msra.mxu0 0.0
      %4675 = vmatprep.subr.mxu0 0.0
      %4676 = vmatpush1.msra.mxu0 0.0
      %4677 = vmatprep.subr.mxu0 0.0
      %4678 = vmatpush1.msra.mxu0 0.0
      %4679 = vmatprep.subr.mxu0 0.0
      %4680 = vmatpush1.msra.mxu0 0.0
      %4681 = vmatprep.mubr.f32.mxu0 0.0
      %4682 = vmatmul.mubr.f32.gmra.mrb[0].mxu0 %v4615
      %v4683 = vpop.f32.mrb[0].mxu0
      %v4684 = vadd.f32 0.0, %v4683
      %v4685 = vpop.f32.mrb[0].mxu0
      %4686 = vdwg.mxu0
      %v4687 = vld [vmem:[%s31] sm:$0xff]
      %4688 = vmatprep.subr.mxu0 0.0
      %4689 = vmatpush1.msra.mxu0 %v1357
      %4690 = vmatprep.subr.mxu0 0.0
      %4691 = vmatpush1.msra.mxu0 %v1358
      %4692 = vmatprep.subr.mxu0 0.0
      %4693 = vmatpush1.msra.mxu0 %v1359
      %4694 = vmatprep.subr.mxu0 0.0
      %4695 = vmatpush1.msra.mxu0 %v1360
      %4696 = vmatprep.subr.mxu0 0.0
      %4697 = vmatpush1.msra.mxu0 0.0
      %4698 = vmatprep.subr.mxu0 0.0
      %4699 = vmatpush1.msra.mxu0 0.0
      %4700 = vmatprep.subr.mxu0 0.0
      %4701 = vmatpush1.msra.mxu0 0.0
      %4702 = vmatprep.subr.mxu0 0.0
      %4703 = vmatpush1.msra.mxu0 0.0
      %4704 = vmatprep.subr.mxu0 0.0
      %4705 = vmatpush1.msra.mxu0 0.0
      %4706 = vmatprep.subr.mxu0 0.0
      %4707 = vmatpush1.msra.mxu0 0.0
      %4708 = vmatprep.subr.mxu0 0.0
      %4709 = vmatpush1.msra.mxu0 0.0
      %4710 = vmatprep.subr.mxu0 0.0
      %4711 = vmatpush1.msra.mxu0 0.0
      %4712 = vmatprep.subr.mxu0 0.0
      %4713 = vmatpush1.msra.mxu0 0.0
      %4714 = vmatprep.subr.mxu0 0.0
      %4715 = vmatpush1.msra.mxu0 0.0
      %4716 = vmatprep.subr.mxu0 0.0
      %4717 = vmatpush1.msra.mxu0 0.0
      %4718 = vmatprep.subr.mxu0 0.0
      %4719 = vmatpush1.msra.mxu0 0.0
      %4720 = vmatprep.subr.mxu0 0.0
      %4721 = vmatpush1.msra.mxu0 0.0
      %4722 = vmatprep.subr.mxu0 0.0
      %4723 = vmatpush1.msra.mxu0 0.0
      %4724 = vmatprep.subr.mxu0 0.0
      %4725 = vmatpush1.msra.mxu0 0.0
      %4726 = vmatprep.subr.mxu0 0.0
      %4727 = vmatpush1.msra.mxu0 0.0
      %4728 = vmatprep.subr.mxu0 0.0
      %4729 = vmatpush1.msra.mxu0 0.0
      %4730 = vmatprep.subr.mxu0 0.0
      %4731 = vmatpush1.msra.mxu0 0.0
      %4732 = vmatprep.subr.mxu0 0.0
      %4733 = vmatpush1.msra.mxu0 0.0
      %4734 = vmatprep.subr.mxu0 0.0
      %4735 = vmatpush1.msra.mxu0 0.0
      %4736 = vmatprep.subr.mxu0 0.0
      %4737 = vmatpush1.msra.mxu0 0.0
      %4738 = vmatprep.subr.mxu0 0.0
      %4739 = vmatpush1.msra.mxu0 0.0
      %4740 = vmatprep.subr.mxu0 0.0
      %4741 = vmatpush1.msra.mxu0 0.0
      %4742 = vmatprep.subr.mxu0 0.0
      %4743 = vmatpush1.msra.mxu0 0.0
      %4744 = vmatprep.subr.mxu0 0.0
      %4745 = vmatpush1.msra.mxu0 0.0
      %4746 = vmatprep.subr.mxu0 0.0
      %4747 = vmatpush1.msra.mxu0 0.0
      %4748 = vmatprep.subr.mxu0 0.0
      %4749 = vmatpush1.msra.mxu0 0.0
      %4750 = vmatprep.subr.mxu0 0.0
      %4751 = vmatpush1.msra.mxu0 0.0
      %4752 = vmatprep.mubr.f32.mxu0 0.0
      %4753 = vmatmul.mubr.f32.gmra.mrb[0].mxu0 %v4615
      %v4754 = vpop.f32.mrb[0].mxu0
      %v4755 = vadd.f32 0.0, %v4754
      %v4756 = vpop.f32.mrb[0].mxu0
      %4757 = vdwg.mxu0
      %s4758 = scalar_lea.vmem %s31, 8
      %v4759 = vld [vmem:[%s4758] sm:$0xff]
      %v4761 = vsel %vm1445, %v4759, 0
      %4763 = vmatprep.subr.mxu0 0.0
      %4764 = vmatpush1.msra.mxu0 %v4755
      %4765 = vmatprep.subr.mxu0 0.0
      %4766 = vmatpush1.msra.mxu0 0.0
      %4767 = vmatprep.subr.mxu0 0.0
      %4768 = vmatpush1.msra.mxu0 0.0
      %4769 = vmatprep.subr.mxu0 0.0
      %4770 = vmatpush1.msra.mxu0 0.0
      %4771 = vmatprep.subr.mxu0 0.0
      %4772 = vmatpush1.msra.mxu0 0.0
      %4773 = vmatprep.subr.mxu0 0.0
      %4774 = vmatpush1.msra.mxu0 0.0
      %4775 = vmatprep.subr.mxu0 0.0
      %4776 = vmatpush1.msra.mxu0 0.0
      %4777 = vmatprep.subr.mxu0 0.0
      %4778 = vmatpush1.msra.mxu0 0.0
      %4779 = vmatprep.subr.mxu0 0.0
      %4780 = vmatpush1.msra.mxu0 0.0
      %4781 = vmatprep.subr.mxu0 0.0
      %4782 = vmatpush1.msra.mxu0 0.0
      %4783 = vmatprep.subr.mxu0 0.0
      %4784 = vmatpush1.msra.mxu0 0.0
      %4785 = vmatprep.subr.mxu0 0.0
      %4786 = vmatpush1.msra.mxu0 0.0
      %4787 = vmatprep.subr.mxu0 0.0
      %4788 = vmatpush1.msra.mxu0 0.0
      %4789 = vmatprep.subr.mxu0 0.0
      %4790 = vmatpush1.msra.mxu0 0.0
      %4791 = vmatprep.subr.mxu0 0.0
      %4792 = vmatpush1.msra.mxu0 0.0
      %4793 = vmatprep.subr.mxu0 0.0
      %4794 = vmatpush1.msra.mxu0 0.0
      %4795 = vmatprep.subr.mxu0 0.0
      %4796 = vmatpush1.msra.mxu0 0.0
      %4797 = vmatprep.subr.mxu0 0.0
      %4798 = vmatpush1.msra.mxu0 0.0
      %4799 = vmatprep.subr.mxu0 0.0
      %4800 = vmatpush1.msra.mxu0 0.0
      %4801 = vmatprep.subr.mxu0 0.0
      %4802 = vmatpush1.msra.mxu0 0.0
      %4803 = vmatprep.subr.mxu0 0.0
      %4804 = vmatpush1.msra.mxu0 0.0
      %4805 = vmatprep.subr.mxu0 0.0
      %4806 = vmatpush1.msra.mxu0 0.0
      %4807 = vmatprep.subr.mxu0 0.0
      %4808 = vmatpush1.msra.mxu0 0.0
      %4809 = vmatprep.subr.mxu0 0.0
      %4810 = vmatpush1.msra.mxu0 0.0
      %4811 = vmatprep.subr.mxu0 0.0
      %4812 = vmatpush1.msra.mxu0 0.0
      %4813 = vmatprep.subr.mxu0 0.0
      %4814 = vmatpush1.msra.mxu0 0.0
      %4815 = vmatprep.subr.mxu0 0.0
      %4816 = vmatpush1.msra.mxu0 0.0
      %4817 = vmatprep.subr.mxu0 0.0
      %4818 = vmatpush1.msra.mxu0 0.0
      %4819 = vmatprep.subr.mxu0 0.0
      %4820 = vmatpush1.msra.mxu0 0.0
      %4821 = vmatprep.subr.mxu0 0.0
      %4822 = vmatpush1.msra.mxu0 0.0
      %4823 = vmatprep.subr.mxu0 0.0
      %4824 = vmatpush1.msra.mxu0 0.0
      %4825 = vmatprep.subr.mxu0 0.0
      %4826 = vmatpush1.msra.mxu0 0.0
      %4827 = vmatprep.mubr.f32.mxu0 0.0
      %4828 = vmatmul.mubr.f32.gmra.mrb[0].mxu0 %v4761
      %v4829 = vpop.f32.mrb[0].mxu0
      %v4830 = vadd.f32 0.0, %v4829
      %v4831 = vpop.f32.mrb[0].mxu0
      %4832 = vdwg.mxu0
      %v4834 = vsel %vm1445, %v4687, 0
      %4836 = vmatprep.subr.mxu0 0.0
      %4837 = vmatpush1.msra.mxu0 %v4684
      %4838 = vmatprep.subr.mxu0 0.0
      %4839 = vmatpush1.msra.mxu0 0.0
      %4840 = vmatprep.subr.mxu0 0.0
      %4841 = vmatpush1.msra.mxu0 0.0
      %4842 = vmatprep.subr.mxu0 0.0
      %4843 = vmatpush1.msra.mxu0 0.0
      %4844 = vmatprep.subr.mxu0 0.0
      %4845 = vmatpush1.msra.mxu0 0.0
      %4846 = vmatprep.subr.mxu0 0.0
      %4847 = vmatpush1.msra.mxu0 0.0
      %4848 = vmatprep.subr.mxu0 0.0
      %4849 = vmatpush1.msra.mxu0 0.0
      %4850 = vmatprep.subr.mxu0 0.0
      %4851 = vmatpush1.msra.mxu0 0.0
      %4852 = vmatprep.subr.mxu0 0.0
      %4853 = vmatpush1.msra.mxu0 0.0
      %4854 = vmatprep.subr.mxu0 0.0
      %4855 = vmatpush1.msra.mxu0 0.0
      %4856 = vmatprep.subr.mxu0 0.0
      %4857 = vmatpush1.msra.mxu0 0.0
      %4858 = vmatprep.subr.mxu0 0.0
      %4859 = vmatpush1.msra.mxu0 0.0
      %4860 = vmatprep.subr.mxu0 0.0
      %4861 = vmatpush1.msra.mxu0 0.0
      %4862 = vmatprep.subr.mxu0 0.0
      %4863 = vmatpush1.msra.mxu0 0.0
      %4864 = vmatprep.subr.mxu0 0.0
      %4865 = vmatpush1.msra.mxu0 0.0
      %4866 = vmatprep.subr.mxu0 0.0
      %4867 = vmatpush1.msra.mxu0 0.0
      %4868 = vmatprep.subr.mxu0 0.0
      %4869 = vmatpush1.msra.mxu0 0.0
      %4870 = vmatprep.subr.mxu0 0.0
      %4871 = vmatpush1.msra.mxu0 0.0
      %4872 = vmatprep.subr.mxu0 0.0
      %4873 = vmatpush1.msra.mxu0 0.0
      %4874 = vmatprep.subr.mxu0 0.0
      %4875 = vmatpush1.msra.mxu0 0.0
      %4876 = vmatprep.subr.mxu0 0.0
      %4877 = vmatpush1.msra.mxu0 0.0
      %4878 = vmatprep.subr.mxu0 0.0
      %4879 = vmatpush1.msra.mxu0 0.0
      %4880 = vmatprep.subr.mxu0 0.0
      %4881 = vmatpush1.msra.mxu0 0.0
      %4882 = vmatprep.subr.mxu0 0.0
      %4883 = vmatpush1.msra.mxu0 0.0
      %4884 = vmatprep.subr.mxu0 0.0
      %4885 = vmatpush1.msra.mxu0 0.0
      %4886 = vmatprep.subr.mxu0 0.0
      %4887 = vmatpush1.msra.mxu0 0.0
      %4888 = vmatprep.subr.mxu0 0.0
      %4889 = vmatpush1.msra.mxu0 0.0
      %4890 = vmatprep.subr.mxu0 0.0
      %4891 = vmatpush1.msra.mxu0 0.0
      %4892 = vmatprep.subr.mxu0 0.0
      %4893 = vmatpush1.msra.mxu0 0.0
      %4894 = vmatprep.subr.mxu0 0.0
      %4895 = vmatpush1.msra.mxu0 0.0
      %4896 = vmatprep.subr.mxu0 0.0
      %4897 = vmatpush1.msra.mxu0 0.0
      %4898 = vmatprep.subr.mxu0 0.0
      %4899 = vmatpush1.msra.mxu0 0.0
      %4900 = vmatprep.mubr.f32.mxu0 0.0
      %4901 = vmatmul.mubr.f32.gmra.mrb[0].mxu0 %v4834
      %v4902 = vpop.f32.mrb[0].mxu0
      %v4903 = vadd.f32 %v4830, %v4902
      %v4904 = vpop.f32.mrb[0].mxu0
      %4905 = vdwg.mxu0
      %4906 = vmatprep.subr.mxu0 0.0
      %4907 = vmatpush1.msra.mxu0 %v1625
      %4908 = vmatprep.subr.mxu0 0.0
      %4909 = vmatpush1.msra.mxu0 %v1626
      %4910 = vmatprep.subr.mxu0 0.0
      %4911 = vmatpush1.msra.mxu0 %v1627
      %4912 = vmatprep.subr.mxu0 0.0
      %4913 = vmatpush1.msra.mxu0 %v1628
      %4914 = vmatprep.subr.mxu0 0.0
      %4915 = vmatpush1.msra.mxu0 0.0
      %4916 = vmatprep.subr.mxu0 0.0
      %4917 = vmatpush1.msra.mxu0 0.0
      %4918 = vmatprep.subr.mxu0 0.0
      %4919 = vmatpush1.msra.mxu0 0.0
      %4920 = vmatprep.subr.mxu0 0.0
      %4921 = vmatpush1.msra.mxu0 0.0
      %4922 = vmatprep.subr.mxu0 0.0
      %4923 = vmatpush1.msra.mxu0 0.0
      %4924 = vmatprep.subr.mxu0 0.0
      %4925 = vmatpush1.msra.mxu0 0.0
      %4926 = vmatprep.subr.mxu0 0.0
      %4927 = vmatpush1.msra.mxu0 0.0
      %4928 = vmatprep.subr.mxu0 0.0
      %4929 = vmatpush1.msra.mxu0 0.0
      %4930 = vmatprep.subr.mxu0 0.0
      %4931 = vmatpush1.msra.mxu0 0.0
      %4932 = vmatprep.subr.mxu0 0.0
      %4933 = vmatpush1.msra.mxu0 0.0
      %4934 = vmatprep.subr.mxu0 0.0
      %4935 = vmatpush1.msra.mxu0 0.0
      %4936 = vmatprep.subr.mxu0 0.0
      %4937 = vmatpush1.msra.mxu0 0.0
      %4938 = vmatprep.subr.mxu0 0.0
      %4939 = vmatpush1.msra.mxu0 0.0
      %4940 = vmatprep.subr.mxu0 0.0
      %4941 = vmatpush1.msra.mxu0 0.0
      %4942 = vmatprep.subr.mxu0 0.0
      %4943 = vmatpush1.msra.mxu0 0.0
      %4944 = vmatprep.subr.mxu0 0.0
      %4945 = vmatpush1.msra.mxu0 0.0
      %4946 = vmatprep.subr.mxu0 0.0
      %4947 = vmatpush1.msra.mxu0 0.0
      %4948 = vmatprep.subr.mxu0 0.0
      %4949 = vmatpush1.msra.mxu0 0.0
      %4950 = vmatprep.subr.mxu0 0.0
      %4951 = vmatpush1.msra.mxu0 0.0
      %4952 = vmatprep.subr.mxu0 0.0
      %4953 = vmatpush1.msra.mxu0 0.0
      %4954 = vmatprep.subr.mxu0 0.0
      %4955 = vmatpush1.msra.mxu0 0.0
      %4956 = vmatprep.subr.mxu0 0.0
      %4957 = vmatpush1.msra.mxu0 0.0
      %4958 = vmatprep.subr.mxu0 0.0
      %4959 = vmatpush1.msra.mxu0 0.0
      %4960 = vmatprep.subr.mxu0 0.0
      %4961 = vmatpush1.msra.mxu0 0.0
      %4962 = vmatprep.subr.mxu0 0.0
      %4963 = vmatpush1.msra.mxu0 0.0
      %4964 = vmatprep.subr.mxu0 0.0
      %4965 = vmatpush1.msra.mxu0 0.0
      %4966 = vmatprep.subr.mxu0 0.0
      %4967 = vmatpush1.msra.mxu0 0.0
      %4968 = vmatprep.subr.mxu0 0.0
      %4969 = vmatpush1.msra.mxu0 0.0
      %4970 = vmatprep.mubr.f32.mxu0 0.0
      %4971 = vmatmul.mubr.f32.gmra.mrb[0].mxu0 %v4615
      %v4972 = vpop.f32.mrb[0].mxu0
      %v4973 = vadd.f32 0.0, %v4972
      %v4974 = vpop.f32.mrb[0].mxu0
      %4975 = vdwg.mxu0
      %s4976 = scalar_lea.vmem %s31, 16
      %v4977 = vld [vmem:[%s4976] sm:$0xff]
      %v4979 = vsel %vm1445, %v4977, 0
      %4981 = vmatprep.subr.mxu0 0.0
      %4982 = vmatpush1.msra.mxu0 %v4973
      %4983 = vmatprep.subr.mxu0 0.0
      %4984 = vmatpush1.msra.mxu0 0.0
      %4985 = vmatprep.subr.mxu0 0.0
      %4986 = vmatpush1.msra.mxu0 0.0
      %4987 = vmatprep.subr.mxu0 0.0
      %4988 = vmatpush1.msra.mxu0 0.0
      %4989 = vmatprep.subr.mxu0 0.0
      %4990 = vmatpush1.msra.mxu0 0.0
      %4991 = vmatprep.subr.mxu0 0.0
      %4992 = vmatpush1.msra.mxu0 0.0
      %4993 = vmatprep.subr.mxu0 0.0
      %4994 = vmatpush1.msra.mxu0 0.0
      %4995 = vmatprep.subr.mxu0 0.0
      %4996 = vmatpush1.msra.mxu0 0.0
      %4997 = vmatprep.subr.mxu0 0.0
      %4998 = vmatpush1.msra.mxu0 0.0
      %4999 = vmatprep.subr.mxu0 0.0
      %5000 = vmatpush1.msra.mxu0 0.0
      %5001 = vmatprep.subr.mxu0 0.0
      %5002 = vmatpush1.msra.mxu0 0.0
      %5003 = vmatprep.subr.mxu0 0.0
      %5004 = vmatpush1.msra.mxu0 0.0
      %5005 = vmatprep.subr.mxu0 0.0
      %5006 = vmatpush1.msra.mxu0 0.0
      %5007 = vmatprep.subr.mxu0 0.0
      %5008 = vmatpush1.msra.mxu0 0.0
      %5009 = vmatprep.subr.mxu0 0.0
      %5010 = vmatpush1.msra.mxu0 0.0
      %5011 = vmatprep.subr.mxu0 0.0
      %5012 = vmatpush1.msra.mxu0 0.0
      %5013 = vmatprep.subr.mxu0 0.0
      %5014 = vmatpush1.msra.mxu0 0.0
      %5015 = vmatprep.subr.mxu0 0.0
      %5016 = vmatpush1.msra.mxu0 0.0
      %5017 = vmatprep.subr.mxu0 0.0
      %5018 = vmatpush1.msra.mxu0 0.0
      %5019 = vmatprep.subr.mxu0 0.0
      %5020 = vmatpush1.msra.mxu0 0.0
      %5021 = vmatprep.subr.mxu0 0.0
      %5022 = vmatpush1.msra.mxu0 0.0
      %5023 = vmatprep.subr.mxu0 0.0
      %5024 = vmatpush1.msra.mxu0 0.0
      %5025 = vmatprep.subr.mxu0 0.0
      %5026 = vmatpush1.msra.mxu0 0.0
      %5027 = vmatprep.subr.mxu0 0.0
      %5028 = vmatpush1.msra.mxu0 0.0
      %5029 = vmatprep.subr.mxu0 0.0
      %5030 = vmatpush1.msra.mxu0 0.0
      %5031 = vmatprep.subr.mxu0 0.0
      %5032 = vmatpush1.msra.mxu0 0.0
      %5033 = vmatprep.subr.mxu0 0.0
      %5034 = vmatpush1.msra.mxu0 0.0
      %5035 = vmatprep.subr.mxu0 0.0
      %5036 = vmatpush1.msra.mxu0 0.0
      %5037 = vmatprep.subr.mxu0 0.0
      %5038 = vmatpush1.msra.mxu0 0.0
      %5039 = vmatprep.subr.mxu0 0.0
      %5040 = vmatpush1.msra.mxu0 0.0
      %5041 = vmatprep.subr.mxu0 0.0
      %5042 = vmatpush1.msra.mxu0 0.0
      %5043 = vmatprep.subr.mxu0 0.0
      %5044 = vmatpush1.msra.mxu0 0.0
      %5045 = vmatprep.mubr.f32.mxu0 0.0
      %5046 = vmatmul.mubr.f32.gmra.mrb[0].mxu0 %v4979
      %v5047 = vpop.f32.mrb[0].mxu0
      %v5048 = vadd.f32 0.0, %v5047
      %v5049 = vpop.f32.mrb[0].mxu0
      %5050 = vdwg.mxu0
      %v5051 = vadd.f32 %v4903, %v5048
      %v5052 = vld [vmem:[%s33] sm:$0xff]
      %5054 = vset.pattern.permute.xlu0 0
      %5055 = vperm.xlu0 %5054, %v5052
      %v5056 = vpop.permute.xlu0 %5055
      %v5058 = vadd.f32 %v5051, %v5056
      %v5059 = vadd.f32 %v5058, %v4166
      %v5060 = vmax.f32 %v5059, 0.0
      %v5062 = vsel %vm4167, %v5060, 0
      %5064 = vmatprep.subr.mxu0 0.0
      %5065 = vmatpush1.msra.mxu0 %v2273
      %5066 = vmatprep.subr.mxu0 0.0
      %5067 = vmatpush1.msra.mxu0 %v2274
      %5068 = vmatprep.subr.mxu0 0.0
      %5069 = vmatpush1.msra.mxu0 %v2275
      %5070 = vmatprep.subr.mxu0 0.0
      %5071 = vmatpush1.msra.mxu0 %v2276
      %5072 = vmatprep.subr.mxu0 0.0
      %5073 = vmatpush1.msra.mxu0 0.0
      %5074 = vmatprep.subr.mxu0 0.0
      %5075 = vmatpush1.msra.mxu0 0.0
      %5076 = vmatprep.subr.mxu0 0.0
      %5077 = vmatpush1.msra.mxu0 0.0
      %5078 = vmatprep.subr.mxu0 0.0
      %5079 = vmatpush1.msra.mxu0 0.0
      %5080 = vmatprep.subr.mxu0 0.0
      %5081 = vmatpush1.msra.mxu0 0.0
      %5082 = vmatprep.subr.mxu0 0.0
      %5083 = vmatpush1.msra.mxu0 0.0
      %5084 = vmatprep.subr.mxu0 0.0
      %5085 = vmatpush1.msra.mxu0 0.0
      %5086 = vmatprep.subr.mxu0 0.0
      %5087 = vmatpush1.msra.mxu0 0.0
      %5088 = vmatprep.subr.mxu0 0.0
      %5089 = vmatpush1.msra.mxu0 0.0
      %5090 = vmatprep.subr.mxu0 0.0
      %5091 = vmatpush1.msra.mxu0 0.0
      %5092 = vmatprep.subr.mxu0 0.0
      %5093 = vmatpush1.msra.mxu0 0.0
      %5094 = vmatprep.subr.mxu0 0.0
      %5095 = vmatpush1.msra.mxu0 0.0
      %5096 = vmatprep.subr.mxu0 0.0
      %5097 = vmatpush1.msra.mxu0 0.0
      %5098 = vmatprep.subr.mxu0 0.0
      %5099 = vmatpush1.msra.mxu0 0.0
      %5100 = vmatprep.subr.mxu0 0.0
      %5101 = vmatpush1.msra.mxu0 0.0
      %5102 = vmatprep.subr.mxu0 0.0
      %5103 = vmatpush1.msra.mxu0 0.0
      %5104 = vmatprep.subr.mxu0 0.0
      %5105 = vmatpush1.msra.mxu0 0.0
      %5106 = vmatprep.subr.mxu0 0.0
      %5107 = vmatpush1.msra.mxu0 0.0
      %5108 = vmatprep.subr.mxu0 0.0
      %5109 = vmatpush1.msra.mxu0 0.0
      %5110 = vmatprep.subr.mxu0 0.0
      %5111 = vmatpush1.msra.mxu0 0.0
      %5112 = vmatprep.subr.mxu0 0.0
      %5113 = vmatpush1.msra.mxu0 0.0
      %5114 = vmatprep.subr.mxu0 0.0
      %5115 = vmatpush1.msra.mxu0 0.0
      %5116 = vmatprep.subr.mxu0 0.0
      %5117 = vmatpush1.msra.mxu0 0.0
      %5118 = vmatprep.subr.mxu0 0.0
      %5119 = vmatpush1.msra.mxu0 0.0
      %5120 = vmatprep.subr.mxu0 0.0
      %5121 = vmatpush1.msra.mxu0 0.0
      %5122 = vmatprep.subr.mxu0 0.0
      %5123 = vmatpush1.msra.mxu0 0.0
      %5124 = vmatprep.subr.mxu0 0.0
      %5125 = vmatpush1.msra.mxu0 0.0
      %5126 = vmatprep.subr.mxu0 0.0
      %5127 = vmatpush1.msra.mxu0 0.0
      %5128 = vmatprep.mubr.f32.mxu0 0.0
      %5129 = vmatmul.mubr.f32.gmra.mrb[0].mxu0 %v5062
      %v5130 = vpop.f32.mrb[0].mxu0
      %v5131 = vadd.f32 0.0, %v5130
      %v5132 = vpop.f32.mrb[0].mxu0
      %5133 = vdwg.mxu0
      %v5134 = vld [vmem:[%s35] sm:$0xff]
      %5135 = vmatprep.subr.mxu0 0.0
      %5136 = vmatpush1.msra.mxu0 %v2392
      %5137 = vmatprep.subr.mxu0 0.0
      %5138 = vmatpush1.msra.mxu0 %v2393
      %5139 = vmatprep.subr.mxu0 0.0
      %5140 = vmatpush1.msra.mxu0 %v2394
      %5141 = vmatprep.subr.mxu0 0.0
      %5142 = vmatpush1.msra.mxu0 %v2395
      %5143 = vmatprep.subr.mxu0 0.0
      %5144 = vmatpush1.msra.mxu0 0.0
      %5145 = vmatprep.subr.mxu0 0.0
      %5146 = vmatpush1.msra.mxu0 0.0
      %5147 = vmatprep.subr.mxu0 0.0
      %5148 = vmatpush1.msra.mxu0 0.0
      %5149 = vmatprep.subr.mxu0 0.0
      %5150 = vmatpush1.msra.mxu0 0.0
      %5151 = vmatprep.subr.mxu0 0.0
      %5152 = vmatpush1.msra.mxu0 0.0
      %5153 = vmatprep.subr.mxu0 0.0
      %5154 = vmatpush1.msra.mxu0 0.0
      %5155 = vmatprep.subr.mxu0 0.0
      %5156 = vmatpush1.msra.mxu0 0.0
      %5157 = vmatprep.subr.mxu0 0.0
      %5158 = vmatpush1.msra.mxu0 0.0
      %5159 = vmatprep.subr.mxu0 0.0
      %5160 = vmatpush1.msra.mxu0 0.0
      %5161 = vmatprep.subr.mxu0 0.0
      %5162 = vmatpush1.msra.mxu0 0.0
      %5163 = vmatprep.subr.mxu0 0.0
      %5164 = vmatpush1.msra.mxu0 0.0
      %5165 = vmatprep.subr.mxu0 0.0
      %5166 = vmatpush1.msra.mxu0 0.0
      %5167 = vmatprep.subr.mxu0 0.0
      %5168 = vmatpush1.msra.mxu0 0.0
      %5169 = vmatprep.subr.mxu0 0.0
      %5170 = vmatpush1.msra.mxu0 0.0
      %5171 = vmatprep.subr.mxu0 0.0
      %5172 = vmatpush1.msra.mxu0 0.0
      %5173 = vmatprep.subr.mxu0 0.0
      %5174 = vmatpush1.msra.mxu0 0.0
      %5175 = vmatprep.subr.mxu0 0.0
      %5176 = vmatpush1.msra.mxu0 0.0
      %5177 = vmatprep.subr.mxu0 0.0
      %5178 = vmatpush1.msra.mxu0 0.0
      %5179 = vmatprep.subr.mxu0 0.0
      %5180 = vmatpush1.msra.mxu0 0.0
      %5181 = vmatprep.subr.mxu0 0.0
      %5182 = vmatpush1.msra.mxu0 0.0
      %5183 = vmatprep.subr.mxu0 0.0
      %5184 = vmatpush1.msra.mxu0 0.0
      %5185 = vmatprep.subr.mxu0 0.0
      %5186 = vmatpush1.msra.mxu0 0.0
      %5187 = vmatprep.subr.mxu0 0.0
      %5188 = vmatpush1.msra.mxu0 0.0
      %5189 = vmatprep.subr.mxu0 0.0
      %5190 = vmatpush1.msra.mxu0 0.0
      %5191 = vmatprep.subr.mxu0 0.0
      %5192 = vmatpush1.msra.mxu0 0.0
      %5193 = vmatprep.subr.mxu0 0.0
      %5194 = vmatpush1.msra.mxu0 0.0
      %5195 = vmatprep.subr.mxu0 0.0
      %5196 = vmatpush1.msra.mxu0 0.0
      %5197 = vmatprep.subr.mxu0 0.0
      %5198 = vmatpush1.msra.mxu0 0.0
      %5199 = vmatprep.mubr.f32.mxu0 0.0
      %5200 = vmatmul.mubr.f32.gmra.mrb[0].mxu0 %v5062
      %v5201 = vpop.f32.mrb[0].mxu0
      %v5202 = vadd.f32 0.0, %v5201
      %v5203 = vpop.f32.mrb[0].mxu0
      %5204 = vdwg.mxu0
      %s5205 = scalar_lea.vmem %s35, 8
      %v5206 = vld [vmem:[%s5205] sm:$0xff]
      %v5208 = vsel %vm1445, %v5206, 0
      %5210 = vmatprep.subr.mxu0 0.0
      %5211 = vmatpush1.msra.mxu0 %v5202
      %5212 = vmatprep.subr.mxu0 0.0
      %5213 = vmatpush1.msra.mxu0 0.0
      %5214 = vmatprep.subr.mxu0 0.0
      %5215 = vmatpush1.msra.mxu0 0.0
      %5216 = vmatprep.subr.mxu0 0.0
      %5217 = vmatpush1.msra.mxu0 0.0
      %5218 = vmatprep.subr.mxu0 0.0
      %5219 = vmatpush1.msra.mxu0 0.0
      %5220 = vmatprep.subr.mxu0 0.0
      %5221 = vmatpush1.msra.mxu0 0.0
      %5222 = vmatprep.subr.mxu0 0.0
      %5223 = vmatpush1.msra.mxu0 0.0
      %5224 = vmatprep.subr.mxu0 0.0
      %5225 = vmatpush1.msra.mxu0 0.0
      %5226 = vmatprep.subr.mxu0 0.0
      %5227 = vmatpush1.msra.mxu0 0.0
      %5228 = vmatprep.subr.mxu0 0.0
      %5229 = vmatpush1.msra.mxu0 0.0
      %5230 = vmatprep.subr.mxu0 0.0
      %5231 = vmatpush1.msra.mxu0 0.0
      %5232 = vmatprep.subr.mxu0 0.0
      %5233 = vmatpush1.msra.mxu0 0.0
      %5234 = vmatprep.subr.mxu0 0.0
      %5235 = vmatpush1.msra.mxu0 0.0
      %5236 = vmatprep.subr.mxu0 0.0
      %5237 = vmatpush1.msra.mxu0 0.0
      %5238 = vmatprep.subr.mxu0 0.0
      %5239 = vmatpush1.msra.mxu0 0.0
      %5240 = vmatprep.subr.mxu0 0.0
      %5241 = vmatpush1.msra.mxu0 0.0
      %5242 = vmatprep.subr.mxu0 0.0
      %5243 = vmatpush1.msra.mxu0 0.0
      %5244 = vmatprep.subr.mxu0 0.0
      %5245 = vmatpush1.msra.mxu0 0.0
      %5246 = vmatprep.subr.mxu0 0.0
      %5247 = vmatpush1.msra.mxu0 0.0
      %5248 = vmatprep.subr.mxu0 0.0
      %5249 = vmatpush1.msra.mxu0 0.0
      %5250 = vmatprep.subr.mxu0 0.0
      %5251 = vmatpush1.msra.mxu0 0.0
      %5252 = vmatprep.subr.mxu0 0.0
      %5253 = vmatpush1.msra.mxu0 0.0
      %5254 = vmatprep.subr.mxu0 0.0
      %5255 = vmatpush1.msra.mxu0 0.0
      %5256 = vmatprep.subr.mxu0 0.0
      %5257 = vmatpush1.msra.mxu0 0.0
      %5258 = vmatprep.subr.mxu0 0.0
      %5259 = vmatpush1.msra.mxu0 0.0
      %5260 = vmatprep.subr.mxu0 0.0
      %5261 = vmatpush1.msra.mxu0 0.0
      %5262 = vmatprep.subr.mxu0 0.0
      %5263 = vmatpush1.msra.mxu0 0.0
      %5264 = vmatprep.subr.mxu0 0.0
      %5265 = vmatpush1.msra.mxu0 0.0
      %5266 = vmatprep.subr.mxu0 0.0
      %5267 = vmatpush1.msra.mxu0 0.0
      %5268 = vmatprep.subr.mxu0 0.0
      %5269 = vmatpush1.msra.mxu0 0.0
      %5270 = vmatprep.subr.mxu0 0.0
      %5271 = vmatpush1.msra.mxu0 0.0
      %5272 = vmatprep.subr.mxu0 0.0
      %5273 = vmatpush1.msra.mxu0 0.0
      %5274 = vmatprep.mubr.f32.mxu0 0.0
      %5275 = vmatmul.mubr.f32.gmra.mrb[0].mxu0 %v5208
      %v5276 = vpop.f32.mrb[0].mxu0
      %v5277 = vadd.f32 0.0, %v5276
      %v5278 = vpop.f32.mrb[0].mxu0
      %5279 = vdwg.mxu0
      %v5281 = vsel %vm1445, %v5134, 0
      %5283 = vmatprep.subr.mxu0 0.0
      %5284 = vmatpush1.msra.mxu0 %v5131
      %5285 = vmatprep.subr.mxu0 0.0
      %5286 = vmatpush1.msra.mxu0 0.0
      %5287 = vmatprep.subr.mxu0 0.0
      %5288 = vmatpush1.msra.mxu0 0.0
      %5289 = vmatprep.subr.mxu0 0.0
      %5290 = vmatpush1.msra.mxu0 0.0
      %5291 = vmatprep.subr.mxu0 0.0
      %5292 = vmatpush1.msra.mxu0 0.0
      %5293 = vmatprep.subr.mxu0 0.0
      %5294 = vmatpush1.msra.mxu0 0.0
      %5295 = vmatprep.subr.mxu0 0.0
      %5296 = vmatpush1.msra.mxu0 0.0
      %5297 = vmatprep.subr.mxu0 0.0
      %5298 = vmatpush1.msra.mxu0 0.0
      %5299 = vmatprep.subr.mxu0 0.0
      %5300 = vmatpush1.msra.mxu0 0.0
      %5301 = vmatprep.subr.mxu0 0.0
      %5302 = vmatpush1.msra.mxu0 0.0
      %5303 = vmatprep.subr.mxu0 0.0
      %5304 = vmatpush1.msra.mxu0 0.0
      %5305 = vmatprep.subr.mxu0 0.0
      %5306 = vmatpush1.msra.mxu0 0.0
      %5307 = vmatprep.subr.mxu0 0.0
      %5308 = vmatpush1.msra.mxu0 0.0
      %5309 = vmatprep.subr.mxu0 0.0
      %5310 = vmatpush1.msra.mxu0 0.0
      %5311 = vmatprep.subr.mxu0 0.0
      %5312 = vmatpush1.msra.mxu0 0.0
      %5313 = vmatprep.subr.mxu0 0.0
      %5314 = vmatpush1.msra.mxu0 0.0
      %5315 = vmatprep.subr.mxu0 0.0
      %5316 = vmatpush1.msra.mxu0 0.0
      %5317 = vmatprep.subr.mxu0 0.0
      %5318 = vmatpush1.msra.mxu0 0.0
      %5319 = vmatprep.subr.mxu0 0.0
      %5320 = vmatpush1.msra.mxu0 0.0
      %5321 = vmatprep.subr.mxu0 0.0
      %5322 = vmatpush1.msra.mxu0 0.0
      %5323 = vmatprep.subr.mxu0 0.0
      %5324 = vmatpush1.msra.mxu0 0.0
      %5325 = vmatprep.subr.mxu0 0.0
      %5326 = vmatpush1.msra.mxu0 0.0
      %5327 = vmatprep.subr.mxu0 0.0
      %5328 = vmatpush1.msra.mxu0 0.0
      %5329 = vmatprep.subr.mxu0 0.0
      %5330 = vmatpush1.msra.mxu0 0.0
      %5331 = vmatprep.subr.mxu0 0.0
      %5332 = vmatpush1.msra.mxu0 0.0
      %5333 = vmatprep.subr.mxu0 0.0
      %5334 = vmatpush1.msra.mxu0 0.0
      %5335 = vmatprep.subr.mxu0 0.0
      %5336 = vmatpush1.msra.mxu0 0.0
      %5337 = vmatprep.subr.mxu0 0.0
      %5338 = vmatpush1.msra.mxu0 0.0
      %5339 = vmatprep.subr.mxu0 0.0
      %5340 = vmatpush1.msra.mxu0 0.0
      %5341 = vmatprep.subr.mxu0 0.0
      %5342 = vmatpush1.msra.mxu0 0.0
      %5343 = vmatprep.subr.mxu0 0.0
      %5344 = vmatpush1.msra.mxu0 0.0
      %5345 = vmatprep.subr.mxu0 0.0
      %5346 = vmatpush1.msra.mxu0 0.0
      %5347 = vmatprep.mubr.f32.mxu0 0.0
      %5348 = vmatmul.mubr.f32.gmra.mrb[0].mxu0 %v5281
      %v5349 = vpop.f32.mrb[0].mxu0
      %v5350 = vadd.f32 %v5277, %v5349
      %v5351 = vpop.f32.mrb[0].mxu0
      %5352 = vdwg.mxu0
      %5353 = vmatprep.subr.mxu0 0.0
      %5354 = vmatpush1.msra.mxu0 %v2659
      %5355 = vmatprep.subr.mxu0 0.0
      %5356 = vmatpush1.msra.mxu0 %v2660
      %5357 = vmatprep.subr.mxu0 0.0
      %5358 = vmatpush1.msra.mxu0 %v2661
      %5359 = vmatprep.subr.mxu0 0.0
      %5360 = vmatpush1.msra.mxu0 %v2662
      %5361 = vmatprep.subr.mxu0 0.0
      %5362 = vmatpush1.msra.mxu0 0.0
      %5363 = vmatprep.subr.mxu0 0.0
      %5364 = vmatpush1.msra.mxu0 0.0
      %5365 = vmatprep.subr.mxu0 0.0
      %5366 = vmatpush1.msra.mxu0 0.0
      %5367 = vmatprep.subr.mxu0 0.0
      %5368 = vmatpush1.msra.mxu0 0.0
      %5369 = vmatprep.subr.mxu0 0.0
      %5370 = vmatpush1.msra.mxu0 0.0
      %5371 = vmatprep.subr.mxu0 0.0
      %5372 = vmatpush1.msra.mxu0 0.0
      %5373 = vmatprep.subr.mxu0 0.0
      %5374 = vmatpush1.msra.mxu0 0.0
      %5375 = vmatprep.subr.mxu0 0.0
      %5376 = vmatpush1.msra.mxu0 0.0
      %5377 = vmatprep.subr.mxu0 0.0
      %5378 = vmatpush1.msra.mxu0 0.0
      %5379 = vmatprep.subr.mxu0 0.0
      %5380 = vmatpush1.msra.mxu0 0.0
      %5381 = vmatprep.subr.mxu0 0.0
      %5382 = vmatpush1.msra.mxu0 0.0
      %5383 = vmatprep.subr.mxu0 0.0
      %5384 = vmatpush1.msra.mxu0 0.0
      %5385 = vmatprep.subr.mxu0 0.0
      %5386 = vmatpush1.msra.mxu0 0.0
      %5387 = vmatprep.subr.mxu0 0.0
      %5388 = vmatpush1.msra.mxu0 0.0
      %5389 = vmatprep.subr.mxu0 0.0
      %5390 = vmatpush1.msra.mxu0 0.0
      %5391 = vmatprep.subr.mxu0 0.0
      %5392 = vmatpush1.msra.mxu0 0.0
      %5393 = vmatprep.subr.mxu0 0.0
      %5394 = vmatpush1.msra.mxu0 0.0
      %5395 = vmatprep.subr.mxu0 0.0
      %5396 = vmatpush1.msra.mxu0 0.0
      %5397 = vmatprep.subr.mxu0 0.0
      %5398 = vmatpush1.msra.mxu0 0.0
      %5399 = vmatprep.subr.mxu0 0.0
      %5400 = vmatpush1.msra.mxu0 0.0
      %5401 = vmatprep.subr.mxu0 0.0
      %5402 = vmatpush1.msra.mxu0 0.0
      %5403 = vmatprep.subr.mxu0 0.0
      %5404 = vmatpush1.msra.mxu0 0.0
      %5405 = vmatprep.subr.mxu0 0.0
      %5406 = vmatpush1.msra.mxu0 0.0
      %5407 = vmatprep.subr.mxu0 0.0
      %5408 = vmatpush1.msra.mxu0 0.0
      %5409 = vmatprep.subr.mxu0 0.0
      %5410 = vmatpush1.msra.mxu0 0.0
      %5411 = vmatprep.subr.mxu0 0.0
      %5412 = vmatpush1.msra.mxu0 0.0
      %5413 = vmatprep.subr.mxu0 0.0
      %5414 = vmatpush1.msra.mxu0 0.0
      %5415 = vmatprep.subr.mxu0 0.0
      %5416 = vmatpush1.msra.mxu0 0.0
      %5417 = vmatprep.mubr.f32.mxu0 0.0
      %5418 = vmatmul.mubr.f32.gmra.mrb[0].mxu0 %v5062
      %v5419 = vpop.f32.mrb[0].mxu0
      %v5420 = vadd.f32 0.0, %v5419
      %v5421 = vpop.f32.mrb[0].mxu0
      %5422 = vdwg.mxu0
      %s5423 = scalar_lea.vmem %s35, 16
      %v5424 = vld [vmem:[%s5423] sm:$0xff]
      %v5426 = vsel %vm1445, %v5424, 0
      %5428 = vmatprep.subr.mxu0 0.0
      %5429 = vmatpush1.msra.mxu0 %v5420
      %5430 = vmatprep.subr.mxu0 0.0
      %5431 = vmatpush1.msra.mxu0 0.0
      %5432 = vmatprep.subr.mxu0 0.0
      %5433 = vmatpush1.msra.mxu0 0.0
      %5434 = vmatprep.subr.mxu0 0.0
      %5435 = vmatpush1.msra.mxu0 0.0
      %5436 = vmatprep.subr.mxu0 0.0
      %5437 = vmatpush1.msra.mxu0 0.0
      %5438 = vmatprep.subr.mxu0 0.0
      %5439 = vmatpush1.msra.mxu0 0.0
      %5440 = vmatprep.subr.mxu0 0.0
      %5441 = vmatpush1.msra.mxu0 0.0
      %5442 = vmatprep.subr.mxu0 0.0
      %5443 = vmatpush1.msra.mxu0 0.0
      %5444 = vmatprep.subr.mxu0 0.0
      %5445 = vmatpush1.msra.mxu0 0.0
      %5446 = vmatprep.subr.mxu0 0.0
      %5447 = vmatpush1.msra.mxu0 0.0
      %5448 = vmatprep.subr.mxu0 0.0
      %5449 = vmatpush1.msra.mxu0 0.0
      %5450 = vmatprep.subr.mxu0 0.0
      %5451 = vmatpush1.msra.mxu0 0.0
      %5452 = vmatprep.subr.mxu0 0.0
      %5453 = vmatpush1.msra.mxu0 0.0
      %5454 = vmatprep.subr.mxu0 0.0
      %5455 = vmatpush1.msra.mxu0 0.0
      %5456 = vmatprep.subr.mxu0 0.0
      %5457 = vmatpush1.msra.mxu0 0.0
      %5458 = vmatprep.subr.mxu0 0.0
      %5459 = vmatpush1.msra.mxu0 0.0
      %5460 = vmatprep.subr.mxu0 0.0
      %5461 = vmatpush1.msra.mxu0 0.0
      %5462 = vmatprep.subr.mxu0 0.0
      %5463 = vmatpush1.msra.mxu0 0.0
      %5464 = vmatprep.subr.mxu0 0.0
      %5465 = vmatpush1.msra.mxu0 0.0
      %5466 = vmatprep.subr.mxu0 0.0
      %5467 = vmatpush1.msra.mxu0 0.0
      %5468 = vmatprep.subr.mxu0 0.0
      %5469 = vmatpush1.msra.mxu0 0.0
      %5470 = vmatprep.subr.mxu0 0.0
      %5471 = vmatpush1.msra.mxu0 0.0
      %5472 = vmatprep.subr.mxu0 0.0
      %5473 = vmatpush1.msra.mxu0 0.0
      %5474 = vmatprep.subr.mxu0 0.0
      %5475 = vmatpush1.msra.mxu0 0.0
      %5476 = vmatprep.subr.mxu0 0.0
      %5477 = vmatpush1.msra.mxu0 0.0
      %5478 = vmatprep.subr.mxu0 0.0
      %5479 = vmatpush1.msra.mxu0 0.0
      %5480 = vmatprep.subr.mxu0 0.0
      %5481 = vmatpush1.msra.mxu0 0.0
      %5482 = vmatprep.subr.mxu0 0.0
      %5483 = vmatpush1.msra.mxu0 0.0
      %5484 = vmatprep.subr.mxu0 0.0
      %5485 = vmatpush1.msra.mxu0 0.0
      %5486 = vmatprep.subr.mxu0 0.0
      %5487 = vmatpush1.msra.mxu0 0.0
      %5488 = vmatprep.subr.mxu0 0.0
      %5489 = vmatpush1.msra.mxu0 0.0
      %5490 = vmatprep.subr.mxu0 0.0
      %5491 = vmatpush1.msra.mxu0 0.0
      %5492 = vmatprep.mubr.f32.mxu0 0.0
      %5493 = vmatmul.mubr.f32.gmra.mrb[0].mxu0 %v5426
      %v5494 = vpop.f32.mrb[0].mxu0
      %v5495 = vadd.f32 0.0, %v5494
      %v5496 = vpop.f32.mrb[0].mxu0
      %5497 = vdwg.mxu0
      %v5498 = vadd.f32 %v5350, %v5495
      %v5499 = vld [vmem:[%s37] sm:$0xff]
      %5501 = vset.pattern.permute.xlu0 0
      %5502 = vperm.xlu0 %5501, %v5499
      %v5503 = vpop.permute.xlu0 %5502
      %v5505 = vadd.f32 %v5498, %v5503
      %v5506 = vld [vmem:[%s39] sm:$0xff]
      %v5507 = vld [vmem:[%s39 + $0x8] sm:$0xff]
      %v5508 = vld [vmem:[%s41] sm:$0x1]
      %v5510 = vlaneseq
      %v5511 = vshrl.u32 %v5510, 7
      %v5512 = vsub.s32 0, %v5511
      %v5513 = vrot.slane %v5508, %v5512
      %vm5515 = vcmask 130048
      %v5517 = vsel %vm5515, %v5505, 0
      %5519 = vmatprep.subr.mxu0 0.0
      %5520 = vmatpush1.msra.mxu0 %v5506
      %5521 = vmatprep.subr.mxu0 0.0
      %5522 = vmatpush1.msra.mxu0 %v5507
      %5523 = vmatprep.subr.mxu0 0.0
      %5524 = vmatpush1.msra.mxu0 0.0
      %5525 = vmatprep.subr.mxu0 0.0
      %5526 = vmatpush1.msra.mxu0 0.0
      %5527 = vmatprep.subr.mxu0 0.0
      %5528 = vmatpush1.msra.mxu0 0.0
      %5529 = vmatprep.subr.mxu0 0.0
      %5530 = vmatpush1.msra.mxu0 0.0
      %5531 = vmatprep.subr.mxu0 0.0
      %5532 = vmatpush1.msra.mxu0 0.0
      %5533 = vmatprep.subr.mxu0 0.0
      %5534 = vmatpush1.msra.mxu0 0.0
      %5535 = vmatprep.subr.mxu0 0.0
      %5536 = vmatpush1.msra.mxu0 0.0
      %5537 = vmatprep.subr.mxu0 0.0
      %5538 = vmatpush1.msra.mxu0 0.0
      %5539 = vmatprep.subr.mxu0 0.0
      %5540 = vmatpush1.msra.mxu0 0.0
      %5541 = vmatprep.subr.mxu0 0.0
      %5542 = vmatpush1.msra.mxu0 0.0
      %5543 = vmatprep.subr.mxu0 0.0
      %5544 = vmatpush1.msra.mxu0 0.0
      %5545 = vmatprep.subr.mxu0 0.0
      %5546 = vmatpush1.msra.mxu0 0.0
      %5547 = vmatprep.subr.mxu0 0.0
      %5548 = vmatpush1.msra.mxu0 0.0
      %5549 = vmatprep.subr.mxu0 0.0
      %5550 = vmatpush1.msra.mxu0 0.0
      %5551 = vmatprep.subr.mxu0 0.0
      %5552 = vmatpush1.msra.mxu0 0.0
      %5553 = vmatprep.subr.mxu0 0.0
      %5554 = vmatpush1.msra.mxu0 0.0
      %5555 = vmatprep.subr.mxu0 0.0
      %5556 = vmatpush1.msra.mxu0 0.0
      %5557 = vmatprep.subr.mxu0 0.0
      %5558 = vmatpush1.msra.mxu0 0.0
      %5559 = vmatprep.subr.mxu0 0.0
      %5560 = vmatpush1.msra.mxu0 0.0
      %5561 = vmatprep.subr.mxu0 0.0
      %5562 = vmatpush1.msra.mxu0 0.0
      %5563 = vmatprep.subr.mxu0 0.0
      %5564 = vmatpush1.msra.mxu0 0.0
      %5565 = vmatprep.subr.mxu0 0.0
      %5566 = vmatpush1.msra.mxu0 0.0
      %5567 = vmatprep.subr.mxu0 0.0
      %5568 = vmatpush1.msra.mxu0 0.0
      %5569 = vmatprep.subr.mxu0 0.0
      %5570 = vmatpush1.msra.mxu0 0.0
      %5571 = vmatprep.subr.mxu0 0.0
      %5572 = vmatpush1.msra.mxu0 0.0
      %5573 = vmatprep.subr.mxu0 0.0
      %5574 = vmatpush1.msra.mxu0 0.0
      %5575 = vmatprep.subr.mxu0 0.0
      %5576 = vmatpush1.msra.mxu0 0.0
      %5577 = vmatprep.subr.mxu0 0.0
      %5578 = vmatpush1.msra.mxu0 0.0
      %5579 = vmatprep.subr.mxu0 0.0
      %5580 = vmatpush1.msra.mxu0 0.0
      %5581 = vmatprep.subr.mxu0 0.0
      %5582 = vmatpush1.msra.mxu0 0.0
      %5583 = vmatprep.mubr.f32.mxu0 0.0
      %5584 = vmatmul.mubr.f32.gmra.mrb[0].mxu0 %v5517
      %v5585 = vpop.f32.mrb[0].mxu0
      %v5586 = vadd.f32 %v5513, %v5585
      %v5587 = vpop.f32.mrb[0].mxu0
      %5588 = vdwg.mxu0
      %v5589 = vld [vmem:[%s43] sm:$0xff]
      %v5590 = vld [vmem:[%s43 + $0x8] sm:$0xff]
      %v5591 = vld [vmem:[%s45] sm:$0x1]
      %v5593 = vlaneseq
      %v5594 = vshrl.u32 %v5593, 7
      %v5595 = vsub.s32 0, %v5594
      %v5596 = vrot.slane %v5591, %v5595
      %5598 = vmatprep.subr.mxu0 0.0
      %5599 = vmatpush1.msra.mxu0 %v5589
      %5600 = vmatprep.subr.mxu0 0.0
      %5601 = vmatpush1.msra.mxu0 %v5590
      %5602 = vmatprep.subr.mxu0 0.0
      %5603 = vmatpush1.msra.mxu0 0.0
      %5604 = vmatprep.subr.mxu0 0.0
      %5605 = vmatpush1.msra.mxu0 0.0
      %5606 = vmatprep.subr.mxu0 0.0
      %5607 = vmatpush1.msra.mxu0 0.0
      %5608 = vmatprep.subr.mxu0 0.0
      %5609 = vmatpush1.msra.mxu0 0.0
      %5610 = vmatprep.subr.mxu0 0.0
      %5611 = vmatpush1.msra.mxu0 0.0
      %5612 = vmatprep.subr.mxu0 0.0
      %5613 = vmatpush1.msra.mxu0 0.0
      %5614 = vmatprep.subr.mxu0 0.0
      %5615 = vmatpush1.msra.mxu0 0.0
      %5616 = vmatprep.subr.mxu0 0.0
      %5617 = vmatpush1.msra.mxu0 0.0
      %5618 = vmatprep.subr.mxu0 0.0
      %5619 = vmatpush1.msra.mxu0 0.0
      %5620 = vmatprep.subr.mxu0 0.0
      %5621 = vmatpush1.msra.mxu0 0.0
      %5622 = vmatprep.subr.mxu0 0.0
      %5623 = vmatpush1.msra.mxu0 0.0
      %5624 = vmatprep.subr.mxu0 0.0
      %5625 = vmatpush1.msra.mxu0 0.0
      %5626 = vmatprep.subr.mxu0 0.0
      %5627 = vmatpush1.msra.mxu0 0.0
      %5628 = vmatprep.subr.mxu0 0.0
      %5629 = vmatpush1.msra.mxu0 0.0
      %5630 = vmatprep.subr.mxu0 0.0
      %5631 = vmatpush1.msra.mxu0 0.0
      %5632 = vmatprep.subr.mxu0 0.0
      %5633 = vmatpush1.msra.mxu0 0.0
      %5634 = vmatprep.subr.mxu0 0.0
      %5635 = vmatpush1.msra.mxu0 0.0
      %5636 = vmatprep.subr.mxu0 0.0
      %5637 = vmatpush1.msra.mxu0 0.0
      %5638 = vmatprep.subr.mxu0 0.0
      %5639 = vmatpush1.msra.mxu0 0.0
      %5640 = vmatprep.subr.mxu0 0.0
      %5641 = vmatpush1.msra.mxu0 0.0
      %5642 = vmatprep.subr.mxu0 0.0
      %5643 = vmatpush1.msra.mxu0 0.0
      %5644 = vmatprep.subr.mxu0 0.0
      %5645 = vmatpush1.msra.mxu0 0.0
      %5646 = vmatprep.subr.mxu0 0.0
      %5647 = vmatpush1.msra.mxu0 0.0
      %5648 = vmatprep.subr.mxu0 0.0
      %5649 = vmatpush1.msra.mxu0 0.0
      %5650 = vmatprep.subr.mxu0 0.0
      %5651 = vmatpush1.msra.mxu0 0.0
      %5652 = vmatprep.subr.mxu0 0.0
      %5653 = vmatpush1.msra.mxu0 0.0
      %5654 = vmatprep.subr.mxu0 0.0
      %5655 = vmatpush1.msra.mxu0 0.0
      %5656 = vmatprep.subr.mxu0 0.0
      %5657 = vmatpush1.msra.mxu0 0.0
      %5658 = vmatprep.subr.mxu0 0.0
      %5659 = vmatpush1.msra.mxu0 0.0
      %5660 = vmatprep.subr.mxu0 0.0
      %5661 = vmatpush1.msra.mxu0 0.0
      %5662 = vmatprep.mubr.f32.mxu0 0.0
      %5663 = vmatmul.mubr.f32.gmra.mrb[0].mxu0 %v5517
      %v5664 = vpop.f32.mrb[0].mxu0
      %v5665 = vadd.f32 %v5596, %v5664
      %v5666 = vpop.f32.mrb[0].mxu0
      %5667 = vdwg.mxu0
      %v5668 = vld [vmem:[%s47] sm:$0xff]
      %v5669 = vld [vmem:[%s47 + $0x8] sm:$0xff]
      %v5670 = vld [vmem:[%s49] sm:$0x1]
      %v5672 = vlaneseq
      %v5673 = vshrl.u32 %v5672, 7
      %v5674 = vsub.s32 0, %v5673
      %v5675 = vrot.slane %v5670, %v5674
      %5677 = vmatprep.subr.mxu0 0.0
      %5678 = vmatpush1.msra.mxu0 %v5668
      %5679 = vmatprep.subr.mxu0 0.0
      %5680 = vmatpush1.msra.mxu0 %v5669
      %5681 = vmatprep.subr.mxu0 0.0
      %5682 = vmatpush1.msra.mxu0 0.0
      %5683 = vmatprep.subr.mxu0 0.0
      %5684 = vmatpush1.msra.mxu0 0.0
      %5685 = vmatprep.subr.mxu0 0.0
      %5686 = vmatpush1.msra.mxu0 0.0
      %5687 = vmatprep.subr.mxu0 0.0
      %5688 = vmatpush1.msra.mxu0 0.0
      %5689 = vmatprep.subr.mxu0 0.0
      %5690 = vmatpush1.msra.mxu0 0.0
      %5691 = vmatprep.subr.mxu0 0.0
      %5692 = vmatpush1.msra.mxu0 0.0
      %5693 = vmatprep.subr.mxu0 0.0
      %5694 = vmatpush1.msra.mxu0 0.0
      %5695 = vmatprep.subr.mxu0 0.0
      %5696 = vmatpush1.msra.mxu0 0.0
      %5697 = vmatprep.subr.mxu0 0.0
      %5698 = vmatpush1.msra.mxu0 0.0
      %5699 = vmatprep.subr.mxu0 0.0
      %5700 = vmatpush1.msra.mxu0 0.0
      %5701 = vmatprep.subr.mxu0 0.0
      %5702 = vmatpush1.msra.mxu0 0.0
      %5703 = vmatprep.subr.mxu0 0.0
      %5704 = vmatpush1.msra.mxu0 0.0
      %5705 = vmatprep.subr.mxu0 0.0
      %5706 = vmatpush1.msra.mxu0 0.0
      %5707 = vmatprep.subr.mxu0 0.0
      %5708 = vmatpush1.msra.mxu0 0.0
      %5709 = vmatprep.subr.mxu0 0.0
      %5710 = vmatpush1.msra.mxu0 0.0
      %5711 = vmatprep.subr.mxu0 0.0
      %5712 = vmatpush1.msra.mxu0 0.0
      %5713 = vmatprep.subr.mxu0 0.0
      %5714 = vmatpush1.msra.mxu0 0.0
      %5715 = vmatprep.subr.mxu0 0.0
      %5716 = vmatpush1.msra.mxu0 0.0
      %5717 = vmatprep.subr.mxu0 0.0
      %5718 = vmatpush1.msra.mxu0 0.0
      %5719 = vmatprep.subr.mxu0 0.0
      %5720 = vmatpush1.msra.mxu0 0.0
      %5721 = vmatprep.subr.mxu0 0.0
      %5722 = vmatpush1.msra.mxu0 0.0
      %5723 = vmatprep.subr.mxu0 0.0
      %5724 = vmatpush1.msra.mxu0 0.0
      %5725 = vmatprep.subr.mxu0 0.0
      %5726 = vmatpush1.msra.mxu0 0.0
      %5727 = vmatprep.subr.mxu0 0.0
      %5728 = vmatpush1.msra.mxu0 0.0
      %5729 = vmatprep.subr.mxu0 0.0
      %5730 = vmatpush1.msra.mxu0 0.0
      %5731 = vmatprep.subr.mxu0 0.0
      %5732 = vmatpush1.msra.mxu0 0.0
      %5733 = vmatprep.subr.mxu0 0.0
      %5734 = vmatpush1.msra.mxu0 0.0
      %5735 = vmatprep.subr.mxu0 0.0
      %5736 = vmatpush1.msra.mxu0 0.0
      %5737 = vmatprep.subr.mxu0 0.0
      %5738 = vmatpush1.msra.mxu0 0.0
      %5739 = vmatprep.subr.mxu0 0.0
      %5740 = vmatpush1.msra.mxu0 0.0
      %5741 = vmatprep.mubr.f32.mxu0 0.0
      %5742 = vmatmul.mubr.f32.gmra.mrb[0].mxu0 %v5517
      %v5743 = vpop.f32.mrb[0].mxu0
      %v5744 = vadd.f32 %v5675, %v5743
      %v5745 = vpop.f32.mrb[0].mxu0
      %5746 = vdwg.mxu0
      %v5748 = vsel %vm5515, %v5586, 0
      %v5751 = vsel %vm5515, %v5665, 0
      %5753 = vmatprep.subr.mxu0 0.0
      %5754 = vmatpush1.xpose.msra.mxu0 %v5751
      %5755 = vmatprep.subr.mxu0 0.0
      %5756 = vmatpush1.xpose.msra.mxu0 0.0
      %5757 = vmatprep.subr.mxu0 0.0
      %5758 = vmatpush1.xpose.msra.mxu0 0.0
      %5759 = vmatprep.subr.mxu0 0.0
      %5760 = vmatpush1.xpose.msra.mxu0 0.0
      %5761 = vmatprep.subr.mxu0 0.0
      %5762 = vmatpush1.xpose.msra.mxu0 0.0
      %5763 = vmatprep.subr.mxu0 0.0
      %5764 = vmatpush1.xpose.msra.mxu0 0.0
      %5765 = vmatprep.subr.mxu0 0.0
      %5766 = vmatpush1.xpose.msra.mxu0 0.0
      %5767 = vmatprep.subr.mxu0 0.0
      %5768 = vmatpush1.xpose.msra.mxu0 0.0
      %5769 = vmatprep.subr.mxu0 0.0
      %5770 = vmatpush1.xpose.msra.mxu0 0.0
      %5771 = vmatprep.subr.mxu0 0.0
      %5772 = vmatpush1.xpose.msra.mxu0 0.0
      %5773 = vmatprep.subr.mxu0 0.0
      %5774 = vmatpush1.xpose.msra.mxu0 0.0
      %5775 = vmatprep.subr.mxu0 0.0
      %5776 = vmatpush1.xpose.msra.mxu0 0.0
      %5777 = vmatprep.subr.mxu0 0.0
      %5778 = vmatpush1.xpose.msra.mxu0 0.0
      %5779 = vmatprep.subr.mxu0 0.0
      %5780 = vmatpush1.xpose.msra.mxu0 0.0
      %5781 = vmatprep.subr.mxu0 0.0
      %5782 = vmatpush1.xpose.msra.mxu0 0.0
      %5783 = vmatprep.subr.mxu0 0.0
      %5784 = vmatpush1.xpose.msra.mxu0 0.0
      %5785 = vmatprep.subr.mxu0 0.0
      %5786 = vmatpush1.xpose.msra.mxu0 0.0
      %5787 = vmatprep.subr.mxu0 0.0
      %5788 = vmatpush1.xpose.msra.mxu0 0.0
      %5789 = vmatprep.subr.mxu0 0.0
      %5790 = vmatpush1.xpose.msra.mxu0 0.0
      %5791 = vmatprep.subr.mxu0 0.0
      %5792 = vmatpush1.xpose.msra.mxu0 0.0
      %5793 = vmatprep.subr.mxu0 0.0
      %5794 = vmatpush1.xpose.msra.mxu0 0.0
      %5795 = vmatprep.subr.mxu0 0.0
      %5796 = vmatpush1.xpose.msra.mxu0 0.0
      %5797 = vmatprep.subr.mxu0 0.0
      %5798 = vmatpush1.xpose.msra.mxu0 0.0
      %5799 = vmatprep.subr.mxu0 0.0
      %5800 = vmatpush1.xpose.msra.mxu0 0.0
      %5801 = vmatprep.subr.mxu0 0.0
      %5802 = vmatpush1.xpose.msra.mxu0 0.0
      %5803 = vmatprep.subr.mxu0 0.0
      %5804 = vmatpush1.xpose.msra.mxu0 0.0
      %5805 = vmatprep.subr.mxu0 0.0
      %5806 = vmatpush1.xpose.msra.mxu0 0.0
      %5807 = vmatprep.subr.mxu0 0.0
      %5808 = vmatpush1.xpose.msra.mxu0 0.0
      %5809 = vmatprep.subr.mxu0 0.0
      %5810 = vmatpush1.xpose.msra.mxu0 0.0
      %5811 = vmatprep.subr.mxu0 0.0
      %5812 = vmatpush1.xpose.msra.mxu0 0.0
      %5813 = vmatprep.subr.mxu0 0.0
      %5814 = vmatpush1.xpose.msra.mxu0 0.0
      %5815 = vmatprep.subr.mxu0 0.0
      %5816 = vmatpush1.xpose.msra.mxu0 0.0
      %5817 = vmatprep.mubr.f32.mxu0 0.0
      %5818 = vmatmul.mubr.f32.gmra.mrb[0].mxu0 %v5748
      %v5819 = vpop.f32.mrb[0].mxu0
      %v5820 = vadd.f32 0.0, %v5819
      %v5821 = vpop.f32.mrb[0].mxu0
      %5822 = vdwg.mxu0
      %v5823 = vmul.f32 %v5820, 0.25
      %v5824 = vsel %vm1445, %v5823, -inf
      %5825 = vmax.xlane.f32.xlu0 %v5824
      %v5826 = vpop.xlane.xlu0 %5825
      %v5827 = vsub.f32 %v5823, %v5826
      %v5828 = vmul.f32 %v5827, 1.442695
      %v5829 = vpow.pop %v5828
      %v5830 = vsel %vm1445, %v5829, 0.0
      %5831 = vadd.xlane.f32.xlu0 %v5830
      %v5832 = vpop.xlane.xlu0 %5831
      %v5833 = vrcp.pop %v5832
      %v5834 = vmul.f32 %v5829, %v5833
      %v5836 = vsel %vm1445, %v5834, 0
      %5838 = vmatprep.subr.mxu0 0.0
      %5839 = vmatpush1.msra.mxu0 %v5744
      %5840 = vmatprep.subr.mxu0 0.0
      %5841 = vmatpush1.msra.mxu0 0.0
      %5842 = vmatprep.subr.mxu0 0.0
      %5843 = vmatpush1.msra.mxu0 0.0
      %5844 = vmatprep.subr.mxu0 0.0
      %5845 = vmatpush1.msra.mxu0 0.0
      %5846 = vmatprep.subr.mxu0 0.0
      %5847 = vmatpush1.msra.mxu0 0.0
      %5848 = vmatprep.subr.mxu0 0.0
      %5849 = vmatpush1.msra.mxu0 0.0
      %5850 = vmatprep.subr.mxu0 0.0
      %5851 = vmatpush1.msra.mxu0 0.0
      %5852 = vmatprep.subr.mxu0 0.0
      %5853 = vmatpush1.msra.mxu0 0.0
      %5854 = vmatprep.subr.mxu0 0.0
      %5855 = vmatpush1.msra.mxu0 0.0
      %5856 = vmatprep.subr.mxu0 0.0
      %5857 = vmatpush1.msra.mxu0 0.0
      %5858 = vmatprep.subr.mxu0 0.0
      %5859 = vmatpush1.msra.mxu0 0.0
      %5860 = vmatprep.subr.mxu0 0.0
      %5861 = vmatpush1.msra.mxu0 0.0
      %5862 = vmatprep.subr.mxu0 0.0
      %5863 = vmatpush1.msra.mxu0 0.0
      %5864 = vmatprep.subr.mxu0 0.0
      %5865 = vmatpush1.msra.mxu0 0.0
      %5866 = vmatprep.subr.mxu0 0.0
      %5867 = vmatpush1.msra.mxu0 0.0
      %5868 = vmatprep.subr.mxu0 0.0
      %5869 = vmatpush1.msra.mxu0 0.0
      %5870 = vmatprep.subr.mxu0 0.0
      %5871 = vmatpush1.msra.mxu0 0.0
      %5872 = vmatprep.subr.mxu0 0.0
      %5873 = vmatpush1.msra.mxu0 0.0
      %5874 = vmatprep.subr.mxu0 0.0
      %5875 = vmatpush1.msra.mxu0 0.0
      %5876 = vmatprep.subr.mxu0 0.0
      %5877 = vmatpush1.msra.mxu0 0.0
      %5878 = vmatprep.subr.mxu0 0.0
      %5879 = vmatpush1.msra.mxu0 0.0
      %5880 = vmatprep.subr.mxu0 0.0
      %5881 = vmatpush1.msra.mxu0 0.0
      %5882 = vmatprep.subr.mxu0 0.0
      %5883 = vmatpush1.msra.mxu0 0.0
      %5884 = vmatprep.subr.mxu0 0.0
      %5885 = vmatpush1.msra.mxu0 0.0
      %5886 = vmatprep.subr.mxu0 0.0
      %5887 = vmatpush1.msra.mxu0 0.0
      %5888 = vmatprep.subr.mxu0 0.0
      %5889 = vmatpush1.msra.mxu0 0.0
      %5890 = vmatprep.subr.mxu0 0.0
      %5891 = vmatpush1.msra.mxu0 0.0
      %5892 = vmatprep.subr.mxu0 0.0
      %5893 = vmatpush1.msra.mxu0 0.0
      %5894 = vmatprep.subr.mxu0 0.0
      %5895 = vmatpush1.msra.mxu0 0.0
      %5896 = vmatprep.subr.mxu0 0.0
      %5897 = vmatpush1.msra.mxu0 0.0
      %5898 = vmatprep.subr.mxu0 0.0
      %5899 = vmatpush1.msra.mxu0 0.0
      %5900 = vmatprep.subr.mxu0 0.0
      %5901 = vmatpush1.msra.mxu0 0.0
      %5902 = vmatprep.mubr.f32.mxu0 0.0
      %5903 = vmatmul.mubr.f32.gmra.mrb[0].mxu0 %v5836
      %v5904 = vpop.f32.mrb[0].mxu0
      %v5905 = vadd.f32 %v5505, %v5904
      %v5906 = vpop.f32.mrb[0].mxu0
      %5907 = vdwg.mxu0
      %v5909 = vsel %vm5515, %v5905, 0
      %5911 = vmatprep.subr.mxu0 0.0
      %5912 = vmatpush1.msra.mxu0 %v1238
      %5913 = vmatprep.subr.mxu0 0.0
      %5914 = vmatpush1.msra.mxu0 %v1239
      %5915 = vmatprep.subr.mxu0 0.0
      %5916 = vmatpush1.msra.mxu0 0.0
      %5917 = vmatprep.subr.mxu0 0.0
      %5918 = vmatpush1.msra.mxu0 0.0
      %5919 = vmatprep.subr.mxu0 0.0
      %5920 = vmatpush1.msra.mxu0 0.0
      %5921 = vmatprep.subr.mxu0 0.0
      %5922 = vmatpush1.msra.mxu0 0.0
      %5923 = vmatprep.subr.mxu0 0.0
      %5924 = vmatpush1.msra.mxu0 0.0
      %5925 = vmatprep.subr.mxu0 0.0
      %5926 = vmatpush1.msra.mxu0 0.0
      %5927 = vmatprep.subr.mxu0 0.0
      %5928 = vmatpush1.msra.mxu0 0.0
      %5929 = vmatprep.subr.mxu0 0.0
      %5930 = vmatpush1.msra.mxu0 0.0
      %5931 = vmatprep.subr.mxu0 0.0
      %5932 = vmatpush1.msra.mxu0 0.0
      %5933 = vmatprep.subr.mxu0 0.0
      %5934 = vmatpush1.msra.mxu0 0.0
      %5935 = vmatprep.subr.mxu0 0.0
      %5936 = vmatpush1.msra.mxu0 0.0
      %5937 = vmatprep.subr.mxu0 0.0
      %5938 = vmatpush1.msra.mxu0 0.0
      %5939 = vmatprep.subr.mxu0 0.0
      %5940 = vmatpush1.msra.mxu0 0.0
      %5941 = vmatprep.subr.mxu0 0.0
      %5942 = vmatpush1.msra.mxu0 0.0
      %5943 = vmatprep.subr.mxu0 0.0
      %5944 = vmatpush1.msra.mxu0 0.0
      %5945 = vmatprep.subr.mxu0 0.0
      %5946 = vmatpush1.msra.mxu0 0.0
      %5947 = vmatprep.subr.mxu0 0.0
      %5948 = vmatpush1.msra.mxu0 0.0
      %5949 = vmatprep.subr.mxu0 0.0
      %5950 = vmatpush1.msra.mxu0 0.0
      %5951 = vmatprep.subr.mxu0 0.0
      %5952 = vmatpush1.msra.mxu0 0.0
      %5953 = vmatprep.subr.mxu0 0.0
      %5954 = vmatpush1.msra.mxu0 0.0
      %5955 = vmatprep.subr.mxu0 0.0
      %5956 = vmatpush1.msra.mxu0 0.0
      %5957 = vmatprep.subr.mxu0 0.0
      %5958 = vmatpush1.msra.mxu0 0.0
      %5959 = vmatprep.subr.mxu0 0.0
      %5960 = vmatpush1.msra.mxu0 0.0
      %5961 = vmatprep.subr.mxu0 0.0
      %5962 = vmatpush1.msra.mxu0 0.0
      %5963 = vmatprep.subr.mxu0 0.0
      %5964 = vmatpush1.msra.mxu0 0.0
      %5965 = vmatprep.subr.mxu0 0.0
      %5966 = vmatpush1.msra.mxu0 0.0
      %5967 = vmatprep.subr.mxu0 0.0
      %5968 = vmatpush1.msra.mxu0 0.0
      %5969 = vmatprep.subr.mxu0 0.0
      %5970 = vmatpush1.msra.mxu0 0.0
      %5971 = vmatprep.subr.mxu0 0.0
      %5972 = vmatpush1.msra.mxu0 0.0
      %5973 = vmatprep.subr.mxu0 0.0
      %5974 = vmatpush1.msra.mxu0 0.0
      %5975 = vmatprep.mubr.f32.mxu0 0.0
      %5976 = vmatmul.mubr.f32.gmra.mrb[0].mxu0 %v5909
      %v5977 = vpop.f32.mrb[0].mxu0
      %v5978 = vadd.f32 0.0, %v5977
      %v5979 = vpop.f32.mrb[0].mxu0
      %5980 = vdwg.mxu0
      %v5981 = vld [vmem:[%s51] sm:$0xff]
      %5982 = vmatprep.subr.mxu0 0.0
      %5983 = vmatpush1.msra.mxu0 %v1357
      %5984 = vmatprep.subr.mxu0 0.0
      %5985 = vmatpush1.msra.mxu0 %v1358
      %5986 = vmatprep.subr.mxu0 0.0
      %5987 = vmatpush1.msra.mxu0 0.0
      %5988 = vmatprep.subr.mxu0 0.0
      %5989 = vmatpush1.msra.mxu0 0.0
      %5990 = vmatprep.subr.mxu0 0.0
      %5991 = vmatpush1.msra.mxu0 0.0
      %5992 = vmatprep.subr.mxu0 0.0
      %5993 = vmatpush1.msra.mxu0 0.0
      %5994 = vmatprep.subr.mxu0 0.0
      %5995 = vmatpush1.msra.mxu0 0.0
      %5996 = vmatprep.subr.mxu0 0.0
      %5997 = vmatpush1.msra.mxu0 0.0
      %5998 = vmatprep.subr.mxu0 0.0
      %5999 = vmatpush1.msra.mxu0 0.0
      %6000 = vmatprep.subr.mxu0 0.0
      %6001 = vmatpush1.msra.mxu0 0.0
      %6002 = vmatprep.subr.mxu0 0.0
      %6003 = vmatpush1.msra.mxu0 0.0
      %6004 = vmatprep.subr.mxu0 0.0
      %6005 = vmatpush1.msra.mxu0 0.0
      %6006 = vmatprep.subr.mxu0 0.0
      %6007 = vmatpush1.msra.mxu0 0.0
      %6008 = vmatprep.subr.mxu0 0.0
      %6009 = vmatpush1.msra.mxu0 0.0
      %6010 = vmatprep.subr.mxu0 0.0
      %6011 = vmatpush1.msra.mxu0 0.0
      %6012 = vmatprep.subr.mxu0 0.0
      %6013 = vmatpush1.msra.mxu0 0.0
      %6014 = vmatprep.subr.mxu0 0.0
      %6015 = vmatpush1.msra.mxu0 0.0
      %6016 = vmatprep.subr.mxu0 0.0
      %6017 = vmatpush1.msra.mxu0 0.0
      %6018 = vmatprep.subr.mxu0 0.0
      %6019 = vmatpush1.msra.mxu0 0.0
      %6020 = vmatprep.subr.mxu0 0.0
      %6021 = vmatpush1.msra.mxu0 0.0
      %6022 = vmatprep.subr.mxu0 0.0
      %6023 = vmatpush1.msra.mxu0 0.0
      %6024 = vmatprep.subr.mxu0 0.0
      %6025 = vmatpush1.msra.mxu0 0.0
      %6026 = vmatprep.subr.mxu0 0.0
      %6027 = vmatpush1.msra.mxu0 0.0
      %6028 = vmatprep.subr.mxu0 0.0
      %6029 = vmatpush1.msra.mxu0 0.0
      %6030 = vmatprep.subr.mxu0 0.0
      %6031 = vmatpush1.msra.mxu0 0.0
      %6032 = vmatprep.subr.mxu0 0.0
      %6033 = vmatpush1.msra.mxu0 0.0
      %6034 = vmatprep.subr.mxu0 0.0
      %6035 = vmatpush1.msra.mxu0 0.0
      %6036 = vmatprep.subr.mxu0 0.0
      %6037 = vmatpush1.msra.mxu0 0.0
      %6038 = vmatprep.subr.mxu0 0.0
      %6039 = vmatpush1.msra.mxu0 0.0
      %6040 = vmatprep.subr.mxu0 0.0
      %6041 = vmatpush1.msra.mxu0 0.0
      %6042 = vmatprep.subr.mxu0 0.0
      %6043 = vmatpush1.msra.mxu0 0.0
      %6044 = vmatprep.subr.mxu0 0.0
      %6045 = vmatpush1.msra.mxu0 0.0
      %6046 = vmatprep.mubr.f32.mxu0 0.0
      %6047 = vmatmul.mubr.f32.gmra.mrb[0].mxu0 %v5909
      %v6048 = vpop.f32.mrb[0].mxu0
      %v6049 = vadd.f32 0.0, %v6048
      %v6050 = vpop.f32.mrb[0].mxu0
      %6051 = vdwg.mxu0
      %s6052 = scalar_lea.vmem %s51, 8
      %v6053 = vld [vmem:[%s6052] sm:$0xff]
      %v6055 = vsel %vm1445, %v6053, 0
      %6057 = vmatprep.subr.mxu0 0.0
      %6058 = vmatpush1.msra.mxu0 %v6049
      %6059 = vmatprep.subr.mxu0 0.0
      %6060 = vmatpush1.msra.mxu0 0.0
      %6061 = vmatprep.subr.mxu0 0.0
      %6062 = vmatpush1.msra.mxu0 0.0
      %6063 = vmatprep.subr.mxu0 0.0
      %6064 = vmatpush1.msra.mxu0 0.0
      %6065 = vmatprep.subr.mxu0 0.0
      %6066 = vmatpush1.msra.mxu0 0.0
      %6067 = vmatprep.subr.mxu0 0.0
      %6068 = vmatpush1.msra.mxu0 0.0
      %6069 = vmatprep.subr.mxu0 0.0
      %6070 = vmatpush1.msra.mxu0 0.0
      %6071 = vmatprep.subr.mxu0 0.0
      %6072 = vmatpush1.msra.mxu0 0.0
      %6073 = vmatprep.subr.mxu0 0.0
      %6074 = vmatpush1.msra.mxu0 0.0
      %6075 = vmatprep.subr.mxu0 0.0
      %6076 = vmatpush1.msra.mxu0 0.0
      %6077 = vmatprep.subr.mxu0 0.0
      %6078 = vmatpush1.msra.mxu0 0.0
      %6079 = vmatprep.subr.mxu0 0.0
      %6080 = vmatpush1.msra.mxu0 0.0
      %6081 = vmatprep.subr.mxu0 0.0
      %6082 = vmatpush1.msra.mxu0 0.0
      %6083 = vmatprep.subr.mxu0 0.0
      %6084 = vmatpush1.msra.mxu0 0.0
      %6085 = vmatprep.subr.mxu0 0.0
      %6086 = vmatpush1.msra.mxu0 0.0
      %6087 = vmatprep.subr.mxu0 0.0
      %6088 = vmatpush1.msra.mxu0 0.0
      %6089 = vmatprep.subr.mxu0 0.0
      %6090 = vmatpush1.msra.mxu0 0.0
      %6091 = vmatprep.subr.mxu0 0.0
      %6092 = vmatpush1.msra.mxu0 0.0
      %6093 = vmatprep.subr.mxu0 0.0
      %6094 = vmatpush1.msra.mxu0 0.0
      %6095 = vmatprep.subr.mxu0 0.0
      %6096 = vmatpush1.msra.mxu0 0.0
      %6097 = vmatprep.subr.mxu0 0.0
      %6098 = vmatpush1.msra.mxu0 0.0
      %6099 = vmatprep.subr.mxu0 0.0
      %6100 = vmatpush1.msra.mxu0 0.0
      %6101 = vmatprep.subr.mxu0 0.0
      %6102 = vmatpush1.msra.mxu0 0.0
      %6103 = vmatprep.subr.mxu0 0.0
      %6104 = vmatpush1.msra.mxu0 0.0
      %6105 = vmatprep.subr.mxu0 0.0
      %6106 = vmatpush1.msra.mxu0 0.0
      %6107 = vmatprep.subr.mxu0 0.0
      %6108 = vmatpush1.msra.mxu0 0.0
      %6109 = vmatprep.subr.mxu0 0.0
      %6110 = vmatpush1.msra.mxu0 0.0
      %6111 = vmatprep.subr.mxu0 0.0
      %6112 = vmatpush1.msra.mxu0 0.0
      %6113 = vmatprep.subr.mxu0 0.0
      %6114 = vmatpush1.msra.mxu0 0.0
      %6115 = vmatprep.subr.mxu0 0.0
      %6116 = vmatpush1.msra.mxu0 0.0
      %6117 = vmatprep.subr.mxu0 0.0
      %6118 = vmatpush1.msra.mxu0 0.0
      %6119 = vmatprep.subr.mxu0 0.0
      %6120 = vmatpush1.msra.mxu0 0.0
      %6121 = vmatprep.mubr.f32.mxu0 0.0
      %6122 = vmatmul.mubr.f32.gmra.mrb[0].mxu0 %v6055
      %v6123 = vpop.f32.mrb[0].mxu0
      %v6124 = vadd.f32 0.0, %v6123
      %v6125 = vpop.f32.mrb[0].mxu0
      %6126 = vdwg.mxu0
      %v6128 = vsel %vm1445, %v5981, 0
      %6130 = vmatprep.subr.mxu0 0.0
      %6131 = vmatpush1.msra.mxu0 %v5978
      %6132 = vmatprep.subr.mxu0 0.0
      %6133 = vmatpush1.msra.mxu0 0.0
      %6134 = vmatprep.subr.mxu0 0.0
      %6135 = vmatpush1.msra.mxu0 0.0
      %6136 = vmatprep.subr.mxu0 0.0
      %6137 = vmatpush1.msra.mxu0 0.0
      %6138 = vmatprep.subr.mxu0 0.0
      %6139 = vmatpush1.msra.mxu0 0.0
      %6140 = vmatprep.subr.mxu0 0.0
      %6141 = vmatpush1.msra.mxu0 0.0
      %6142 = vmatprep.subr.mxu0 0.0
      %6143 = vmatpush1.msra.mxu0 0.0
      %6144 = vmatprep.subr.mxu0 0.0
      %6145 = vmatpush1.msra.mxu0 0.0
      %6146 = vmatprep.subr.mxu0 0.0
      %6147 = vmatpush1.msra.mxu0 0.0
      %6148 = vmatprep.subr.mxu0 0.0
      %6149 = vmatpush1.msra.mxu0 0.0
      %6150 = vmatprep.subr.mxu0 0.0
      %6151 = vmatpush1.msra.mxu0 0.0
      %6152 = vmatprep.subr.mxu0 0.0
      %6153 = vmatpush1.msra.mxu0 0.0
      %6154 = vmatprep.subr.mxu0 0.0
      %6155 = vmatpush1.msra.mxu0 0.0
      %6156 = vmatprep.subr.mxu0 0.0
      %6157 = vmatpush1.msra.mxu0 0.0
      %6158 = vmatprep.subr.mxu0 0.0
      %6159 = vmatpush1.msra.mxu0 0.0
      %6160 = vmatprep.subr.mxu0 0.0
      %6161 = vmatpush1.msra.mxu0 0.0
      %6162 = vmatprep.subr.mxu0 0.0
      %6163 = vmatpush1.msra.mxu0 0.0
      %6164 = vmatprep.subr.mxu0 0.0
      %6165 = vmatpush1.msra.mxu0 0.0
      %6166 = vmatprep.subr.mxu0 0.0
      %6167 = vmatpush1.msra.mxu0 0.0
      %6168 = vmatprep.subr.mxu0 0.0
      %6169 = vmatpush1.msra.mxu0 0.0
      %6170 = vmatprep.subr.mxu0 0.0
      %6171 = vmatpush1.msra.mxu0 0.0
      %6172 = vmatprep.subr.mxu0 0.0
      %6173 = vmatpush1.msra.mxu0 0.0
      %6174 = vmatprep.subr.mxu0 0.0
      %6175 = vmatpush1.msra.mxu0 0.0
      %6176 = vmatprep.subr.mxu0 0.0
      %6177 = vmatpush1.msra.mxu0 0.0
      %6178 = vmatprep.subr.mxu0 0.0
      %6179 = vmatpush1.msra.mxu0 0.0
      %6180 = vmatprep.subr.mxu0 0.0
      %6181 = vmatpush1.msra.mxu0 0.0
      %6182 = vmatprep.subr.mxu0 0.0
      %6183 = vmatpush1.msra.mxu0 0.0
      %6184 = vmatprep.subr.mxu0 0.0
      %6185 = vmatpush1.msra.mxu0 0.0
      %6186 = vmatprep.subr.mxu0 0.0
      %6187 = vmatpush1.msra.mxu0 0.0
      %6188 = vmatprep.subr.mxu0 0.0
      %6189 = vmatpush1.msra.mxu0 0.0
      %6190 = vmatprep.subr.mxu0 0.0
      %6191 = vmatpush1.msra.mxu0 0.0
      %6192 = vmatprep.subr.mxu0 0.0
      %6193 = vmatpush1.msra.mxu0 0.0
      %6194 = vmatprep.mubr.f32.mxu0 0.0
      %6195 = vmatmul.mubr.f32.gmra.mrb[0].mxu0 %v6128
      %v6196 = vpop.f32.mrb[0].mxu0
      %v6197 = vadd.f32 %v6124, %v6196
      %v6198 = vpop.f32.mrb[0].mxu0
      %6199 = vdwg.mxu0
      %6200 = vmatprep.subr.mxu0 0.0
      %6201 = vmatpush1.msra.mxu0 %v1625
      %6202 = vmatprep.subr.mxu0 0.0
      %6203 = vmatpush1.msra.mxu0 %v1626
      %6204 = vmatprep.subr.mxu0 0.0
      %6205 = vmatpush1.msra.mxu0 0.0
      %6206 = vmatprep.subr.mxu0 0.0
      %6207 = vmatpush1.msra.mxu0 0.0
      %6208 = vmatprep.subr.mxu0 0.0
      %6209 = vmatpush1.msra.mxu0 0.0
      %6210 = vmatprep.subr.mxu0 0.0
      %6211 = vmatpush1.msra.mxu0 0.0
      %6212 = vmatprep.subr.mxu0 0.0
      %6213 = vmatpush1.msra.mxu0 0.0
      %6214 = vmatprep.subr.mxu0 0.0
      %6215 = vmatpush1.msra.mxu0 0.0
      %6216 = vmatprep.subr.mxu0 0.0
      %6217 = vmatpush1.msra.mxu0 0.0
      %6218 = vmatprep.subr.mxu0 0.0
      %6219 = vmatpush1.msra.mxu0 0.0
      %6220 = vmatprep.subr.mxu0 0.0
      %6221 = vmatpush1.msra.mxu0 0.0
      %6222 = vmatprep.subr.mxu0 0.0
      %6223 = vmatpush1.msra.mxu0 0.0
      %6224 = vmatprep.subr.mxu0 0.0
      %6225 = vmatpush1.msra.mxu0 0.0
      %6226 = vmatprep.subr.mxu0 0.0
      %6227 = vmatpush1.msra.mxu0 0.0
      %6228 = vmatprep.subr.mxu0 0.0
      %6229 = vmatpush1.msra.mxu0 0.0
      %6230 = vmatprep.subr.mxu0 0.0
      %6231 = vmatpush1.msra.mxu0 0.0
      %6232 = vmatprep.subr.mxu0 0.0
      %6233 = vmatpush1.msra.mxu0 0.0
      %6234 = vmatprep.subr.mxu0 0.0
      %6235 = vmatpush1.msra.mxu0 0.0
      %6236 = vmatprep.subr.mxu0 0.0
      %6237 = vmatpush1.msra.mxu0 0.0
      %6238 = vmatprep.subr.mxu0 0.0
      %6239 = vmatpush1.msra.mxu0 0.0
      %6240 = vmatprep.subr.mxu0 0.0
      %6241 = vmatpush1.msra.mxu0 0.0
      %6242 = vmatprep.subr.mxu0 0.0
      %6243 = vmatpush1.msra.mxu0 0.0
      %6244 = vmatprep.subr.mxu0 0.0
      %6245 = vmatpush1.msra.mxu0 0.0
      %6246 = vmatprep.subr.mxu0 0.0
      %6247 = vmatpush1.msra.mxu0 0.0
      %6248 = vmatprep.subr.mxu0 0.0
      %6249 = vmatpush1.msra.mxu0 0.0
      %6250 = vmatprep.subr.mxu0 0.0
      %6251 = vmatpush1.msra.mxu0 0.0
      %6252 = vmatprep.subr.mxu0 0.0
      %6253 = vmatpush1.msra.mxu0 0.0
      %6254 = vmatprep.subr.mxu0 0.0
      %6255 = vmatpush1.msra.mxu0 0.0
      %6256 = vmatprep.subr.mxu0 0.0
      %6257 = vmatpush1.msra.mxu0 0.0
      %6258 = vmatprep.subr.mxu0 0.0
      %6259 = vmatpush1.msra.mxu0 0.0
      %6260 = vmatprep.subr.mxu0 0.0
      %6261 = vmatpush1.msra.mxu0 0.0
      %6262 = vmatprep.subr.mxu0 0.0
      %6263 = vmatpush1.msra.mxu0 0.0
      %6264 = vmatprep.mubr.f32.mxu0 0.0
      %6265 = vmatmul.mubr.f32.gmra.mrb[0].mxu0 %v5909
      %v6266 = vpop.f32.mrb[0].mxu0
      %v6267 = vadd.f32 0.0, %v6266
      %v6268 = vpop.f32.mrb[0].mxu0
      %6269 = vdwg.mxu0
      %s6270 = scalar_lea.vmem %s51, 16
      %v6271 = vld [vmem:[%s6270] sm:$0xff]
      %v6273 = vsel %vm1445, %v6271, 0
      %6275 = vmatprep.subr.mxu0 0.0
      %6276 = vmatpush1.msra.mxu0 %v6267
      %6277 = vmatprep.subr.mxu0 0.0
      %6278 = vmatpush1.msra.mxu0 0.0
      %6279 = vmatprep.subr.mxu0 0.0
      %6280 = vmatpush1.msra.mxu0 0.0
      %6281 = vmatprep.subr.mxu0 0.0
      %6282 = vmatpush1.msra.mxu0 0.0
      %6283 = vmatprep.subr.mxu0 0.0
      %6284 = vmatpush1.msra.mxu0 0.0
      %6285 = vmatprep.subr.mxu0 0.0
      %6286 = vmatpush1.msra.mxu0 0.0
      %6287 = vmatprep.subr.mxu0 0.0
      %6288 = vmatpush1.msra.mxu0 0.0
      %6289 = vmatprep.subr.mxu0 0.0
      %6290 = vmatpush1.msra.mxu0 0.0
      %6291 = vmatprep.subr.mxu0 0.0
      %6292 = vmatpush1.msra.mxu0 0.0
      %6293 = vmatprep.subr.mxu0 0.0
      %6294 = vmatpush1.msra.mxu0 0.0
      %6295 = vmatprep.subr.mxu0 0.0
      %6296 = vmatpush1.msra.mxu0 0.0
      %6297 = vmatprep.subr.mxu0 0.0
      %6298 = vmatpush1.msra.mxu0 0.0
      %6299 = vmatprep.subr.mxu0 0.0
      %6300 = vmatpush1.msra.mxu0 0.0
      %6301 = vmatprep.subr.mxu0 0.0
      %6302 = vmatpush1.msra.mxu0 0.0
      %6303 = vmatprep.subr.mxu0 0.0
      %6304 = vmatpush1.msra.mxu0 0.0
      %6305 = vmatprep.subr.mxu0 0.0
      %6306 = vmatpush1.msra.mxu0 0.0
      %6307 = vmatprep.subr.mxu0 0.0
      %6308 = vmatpush1.msra.mxu0 0.0
      %6309 = vmatprep.subr.mxu0 0.0
      %6310 = vmatpush1.msra.mxu0 0.0
      %6311 = vmatprep.subr.mxu0 0.0
      %6312 = vmatpush1.msra.mxu0 0.0
      %6313 = vmatprep.subr.mxu0 0.0
      %6314 = vmatpush1.msra.mxu0 0.0
      %6315 = vmatprep.subr.mxu0 0.0
      %6316 = vmatpush1.msra.mxu0 0.0
      %6317 = vmatprep.subr.mxu0 0.0
      %6318 = vmatpush1.msra.mxu0 0.0
      %6319 = vmatprep.subr.mxu0 0.0
      %6320 = vmatpush1.msra.mxu0 0.0
      %6321 = vmatprep.subr.mxu0 0.0
      %6322 = vmatpush1.msra.mxu0 0.0
      %6323 = vmatprep.subr.mxu0 0.0
      %6324 = vmatpush1.msra.mxu0 0.0
      %6325 = vmatprep.subr.mxu0 0.0
      %6326 = vmatpush1.msra.mxu0 0.0
      %6327 = vmatprep.subr.mxu0 0.0
      %6328 = vmatpush1.msra.mxu0 0.0
      %6329 = vmatprep.subr.mxu0 0.0
      %6330 = vmatpush1.msra.mxu0 0.0
      %6331 = vmatprep.subr.mxu0 0.0
      %6332 = vmatpush1.msra.mxu0 0.0
      %6333 = vmatprep.subr.mxu0 0.0
      %6334 = vmatpush1.msra.mxu0 0.0
      %6335 = vmatprep.subr.mxu0 0.0
      %6336 = vmatpush1.msra.mxu0 0.0
      %6337 = vmatprep.subr.mxu0 0.0
      %6338 = vmatpush1.msra.mxu0 0.0
      %6339 = vmatprep.mubr.f32.mxu0 0.0
      %6340 = vmatmul.mubr.f32.gmra.mrb[0].mxu0 %v6273
      %v6341 = vpop.f32.mrb[0].mxu0
      %v6342 = vadd.f32 0.0, %v6341
      %v6343 = vpop.f32.mrb[0].mxu0
      %6344 = vdwg.mxu0
      %v6345 = vadd.f32 %v6197, %v6342
      %v6346 = vld [vmem:[%s53] sm:$0xff]
      %6348 = vset.pattern.permute.xlu0 0
      %6349 = vperm.xlu0 %6348, %v6346
      %v6350 = vpop.permute.xlu0 %6349
      %v6352 = vadd.f32 %v6345, %v6350
      %v6353 = vmax.f32 %v6352, 0.0
      %v6355 = vsel %vm5515, %v6353, 0
      %6357 = vmatprep.subr.mxu0 0.0
      %6358 = vmatpush1.msra.mxu0 %v1238
      %6359 = vmatprep.subr.mxu0 0.0
      %6360 = vmatpush1.msra.mxu0 %v1239
      %6361 = vmatprep.subr.mxu0 0.0
      %6362 = vmatpush1.msra.mxu0 0.0
      %6363 = vmatprep.subr.mxu0 0.0
      %6364 = vmatpush1.msra.mxu0 0.0
      %6365 = vmatprep.subr.mxu0 0.0
      %6366 = vmatpush1.msra.mxu0 0.0
      %6367 = vmatprep.subr.mxu0 0.0
      %6368 = vmatpush1.msra.mxu0 0.0
      %6369 = vmatprep.subr.mxu0 0.0
      %6370 = vmatpush1.msra.mxu0 0.0
      %6371 = vmatprep.subr.mxu0 0.0
      %6372 = vmatpush1.msra.mxu0 0.0
      %6373 = vmatprep.subr.mxu0 0.0
      %6374 = vmatpush1.msra.mxu0 0.0
      %6375 = vmatprep.subr.mxu0 0.0
      %6376 = vmatpush1.msra.mxu0 0.0
      %6377 = vmatprep.subr.mxu0 0.0
      %6378 = vmatpush1.msra.mxu0 0.0
      %6379 = vmatprep.subr.mxu0 0.0
      %6380 = vmatpush1.msra.mxu0 0.0
      %6381 = vmatprep.subr.mxu0 0.0
      %6382 = vmatpush1.msra.mxu0 0.0
      %6383 = vmatprep.subr.mxu0 0.0
      %6384 = vmatpush1.msra.mxu0 0.0
      %6385 = vmatprep.subr.mxu0 0.0
      %6386 = vmatpush1.msra.mxu0 0.0
      %6387 = vmatprep.subr.mxu0 0.0
      %6388 = vmatpush1.msra.mxu0 0.0
      %6389 = vmatprep.subr.mxu0 0.0
      %6390 = vmatpush1.msra.mxu0 0.0
      %6391 = vmatprep.subr.mxu0 0.0
      %6392 = vmatpush1.msra.mxu0 0.0
      %6393 = vmatprep.subr.mxu0 0.0
      %6394 = vmatpush1.msra.mxu0 0.0
      %6395 = vmatprep.subr.mxu0 0.0
      %6396 = vmatpush1.msra.mxu0 0.0
      %6397 = vmatprep.subr.mxu0 0.0
      %6398 = vmatpush1.msra.mxu0 0.0
      %6399 = vmatprep.subr.mxu0 0.0
      %6400 = vmatpush1.msra.mxu0 0.0
      %6401 = vmatprep.subr.mxu0 0.0
      %6402 = vmatpush1.msra.mxu0 0.0
      %6403 = vmatprep.subr.mxu0 0.0
      %6404 = vmatpush1.msra.mxu0 0.0
      %6405 = vmatprep.subr.mxu0 0.0
      %6406 = vmatpush1.msra.mxu0 0.0
      %6407 = vmatprep.subr.mxu0 0.0
      %6408 = vmatpush1.msra.mxu0 0.0
      %6409 = vmatprep.subr.mxu0 0.0
      %6410 = vmatpush1.msra.mxu0 0.0
      %6411 = vmatprep.subr.mxu0 0.0
      %6412 = vmatpush1.msra.mxu0 0.0
      %6413 = vmatprep.subr.mxu0 0.0
      %6414 = vmatpush1.msra.mxu0 0.0
      %6415 = vmatprep.subr.mxu0 0.0
      %6416 = vmatpush1.msra.mxu0 0.0
      %6417 = vmatprep.subr.mxu0 0.0
      %6418 = vmatpush1.msra.mxu0 0.0
      %6419 = vmatprep.subr.mxu0 0.0
      %6420 = vmatpush1.msra.mxu0 0.0
      %6421 = vmatprep.mubr.f32.mxu0 0.0
      %6422 = vmatmul.mubr.f32.gmra.mrb[0].mxu0 %v6355
      %v6423 = vpop.f32.mrb[0].mxu0
      %v6424 = vadd.f32 0.0, %v6423
      %v6425 = vpop.f32.mrb[0].mxu0
      %6426 = vdwg.mxu0
      %v6427 = vld [vmem:[%s55] sm:$0xff]
      %6428 = vmatprep.subr.mxu0 0.0
      %6429 = vmatpush1.msra.mxu0 %v1357
      %6430 = vmatprep.subr.mxu0 0.0
      %6431 = vmatpush1.msra.mxu0 %v1358
      %6432 = vmatprep.subr.mxu0 0.0
      %6433 = vmatpush1.msra.mxu0 0.0
      %6434 = vmatprep.subr.mxu0 0.0
      %6435 = vmatpush1.msra.mxu0 0.0
      %6436 = vmatprep.subr.mxu0 0.0
      %6437 = vmatpush1.msra.mxu0 0.0
      %6438 = vmatprep.subr.mxu0 0.0
      %6439 = vmatpush1.msra.mxu0 0.0
      %6440 = vmatprep.subr.mxu0 0.0
      %6441 = vmatpush1.msra.mxu0 0.0
      %6442 = vmatprep.subr.mxu0 0.0
      %6443 = vmatpush1.msra.mxu0 0.0
      %6444 = vmatprep.subr.mxu0 0.0
      %6445 = vmatpush1.msra.mxu0 0.0
      %6446 = vmatprep.subr.mxu0 0.0
      %6447 = vmatpush1.msra.mxu0 0.0
      %6448 = vmatprep.subr.mxu0 0.0
      %6449 = vmatpush1.msra.mxu0 0.0
      %6450 = vmatprep.subr.mxu0 0.0
      %6451 = vmatpush1.msra.mxu0 0.0
      %6452 = vmatprep.subr.mxu0 0.0
      %6453 = vmatpush1.msra.mxu0 0.0
      %6454 = vmatprep.subr.mxu0 0.0
      %6455 = vmatpush1.msra.mxu0 0.0
      %6456 = vmatprep.subr.mxu0 0.0
      %6457 = vmatpush1.msra.mxu0 0.0
      %6458 = vmatprep.subr.mxu0 0.0
      %6459 = vmatpush1.msra.mxu0 0.0
      %6460 = vmatprep.subr.mxu0 0.0
      %6461 = vmatpush1.msra.mxu0 0.0
      %6462 = vmatprep.subr.mxu0 0.0
      %6463 = vmatpush1.msra.mxu0 0.0
      %6464 = vmatprep.subr.mxu0 0.0
      %6465 = vmatpush1.msra.mxu0 0.0
      %6466 = vmatprep.subr.mxu0 0.0
      %6467 = vmatpush1.msra.mxu0 0.0
      %6468 = vmatprep.subr.mxu0 0.0
      %6469 = vmatpush1.msra.mxu0 0.0
      %6470 = vmatprep.subr.mxu0 0.0
      %6471 = vmatpush1.msra.mxu0 0.0
      %6472 = vmatprep.subr.mxu0 0.0
      %6473 = vmatpush1.msra.mxu0 0.0
      %6474 = vmatprep.subr.mxu0 0.0
      %6475 = vmatpush1.msra.mxu0 0.0
      %6476 = vmatprep.subr.mxu0 0.0
      %6477 = vmatpush1.msra.mxu0 0.0
      %6478 = vmatprep.subr.mxu0 0.0
      %6479 = vmatpush1.msra.mxu0 0.0
      %6480 = vmatprep.subr.mxu0 0.0
      %6481 = vmatpush1.msra.mxu0 0.0
      %6482 = vmatprep.subr.mxu0 0.0
      %6483 = vmatpush1.msra.mxu0 0.0
      %6484 = vmatprep.subr.mxu0 0.0
      %6485 = vmatpush1.msra.mxu0 0.0
      %6486 = vmatprep.subr.mxu0 0.0
      %6487 = vmatpush1.msra.mxu0 0.0
      %6488 = vmatprep.subr.mxu0 0.0
      %6489 = vmatpush1.msra.mxu0 0.0
      %6490 = vmatprep.subr.mxu0 0.0
      %6491 = vmatpush1.msra.mxu0 0.0
      %6492 = vmatprep.mubr.f32.mxu0 0.0
      %6493 = vmatmul.mubr.f32.gmra.mrb[0].mxu0 %v6355
      %v6494 = vpop.f32.mrb[0].mxu0
      %v6495 = vadd.f32 0.0, %v6494
      %v6496 = vpop.f32.mrb[0].mxu0
      %6497 = vdwg.mxu0
      %s6498 = scalar_lea.vmem %s55, 8
      %v6499 = vld [vmem:[%s6498] sm:$0xff]
      %v6501 = vsel %vm1445, %v6499, 0
      %6503 = vmatprep.subr.mxu0 0.0
      %6504 = vmatpush1.msra.mxu0 %v6495
      %6505 = vmatprep.subr.mxu0 0.0
      %6506 = vmatpush1.msra.mxu0 0.0
      %6507 = vmatprep.subr.mxu0 0.0
      %6508 = vmatpush1.msra.mxu0 0.0
      %6509 = vmatprep.subr.mxu0 0.0
      %6510 = vmatpush1.msra.mxu0 0.0
      %6511 = vmatprep.subr.mxu0 0.0
      %6512 = vmatpush1.msra.mxu0 0.0
      %6513 = vmatprep.subr.mxu0 0.0
      %6514 = vmatpush1.msra.mxu0 0.0
      %6515 = vmatprep.subr.mxu0 0.0
      %6516 = vmatpush1.msra.mxu0 0.0
      %6517 = vmatprep.subr.mxu0 0.0
      %6518 = vmatpush1.msra.mxu0 0.0
      %6519 = vmatprep.subr.mxu0 0.0
      %6520 = vmatpush1.msra.mxu0 0.0
      %6521 = vmatprep.subr.mxu0 0.0
      %6522 = vmatpush1.msra.mxu0 0.0
      %6523 = vmatprep.subr.mxu0 0.0
      %6524 = vmatpush1.msra.mxu0 0.0
      %6525 = vmatprep.subr.mxu0 0.0
      %6526 = vmatpush1.msra.mxu0 0.0
      %6527 = vmatprep.subr.mxu0 0.0
      %6528 = vmatpush1.msra.mxu0 0.0
      %6529 = vmatprep.subr.mxu0 0.0
      %6530 = vmatpush1.msra.mxu0 0.0
      %6531 = vmatprep.subr.mxu0 0.0
      %6532 = vmatpush1.msra.mxu0 0.0
      %6533 = vmatprep.subr.mxu0 0.0
      %6534 = vmatpush1.msra.mxu0 0.0
      %6535 = vmatprep.subr.mxu0 0.0
      %6536 = vmatpush1.msra.mxu0 0.0
      %6537 = vmatprep.subr.mxu0 0.0
      %6538 = vmatpush1.msra.mxu0 0.0
      %6539 = vmatprep.subr.mxu0 0.0
      %6540 = vmatpush1.msra.mxu0 0.0
      %6541 = vmatprep.subr.mxu0 0.0
      %6542 = vmatpush1.msra.mxu0 0.0
      %6543 = vmatprep.subr.mxu0 0.0
      %6544 = vmatpush1.msra.mxu0 0.0
      %6545 = vmatprep.subr.mxu0 0.0
      %6546 = vmatpush1.msra.mxu0 0.0
      %6547 = vmatprep.subr.mxu0 0.0
      %6548 = vmatpush1.msra.mxu0 0.0
      %6549 = vmatprep.subr.mxu0 0.0
      %6550 = vmatpush1.msra.mxu0 0.0
      %6551 = vmatprep.subr.mxu0 0.0
      %6552 = vmatpush1.msra.mxu0 0.0
      %6553 = vmatprep.subr.mxu0 0.0
      %6554 = vmatpush1.msra.mxu0 0.0
      %6555 = vmatprep.subr.mxu0 0.0
      %6556 = vmatpush1.msra.mxu0 0.0
      %6557 = vmatprep.subr.mxu0 0.0
      %6558 = vmatpush1.msra.mxu0 0.0
      %6559 = vmatprep.subr.mxu0 0.0
      %6560 = vmatpush1.msra.mxu0 0.0
      %6561 = vmatprep.subr.mxu0 0.0
      %6562 = vmatpush1.msra.mxu0 0.0
      %6563 = vmatprep.subr.mxu0 0.0
      %6564 = vmatpush1.msra.mxu0 0.0
      %6565 = vmatprep.subr.mxu0 0.0
      %6566 = vmatpush1.msra.mxu0 0.0
      %6567 = vmatprep.mubr.f32.mxu0 0.0
      %6568 = vmatmul.mubr.f32.gmra.mrb[0].mxu0 %v6501
      %v6569 = vpop.f32.mrb[0].mxu0
      %v6570 = vadd.f32 0.0, %v6569
      %v6571 = vpop.f32.mrb[0].mxu0
      %6572 = vdwg.mxu0
      %v6574 = vsel %vm1445, %v6427, 0
      %6576 = vmatprep.subr.mxu0 0.0
      %6577 = vmatpush1.msra.mxu0 %v6424
      %6578 = vmatprep.subr.mxu0 0.0
      %6579 = vmatpush1.msra.mxu0 0.0
      %6580 = vmatprep.subr.mxu0 0.0
      %6581 = vmatpush1.msra.mxu0 0.0
      %6582 = vmatprep.subr.mxu0 0.0
      %6583 = vmatpush1.msra.mxu0 0.0
      %6584 = vmatprep.subr.mxu0 0.0
      %6585 = vmatpush1.msra.mxu0 0.0
      %6586 = vmatprep.subr.mxu0 0.0
      %6587 = vmatpush1.msra.mxu0 0.0
      %6588 = vmatprep.subr.mxu0 0.0
      %6589 = vmatpush1.msra.mxu0 0.0
      %6590 = vmatprep.subr.mxu0 0.0
      %6591 = vmatpush1.msra.mxu0 0.0
      %6592 = vmatprep.subr.mxu0 0.0
      %6593 = vmatpush1.msra.mxu0 0.0
      %6594 = vmatprep.subr.mxu0 0.0
      %6595 = vmatpush1.msra.mxu0 0.0
      %6596 = vmatprep.subr.mxu0 0.0
      %6597 = vmatpush1.msra.mxu0 0.0
      %6598 = vmatprep.subr.mxu0 0.0
      %6599 = vmatpush1.msra.mxu0 0.0
      %6600 = vmatprep.subr.mxu0 0.0
      %6601 = vmatpush1.msra.mxu0 0.0
      %6602 = vmatprep.subr.mxu0 0.0
      %6603 = vmatpush1.msra.mxu0 0.0
      %6604 = vmatprep.subr.mxu0 0.0
      %6605 = vmatpush1.msra.mxu0 0.0
      %6606 = vmatprep.subr.mxu0 0.0
      %6607 = vmatpush1.msra.mxu0 0.0
      %6608 = vmatprep.subr.mxu0 0.0
      %6609 = vmatpush1.msra.mxu0 0.0
      %6610 = vmatprep.subr.mxu0 0.0
      %6611 = vmatpush1.msra.mxu0 0.0
      %6612 = vmatprep.subr.mxu0 0.0
      %6613 = vmatpush1.msra.mxu0 0.0
      %6614 = vmatprep.subr.mxu0 0.0
      %6615 = vmatpush1.msra.mxu0 0.0
      %6616 = vmatprep.subr.mxu0 0.0
      %6617 = vmatpush1.msra.mxu0 0.0
      %6618 = vmatprep.subr.mxu0 0.0
      %6619 = vmatpush1.msra.mxu0 0.0
      %6620 = vmatprep.subr.mxu0 0.0
      %6621 = vmatpush1.msra.mxu0 0.0
      %6622 = vmatprep.subr.mxu0 0.0
      %6623 = vmatpush1.msra.mxu0 0.0
      %6624 = vmatprep.subr.mxu0 0.0
      %6625 = vmatpush1.msra.mxu0 0.0
      %6626 = vmatprep.subr.mxu0 0.0
      %6627 = vmatpush1.msra.mxu0 0.0
      %6628 = vmatprep.subr.mxu0 0.0
      %6629 = vmatpush1.msra.mxu0 0.0
      %6630 = vmatprep.subr.mxu0 0.0
      %6631 = vmatpush1.msra.mxu0 0.0
      %6632 = vmatprep.subr.mxu0 0.0
      %6633 = vmatpush1.msra.mxu0 0.0
      %6634 = vmatprep.subr.mxu0 0.0
      %6635 = vmatpush1.msra.mxu0 0.0
      %6636 = vmatprep.subr.mxu0 0.0
      %6637 = vmatpush1.msra.mxu0 0.0
      %6638 = vmatprep.subr.mxu0 0.0
      %6639 = vmatpush1.msra.mxu0 0.0
      %6640 = vmatprep.mubr.f32.mxu0 0.0
      %6641 = vmatmul.mubr.f32.gmra.mrb[0].mxu0 %v6574
      %v6642 = vpop.f32.mrb[0].mxu0
      %v6643 = vadd.f32 %v6570, %v6642
      %v6644 = vpop.f32.mrb[0].mxu0
      %6645 = vdwg.mxu0
      %6646 = vmatprep.subr.mxu0 0.0
      %6647 = vmatpush1.msra.mxu0 %v1625
      %6648 = vmatprep.subr.mxu0 0.0
      %6649 = vmatpush1.msra.mxu0 %v1626
      %6650 = vmatprep.subr.mxu0 0.0
      %6651 = vmatpush1.msra.mxu0 0.0
      %6652 = vmatprep.subr.mxu0 0.0
      %6653 = vmatpush1.msra.mxu0 0.0
      %6654 = vmatprep.subr.mxu0 0.0
      %6655 = vmatpush1.msra.mxu0 0.0
      %6656 = vmatprep.subr.mxu0 0.0
      %6657 = vmatpush1.msra.mxu0 0.0
      %6658 = vmatprep.subr.mxu0 0.0
      %6659 = vmatpush1.msra.mxu0 0.0
      %6660 = vmatprep.subr.mxu0 0.0
      %6661 = vmatpush1.msra.mxu0 0.0
      %6662 = vmatprep.subr.mxu0 0.0
      %6663 = vmatpush1.msra.mxu0 0.0
      %6664 = vmatprep.subr.mxu0 0.0
      %6665 = vmatpush1.msra.mxu0 0.0
      %6666 = vmatprep.subr.mxu0 0.0
      %6667 = vmatpush1.msra.mxu0 0.0
      %6668 = vmatprep.subr.mxu0 0.0
      %6669 = vmatpush1.msra.mxu0 0.0
      %6670 = vmatprep.subr.mxu0 0.0
      %6671 = vmatpush1.msra.mxu0 0.0
      %6672 = vmatprep.subr.mxu0 0.0
      %6673 = vmatpush1.msra.mxu0 0.0
      %6674 = vmatprep.subr.mxu0 0.0
      %6675 = vmatpush1.msra.mxu0 0.0
      %6676 = vmatprep.subr.mxu0 0.0
      %6677 = vmatpush1.msra.mxu0 0.0
      %6678 = vmatprep.subr.mxu0 0.0
      %6679 = vmatpush1.msra.mxu0 0.0
      %6680 = vmatprep.subr.mxu0 0.0
      %6681 = vmatpush1.msra.mxu0 0.0
      %6682 = vmatprep.subr.mxu0 0.0
      %6683 = vmatpush1.msra.mxu0 0.0
      %6684 = vmatprep.subr.mxu0 0.0
      %6685 = vmatpush1.msra.mxu0 0.0
      %6686 = vmatprep.subr.mxu0 0.0
      %6687 = vmatpush1.msra.mxu0 0.0
      %6688 = vmatprep.subr.mxu0 0.0
      %6689 = vmatpush1.msra.mxu0 0.0
      %6690 = vmatprep.subr.mxu0 0.0
      %6691 = vmatpush1.msra.mxu0 0.0
      %6692 = vmatprep.subr.mxu0 0.0
      %6693 = vmatpush1.msra.mxu0 0.0
      %6694 = vmatprep.subr.mxu0 0.0
      %6695 = vmatpush1.msra.mxu0 0.0
      %6696 = vmatprep.subr.mxu0 0.0
      %6697 = vmatpush1.msra.mxu0 0.0
      %6698 = vmatprep.subr.mxu0 0.0
      %6699 = vmatpush1.msra.mxu0 0.0
      %6700 = vmatprep.subr.mxu0 0.0
      %6701 = vmatpush1.msra.mxu0 0.0
      %6702 = vmatprep.subr.mxu0 0.0
      %6703 = vmatpush1.msra.mxu0 0.0
      %6704 = vmatprep.subr.mxu0 0.0
      %6705 = vmatpush1.msra.mxu0 0.0
      %6706 = vmatprep.subr.mxu0 0.0
      %6707 = vmatpush1.msra.mxu0 0.0
      %6708 = vmatprep.subr.mxu0 0.0
      %6709 = vmatpush1.msra.mxu0 0.0
      %6710 = vmatprep.mubr.f32.mxu0 0.0
      %6711 = vmatmul.mubr.f32.gmra.mrb[0].mxu0 %v6355
      %v6712 = vpop.f32.mrb[0].mxu0
      %v6713 = vadd.f32 0.0, %v6712
      %v6714 = vpop.f32.mrb[0].mxu0
      %6715 = vdwg.mxu0
      %s6716 = scalar_lea.vmem %s55, 16
      %v6717 = vld [vmem:[%s6716] sm:$0xff]
      %v6719 = vsel %vm1445, %v6717, 0
      %6721 = vmatprep.subr.mxu0 0.0
      %6722 = vmatpush1.msra.mxu0 %v6713
      %6723 = vmatprep.subr.mxu0 0.0
      %6724 = vmatpush1.msra.mxu0 0.0
      %6725 = vmatprep.subr.mxu0 0.0
      %6726 = vmatpush1.msra.mxu0 0.0
      %6727 = vmatprep.subr.mxu0 0.0
      %6728 = vmatpush1.msra.mxu0 0.0
      %6729 = vmatprep.subr.mxu0 0.0
      %6730 = vmatpush1.msra.mxu0 0.0
      %6731 = vmatprep.subr.mxu0 0.0
      %6732 = vmatpush1.msra.mxu0 0.0
      %6733 = vmatprep.subr.mxu0 0.0
      %6734 = vmatpush1.msra.mxu0 0.0
      %6735 = vmatprep.subr.mxu0 0.0
      %6736 = vmatpush1.msra.mxu0 0.0
      %6737 = vmatprep.subr.mxu0 0.0
      %6738 = vmatpush1.msra.mxu0 0.0
      %6739 = vmatprep.subr.mxu0 0.0
      %6740 = vmatpush1.msra.mxu0 0.0
      %6741 = vmatprep.subr.mxu0 0.0
      %6742 = vmatpush1.msra.mxu0 0.0
      %6743 = vmatprep.subr.mxu0 0.0
      %6744 = vmatpush1.msra.mxu0 0.0
      %6745 = vmatprep.subr.mxu0 0.0
      %6746 = vmatpush1.msra.mxu0 0.0
      %6747 = vmatprep.subr.mxu0 0.0
      %6748 = vmatpush1.msra.mxu0 0.0
      %6749 = vmatprep.subr.mxu0 0.0
      %6750 = vmatpush1.msra.mxu0 0.0
      %6751 = vmatprep.subr.mxu0 0.0
      %6752 = vmatpush1.msra.mxu0 0.0
      %6753 = vmatprep.subr.mxu0 0.0
      %6754 = vmatpush1.msra.mxu0 0.0
      %6755 = vmatprep.subr.mxu0 0.0
      %6756 = vmatpush1.msra.mxu0 0.0
      %6757 = vmatprep.subr.mxu0 0.0
      %6758 = vmatpush1.msra.mxu0 0.0
      %6759 = vmatprep.subr.mxu0 0.0
      %6760 = vmatpush1.msra.mxu0 0.0
      %6761 = vmatprep.subr.mxu0 0.0
      %6762 = vmatpush1.msra.mxu0 0.0
      %6763 = vmatprep.subr.mxu0 0.0
      %6764 = vmatpush1.msra.mxu0 0.0
      %6765 = vmatprep.subr.mxu0 0.0
      %6766 = vmatpush1.msra.mxu0 0.0
      %6767 = vmatprep.subr.mxu0 0.0
      %6768 = vmatpush1.msra.mxu0 0.0
      %6769 = vmatprep.subr.mxu0 0.0
      %6770 = vmatpush1.msra.mxu0 0.0
      %6771 = vmatprep.subr.mxu0 0.0
      %6772 = vmatpush1.msra.mxu0 0.0
      %6773 = vmatprep.subr.mxu0 0.0
      %6774 = vmatpush1.msra.mxu0 0.0
      %6775 = vmatprep.subr.mxu0 0.0
      %6776 = vmatpush1.msra.mxu0 0.0
      %6777 = vmatprep.subr.mxu0 0.0
      %6778 = vmatpush1.msra.mxu0 0.0
      %6779 = vmatprep.subr.mxu0 0.0
      %6780 = vmatpush1.msra.mxu0 0.0
      %6781 = vmatprep.subr.mxu0 0.0
      %6782 = vmatpush1.msra.mxu0 0.0
      %6783 = vmatprep.subr.mxu0 0.0
      %6784 = vmatpush1.msra.mxu0 0.0
      %6785 = vmatprep.mubr.f32.mxu0 0.0
      %6786 = vmatmul.mubr.f32.gmra.mrb[0].mxu0 %v6719
      %v6787 = vpop.f32.mrb[0].mxu0
      %v6788 = vadd.f32 0.0, %v6787
      %v6789 = vpop.f32.mrb[0].mxu0
      %6790 = vdwg.mxu0
      %v6791 = vadd.f32 %v6643, %v6788
      %v6792 = vld [vmem:[%s57] sm:$0xff]
      %6794 = vset.pattern.permute.xlu0 0
      %6795 = vperm.xlu0 %6794, %v6792
      %v6796 = vpop.permute.xlu0 %6795
      %v6798 = vadd.f32 %v6791, %v6796
      %v6799 = vadd.f32 %v6798, %v5905
      %v6800 = vmax.f32 %v6799, 0.0
      %v6802 = vsel %vm5515, %v6800, 0
      %6804 = vmatprep.subr.mxu0 0.0
      %6805 = vmatpush1.msra.mxu0 %v2273
      %6806 = vmatprep.subr.mxu0 0.0
      %6807 = vmatpush1.msra.mxu0 %v2274
      %6808 = vmatprep.subr.mxu0 0.0
      %6809 = vmatpush1.msra.mxu0 0.0
      %6810 = vmatprep.subr.mxu0 0.0
      %6811 = vmatpush1.msra.mxu0 0.0
      %6812 = vmatprep.subr.mxu0 0.0
      %6813 = vmatpush1.msra.mxu0 0.0
      %6814 = vmatprep.subr.mxu0 0.0
      %6815 = vmatpush1.msra.mxu0 0.0
      %6816 = vmatprep.subr.mxu0 0.0
      %6817 = vmatpush1.msra.mxu0 0.0
      %6818 = vmatprep.subr.mxu0 0.0
      %6819 = vmatpush1.msra.mxu0 0.0
      %6820 = vmatprep.subr.mxu0 0.0
      %6821 = vmatpush1.msra.mxu0 0.0
      %6822 = vmatprep.subr.mxu0 0.0
      %6823 = vmatpush1.msra.mxu0 0.0
      %6824 = vmatprep.subr.mxu0 0.0
      %6825 = vmatpush1.msra.mxu0 0.0
      %6826 = vmatprep.subr.mxu0 0.0
      %6827 = vmatpush1.msra.mxu0 0.0
      %6828 = vmatprep.subr.mxu0 0.0
      %6829 = vmatpush1.msra.mxu0 0.0
      %6830 = vmatprep.subr.mxu0 0.0
      %6831 = vmatpush1.msra.mxu0 0.0
      %6832 = vmatprep.subr.mxu0 0.0
      %6833 = vmatpush1.msra.mxu0 0.0
      %6834 = vmatprep.subr.mxu0 0.0
      %6835 = vmatpush1.msra.mxu0 0.0
      %6836 = vmatprep.subr.mxu0 0.0
      %6837 = vmatpush1.msra.mxu0 0.0
      %6838 = vmatprep.subr.mxu0 0.0
      %6839 = vmatpush1.msra.mxu0 0.0
      %6840 = vmatprep.subr.mxu0 0.0
      %6841 = vmatpush1.msra.mxu0 0.0
      %6842 = vmatprep.subr.mxu0 0.0
      %6843 = vmatpush1.msra.mxu0 0.0
      %6844 = vmatprep.subr.mxu0 0.0
      %6845 = vmatpush1.msra.mxu0 0.0
      %6846 = vmatprep.subr.mxu0 0.0
      %6847 = vmatpush1.msra.mxu0 0.0
      %6848 = vmatprep.subr.mxu0 0.0
      %6849 = vmatpush1.msra.mxu0 0.0
      %6850 = vmatprep.subr.mxu0 0.0
      %6851 = vmatpush1.msra.mxu0 0.0
      %6852 = vmatprep.subr.mxu0 0.0
      %6853 = vmatpush1.msra.mxu0 0.0
      %6854 = vmatprep.subr.mxu0 0.0
      %6855 = vmatpush1.msra.mxu0 0.0
      %6856 = vmatprep.subr.mxu0 0.0
      %6857 = vmatpush1.msra.mxu0 0.0
      %6858 = vmatprep.subr.mxu0 0.0
      %6859 = vmatpush1.msra.mxu0 0.0
      %6860 = vmatprep.subr.mxu0 0.0
      %6861 = vmatpush1.msra.mxu0 0.0
      %6862 = vmatprep.subr.mxu0 0.0
      %6863 = vmatpush1.msra.mxu0 0.0
      %6864 = vmatprep.subr.mxu0 0.0
      %6865 = vmatpush1.msra.mxu0 0.0
      %6866 = vmatprep.subr.mxu0 0.0
      %6867 = vmatpush1.msra.mxu0 0.0
      %6868 = vmatprep.mubr.f32.mxu0 0.0
      %6869 = vmatmul.mubr.f32.gmra.mrb[0].mxu0 %v6802
      %v6870 = vpop.f32.mrb[0].mxu0
      %v6871 = vadd.f32 0.0, %v6870
      %v6872 = vpop.f32.mrb[0].mxu0
      %6873 = vdwg.mxu0
      %v6874 = vld [vmem:[%s59] sm:$0xff]
      %v6875 = vld [vmem:[%s59 + $0x8] sm:$0xff]
      %6876 = vmatprep.subr.mxu0 0.0
      %6877 = vmatpush1.msra.mxu0 %v2392
      %6878 = vmatprep.subr.mxu0 0.0
      %6879 = vmatpush1.msra.mxu0 %v2393
      %6880 = vmatprep.subr.mxu0 0.0
      %6881 = vmatpush1.msra.mxu0 0.0
      %6882 = vmatprep.subr.mxu0 0.0
      %6883 = vmatpush1.msra.mxu0 0.0
      %6884 = vmatprep.subr.mxu0 0.0
      %6885 = vmatpush1.msra.mxu0 0.0
      %6886 = vmatprep.subr.mxu0 0.0
      %6887 = vmatpush1.msra.mxu0 0.0
      %6888 = vmatprep.subr.mxu0 0.0
      %6889 = vmatpush1.msra.mxu0 0.0
      %6890 = vmatprep.subr.mxu0 0.0
      %6891 = vmatpush1.msra.mxu0 0.0
      %6892 = vmatprep.subr.mxu0 0.0
      %6893 = vmatpush1.msra.mxu0 0.0
      %6894 = vmatprep.subr.mxu0 0.0
      %6895 = vmatpush1.msra.mxu0 0.0
      %6896 = vmatprep.subr.mxu0 0.0
      %6897 = vmatpush1.msra.mxu0 0.0
      %6898 = vmatprep.subr.mxu0 0.0
      %6899 = vmatpush1.msra.mxu0 0.0
      %6900 = vmatprep.subr.mxu0 0.0
      %6901 = vmatpush1.msra.mxu0 0.0
      %6902 = vmatprep.subr.mxu0 0.0
      %6903 = vmatpush1.msra.mxu0 0.0
      %6904 = vmatprep.subr.mxu0 0.0
      %6905 = vmatpush1.msra.mxu0 0.0
      %6906 = vmatprep.subr.mxu0 0.0
      %6907 = vmatpush1.msra.mxu0 0.0
      %6908 = vmatprep.subr.mxu0 0.0
      %6909 = vmatpush1.msra.mxu0 0.0
      %6910 = vmatprep.subr.mxu0 0.0
      %6911 = vmatpush1.msra.mxu0 0.0
      %6912 = vmatprep.subr.mxu0 0.0
      %6913 = vmatpush1.msra.mxu0 0.0
      %6914 = vmatprep.subr.mxu0 0.0
      %6915 = vmatpush1.msra.mxu0 0.0
      %6916 = vmatprep.subr.mxu0 0.0
      %6917 = vmatpush1.msra.mxu0 0.0
      %6918 = vmatprep.subr.mxu0 0.0
      %6919 = vmatpush1.msra.mxu0 0.0
      %6920 = vmatprep.subr.mxu0 0.0
      %6921 = vmatpush1.msra.mxu0 0.0
      %6922 = vmatprep.subr.mxu0 0.0
      %6923 = vmatpush1.msra.mxu0 0.0
      %6924 = vmatprep.subr.mxu0 0.0
      %6925 = vmatpush1.msra.mxu0 0.0
      %6926 = vmatprep.subr.mxu0 0.0
      %6927 = vmatpush1.msra.mxu0 0.0
      %6928 = vmatprep.subr.mxu0 0.0
      %6929 = vmatpush1.msra.mxu0 0.0
      %6930 = vmatprep.subr.mxu0 0.0
      %6931 = vmatpush1.msra.mxu0 0.0
      %6932 = vmatprep.subr.mxu0 0.0
      %6933 = vmatpush1.msra.mxu0 0.0
      %6934 = vmatprep.subr.mxu0 0.0
      %6935 = vmatpush1.msra.mxu0 0.0
      %6936 = vmatprep.subr.mxu0 0.0
      %6937 = vmatpush1.msra.mxu0 0.0
      %6938 = vmatprep.subr.mxu0 0.0
      %6939 = vmatpush1.msra.mxu0 0.0
      %6940 = vmatprep.mubr.f32.mxu0 0.0
      %6941 = vmatmul.mubr.f32.gmra.mrb[0].mxu0 %v6802
      %v6942 = vpop.f32.mrb[0].mxu0
      %v6943 = vadd.f32 0.0, %v6942
      %v6944 = vpop.f32.mrb[0].mxu0
      %6945 = vdwg.mxu0
      %s6946 = scalar_lea.vmem %s59, 16
      %v6947 = vld [vmem:[%s6946] sm:$0xff]
      %v6948 = vld [vmem:[%s6946 + $0x8] sm:$0xff]
      %v6950 = vsel %vm1445, %v6947, 0
      %v6953 = vsel %vm1445, %v6948, 0
      %6955 = vmatprep.subr.mxu0 0.0
      %6956 = vmatpush1.msra.mxu0 %v6943
      %6957 = vmatprep.subr.mxu0 0.0
      %6958 = vmatpush1.msra.mxu0 0.0
      %6959 = vmatprep.subr.mxu0 0.0
      %6960 = vmatpush1.msra.mxu0 0.0
      %6961 = vmatprep.subr.mxu0 0.0
      %6962 = vmatpush1.msra.mxu0 0.0
      %6963 = vmatprep.subr.mxu0 0.0
      %6964 = vmatpush1.msra.mxu0 0.0
      %6965 = vmatprep.subr.mxu0 0.0
      %6966 = vmatpush1.msra.mxu0 0.0
      %6967 = vmatprep.subr.mxu0 0.0
      %6968 = vmatpush1.msra.mxu0 0.0
      %6969 = vmatprep.subr.mxu0 0.0
      %6970 = vmatpush1.msra.mxu0 0.0
      %6971 = vmatprep.subr.mxu0 0.0
      %6972 = vmatpush1.msra.mxu0 0.0
      %6973 = vmatprep.subr.mxu0 0.0
      %6974 = vmatpush1.msra.mxu0 0.0
      %6975 = vmatprep.subr.mxu0 0.0
      %6976 = vmatpush1.msra.mxu0 0.0
      %6977 = vmatprep.subr.mxu0 0.0
      %6978 = vmatpush1.msra.mxu0 0.0
      %6979 = vmatprep.subr.mxu0 0.0
      %6980 = vmatpush1.msra.mxu0 0.0
      %6981 = vmatprep.subr.mxu0 0.0
      %6982 = vmatpush1.msra.mxu0 0.0
      %6983 = vmatprep.subr.mxu0 0.0
      %6984 = vmatpush1.msra.mxu0 0.0
      %6985 = vmatprep.subr.mxu0 0.0
      %6986 = vmatpush1.msra.mxu0 0.0
      %6987 = vmatprep.subr.mxu0 0.0
      %6988 = vmatpush1.msra.mxu0 0.0
      %6989 = vmatprep.subr.mxu0 0.0
      %6990 = vmatpush1.msra.mxu0 0.0
      %6991 = vmatprep.subr.mxu0 0.0
      %6992 = vmatpush1.msra.mxu0 0.0
      %6993 = vmatprep.subr.mxu0 0.0
      %6994 = vmatpush1.msra.mxu0 0.0
      %6995 = vmatprep.subr.mxu0 0.0
      %6996 = vmatpush1.msra.mxu0 0.0
      %6997 = vmatprep.subr.mxu0 0.0
      %6998 = vmatpush1.msra.mxu0 0.0
      %6999 = vmatprep.subr.mxu0 0.0
      %7000 = vmatpush1.msra.mxu0 0.0
      %7001 = vmatprep.subr.mxu0 0.0
      %7002 = vmatpush1.msra.mxu0 0.0
      %7003 = vmatprep.subr.mxu0 0.0
      %7004 = vmatpush1.msra.mxu0 0.0
      %7005 = vmatprep.subr.mxu0 0.0
      %7006 = vmatpush1.msra.mxu0 0.0
      %7007 = vmatprep.subr.mxu0 0.0
      %7008 = vmatpush1.msra.mxu0 0.0
      %7009 = vmatprep.subr.mxu0 0.0
      %7010 = vmatpush1.msra.mxu0 0.0
      %7011 = vmatprep.subr.mxu0 0.0
      %7012 = vmatpush1.msra.mxu0 0.0
      %7013 = vmatprep.subr.mxu0 0.0
      %7014 = vmatpush1.msra.mxu0 0.0
      %7015 = vmatprep.subr.mxu0 0.0
      %7016 = vmatpush1.msra.mxu0 0.0
      %7017 = vmatprep.subr.mxu0 0.0
      %7018 = vmatpush1.msra.mxu0 0.0
      %7019 = vmatprep.mubr.f32.mxu0 0.0
      %7020 = vmatmul.mubr.f32.gmra.mrb[0].mxu0 %v6950
      %v7021 = vpop.f32.mrb[0].mxu0
      %v7022 = vadd.f32 0.0, %v7021
      %v7023 = vpop.f32.mrb[0].mxu0
      %7024 = vmatprep.mubr.f32.mxu0 0.0
      %7025 = vmatmul.mubr.f32.gmra.mrb[0].mxu0 %v6953
      %v7026 = vpop.f32.mrb[0].mxu0
      %v7027 = vadd.f32 0.0, %v7026
      %v7028 = vpop.f32.mrb[0].mxu0
      %7029 = vdwg.mxu0
      %v7031 = vsel %vm1445, %v6874, 0
      %v7034 = vsel %vm1445, %v6875, 0
      %7036 = vmatprep.subr.mxu0 0.0
      %7037 = vmatpush1.msra.mxu0 %v6871
      %7038 = vmatprep.subr.mxu0 0.0
      %7039 = vmatpush1.msra.mxu0 0.0
      %7040 = vmatprep.subr.mxu0 0.0
      %7041 = vmatpush1.msra.mxu0 0.0
      %7042 = vmatprep.subr.mxu0 0.0
      %7043 = vmatpush1.msra.mxu0 0.0
      %7044 = vmatprep.subr.mxu0 0.0
      %7045 = vmatpush1.msra.mxu0 0.0
      %7046 = vmatprep.subr.mxu0 0.0
      %7047 = vmatpush1.msra.mxu0 0.0
      %7048 = vmatprep.subr.mxu0 0.0
      %7049 = vmatpush1.msra.mxu0 0.0
      %7050 = vmatprep.subr.mxu0 0.0
      %7051 = vmatpush1.msra.mxu0 0.0
      %7052 = vmatprep.subr.mxu0 0.0
      %7053 = vmatpush1.msra.mxu0 0.0
      %7054 = vmatprep.subr.mxu0 0.0
      %7055 = vmatpush1.msra.mxu0 0.0
      %7056 = vmatprep.subr.mxu0 0.0
      %7057 = vmatpush1.msra.mxu0 0.0
      %7058 = vmatprep.subr.mxu0 0.0
      %7059 = vmatpush1.msra.mxu0 0.0
      %7060 = vmatprep.subr.mxu0 0.0
      %7061 = vmatpush1.msra.mxu0 0.0
      %7062 = vmatprep.subr.mxu0 0.0
      %7063 = vmatpush1.msra.mxu0 0.0
      %7064 = vmatprep.subr.mxu0 0.0
      %7065 = vmatpush1.msra.mxu0 0.0
      %7066 = vmatprep.subr.mxu0 0.0
      %7067 = vmatpush1.msra.mxu0 0.0
      %7068 = vmatprep.subr.mxu0 0.0
      %7069 = vmatpush1.msra.mxu0 0.0
      %7070 = vmatprep.subr.mxu0 0.0
      %7071 = vmatpush1.msra.mxu0 0.0
      %7072 = vmatprep.subr.mxu0 0.0
      %7073 = vmatpush1.msra.mxu0 0.0
      %7074 = vmatprep.subr.mxu0 0.0
      %7075 = vmatpush1.msra.mxu0 0.0
      %7076 = vmatprep.subr.mxu0 0.0
      %7077 = vmatpush1.msra.mxu0 0.0
      %7078 = vmatprep.subr.mxu0 0.0
      %7079 = vmatpush1.msra.mxu0 0.0
      %7080 = vmatprep.subr.mxu0 0.0
      %7081 = vmatpush1.msra.mxu0 0.0
      %7082 = vmatprep.subr.mxu0 0.0
      %7083 = vmatpush1.msra.mxu0 0.0
      %7084 = vmatprep.subr.mxu0 0.0
      %7085 = vmatpush1.msra.mxu0 0.0
      %7086 = vmatprep.subr.mxu0 0.0
      %7087 = vmatpush1.msra.mxu0 0.0
      %7088 = vmatprep.subr.mxu0 0.0
      %7089 = vmatpush1.msra.mxu0 0.0
      %7090 = vmatprep.subr.mxu0 0.0
      %7091 = vmatpush1.msra.mxu0 0.0
      %7092 = vmatprep.subr.mxu0 0.0
      %7093 = vmatpush1.msra.mxu0 0.0
      %7094 = vmatprep.subr.mxu0 0.0
      %7095 = vmatpush1.msra.mxu0 0.0
      %7096 = vmatprep.subr.mxu0 0.0
      %7097 = vmatpush1.msra.mxu0 0.0
      %7098 = vmatprep.subr.mxu0 0.0
      %7099 = vmatpush1.msra.mxu0 0.0
      %7100 = vmatprep.mubr.f32.mxu0 0.0
      %7101 = vmatmul.mubr.f32.gmra.mrb[0].mxu0 %v7031
      %v7102 = vpop.f32.mrb[0].mxu0
      %v7103 = vadd.f32 %v7022, %v7102
      %v7104 = vpop.f32.mrb[0].mxu0
      %7105 = vmatprep.mubr.f32.mxu0 0.0
      %7106 = vmatmul.mubr.f32.gmra.mrb[0].mxu0 %v7034
      %v7107 = vpop.f32.mrb[0].mxu0
      %v7108 = vadd.f32 %v7027, %v7107
      %v7109 = vpop.f32.mrb[0].mxu0
      %7110 = vdwg.mxu0
      %7111 = vmatprep.subr.mxu0 0.0
      %7112 = vmatpush1.msra.mxu0 %v2659
      %7113 = vmatprep.subr.mxu0 0.0
      %7114 = vmatpush1.msra.mxu0 %v2660
      %7115 = vmatprep.subr.mxu0 0.0
      %7116 = vmatpush1.msra.mxu0 0.0
      %7117 = vmatprep.subr.mxu0 0.0
      %7118 = vmatpush1.msra.mxu0 0.0
      %7119 = vmatprep.subr.mxu0 0.0
      %7120 = vmatpush1.msra.mxu0 0.0
      %7121 = vmatprep.subr.mxu0 0.0
      %7122 = vmatpush1.msra.mxu0 0.0
      %7123 = vmatprep.subr.mxu0 0.0
      %7124 = vmatpush1.msra.mxu0 0.0
      %7125 = vmatprep.subr.mxu0 0.0
      %7126 = vmatpush1.msra.mxu0 0.0
      %7127 = vmatprep.subr.mxu0 0.0
      %7128 = vmatpush1.msra.mxu0 0.0
      %7129 = vmatprep.subr.mxu0 0.0
      %7130 = vmatpush1.msra.mxu0 0.0
      %7131 = vmatprep.subr.mxu0 0.0
      %7132 = vmatpush1.msra.mxu0 0.0
      %7133 = vmatprep.subr.mxu0 0.0
      %7134 = vmatpush1.msra.mxu0 0.0
      %7135 = vmatprep.subr.mxu0 0.0
      %7136 = vmatpush1.msra.mxu0 0.0
      %7137 = vmatprep.subr.mxu0 0.0
      %7138 = vmatpush1.msra.mxu0 0.0
      %7139 = vmatprep.subr.mxu0 0.0
      %7140 = vmatpush1.msra.mxu0 0.0
      %7141 = vmatprep.subr.mxu0 0.0
      %7142 = vmatpush1.msra.mxu0 0.0
      %7143 = vmatprep.subr.mxu0 0.0
      %7144 = vmatpush1.msra.mxu0 0.0
      %7145 = vmatprep.subr.mxu0 0.0
      %7146 = vmatpush1.msra.mxu0 0.0
      %7147 = vmatprep.subr.mxu0 0.0
      %7148 = vmatpush1.msra.mxu0 0.0
      %7149 = vmatprep.subr.mxu0 0.0
      %7150 = vmatpush1.msra.mxu0 0.0
      %7151 = vmatprep.subr.mxu0 0.0
      %7152 = vmatpush1.msra.mxu0 0.0
      %7153 = vmatprep.subr.mxu0 0.0
      %7154 = vmatpush1.msra.mxu0 0.0
      %7155 = vmatprep.subr.mxu0 0.0
      %7156 = vmatpush1.msra.mxu0 0.0
      %7157 = vmatprep.subr.mxu0 0.0
      %7158 = vmatpush1.msra.mxu0 0.0
      %7159 = vmatprep.subr.mxu0 0.0
      %7160 = vmatpush1.msra.mxu0 0.0
      %7161 = vmatprep.subr.mxu0 0.0
      %7162 = vmatpush1.msra.mxu0 0.0
      %7163 = vmatprep.subr.mxu0 0.0
      %7164 = vmatpush1.msra.mxu0 0.0
      %7165 = vmatprep.subr.mxu0 0.0
      %7166 = vmatpush1.msra.mxu0 0.0
      %7167 = vmatprep.subr.mxu0 0.0
      %7168 = vmatpush1.msra.mxu0 0.0
      %7169 = vmatprep.subr.mxu0 0.0
      %7170 = vmatpush1.msra.mxu0 0.0
      %7171 = vmatprep.subr.mxu0 0.0
      %7172 = vmatpush1.msra.mxu0 0.0
      %7173 = vmatprep.subr.mxu0 0.0
      %7174 = vmatpush1.msra.mxu0 0.0
      %7175 = vmatprep.mubr.f32.mxu0 0.0
      %7176 = vmatmul.mubr.f32.gmra.mrb[0].mxu0 %v6802
      %v7177 = vpop.f32.mrb[0].mxu0
      %v7178 = vadd.f32 0.0, %v7177
      %v7179 = vpop.f32.mrb[0].mxu0
      %7180 = vdwg.mxu0
      %s7181 = scalar_lea.vmem %s59, 32
      %v7182 = vld [vmem:[%s7181] sm:$0xff]
      %v7183 = vld [vmem:[%s7181 + $0x8] sm:$0xff]
      %v7185 = vsel %vm1445, %v7182, 0
      %v7188 = vsel %vm1445, %v7183, 0
      %7190 = vmatprep.subr.mxu0 0.0
      %7191 = vmatpush1.msra.mxu0 %v7178
      %7192 = vmatprep.subr.mxu0 0.0
      %7193 = vmatpush1.msra.mxu0 0.0
      %7194 = vmatprep.subr.mxu0 0.0
      %7195 = vmatpush1.msra.mxu0 0.0
      %7196 = vmatprep.subr.mxu0 0.0
      %7197 = vmatpush1.msra.mxu0 0.0
      %7198 = vmatprep.subr.mxu0 0.0
      %7199 = vmatpush1.msra.mxu0 0.0
      %7200 = vmatprep.subr.mxu0 0.0
      %7201 = vmatpush1.msra.mxu0 0.0
      %7202 = vmatprep.subr.mxu0 0.0
      %7203 = vmatpush1.msra.mxu0 0.0
      %7204 = vmatprep.subr.mxu0 0.0
      %7205 = vmatpush1.msra.mxu0 0.0
      %7206 = vmatprep.subr.mxu0 0.0
      %7207 = vmatpush1.msra.mxu0 0.0
      %7208 = vmatprep.subr.mxu0 0.0
      %7209 = vmatpush1.msra.mxu0 0.0
      %7210 = vmatprep.subr.mxu0 0.0
      %7211 = vmatpush1.msra.mxu0 0.0
      %7212 = vmatprep.subr.mxu0 0.0
      %7213 = vmatpush1.msra.mxu0 0.0
      %7214 = vmatprep.subr.mxu0 0.0
      %7215 = vmatpush1.msra.mxu0 0.0
      %7216 = vmatprep.subr.mxu0 0.0
      %7217 = vmatpush1.msra.mxu0 0.0
      %7218 = vmatprep.subr.mxu0 0.0
      %7219 = vmatpush1.msra.mxu0 0.0
      %7220 = vmatprep.subr.mxu0 0.0
      %7221 = vmatpush1.msra.mxu0 0.0
      %7222 = vmatprep.subr.mxu0 0.0
      %7223 = vmatpush1.msra.mxu0 0.0
      %7224 = vmatprep.subr.mxu0 0.0
      %7225 = vmatpush1.msra.mxu0 0.0
      %7226 = vmatprep.subr.mxu0 0.0
      %7227 = vmatpush1.msra.mxu0 0.0
      %7228 = vmatprep.subr.mxu0 0.0
      %7229 = vmatpush1.msra.mxu0 0.0
      %7230 = vmatprep.subr.mxu0 0.0
      %7231 = vmatpush1.msra.mxu0 0.0
      %7232 = vmatprep.subr.mxu0 0.0
      %7233 = vmatpush1.msra.mxu0 0.0
      %7234 = vmatprep.subr.mxu0 0.0
      %7235 = vmatpush1.msra.mxu0 0.0
      %7236 = vmatprep.subr.mxu0 0.0
      %7237 = vmatpush1.msra.mxu0 0.0
      %7238 = vmatprep.subr.mxu0 0.0
      %7239 = vmatpush1.msra.mxu0 0.0
      %7240 = vmatprep.subr.mxu0 0.0
      %7241 = vmatpush1.msra.mxu0 0.0
      %7242 = vmatprep.subr.mxu0 0.0
      %7243 = vmatpush1.msra.mxu0 0.0
      %7244 = vmatprep.subr.mxu0 0.0
      %7245 = vmatpush1.msra.mxu0 0.0
      %7246 = vmatprep.subr.mxu0 0.0
      %7247 = vmatpush1.msra.mxu0 0.0
      %7248 = vmatprep.subr.mxu0 0.0
      %7249 = vmatpush1.msra.mxu0 0.0
      %7250 = vmatprep.subr.mxu0 0.0
      %7251 = vmatpush1.msra.mxu0 0.0
      %7252 = vmatprep.subr.mxu0 0.0
      %7253 = vmatpush1.msra.mxu0 0.0
      %7254 = vmatprep.mubr.f32.mxu0 0.0
      %7255 = vmatmul.mubr.f32.gmra.mrb[0].mxu0 %v7185
      %v7256 = vpop.f32.mrb[0].mxu0
      %v7257 = vadd.f32 0.0, %v7256
      %v7258 = vpop.f32.mrb[0].mxu0
      %7259 = vmatprep.mubr.f32.mxu0 0.0
      %7260 = vmatmul.mubr.f32.gmra.mrb[0].mxu0 %v7188
      %v7261 = vpop.f32.mrb[0].mxu0
      %v7262 = vadd.f32 0.0, %v7261
      %v7263 = vpop.f32.mrb[0].mxu0
      %7264 = vdwg.mxu0
      %v7265 = vadd.f32 %v7103, %v7257
      %v7266 = vadd.f32 %v7108, %v7262
      %v7267 = vld [vmem:[%s61] sm:$0xff]
      %v7268 = vld [vmem:[%s61 + $0x8] sm:$0xff]
      %7270 = vset.pattern.permute.xlu0 0
      %7271 = vperm.xlu0 %7270, %v7267
      %v7272 = vpop.permute.xlu0 %7271
      %7275 = vset.pattern.permute.xlu0 0
      %7276 = vperm.xlu0 %7275, %v7268
      %v7277 = vpop.permute.xlu0 %7276
      %v7279 = vadd.f32 %v7265, %v7272
      %v7280 = vadd.f32 %v7266, %v7277
      %v7282 = vsel %vm1445, %v7279, 0
      %v7285 = vsel %vm1445, %v7280, 0
      %7287 = vmatprep.subr.mxu0 0.0
      %7288 = vmatpush1.msra.mxu0 %v1238
      %7289 = vmatprep.subr.mxu0 0.0
      %7290 = vmatpush1.msra.mxu0 0.0
      %7291 = vmatprep.subr.mxu0 0.0
      %7292 = vmatpush1.msra.mxu0 0.0
      %7293 = vmatprep.subr.mxu0 0.0
      %7294 = vmatpush1.msra.mxu0 0.0
      %7295 = vmatprep.subr.mxu0 0.0
      %7296 = vmatpush1.msra.mxu0 0.0
      %7297 = vmatprep.subr.mxu0 0.0
      %7298 = vmatpush1.msra.mxu0 0.0
      %7299 = vmatprep.subr.mxu0 0.0
      %7300 = vmatpush1.msra.mxu0 0.0
      %7301 = vmatprep.subr.mxu0 0.0
      %7302 = vmatpush1.msra.mxu0 0.0
      %7303 = vmatprep.subr.mxu0 0.0
      %7304 = vmatpush1.msra.mxu0 0.0
      %7305 = vmatprep.subr.mxu0 0.0
      %7306 = vmatpush1.msra.mxu0 0.0
      %7307 = vmatprep.subr.mxu0 0.0
      %7308 = vmatpush1.msra.mxu0 0.0
      %7309 = vmatprep.subr.mxu0 0.0
      %7310 = vmatpush1.msra.mxu0 0.0
      %7311 = vmatprep.subr.mxu0 0.0
      %7312 = vmatpush1.msra.mxu0 0.0
      %7313 = vmatprep.subr.mxu0 0.0
      %7314 = vmatpush1.msra.mxu0 0.0
      %7315 = vmatprep.subr.mxu0 0.0
      %7316 = vmatpush1.msra.mxu0 0.0
      %7317 = vmatprep.subr.mxu0 0.0
      %7318 = vmatpush1.msra.mxu0 0.0
      %7319 = vmatprep.subr.mxu0 0.0
      %7320 = vmatpush1.msra.mxu0 0.0
      %7321 = vmatprep.subr.mxu0 0.0
      %7322 = vmatpush1.msra.mxu0 0.0
      %7323 = vmatprep.subr.mxu0 0.0
      %7324 = vmatpush1.msra.mxu0 0.0
      %7325 = vmatprep.subr.mxu0 0.0
      %7326 = vmatpush1.msra.mxu0 0.0
      %7327 = vmatprep.subr.mxu0 0.0
      %7328 = vmatpush1.msra.mxu0 0.0
      %7329 = vmatprep.subr.mxu0 0.0
      %7330 = vmatpush1.msra.mxu0 0.0
      %7331 = vmatprep.subr.mxu0 0.0
      %7332 = vmatpush1.msra.mxu0 0.0
      %7333 = vmatprep.subr.mxu0 0.0
      %7334 = vmatpush1.msra.mxu0 0.0
      %7335 = vmatprep.subr.mxu0 0.0
      %7336 = vmatpush1.msra.mxu0 0.0
      %7337 = vmatprep.subr.mxu0 0.0
      %7338 = vmatpush1.msra.mxu0 0.0
      %7339 = vmatprep.subr.mxu0 0.0
      %7340 = vmatpush1.msra.mxu0 0.0
      %7341 = vmatprep.subr.mxu0 0.0
      %7342 = vmatpush1.msra.mxu0 0.0
      %7343 = vmatprep.subr.mxu0 0.0
      %7344 = vmatpush1.msra.mxu0 0.0
      %7345 = vmatprep.subr.mxu0 0.0
      %7346 = vmatpush1.msra.mxu0 0.0
      %7347 = vmatprep.subr.mxu0 0.0
      %7348 = vmatpush1.msra.mxu0 0.0
      %7349 = vmatprep.subr.mxu0 0.0
      %7350 = vmatpush1.msra.mxu0 0.0
      %7351 = vmatprep.mubr.f32.mxu0 0.0
      %7352 = vmatmul.mubr.f32.gmra.mrb[0].mxu0 %v7282
      %v7353 = vpop.f32.mrb[0].mxu0
      %v7354 = vadd.f32 0.0, %v7353
      %v7355 = vpop.f32.mrb[0].mxu0
      %7356 = vmatprep.mubr.f32.mxu0 0.0
      %7357 = vmatmul.mubr.f32.gmra.mrb[0].mxu0 %v7285
      %v7358 = vpop.f32.mrb[0].mxu0
      %v7359 = vadd.f32 0.0, %v7358
      %v7360 = vpop.f32.mrb[0].mxu0
      %7361 = vdwg.mxu0
      %v7362 = vld [vmem:[%s63] sm:$0xff]
      %v7363 = vld [vmem:[%s63 + $0x8] sm:$0xff]
      %7364 = vmatprep.subr.mxu0 0.0
      %7365 = vmatpush1.msra.mxu0 %v1357
      %7366 = vmatprep.subr.mxu0 0.0
      %7367 = vmatpush1.msra.mxu0 0.0
      %7368 = vmatprep.subr.mxu0 0.0
      %7369 = vmatpush1.msra.mxu0 0.0
      %7370 = vmatprep.subr.mxu0 0.0
      %7371 = vmatpush1.msra.mxu0 0.0
      %7372 = vmatprep.subr.mxu0 0.0
      %7373 = vmatpush1.msra.mxu0 0.0
      %7374 = vmatprep.subr.mxu0 0.0
      %7375 = vmatpush1.msra.mxu0 0.0
      %7376 = vmatprep.subr.mxu0 0.0
      %7377 = vmatpush1.msra.mxu0 0.0
      %7378 = vmatprep.subr.mxu0 0.0
      %7379 = vmatpush1.msra.mxu0 0.0
      %7380 = vmatprep.subr.mxu0 0.0
      %7381 = vmatpush1.msra.mxu0 0.0
      %7382 = vmatprep.subr.mxu0 0.0
      %7383 = vmatpush1.msra.mxu0 0.0
      %7384 = vmatprep.subr.mxu0 0.0
      %7385 = vmatpush1.msra.mxu0 0.0
      %7386 = vmatprep.subr.mxu0 0.0
      %7387 = vmatpush1.msra.mxu0 0.0
      %7388 = vmatprep.subr.mxu0 0.0
      %7389 = vmatpush1.msra.mxu0 0.0
      %7390 = vmatprep.subr.mxu0 0.0
      %7391 = vmatpush1.msra.mxu0 0.0
      %7392 = vmatprep.subr.mxu0 0.0
      %7393 = vmatpush1.msra.mxu0 0.0
      %7394 = vmatprep.subr.mxu0 0.0
      %7395 = vmatpush1.msra.mxu0 0.0
      %7396 = vmatprep.subr.mxu0 0.0
      %7397 = vmatpush1.msra.mxu0 0.0
      %7398 = vmatprep.subr.mxu0 0.0
      %7399 = vmatpush1.msra.mxu0 0.0
      %7400 = vmatprep.subr.mxu0 0.0
      %7401 = vmatpush1.msra.mxu0 0.0
      %7402 = vmatprep.subr.mxu0 0.0
      %7403 = vmatpush1.msra.mxu0 0.0
      %7404 = vmatprep.subr.mxu0 0.0
      %7405 = vmatpush1.msra.mxu0 0.0
      %7406 = vmatprep.subr.mxu0 0.0
      %7407 = vmatpush1.msra.mxu0 0.0
      %7408 = vmatprep.subr.mxu0 0.0
      %7409 = vmatpush1.msra.mxu0 0.0
      %7410 = vmatprep.subr.mxu0 0.0
      %7411 = vmatpush1.msra.mxu0 0.0
      %7412 = vmatprep.subr.mxu0 0.0
      %7413 = vmatpush1.msra.mxu0 0.0
      %7414 = vmatprep.subr.mxu0 0.0
      %7415 = vmatpush1.msra.mxu0 0.0
      %7416 = vmatprep.subr.mxu0 0.0
      %7417 = vmatpush1.msra.mxu0 0.0
      %7418 = vmatprep.subr.mxu0 0.0
      %7419 = vmatpush1.msra.mxu0 0.0
      %7420 = vmatprep.subr.mxu0 0.0
      %7421 = vmatpush1.msra.mxu0 0.0
      %7422 = vmatprep.subr.mxu0 0.0
      %7423 = vmatpush1.msra.mxu0 0.0
      %7424 = vmatprep.subr.mxu0 0.0
      %7425 = vmatpush1.msra.mxu0 0.0
      %7426 = vmatprep.subr.mxu0 0.0
      %7427 = vmatpush1.msra.mxu0 0.0
      %7428 = vmatprep.mubr.f32.mxu0 0.0
      %7429 = vmatmul.mubr.f32.gmra.mrb[0].mxu0 %v7282
      %v7430 = vpop.f32.mrb[0].mxu0
      %v7431 = vadd.f32 0.0, %v7430
      %v7432 = vpop.f32.mrb[0].mxu0
      %7433 = vmatprep.mubr.f32.mxu0 0.0
      %7434 = vmatmul.mubr.f32.gmra.mrb[0].mxu0 %v7285
      %v7435 = vpop.f32.mrb[0].mxu0
      %v7436 = vadd.f32 0.0, %v7435
      %v7437 = vpop.f32.mrb[0].mxu0
      %7438 = vdwg.mxu0
      %s7439 = scalar_lea.vmem %s63, 16
      %v7440 = vld [vmem:[%s7439] sm:$0xff]
      %v7441 = vld [vmem:[%s7439 + $0x8] sm:$0xff]
      %v7443 = vsel %vm5515, %v7440, 0
      %v7446 = vsel %vm5515, %v7441, 0
      %7448 = vmatprep.subr.mxu0 0.0
      %7449 = vmatpush1.msra.mxu0 %v7431
      %7450 = vmatprep.subr.mxu0 0.0
      %7451 = vmatpush1.msra.mxu0 %v7436
      %7452 = vmatprep.subr.mxu0 0.0
      %7453 = vmatpush1.msra.mxu0 0.0
      %7454 = vmatprep.subr.mxu0 0.0
      %7455 = vmatpush1.msra.mxu0 0.0
      %7456 = vmatprep.subr.mxu0 0.0
      %7457 = vmatpush1.msra.mxu0 0.0
      %7458 = vmatprep.subr.mxu0 0.0
      %7459 = vmatpush1.msra.mxu0 0.0
      %7460 = vmatprep.subr.mxu0 0.0
      %7461 = vmatpush1.msra.mxu0 0.0
      %7462 = vmatprep.subr.mxu0 0.0
      %7463 = vmatpush1.msra.mxu0 0.0
      %7464 = vmatprep.subr.mxu0 0.0
      %7465 = vmatpush1.msra.mxu0 0.0
      %7466 = vmatprep.subr.mxu0 0.0
      %7467 = vmatpush1.msra.mxu0 0.0
      %7468 = vmatprep.subr.mxu0 0.0
      %7469 = vmatpush1.msra.mxu0 0.0
      %7470 = vmatprep.subr.mxu0 0.0
      %7471 = vmatpush1.msra.mxu0 0.0
      %7472 = vmatprep.subr.mxu0 0.0
      %7473 = vmatpush1.msra.mxu0 0.0
      %7474 = vmatprep.subr.mxu0 0.0
      %7475 = vmatpush1.msra.mxu0 0.0
      %7476 = vmatprep.subr.mxu0 0.0
      %7477 = vmatpush1.msra.mxu0 0.0
      %7478 = vmatprep.subr.mxu0 0.0
      %7479 = vmatpush1.msra.mxu0 0.0
      %7480 = vmatprep.subr.mxu0 0.0
      %7481 = vmatpush1.msra.mxu0 0.0
      %7482 = vmatprep.subr.mxu0 0.0
      %7483 = vmatpush1.msra.mxu0 0.0
      %7484 = vmatprep.subr.mxu0 0.0
      %7485 = vmatpush1.msra.mxu0 0.0
      %7486 = vmatprep.subr.mxu0 0.0
      %7487 = vmatpush1.msra.mxu0 0.0
      %7488 = vmatprep.subr.mxu0 0.0
      %7489 = vmatpush1.msra.mxu0 0.0
      %7490 = vmatprep.subr.mxu0 0.0
      %7491 = vmatpush1.msra.mxu0 0.0
      %7492 = vmatprep.subr.mxu0 0.0
      %7493 = vmatpush1.msra.mxu0 0.0
      %7494 = vmatprep.subr.mxu0 0.0
      %7495 = vmatpush1.msra.mxu0 0.0
      %7496 = vmatprep.subr.mxu0 0.0
      %7497 = vmatpush1.msra.mxu0 0.0
      %7498 = vmatprep.subr.mxu0 0.0
      %7499 = vmatpush1.msra.mxu0 0.0
      %7500 = vmatprep.subr.mxu0 0.0
      %7501 = vmatpush1.msra.mxu0 0.0
      %7502 = vmatprep.subr.mxu0 0.0
      %7503 = vmatpush1.msra.mxu0 0.0
      %7504 = vmatprep.subr.mxu0 0.0
      %7505 = vmatpush1.msra.mxu0 0.0
      %7506 = vmatprep.subr.mxu0 0.0
      %7507 = vmatpush1.msra.mxu0 0.0
      %7508 = vmatprep.subr.mxu0 0.0
      %7509 = vmatpush1.msra.mxu0 0.0
      %7510 = vmatprep.subr.mxu0 0.0
      %7511 = vmatpush1.msra.mxu0 0.0
      %7512 = vmatprep.mubr.f32.mxu0 0.0
      %7513 = vmatmul.mubr.f32.gmra.mrb[0].mxu0 %v7443
      %v7514 = vpop.f32.mrb[0].mxu0
      %v7515 = vadd.f32 0.0, %v7514
      %v7516 = vpop.f32.mrb[0].mxu0
      %7517 = vmatprep.mubr.f32.mxu0 0.0
      %7518 = vmatmul.mubr.f32.gmra.mrb[0].mxu0 %v7446
      %v7519 = vpop.f32.mrb[0].mxu0
      %v7520 = vadd.f32 0.0, %v7519
      %v7521 = vpop.f32.mrb[0].mxu0
      %7522 = vdwg.mxu0
      %v7524 = vsel %vm5515, %v7362, 0
      %v7527 = vsel %vm5515, %v7363, 0
      %7529 = vmatprep.subr.mxu0 0.0
      %7530 = vmatpush1.msra.mxu0 %v7354
      %7531 = vmatprep.subr.mxu0 0.0
      %7532 = vmatpush1.msra.mxu0 %v7359
      %7533 = vmatprep.subr.mxu0 0.0
      %7534 = vmatpush1.msra.mxu0 0.0
      %7535 = vmatprep.subr.mxu0 0.0
      %7536 = vmatpush1.msra.mxu0 0.0
      %7537 = vmatprep.subr.mxu0 0.0
      %7538 = vmatpush1.msra.mxu0 0.0
      %7539 = vmatprep.subr.mxu0 0.0
      %7540 = vmatpush1.msra.mxu0 0.0
      %7541 = vmatprep.subr.mxu0 0.0
      %7542 = vmatpush1.msra.mxu0 0.0
      %7543 = vmatprep.subr.mxu0 0.0
      %7544 = vmatpush1.msra.mxu0 0.0
      %7545 = vmatprep.subr.mxu0 0.0
      %7546 = vmatpush1.msra.mxu0 0.0
      %7547 = vmatprep.subr.mxu0 0.0
      %7548 = vmatpush1.msra.mxu0 0.0
      %7549 = vmatprep.subr.mxu0 0.0
      %7550 = vmatpush1.msra.mxu0 0.0
      %7551 = vmatprep.subr.mxu0 0.0
      %7552 = vmatpush1.msra.mxu0 0.0
      %7553 = vmatprep.subr.mxu0 0.0
      %7554 = vmatpush1.msra.mxu0 0.0
      %7555 = vmatprep.subr.mxu0 0.0
      %7556 = vmatpush1.msra.mxu0 0.0
      %7557 = vmatprep.subr.mxu0 0.0
      %7558 = vmatpush1.msra.mxu0 0.0
      %7559 = vmatprep.subr.mxu0 0.0
      %7560 = vmatpush1.msra.mxu0 0.0
      %7561 = vmatprep.subr.mxu0 0.0
      %7562 = vmatpush1.msra.mxu0 0.0
      %7563 = vmatprep.subr.mxu0 0.0
      %7564 = vmatpush1.msra.mxu0 0.0
      %7565 = vmatprep.subr.mxu0 0.0
      %7566 = vmatpush1.msra.mxu0 0.0
      %7567 = vmatprep.subr.mxu0 0.0
      %7568 = vmatpush1.msra.mxu0 0.0
      %7569 = vmatprep.subr.mxu0 0.0
      %7570 = vmatpush1.msra.mxu0 0.0
      %7571 = vmatprep.subr.mxu0 0.0
      %7572 = vmatpush1.msra.mxu0 0.0
      %7573 = vmatprep.subr.mxu0 0.0
      %7574 = vmatpush1.msra.mxu0 0.0
      %7575 = vmatprep.subr.mxu0 0.0
      %7576 = vmatpush1.msra.mxu0 0.0
      %7577 = vmatprep.subr.mxu0 0.0
      %7578 = vmatpush1.msra.mxu0 0.0
      %7579 = vmatprep.subr.mxu0 0.0
      %7580 = vmatpush1.msra.mxu0 0.0
      %7581 = vmatprep.subr.mxu0 0.0
      %7582 = vmatpush1.msra.mxu0 0.0
      %7583 = vmatprep.subr.mxu0 0.0
      %7584 = vmatpush1.msra.mxu0 0.0
      %7585 = vmatprep.subr.mxu0 0.0
      %7586 = vmatpush1.msra.mxu0 0.0
      %7587 = vmatprep.subr.mxu0 0.0
      %7588 = vmatpush1.msra.mxu0 0.0
      %7589 = vmatprep.subr.mxu0 0.0
      %7590 = vmatpush1.msra.mxu0 0.0
      %7591 = vmatprep.subr.mxu0 0.0
      %7592 = vmatpush1.msra.mxu0 0.0
      %7593 = vmatprep.mubr.f32.mxu0 0.0
      %7594 = vmatmul.mubr.f32.gmra.mrb[0].mxu0 %v7524
      %v7595 = vpop.f32.mrb[0].mxu0
      %v7596 = vadd.f32 %v7515, %v7595
      %v7597 = vpop.f32.mrb[0].mxu0
      %7598 = vmatprep.mubr.f32.mxu0 0.0
      %7599 = vmatmul.mubr.f32.gmra.mrb[0].mxu0 %v7527
      %v7600 = vpop.f32.mrb[0].mxu0
      %v7601 = vadd.f32 %v7520, %v7600
      %v7602 = vpop.f32.mrb[0].mxu0
      %7603 = vdwg.mxu0
      %7604 = vmatprep.subr.mxu0 0.0
      %7605 = vmatpush1.msra.mxu0 %v1625
      %7606 = vmatprep.subr.mxu0 0.0
      %7607 = vmatpush1.msra.mxu0 0.0
      %7608 = vmatprep.subr.mxu0 0.0
      %7609 = vmatpush1.msra.mxu0 0.0
      %7610 = vmatprep.subr.mxu0 0.0
      %7611 = vmatpush1.msra.mxu0 0.0
      %7612 = vmatprep.subr.mxu0 0.0
      %7613 = vmatpush1.msra.mxu0 0.0
      %7614 = vmatprep.subr.mxu0 0.0
      %7615 = vmatpush1.msra.mxu0 0.0
      %7616 = vmatprep.subr.mxu0 0.0
      %7617 = vmatpush1.msra.mxu0 0.0
      %7618 = vmatprep.subr.mxu0 0.0
      %7619 = vmatpush1.msra.mxu0 0.0
      %7620 = vmatprep.subr.mxu0 0.0
      %7621 = vmatpush1.msra.mxu0 0.0
      %7622 = vmatprep.subr.mxu0 0.0
      %7623 = vmatpush1.msra.mxu0 0.0
      %7624 = vmatprep.subr.mxu0 0.0
      %7625 = vmatpush1.msra.mxu0 0.0
      %7626 = vmatprep.subr.mxu0 0.0
      %7627 = vmatpush1.msra.mxu0 0.0
      %7628 = vmatprep.subr.mxu0 0.0
      %7629 = vmatpush1.msra.mxu0 0.0
      %7630 = vmatprep.subr.mxu0 0.0
      %7631 = vmatpush1.msra.mxu0 0.0
      %7632 = vmatprep.subr.mxu0 0.0
      %7633 = vmatpush1.msra.mxu0 0.0
      %7634 = vmatprep.subr.mxu0 0.0
      %7635 = vmatpush1.msra.mxu0 0.0
      %7636 = vmatprep.subr.mxu0 0.0
      %7637 = vmatpush1.msra.mxu0 0.0
      %7638 = vmatprep.subr.mxu0 0.0
      %7639 = vmatpush1.msra.mxu0 0.0
      %7640 = vmatprep.subr.mxu0 0.0
      %7641 = vmatpush1.msra.mxu0 0.0
      %7642 = vmatprep.subr.mxu0 0.0
      %7643 = vmatpush1.msra.mxu0 0.0
      %7644 = vmatprep.subr.mxu0 0.0
      %7645 = vmatpush1.msra.mxu0 0.0
      %7646 = vmatprep.subr.mxu0 0.0
      %7647 = vmatpush1.msra.mxu0 0.0
      %7648 = vmatprep.subr.mxu0 0.0
      %7649 = vmatpush1.msra.mxu0 0.0
      %7650 = vmatprep.subr.mxu0 0.0
      %7651 = vmatpush1.msra.mxu0 0.0
      %7652 = vmatprep.subr.mxu0 0.0
      %7653 = vmatpush1.msra.mxu0 0.0
      %7654 = vmatprep.subr.mxu0 0.0
      %7655 = vmatpush1.msra.mxu0 0.0
      %7656 = vmatprep.subr.mxu0 0.0
      %7657 = vmatpush1.msra.mxu0 0.0
      %7658 = vmatprep.subr.mxu0 0.0
      %7659 = vmatpush1.msra.mxu0 0.0
      %7660 = vmatprep.subr.mxu0 0.0
      %7661 = vmatpush1.msra.mxu0 0.0
      %7662 = vmatprep.subr.mxu0 0.0
      %7663 = vmatpush1.msra.mxu0 0.0
      %7664 = vmatprep.subr.mxu0 0.0
      %7665 = vmatpush1.msra.mxu0 0.0
      %7666 = vmatprep.subr.mxu0 0.0
      %7667 = vmatpush1.msra.mxu0 0.0
      %7668 = vmatprep.mubr.f32.mxu0 0.0
      %7669 = vmatmul.mubr.f32.gmra.mrb[0].mxu0 %v7282
      %v7670 = vpop.f32.mrb[0].mxu0
      %v7671 = vadd.f32 0.0, %v7670
      %v7672 = vpop.f32.mrb[0].mxu0
      %7673 = vmatprep.mubr.f32.mxu0 0.0
      %7674 = vmatmul.mubr.f32.gmra.mrb[0].mxu0 %v7285
      %v7675 = vpop.f32.mrb[0].mxu0
      %v7676 = vadd.f32 0.0, %v7675
      %v7677 = vpop.f32.mrb[0].mxu0
      %7678 = vdwg.mxu0
      %s7679 = scalar_lea.vmem %s63, 32
      %v7680 = vld [vmem:[%s7679] sm:$0xff]
      %v7681 = vld [vmem:[%s7679 + $0x8] sm:$0xff]
      %v7683 = vsel %vm5515, %v7680, 0
      %v7686 = vsel %vm5515, %v7681, 0
      %7688 = vmatprep.subr.mxu0 0.0
      %7689 = vmatpush1.msra.mxu0 %v7671
      %7690 = vmatprep.subr.mxu0 0.0
      %7691 = vmatpush1.msra.mxu0 %v7676
      %7692 = vmatprep.subr.mxu0 0.0
      %7693 = vmatpush1.msra.mxu0 0.0
      %7694 = vmatprep.subr.mxu0 0.0
      %7695 = vmatpush1.msra.mxu0 0.0
      %7696 = vmatprep.subr.mxu0 0.0
      %7697 = vmatpush1.msra.mxu0 0.0
      %7698 = vmatprep.subr.mxu0 0.0
      %7699 = vmatpush1.msra.mxu0 0.0
      %7700 = vmatprep.subr.mxu0 0.0
      %7701 = vmatpush1.msra.mxu0 0.0
      %7702 = vmatprep.subr.mxu0 0.0
      %7703 = vmatpush1.msra.mxu0 0.0
      %7704 = vmatprep.subr.mxu0 0.0
      %7705 = vmatpush1.msra.mxu0 0.0
      %7706 = vmatprep.subr.mxu0 0.0
      %7707 = vmatpush1.msra.mxu0 0.0
      %7708 = vmatprep.subr.mxu0 0.0
      %7709 = vmatpush1.msra.mxu0 0.0
      %7710 = vmatprep.subr.mxu0 0.0
      %7711 = vmatpush1.msra.mxu0 0.0
      %7712 = vmatprep.subr.mxu0 0.0
      %7713 = vmatpush1.msra.mxu0 0.0
      %7714 = vmatprep.subr.mxu0 0.0
      %7715 = vmatpush1.msra.mxu0 0.0
      %7716 = vmatprep.subr.mxu0 0.0
      %7717 = vmatpush1.msra.mxu0 0.0
      %7718 = vmatprep.subr.mxu0 0.0
      %7719 = vmatpush1.msra.mxu0 0.0
      %7720 = vmatprep.subr.mxu0 0.0
      %7721 = vmatpush1.msra.mxu0 0.0
      %7722 = vmatprep.subr.mxu0 0.0
      %7723 = vmatpush1.msra.mxu0 0.0
      %7724 = vmatprep.subr.mxu0 0.0
      %7725 = vmatpush1.msra.mxu0 0.0
      %7726 = vmatprep.subr.mxu0 0.0
      %7727 = vmatpush1.msra.mxu0 0.0
      %7728 = vmatprep.subr.mxu0 0.0
      %7729 = vmatpush1.msra.mxu0 0.0
      %7730 = vmatprep.subr.mxu0 0.0
      %7731 = vmatpush1.msra.mxu0 0.0
      %7732 = vmatprep.subr.mxu0 0.0
      %7733 = vmatpush1.msra.mxu0 0.0
      %7734 = vmatprep.subr.mxu0 0.0
      %7735 = vmatpush1.msra.mxu0 0.0
      %7736 = vmatprep.subr.mxu0 0.0
      %7737 = vmatpush1.msra.mxu0 0.0
      %7738 = vmatprep.subr.mxu0 0.0
      %7739 = vmatpush1.msra.mxu0 0.0
      %7740 = vmatprep.subr.mxu0 0.0
      %7741 = vmatpush1.msra.mxu0 0.0
      %7742 = vmatprep.subr.mxu0 0.0
      %7743 = vmatpush1.msra.mxu0 0.0
      %7744 = vmatprep.subr.mxu0 0.0
      %7745 = vmatpush1.msra.mxu0 0.0
      %7746 = vmatprep.subr.mxu0 0.0
      %7747 = vmatpush1.msra.mxu0 0.0
      %7748 = vmatprep.subr.mxu0 0.0
      %7749 = vmatpush1.msra.mxu0 0.0
      %7750 = vmatprep.subr.mxu0 0.0
      %7751 = vmatpush1.msra.mxu0 0.0
      %7752 = vmatprep.mubr.f32.mxu0 0.0
      %7753 = vmatmul.mubr.f32.gmra.mrb[0].mxu0 %v7683
      %v7754 = vpop.f32.mrb[0].mxu0
      %v7755 = vadd.f32 0.0, %v7754
      %v7756 = vpop.f32.mrb[0].mxu0
      %7757 = vmatprep.mubr.f32.mxu0 0.0
      %7758 = vmatmul.mubr.f32.gmra.mrb[0].mxu0 %v7686
      %v7759 = vpop.f32.mrb[0].mxu0
      %v7760 = vadd.f32 0.0, %v7759
      %v7761 = vpop.f32.mrb[0].mxu0
      %7762 = vdwg.mxu0
      %v7763 = vadd.f32 %v7596, %v7755
      %v7764 = vadd.f32 %v7601, %v7760
      %v7765 = vld [vmem:[%s65] sm:$0xff]
      %v7766 = vld [vmem:[%s65 + $0x8] sm:$0xff]
      %7768 = vset.pattern.permute.xlu0 0
      %7769 = vperm.xlu0 %7768, %v7765
      %v7770 = vpop.permute.xlu0 %7769
      %7773 = vset.pattern.permute.xlu0 0
      %7774 = vperm.xlu0 %7773, %v7766
      %v7775 = vpop.permute.xlu0 %7774
      %v7777 = vadd.f32 %v7763, %v7770
      %v7778 = vadd.f32 %v7764, %v7775
      %v7779 = vmax.f32 %v7777, 0.0
      %v7780 = vmax.f32 %v7778, 0.0
      %v7782 = vsel %vm1445, %v7779, 0
      %v7785 = vsel %vm1445, %v7780, 0
      %7787 = vmatprep.subr.mxu0 0.0
      %7788 = vmatpush1.msra.mxu0 %v1238
      %7789 = vmatprep.subr.mxu0 0.0
      %7790 = vmatpush1.msra.mxu0 0.0
      %7791 = vmatprep.subr.mxu0 0.0
      %7792 = vmatpush1.msra.mxu0 0.0
      %7793 = vmatprep.subr.mxu0 0.0
      %7794 = vmatpush1.msra.mxu0 0.0
      %7795 = vmatprep.subr.mxu0 0.0
      %7796 = vmatpush1.msra.mxu0 0.0
      %7797 = vmatprep.subr.mxu0 0.0
      %7798 = vmatpush1.msra.mxu0 0.0
      %7799 = vmatprep.subr.mxu0 0.0
      %7800 = vmatpush1.msra.mxu0 0.0
      %7801 = vmatprep.subr.mxu0 0.0
      %7802 = vmatpush1.msra.mxu0 0.0
      %7803 = vmatprep.subr.mxu0 0.0
      %7804 = vmatpush1.msra.mxu0 0.0
      %7805 = vmatprep.subr.mxu0 0.0
      %7806 = vmatpush1.msra.mxu0 0.0
      %7807 = vmatprep.subr.mxu0 0.0
      %7808 = vmatpush1.msra.mxu0 0.0
      %7809 = vmatprep.subr.mxu0 0.0
      %7810 = vmatpush1.msra.mxu0 0.0
      %7811 = vmatprep.subr.mxu0 0.0
      %7812 = vmatpush1.msra.mxu0 0.0
      %7813 = vmatprep.subr.mxu0 0.0
      %7814 = vmatpush1.msra.mxu0 0.0
      %7815 = vmatprep.subr.mxu0 0.0
      %7816 = vmatpush1.msra.mxu0 0.0
      %7817 = vmatprep.subr.mxu0 0.0
      %7818 = vmatpush1.msra.mxu0 0.0
      %7819 = vmatprep.subr.mxu0 0.0
      %7820 = vmatpush1.msra.mxu0 0.0
      %7821 = vmatprep.subr.mxu0 0.0
      %7822 = vmatpush1.msra.mxu0 0.0
      %7823 = vmatprep.subr.mxu0 0.0
      %7824 = vmatpush1.msra.mxu0 0.0
      %7825 = vmatprep.subr.mxu0 0.0
      %7826 = vmatpush1.msra.mxu0 0.0
      %7827 = vmatprep.subr.mxu0 0.0
      %7828 = vmatpush1.msra.mxu0 0.0
      %7829 = vmatprep.subr.mxu0 0.0
      %7830 = vmatpush1.msra.mxu0 0.0
      %7831 = vmatprep.subr.mxu0 0.0
      %7832 = vmatpush1.msra.mxu0 0.0
      %7833 = vmatprep.subr.mxu0 0.0
      %7834 = vmatpush1.msra.mxu0 0.0
      %7835 = vmatprep.subr.mxu0 0.0
      %7836 = vmatpush1.msra.mxu0 0.0
      %7837 = vmatprep.subr.mxu0 0.0
      %7838 = vmatpush1.msra.mxu0 0.0
      %7839 = vmatprep.subr.mxu0 0.0
      %7840 = vmatpush1.msra.mxu0 0.0
      %7841 = vmatprep.subr.mxu0 0.0
      %7842 = vmatpush1.msra.mxu0 0.0
      %7843 = vmatprep.subr.mxu0 0.0
      %7844 = vmatpush1.msra.mxu0 0.0
      %7845 = vmatprep.subr.mxu0 0.0
      %7846 = vmatpush1.msra.mxu0 0.0
      %7847 = vmatprep.subr.mxu0 0.0
      %7848 = vmatpush1.msra.mxu0 0.0
      %7849 = vmatprep.subr.mxu0 0.0
      %7850 = vmatpush1.msra.mxu0 0.0
      %7851 = vmatprep.mubr.f32.mxu0 0.0
      %7852 = vmatmul.mubr.f32.gmra.mrb[0].mxu0 %v7782
      %v7853 = vpop.f32.mrb[0].mxu0
      %v7854 = vadd.f32 0.0, %v7853
      %v7855 = vpop.f32.mrb[0].mxu0
      %7856 = vmatprep.mubr.f32.mxu0 0.0
      %7857 = vmatmul.mubr.f32.gmra.mrb[0].mxu0 %v7785
      %v7858 = vpop.f32.mrb[0].mxu0
      %v7859 = vadd.f32 0.0, %v7858
      %v7860 = vpop.f32.mrb[0].mxu0
      %7861 = vdwg.mxu0
      %v7862 = vld [vmem:[%s67] sm:$0xff]
      %v7863 = vld [vmem:[%s67 + $0x8] sm:$0xff]
      %7864 = vmatprep.subr.mxu0 0.0
      %7865 = vmatpush1.msra.mxu0 %v1357
      %7866 = vmatprep.subr.mxu0 0.0
      %7867 = vmatpush1.msra.mxu0 0.0
      %7868 = vmatprep.subr.mxu0 0.0
      %7869 = vmatpush1.msra.mxu0 0.0
      %7870 = vmatprep.subr.mxu0 0.0
      %7871 = vmatpush1.msra.mxu0 0.0
      %7872 = vmatprep.subr.mxu0 0.0
      %7873 = vmatpush1.msra.mxu0 0.0
      %7874 = vmatprep.subr.mxu0 0.0
      %7875 = vmatpush1.msra.mxu0 0.0
      %7876 = vmatprep.subr.mxu0 0.0
      %7877 = vmatpush1.msra.mxu0 0.0
      %7878 = vmatprep.subr.mxu0 0.0
      %7879 = vmatpush1.msra.mxu0 0.0
      %7880 = vmatprep.subr.mxu0 0.0
      %7881 = vmatpush1.msra.mxu0 0.0
      %7882 = vmatprep.subr.mxu0 0.0
      %7883 = vmatpush1.msra.mxu0 0.0
      %7884 = vmatprep.subr.mxu0 0.0
      %7885 = vmatpush1.msra.mxu0 0.0
      %7886 = vmatprep.subr.mxu0 0.0
      %7887 = vmatpush1.msra.mxu0 0.0
      %7888 = vmatprep.subr.mxu0 0.0
      %7889 = vmatpush1.msra.mxu0 0.0
      %7890 = vmatprep.subr.mxu0 0.0
      %7891 = vmatpush1.msra.mxu0 0.0
      %7892 = vmatprep.subr.mxu0 0.0
      %7893 = vmatpush1.msra.mxu0 0.0
      %7894 = vmatprep.subr.mxu0 0.0
      %7895 = vmatpush1.msra.mxu0 0.0
      %7896 = vmatprep.subr.mxu0 0.0
      %7897 = vmatpush1.msra.mxu0 0.0
      %7898 = vmatprep.subr.mxu0 0.0
      %7899 = vmatpush1.msra.mxu0 0.0
      %7900 = vmatprep.subr.mxu0 0.0
      %7901 = vmatpush1.msra.mxu0 0.0
      %7902 = vmatprep.subr.mxu0 0.0
      %7903 = vmatpush1.msra.mxu0 0.0
      %7904 = vmatprep.subr.mxu0 0.0
      %7905 = vmatpush1.msra.mxu0 0.0
      %7906 = vmatprep.subr.mxu0 0.0
      %7907 = vmatpush1.msra.mxu0 0.0
      %7908 = vmatprep.subr.mxu0 0.0
      %7909 = vmatpush1.msra.mxu0 0.0
      %7910 = vmatprep.subr.mxu0 0.0
      %7911 = vmatpush1.msra.mxu0 0.0
      %7912 = vmatprep.subr.mxu0 0.0
      %7913 = vmatpush1.msra.mxu0 0.0
      %7914 = vmatprep.subr.mxu0 0.0
      %7915 = vmatpush1.msra.mxu0 0.0
      %7916 = vmatprep.subr.mxu0 0.0
      %7917 = vmatpush1.msra.mxu0 0.0
      %7918 = vmatprep.subr.mxu0 0.0
      %7919 = vmatpush1.msra.mxu0 0.0
      %7920 = vmatprep.subr.mxu0 0.0
      %7921 = vmatpush1.msra.mxu0 0.0
      %7922 = vmatprep.subr.mxu0 0.0
      %7923 = vmatpush1.msra.mxu0 0.0
      %7924 = vmatprep.subr.mxu0 0.0
      %7925 = vmatpush1.msra.mxu0 0.0
      %7926 = vmatprep.subr.mxu0 0.0
      %7927 = vmatpush1.msra.mxu0 0.0
      %7928 = vmatprep.mubr.f32.mxu0 0.0
      %7929 = vmatmul.mubr.f32.gmra.mrb[0].mxu0 %v7782
      %v7930 = vpop.f32.mrb[0].mxu0
      %v7931 = vadd.f32 0.0, %v7930
      %v7932 = vpop.f32.mrb[0].mxu0
      %7933 = vmatprep.mubr.f32.mxu0 0.0
      %7934 = vmatmul.mubr.f32.gmra.mrb[0].mxu0 %v7785
      %v7935 = vpop.f32.mrb[0].mxu0
      %v7936 = vadd.f32 0.0, %v7935
      %v7937 = vpop.f32.mrb[0].mxu0
      %7938 = vdwg.mxu0
      %s7939 = scalar_lea.vmem %s67, 16
      %v7940 = vld [vmem:[%s7939] sm:$0xff]
      %v7941 = vld [vmem:[%s7939 + $0x8] sm:$0xff]
      %v7943 = vsel %vm5515, %v7940, 0
      %v7946 = vsel %vm5515, %v7941, 0
      %7948 = vmatprep.subr.mxu0 0.0
      %7949 = vmatpush1.msra.mxu0 %v7931
      %7950 = vmatprep.subr.mxu0 0.0
      %7951 = vmatpush1.msra.mxu0 %v7936
      %7952 = vmatprep.subr.mxu0 0.0
      %7953 = vmatpush1.msra.mxu0 0.0
      %7954 = vmatprep.subr.mxu0 0.0
      %7955 = vmatpush1.msra.mxu0 0.0
      %7956 = vmatprep.subr.mxu0 0.0
      %7957 = vmatpush1.msra.mxu0 0.0
      %7958 = vmatprep.subr.mxu0 0.0
      %7959 = vmatpush1.msra.mxu0 0.0
      %7960 = vmatprep.subr.mxu0 0.0
      %7961 = vmatpush1.msra.mxu0 0.0
      %7962 = vmatprep.subr.mxu0 0.0
      %7963 = vmatpush1.msra.mxu0 0.0
      %7964 = vmatprep.subr.mxu0 0.0
      %7965 = vmatpush1.msra.mxu0 0.0
      %7966 = vmatprep.subr.mxu0 0.0
      %7967 = vmatpush1.msra.mxu0 0.0
      %7968 = vmatprep.subr.mxu0 0.0
      %7969 = vmatpush1.msra.mxu0 0.0
      %7970 = vmatprep.subr.mxu0 0.0
      %7971 = vmatpush1.msra.mxu0 0.0
      %7972 = vmatprep.subr.mxu0 0.0
      %7973 = vmatpush1.msra.mxu0 0.0
      %7974 = vmatprep.subr.mxu0 0.0
      %7975 = vmatpush1.msra.mxu0 0.0
      %7976 = vmatprep.subr.mxu0 0.0
      %7977 = vmatpush1.msra.mxu0 0.0
      %7978 = vmatprep.subr.mxu0 0.0
      %7979 = vmatpush1.msra.mxu0 0.0
      %7980 = vmatprep.subr.mxu0 0.0
      %7981 = vmatpush1.msra.mxu0 0.0
      %7982 = vmatprep.subr.mxu0 0.0
      %7983 = vmatpush1.msra.mxu0 0.0
      %7984 = vmatprep.subr.mxu0 0.0
      %7985 = vmatpush1.msra.mxu0 0.0
      %7986 = vmatprep.subr.mxu0 0.0
      %7987 = vmatpush1.msra.mxu0 0.0
      %7988 = vmatprep.subr.mxu0 0.0
      %7989 = vmatpush1.msra.mxu0 0.0
      %7990 = vmatprep.subr.mxu0 0.0
      %7991 = vmatpush1.msra.mxu0 0.0
      %7992 = vmatprep.subr.mxu0 0.0
      %7993 = vmatpush1.msra.mxu0 0.0
      %7994 = vmatprep.subr.mxu0 0.0
      %7995 = vmatpush1.msra.mxu0 0.0
      %7996 = vmatprep.subr.mxu0 0.0
      %7997 = vmatpush1.msra.mxu0 0.0
      %7998 = vmatprep.subr.mxu0 0.0
      %7999 = vmatpush1.msra.mxu0 0.0
      %8000 = vmatprep.subr.mxu0 0.0
      %8001 = vmatpush1.msra.mxu0 0.0
      %8002 = vmatprep.subr.mxu0 0.0
      %8003 = vmatpush1.msra.mxu0 0.0
      %8004 = vmatprep.subr.mxu0 0.0
      %8005 = vmatpush1.msra.mxu0 0.0
      %8006 = vmatprep.subr.mxu0 0.0
      %8007 = vmatpush1.msra.mxu0 0.0
      %8008 = vmatprep.subr.mxu0 0.0
      %8009 = vmatpush1.msra.mxu0 0.0
      %8010 = vmatprep.subr.mxu0 0.0
      %8011 = vmatpush1.msra.mxu0 0.0
      %8012 = vmatprep.mubr.f32.mxu0 0.0
      %8013 = vmatmul.mubr.f32.gmra.mrb[0].mxu0 %v7943
      %v8014 = vpop.f32.mrb[0].mxu0
      %v8015 = vadd.f32 0.0, %v8014
      %v8016 = vpop.f32.mrb[0].mxu0
      %8017 = vmatprep.mubr.f32.mxu0 0.0
      %8018 = vmatmul.mubr.f32.gmra.mrb[0].mxu0 %v7946
      %v8019 = vpop.f32.mrb[0].mxu0
      %v8020 = vadd.f32 0.0, %v8019
      %v8021 = vpop.f32.mrb[0].mxu0
      %8022 = vdwg.mxu0
      %v8024 = vsel %vm5515, %v7862, 0
      %v8027 = vsel %vm5515, %v7863, 0
      %8029 = vmatprep.subr.mxu0 0.0
      %8030 = vmatpush1.msra.mxu0 %v7854
      %8031 = vmatprep.subr.mxu0 0.0
      %8032 = vmatpush1.msra.mxu0 %v7859
      %8033 = vmatprep.subr.mxu0 0.0
      %8034 = vmatpush1.msra.mxu0 0.0
      %8035 = vmatprep.subr.mxu0 0.0
      %8036 = vmatpush1.msra.mxu0 0.0
      %8037 = vmatprep.subr.mxu0 0.0
      %8038 = vmatpush1.msra.mxu0 0.0
      %8039 = vmatprep.subr.mxu0 0.0
      %8040 = vmatpush1.msra.mxu0 0.0
      %8041 = vmatprep.subr.mxu0 0.0
      %8042 = vmatpush1.msra.mxu0 0.0
      %8043 = vmatprep.subr.mxu0 0.0
      %8044 = vmatpush1.msra.mxu0 0.0
      %8045 = vmatprep.subr.mxu0 0.0
      %8046 = vmatpush1.msra.mxu0 0.0
      %8047 = vmatprep.subr.mxu0 0.0
      %8048 = vmatpush1.msra.mxu0 0.0
      %8049 = vmatprep.subr.mxu0 0.0
      %8050 = vmatpush1.msra.mxu0 0.0
      %8051 = vmatprep.subr.mxu0 0.0
      %8052 = vmatpush1.msra.mxu0 0.0
      %8053 = vmatprep.subr.mxu0 0.0
      %8054 = vmatpush1.msra.mxu0 0.0
      %8055 = vmatprep.subr.mxu0 0.0
      %8056 = vmatpush1.msra.mxu0 0.0
      %8057 = vmatprep.subr.mxu0 0.0
      %8058 = vmatpush1.msra.mxu0 0.0
      %8059 = vmatprep.subr.mxu0 0.0
      %8060 = vmatpush1.msra.mxu0 0.0
      %8061 = vmatprep.subr.mxu0 0.0
      %8062 = vmatpush1.msra.mxu0 0.0
      %8063 = vmatprep.subr.mxu0 0.0
      %8064 = vmatpush1.msra.mxu0 0.0
      %8065 = vmatprep.subr.mxu0 0.0
      %8066 = vmatpush1.msra.mxu0 0.0
      %8067 = vmatprep.subr.mxu0 0.0
      %8068 = vmatpush1.msra.mxu0 0.0
      %8069 = vmatprep.subr.mxu0 0.0
      %8070 = vmatpush1.msra.mxu0 0.0
      %8071 = vmatprep.subr.mxu0 0.0
      %8072 = vmatpush1.msra.mxu0 0.0
      %8073 = vmatprep.subr.mxu0 0.0
      %8074 = vmatpush1.msra.mxu0 0.0
      %8075 = vmatprep.subr.mxu0 0.0
      %8076 = vmatpush1.msra.mxu0 0.0
      %8077 = vmatprep.subr.mxu0 0.0
      %8078 = vmatpush1.msra.mxu0 0.0
      %8079 = vmatprep.subr.mxu0 0.0
      %8080 = vmatpush1.msra.mxu0 0.0
      %8081 = vmatprep.subr.mxu0 0.0
      %8082 = vmatpush1.msra.mxu0 0.0
      %8083 = vmatprep.subr.mxu0 0.0
      %8084 = vmatpush1.msra.mxu0 0.0
      %8085 = vmatprep.subr.mxu0 0.0
      %8086 = vmatpush1.msra.mxu0 0.0
      %8087 = vmatprep.subr.mxu0 0.0
      %8088 = vmatpush1.msra.mxu0 0.0
      %8089 = vmatprep.subr.mxu0 0.0
      %8090 = vmatpush1.msra.mxu0 0.0
      %8091 = vmatprep.subr.mxu0 0.0
      %8092 = vmatpush1.msra.mxu0 0.0
      %8093 = vmatprep.mubr.f32.mxu0 0.0
      %8094 = vmatmul.mubr.f32.gmra.mrb[0].mxu0 %v8024
      %v8095 = vpop.f32.mrb[0].mxu0
      %v8096 = vadd.f32 %v8015, %v8095
      %v8097 = vpop.f32.mrb[0].mxu0
      %8098 = vmatprep.mubr.f32.mxu0 0.0
      %8099 = vmatmul.mubr.f32.gmra.mrb[0].mxu0 %v8027
      %v8100 = vpop.f32.mrb[0].mxu0
      %v8101 = vadd.f32 %v8020, %v8100
      %v8102 = vpop.f32.mrb[0].mxu0
      %8103 = vdwg.mxu0
      %8104 = vmatprep.subr.mxu0 0.0
      %8105 = vmatpush1.msra.mxu0 %v1625
      %8106 = vmatprep.subr.mxu0 0.0
      %8107 = vmatpush1.msra.mxu0 0.0
      %8108 = vmatprep.subr.mxu0 0.0
      %8109 = vmatpush1.msra.mxu0 0.0
      %8110 = vmatprep.subr.mxu0 0.0
      %8111 = vmatpush1.msra.mxu0 0.0
      %8112 = vmatprep.subr.mxu0 0.0
      %8113 = vmatpush1.msra.mxu0 0.0
      %8114 = vmatprep.subr.mxu0 0.0
      %8115 = vmatpush1.msra.mxu0 0.0
      %8116 = vmatprep.subr.mxu0 0.0
      %8117 = vmatpush1.msra.mxu0 0.0
      %8118 = vmatprep.subr.mxu0 0.0
      %8119 = vmatpush1.msra.mxu0 0.0
      %8120 = vmatprep.subr.mxu0 0.0
      %8121 = vmatpush1.msra.mxu0 0.0
      %8122 = vmatprep.subr.mxu0 0.0
      %8123 = vmatpush1.msra.mxu0 0.0
      %8124 = vmatprep.subr.mxu0 0.0
      %8125 = vmatpush1.msra.mxu0 0.0
      %8126 = vmatprep.subr.mxu0 0.0
      %8127 = vmatpush1.msra.mxu0 0.0
      %8128 = vmatprep.subr.mxu0 0.0
      %8129 = vmatpush1.msra.mxu0 0.0
      %8130 = vmatprep.subr.mxu0 0.0
      %8131 = vmatpush1.msra.mxu0 0.0
      %8132 = vmatprep.subr.mxu0 0.0
      %8133 = vmatpush1.msra.mxu0 0.0
      %8134 = vmatprep.subr.mxu0 0.0
      %8135 = vmatpush1.msra.mxu0 0.0
      %8136 = vmatprep.subr.mxu0 0.0
      %8137 = vmatpush1.msra.mxu0 0.0
      %8138 = vmatprep.subr.mxu0 0.0
      %8139 = vmatpush1.msra.mxu0 0.0
      %8140 = vmatprep.subr.mxu0 0.0
      %8141 = vmatpush1.msra.mxu0 0.0
      %8142 = vmatprep.subr.mxu0 0.0
      %8143 = vmatpush1.msra.mxu0 0.0
      %8144 = vmatprep.subr.mxu0 0.0
      %8145 = vmatpush1.msra.mxu0 0.0
      %8146 = vmatprep.subr.mxu0 0.0
      %8147 = vmatpush1.msra.mxu0 0.0
      %8148 = vmatprep.subr.mxu0 0.0
      %8149 = vmatpush1.msra.mxu0 0.0
      %8150 = vmatprep.subr.mxu0 0.0
      %8151 = vmatpush1.msra.mxu0 0.0
      %8152 = vmatprep.subr.mxu0 0.0
      %8153 = vmatpush1.msra.mxu0 0.0
      %8154 = vmatprep.subr.mxu0 0.0
      %8155 = vmatpush1.msra.mxu0 0.0
      %8156 = vmatprep.subr.mxu0 0.0
      %8157 = vmatpush1.msra.mxu0 0.0
      %8158 = vmatprep.subr.mxu0 0.0
      %8159 = vmatpush1.msra.mxu0 0.0
      %8160 = vmatprep.subr.mxu0 0.0
      %8161 = vmatpush1.msra.mxu0 0.0
      %8162 = vmatprep.subr.mxu0 0.0
      %8163 = vmatpush1.msra.mxu0 0.0
      %8164 = vmatprep.subr.mxu0 0.0
      %8165 = vmatpush1.msra.mxu0 0.0
      %8166 = vmatprep.subr.mxu0 0.0
      %8167 = vmatpush1.msra.mxu0 0.0
      %8168 = vmatprep.mubr.f32.mxu0 0.0
      %8169 = vmatmul.mubr.f32.gmra.mrb[0].mxu0 %v7782
      %v8170 = vpop.f32.mrb[0].mxu0
      %v8171 = vadd.f32 0.0, %v8170
      %v8172 = vpop.f32.mrb[0].mxu0
      %8173 = vmatprep.mubr.f32.mxu0 0.0
      %8174 = vmatmul.mubr.f32.gmra.mrb[0].mxu0 %v7785
      %v8175 = vpop.f32.mrb[0].mxu0
      %v8176 = vadd.f32 0.0, %v8175
      %v8177 = vpop.f32.mrb[0].mxu0
      %8178 = vdwg.mxu0
      %s8179 = scalar_lea.vmem %s67, 32
      %v8180 = vld [vmem:[%s8179] sm:$0xff]
      %v8181 = vld [vmem:[%s8179 + $0x8] sm:$0xff]
      %v8183 = vsel %vm5515, %v8180, 0
      %v8186 = vsel %vm5515, %v8181, 0
      %8188 = vmatprep.subr.mxu0 0.0
      %8189 = vmatpush1.msra.mxu0 %v8171
      %8190 = vmatprep.subr.mxu0 0.0
      %8191 = vmatpush1.msra.mxu0 %v8176
      %8192 = vmatprep.subr.mxu0 0.0
      %8193 = vmatpush1.msra.mxu0 0.0
      %8194 = vmatprep.subr.mxu0 0.0
      %8195 = vmatpush1.msra.mxu0 0.0
      %8196 = vmatprep.subr.mxu0 0.0
      %8197 = vmatpush1.msra.mxu0 0.0
      %8198 = vmatprep.subr.mxu0 0.0
      %8199 = vmatpush1.msra.mxu0 0.0
      %8200 = vmatprep.subr.mxu0 0.0
      %8201 = vmatpush1.msra.mxu0 0.0
      %8202 = vmatprep.subr.mxu0 0.0
      %8203 = vmatpush1.msra.mxu0 0.0
      %8204 = vmatprep.subr.mxu0 0.0
      %8205 = vmatpush1.msra.mxu0 0.0
      %8206 = vmatprep.subr.mxu0 0.0
      %8207 = vmatpush1.msra.mxu0 0.0
      %8208 = vmatprep.subr.mxu0 0.0
      %8209 = vmatpush1.msra.mxu0 0.0
      %8210 = vmatprep.subr.mxu0 0.0
      %8211 = vmatpush1.msra.mxu0 0.0
      %8212 = vmatprep.subr.mxu0 0.0
      %8213 = vmatpush1.msra.mxu0 0.0
      %8214 = vmatprep.subr.mxu0 0.0
      %8215 = vmatpush1.msra.mxu0 0.0
      %8216 = vmatprep.subr.mxu0 0.0
      %8217 = vmatpush1.msra.mxu0 0.0
      %8218 = vmatprep.subr.mxu0 0.0
      %8219 = vmatpush1.msra.mxu0 0.0
      %8220 = vmatprep.subr.mxu0 0.0
      %8221 = vmatpush1.msra.mxu0 0.0
      %8222 = vmatprep.subr.mxu0 0.0
      %8223 = vmatpush1.msra.mxu0 0.0
      %8224 = vmatprep.subr.mxu0 0.0
      %8225 = vmatpush1.msra.mxu0 0.0
      %8226 = vmatprep.subr.mxu0 0.0
      %8227 = vmatpush1.msra.mxu0 0.0
      %8228 = vmatprep.subr.mxu0 0.0
      %8229 = vmatpush1.msra.mxu0 0.0
      %8230 = vmatprep.subr.mxu0 0.0
      %8231 = vmatpush1.msra.mxu0 0.0
      %8232 = vmatprep.subr.mxu0 0.0
      %8233 = vmatpush1.msra.mxu0 0.0
      %8234 = vmatprep.subr.mxu0 0.0
      %8235 = vmatpush1.msra.mxu0 0.0
      %8236 = vmatprep.subr.mxu0 0.0
      %8237 = vmatpush1.msra.mxu0 0.0
      %8238 = vmatprep.subr.mxu0 0.0
      %8239 = vmatpush1.msra.mxu0 0.0
      %8240 = vmatprep.subr.mxu0 0.0
      %8241 = vmatpush1.msra.mxu0 0.0
      %8242 = vmatprep.subr.mxu0 0.0
      %8243 = vmatpush1.msra.mxu0 0.0
      %8244 = vmatprep.subr.mxu0 0.0
      %8245 = vmatpush1.msra.mxu0 0.0
      %8246 = vmatprep.subr.mxu0 0.0
      %8247 = vmatpush1.msra.mxu0 0.0
      %8248 = vmatprep.subr.mxu0 0.0
      %8249 = vmatpush1.msra.mxu0 0.0
      %8250 = vmatprep.subr.mxu0 0.0
      %8251 = vmatpush1.msra.mxu0 0.0
      %8252 = vmatprep.mubr.f32.mxu0 0.0
      %8253 = vmatmul.mubr.f32.gmra.mrb[0].mxu0 %v8183
      %v8254 = vpop.f32.mrb[0].mxu0
      %v8255 = vadd.f32 0.0, %v8254
      %v8256 = vpop.f32.mrb[0].mxu0
      %8257 = vmatprep.mubr.f32.mxu0 0.0
      %8258 = vmatmul.mubr.f32.gmra.mrb[0].mxu0 %v8186
      %v8259 = vpop.f32.mrb[0].mxu0
      %v8260 = vadd.f32 0.0, %v8259
      %v8261 = vpop.f32.mrb[0].mxu0
      %8262 = vdwg.mxu0
      %v8263 = vadd.f32 %v8096, %v8255
      %v8264 = vadd.f32 %v8101, %v8260
      %v8265 = vld [vmem:[%s69] sm:$0xff]
      %v8266 = vld [vmem:[%s69 + $0x8] sm:$0xff]
      %8268 = vset.pattern.permute.xlu0 0
      %8269 = vperm.xlu0 %8268, %v8265
      %v8270 = vpop.permute.xlu0 %8269
      %8273 = vset.pattern.permute.xlu0 0
      %8274 = vperm.xlu0 %8273, %v8266
      %v8275 = vpop.permute.xlu0 %8274
      %v8277 = vadd.f32 %v8263, %v8270
      %v8278 = vadd.f32 %v8264, %v8275
      %v8279 = vadd.f32 %v8277, %v7279
      %v8280 = vadd.f32 %v8278, %v7280
      %v8281 = vmax.f32 %v8279, 0.0
      %v8282 = vmax.f32 %v8280, 0.0
      %v8284 = vsel %vm1445, %v8281, 0
      %v8287 = vsel %vm1445, %v8282, 0
      %8289 = vmatprep.subr.mxu0 0.0
      %8290 = vmatpush1.msra.mxu0 %v2273
      %8291 = vmatprep.subr.mxu0 0.0
      %8292 = vmatpush1.msra.mxu0 0.0
      %8293 = vmatprep.subr.mxu0 0.0
      %8294 = vmatpush1.msra.mxu0 0.0
      %8295 = vmatprep.subr.mxu0 0.0
      %8296 = vmatpush1.msra.mxu0 0.0
      %8297 = vmatprep.subr.mxu0 0.0
      %8298 = vmatpush1.msra.mxu0 0.0
      %8299 = vmatprep.subr.mxu0 0.0
      %8300 = vmatpush1.msra.mxu0 0.0
      %8301 = vmatprep.subr.mxu0 0.0
      %8302 = vmatpush1.msra.mxu0 0.0
      %8303 = vmatprep.subr.mxu0 0.0
      %8304 = vmatpush1.msra.mxu0 0.0
      %8305 = vmatprep.subr.mxu0 0.0
      %8306 = vmatpush1.msra.mxu0 0.0
      %8307 = vmatprep.subr.mxu0 0.0
      %8308 = vmatpush1.msra.mxu0 0.0
      %8309 = vmatprep.subr.mxu0 0.0
      %8310 = vmatpush1.msra.mxu0 0.0
      %8311 = vmatprep.subr.mxu0 0.0
      %8312 = vmatpush1.msra.mxu0 0.0
      %8313 = vmatprep.subr.mxu0 0.0
      %8314 = vmatpush1.msra.mxu0 0.0
      %8315 = vmatprep.subr.mxu0 0.0
      %8316 = vmatpush1.msra.mxu0 0.0
      %8317 = vmatprep.subr.mxu0 0.0
      %8318 = vmatpush1.msra.mxu0 0.0
      %8319 = vmatprep.subr.mxu0 0.0
      %8320 = vmatpush1.msra.mxu0 0.0
      %8321 = vmatprep.subr.mxu0 0.0
      %8322 = vmatpush1.msra.mxu0 0.0
      %8323 = vmatprep.subr.mxu0 0.0
      %8324 = vmatpush1.msra.mxu0 0.0
      %8325 = vmatprep.subr.mxu0 0.0
      %8326 = vmatpush1.msra.mxu0 0.0
      %8327 = vmatprep.subr.mxu0 0.0
      %8328 = vmatpush1.msra.mxu0 0.0
      %8329 = vmatprep.subr.mxu0 0.0
      %8330 = vmatpush1.msra.mxu0 0.0
      %8331 = vmatprep.subr.mxu0 0.0
      %8332 = vmatpush1.msra.mxu0 0.0
      %8333 = vmatprep.subr.mxu0 0.0
      %8334 = vmatpush1.msra.mxu0 0.0
      %8335 = vmatprep.subr.mxu0 0.0
      %8336 = vmatpush1.msra.mxu0 0.0
      %8337 = vmatprep.subr.mxu0 0.0
      %8338 = vmatpush1.msra.mxu0 0.0
      %8339 = vmatprep.subr.mxu0 0.0
      %8340 = vmatpush1.msra.mxu0 0.0
      %8341 = vmatprep.subr.mxu0 0.0
      %8342 = vmatpush1.msra.mxu0 0.0
      %8343 = vmatprep.subr.mxu0 0.0
      %8344 = vmatpush1.msra.mxu0 0.0
      %8345 = vmatprep.subr.mxu0 0.0
      %8346 = vmatpush1.msra.mxu0 0.0
      %8347 = vmatprep.subr.mxu0 0.0
      %8348 = vmatpush1.msra.mxu0 0.0
      %8349 = vmatprep.subr.mxu0 0.0
      %8350 = vmatpush1.msra.mxu0 0.0
      %8351 = vmatprep.subr.mxu0 0.0
      %8352 = vmatpush1.msra.mxu0 0.0
      %8353 = vmatprep.mubr.f32.mxu0 0.0
      %8354 = vmatmul.mubr.f32.gmra.mrb[0].mxu0 %v8284
      %v8355 = vpop.f32.mrb[0].mxu0
      %v8356 = vadd.f32 0.0, %v8355
      %v8357 = vpop.f32.mrb[0].mxu0
      %8358 = vmatprep.mubr.f32.mxu0 0.0
      %8359 = vmatmul.mubr.f32.gmra.mrb[0].mxu0 %v8287
      %v8360 = vpop.f32.mrb[0].mxu0
      %v8361 = vadd.f32 0.0, %v8360
      %v8362 = vpop.f32.mrb[0].mxu0
      %8363 = vdwg.mxu0
      %v8364 = vld [vmem:[%s71] sm:$0xff]
      %v8365 = vld [vmem:[%s71 + $0x8] sm:$0xff]
      %v8366 = vld [vmem:[%s71 + $0x10] sm:$0xff]
      %v8367 = vld [vmem:[%s71 + $0x18] sm:$0xff]
      %8368 = vmatprep.subr.mxu0 0.0
      %8369 = vmatpush1.msra.mxu0 %v2392
      %8370 = vmatprep.subr.mxu0 0.0
      %8371 = vmatpush1.msra.mxu0 0.0
      %8372 = vmatprep.subr.mxu0 0.0
      %8373 = vmatpush1.msra.mxu0 0.0
      %8374 = vmatprep.subr.mxu0 0.0
      %8375 = vmatpush1.msra.mxu0 0.0
      %8376 = vmatprep.subr.mxu0 0.0
      %8377 = vmatpush1.msra.mxu0 0.0
      %8378 = vmatprep.subr.mxu0 0.0
      %8379 = vmatpush1.msra.mxu0 0.0
      %8380 = vmatprep.subr.mxu0 0.0
      %8381 = vmatpush1.msra.mxu0 0.0
      %8382 = vmatprep.subr.mxu0 0.0
      %8383 = vmatpush1.msra.mxu0 0.0
      %8384 = vmatprep.subr.mxu0 0.0
      %8385 = vmatpush1.msra.mxu0 0.0
      %8386 = vmatprep.subr.mxu0 0.0
      %8387 = vmatpush1.msra.mxu0 0.0
      %8388 = vmatprep.subr.mxu0 0.0
      %8389 = vmatpush1.msra.mxu0 0.0
      %8390 = vmatprep.subr.mxu0 0.0
      %8391 = vmatpush1.msra.mxu0 0.0
      %8392 = vmatprep.subr.mxu0 0.0
      %8393 = vmatpush1.msra.mxu0 0.0
      %8394 = vmatprep.subr.mxu0 0.0
      %8395 = vmatpush1.msra.mxu0 0.0
      %8396 = vmatprep.subr.mxu0 0.0
      %8397 = vmatpush1.msra.mxu0 0.0
      %8398 = vmatprep.subr.mxu0 0.0
      %8399 = vmatpush1.msra.mxu0 0.0
      %8400 = vmatprep.subr.mxu0 0.0
      %8401 = vmatpush1.msra.mxu0 0.0
      %8402 = vmatprep.subr.mxu0 0.0
      %8403 = vmatpush1.msra.mxu0 0.0
      %8404 = vmatprep.subr.mxu0 0.0
      %8405 = vmatpush1.msra.mxu0 0.0
      %8406 = vmatprep.subr.mxu0 0.0
      %8407 = vmatpush1.msra.mxu0 0.0
      %8408 = vmatprep.subr.mxu0 0.0
      %8409 = vmatpush1.msra.mxu0 0.0
      %8410 = vmatprep.subr.mxu0 0.0
      %8411 = vmatpush1.msra.mxu0 0.0
      %8412 = vmatprep.subr.mxu0 0.0
      %8413 = vmatpush1.msra.mxu0 0.0
      %8414 = vmatprep.subr.mxu0 0.0
      %8415 = vmatpush1.msra.mxu0 0.0
      %8416 = vmatprep.subr.mxu0 0.0
      %8417 = vmatpush1.msra.mxu0 0.0
      %8418 = vmatprep.subr.mxu0 0.0
      %8419 = vmatpush1.msra.mxu0 0.0
      %8420 = vmatprep.subr.mxu0 0.0
      %8421 = vmatpush1.msra.mxu0 0.0
      %8422 = vmatprep.subr.mxu0 0.0
      %8423 = vmatpush1.msra.mxu0 0.0
      %8424 = vmatprep.subr.mxu0 0.0
      %8425 = vmatpush1.msra.mxu0 0.0
      %8426 = vmatprep.subr.mxu0 0.0
      %8427 = vmatpush1.msra.mxu0 0.0
      %8428 = vmatprep.subr.mxu0 0.0
      %8429 = vmatpush1.msra.mxu0 0.0
      %8430 = vmatprep.subr.mxu0 0.0
      %8431 = vmatpush1.msra.mxu0 0.0
      %8432 = vmatprep.mubr.f32.mxu0 0.0
      %8433 = vmatmul.mubr.f32.gmra.mrb[0].mxu0 %v8284
      %v8434 = vpop.f32.mrb[0].mxu0
      %v8435 = vadd.f32 0.0, %v8434
      %v8436 = vpop.f32.mrb[0].mxu0
      %8437 = vmatprep.mubr.f32.mxu0 0.0
      %8438 = vmatmul.mubr.f32.gmra.mrb[0].mxu0 %v8287
      %v8439 = vpop.f32.mrb[0].mxu0
      %v8440 = vadd.f32 0.0, %v8439
      %v8441 = vpop.f32.mrb[0].mxu0
      %8442 = vdwg.mxu0
      %s8443 = scalar_lea.vmem %s71, 32
      %v8444 = vld [vmem:[%s8443] sm:$0xff]
      %v8445 = vld [vmem:[%s8443 + $0x8] sm:$0xff]
      %v8446 = vld [vmem:[%s8443 + $0x10] sm:$0xff]
      %v8447 = vld [vmem:[%s8443 + $0x18] sm:$0xff]
      %v8449 = vsel %vm5515, %v8444, 0
      %v8452 = vsel %vm5515, %v8445, 0
      %v8455 = vsel %vm5515, %v8446, 0
      %v8458 = vsel %vm5515, %v8447, 0
      %8460 = vmatprep.subr.mxu0 0.0
      %8461 = vmatpush1.msra.mxu0 %v8435
      %8462 = vmatprep.subr.mxu0 0.0
      %8463 = vmatpush1.msra.mxu0 %v8440
      %8464 = vmatprep.subr.mxu0 0.0
      %8465 = vmatpush1.msra.mxu0 0.0
      %8466 = vmatprep.subr.mxu0 0.0
      %8467 = vmatpush1.msra.mxu0 0.0
      %8468 = vmatprep.subr.mxu0 0.0
      %8469 = vmatpush1.msra.mxu0 0.0
      %8470 = vmatprep.subr.mxu0 0.0
      %8471 = vmatpush1.msra.mxu0 0.0
      %8472 = vmatprep.subr.mxu0 0.0
      %8473 = vmatpush1.msra.mxu0 0.0
      %8474 = vmatprep.subr.mxu0 0.0
      %8475 = vmatpush1.msra.mxu0 0.0
      %8476 = vmatprep.subr.mxu0 0.0
      %8477 = vmatpush1.msra.mxu0 0.0
      %8478 = vmatprep.subr.mxu0 0.0
      %8479 = vmatpush1.msra.mxu0 0.0
      %8480 = vmatprep.subr.mxu0 0.0
      %8481 = vmatpush1.msra.mxu0 0.0
      %8482 = vmatprep.subr.mxu0 0.0
      %8483 = vmatpush1.msra.mxu0 0.0
      %8484 = vmatprep.subr.mxu0 0.0
      %8485 = vmatpush1.msra.mxu0 0.0
      %8486 = vmatprep.subr.mxu0 0.0
      %8487 = vmatpush1.msra.mxu0 0.0
      %8488 = vmatprep.subr.mxu0 0.0
      %8489 = vmatpush1.msra.mxu0 0.0
      %8490 = vmatprep.subr.mxu0 0.0
      %8491 = vmatpush1.msra.mxu0 0.0
      %8492 = vmatprep.subr.mxu0 0.0
      %8493 = vmatpush1.msra.mxu0 0.0
      %8494 = vmatprep.subr.mxu0 0.0
      %8495 = vmatpush1.msra.mxu0 0.0
      %8496 = vmatprep.subr.mxu0 0.0
      %8497 = vmatpush1.msra.mxu0 0.0
      %8498 = vmatprep.subr.mxu0 0.0
      %8499 = vmatpush1.msra.mxu0 0.0
      %8500 = vmatprep.subr.mxu0 0.0
      %8501 = vmatpush1.msra.mxu0 0.0
      %8502 = vmatprep.subr.mxu0 0.0
      %8503 = vmatpush1.msra.mxu0 0.0
      %8504 = vmatprep.subr.mxu0 0.0
      %8505 = vmatpush1.msra.mxu0 0.0
      %8506 = vmatprep.subr.mxu0 0.0
      %8507 = vmatpush1.msra.mxu0 0.0
      %8508 = vmatprep.subr.mxu0 0.0
      %8509 = vmatpush1.msra.mxu0 0.0
      %8510 = vmatprep.subr.mxu0 0.0
      %8511 = vmatpush1.msra.mxu0 0.0
      %8512 = vmatprep.subr.mxu0 0.0
      %8513 = vmatpush1.msra.mxu0 0.0
      %8514 = vmatprep.subr.mxu0 0.0
      %8515 = vmatpush1.msra.mxu0 0.0
      %8516 = vmatprep.subr.mxu0 0.0
      %8517 = vmatpush1.msra.mxu0 0.0
      %8518 = vmatprep.subr.mxu0 0.0
      %8519 = vmatpush1.msra.mxu0 0.0
      %8520 = vmatprep.subr.mxu0 0.0
      %8521 = vmatpush1.msra.mxu0 0.0
      %8522 = vmatprep.subr.mxu0 0.0
      %8523 = vmatpush1.msra.mxu0 0.0
      %8524 = vmatprep.mubr.f32.mxu0 0.0
      %8525 = vmatmul.mubr.f32.gmra.mrb[0].mxu0 %v8449
      %v8526 = vpop.f32.mrb[0].mxu0
      %v8527 = vadd.f32 0.0, %v8526
      %v8528 = vpop.f32.mrb[0].mxu0
      %8529 = vmatprep.mubr.f32.mxu0 0.0
      %8530 = vmatmul.mubr.f32.gmra.mrb[0].mxu0 %v8452
      %v8531 = vpop.f32.mrb[0].mxu0
      %v8532 = vadd.f32 0.0, %v8531
      %v8533 = vpop.f32.mrb[0].mxu0
      %8534 = vmatprep.mubr.f32.mxu0 0.0
      %8535 = vmatmul.mubr.f32.gmra.mrb[0].mxu0 %v8455
      %v8536 = vpop.f32.mrb[0].mxu0
      %v8537 = vadd.f32 0.0, %v8536
      %v8538 = vpop.f32.mrb[0].mxu0
      %8539 = vmatprep.mubr.f32.mxu0 0.0
      %8540 = vmatmul.mubr.f32.gmra.mrb[0].mxu0 %v8458
      %v8541 = vpop.f32.mrb[0].mxu0
      %v8542 = vadd.f32 0.0, %v8541
      %v8543 = vpop.f32.mrb[0].mxu0
      %8544 = vdwg.mxu0
      %v8546 = vsel %vm5515, %v8364, 0
      %v8549 = vsel %vm5515, %v8365, 0
      %v8552 = vsel %vm5515, %v8366, 0
      %v8555 = vsel %vm5515, %v8367, 0
      %8557 = vmatprep.subr.mxu0 0.0
      %8558 = vmatpush1.msra.mxu0 %v8356
      %8559 = vmatprep.subr.mxu0 0.0
      %8560 = vmatpush1.msra.mxu0 %v8361
      %8561 = vmatprep.subr.mxu0 0.0
      %8562 = vmatpush1.msra.mxu0 0.0
      %8563 = vmatprep.subr.mxu0 0.0
      %8564 = vmatpush1.msra.mxu0 0.0
      %8565 = vmatprep.subr.mxu0 0.0
      %8566 = vmatpush1.msra.mxu0 0.0
      %8567 = vmatprep.subr.mxu0 0.0
      %8568 = vmatpush1.msra.mxu0 0.0
      %8569 = vmatprep.subr.mxu0 0.0
      %8570 = vmatpush1.msra.mxu0 0.0
      %8571 = vmatprep.subr.mxu0 0.0
      %8572 = vmatpush1.msra.mxu0 0.0
      %8573 = vmatprep.subr.mxu0 0.0
      %8574 = vmatpush1.msra.mxu0 0.0
      %8575 = vmatprep.subr.mxu0 0.0
      %8576 = vmatpush1.msra.mxu0 0.0
      %8577 = vmatprep.subr.mxu0 0.0
      %8578 = vmatpush1.msra.mxu0 0.0
      %8579 = vmatprep.subr.mxu0 0.0
      %8580 = vmatpush1.msra.mxu0 0.0
      %8581 = vmatprep.subr.mxu0 0.0
      %8582 = vmatpush1.msra.mxu0 0.0
      %8583 = vmatprep.subr.mxu0 0.0
      %8584 = vmatpush1.msra.mxu0 0.0
      %8585 = vmatprep.subr.mxu0 0.0
      %8586 = vmatpush1.msra.mxu0 0.0
      %8587 = vmatprep.subr.mxu0 0.0
      %8588 = vmatpush1.msra.mxu0 0.0
      %8589 = vmatprep.subr.mxu0 0.0
      %8590 = vmatpush1.msra.mxu0 0.0
      %8591 = vmatprep.subr.mxu0 0.0
      %8592 = vmatpush1.msra.mxu0 0.0
      %8593 = vmatprep.subr.mxu0 0.0
      %8594 = vmatpush1.msra.mxu0 0.0
      %8595 = vmatprep.subr.mxu0 0.0
      %8596 = vmatpush1.msra.mxu0 0.0
      %8597 = vmatprep.subr.mxu0 0.0
      %8598 = vmatpush1.msra.mxu0 0.0
      %8599 = vmatprep.subr.mxu0 0.0
      %8600 = vmatpush1.msra.mxu0 0.0
      %8601 = vmatprep.subr.mxu0 0.0
      %8602 = vmatpush1.msra.mxu0 0.0
      %8603 = vmatprep.subr.mxu0 0.0
      %8604 = vmatpush1.msra.mxu0 0.0
      %8605 = vmatprep.subr.mxu0 0.0
      %8606 = vmatpush1.msra.mxu0 0.0
      %8607 = vmatprep.subr.mxu0 0.0
      %8608 = vmatpush1.msra.mxu0 0.0
      %8609 = vmatprep.subr.mxu0 0.0
      %8610 = vmatpush1.msra.mxu0 0.0
      %8611 = vmatprep.subr.mxu0 0.0
      %8612 = vmatpush1.msra.mxu0 0.0
      %8613 = vmatprep.subr.mxu0 0.0
      %8614 = vmatpush1.msra.mxu0 0.0
      %8615 = vmatprep.subr.mxu0 0.0
      %8616 = vmatpush1.msra.mxu0 0.0
      %8617 = vmatprep.subr.mxu0 0.0
      %8618 = vmatpush1.msra.mxu0 0.0
      %8619 = vmatprep.subr.mxu0 0.0
      %8620 = vmatpush1.msra.mxu0 0.0
      %8621 = vmatprep.mubr.f32.mxu0 0.0
      %8622 = vmatmul.mubr.f32.gmra.mrb[0].mxu0 %v8546
      %v8623 = vpop.f32.mrb[0].mxu0
      %v8624 = vadd.f32 %v8527, %v8623
      %v8625 = vpop.f32.mrb[0].mxu0
      %8626 = vmatprep.mubr.f32.mxu0 0.0
      %8627 = vmatmul.mubr.f32.gmra.mrb[0].mxu0 %v8549
      %v8628 = vpop.f32.mrb[0].mxu0
      %v8629 = vadd.f32 %v8532, %v8628
      %v8630 = vpop.f32.mrb[0].mxu0
      %8631 = vmatprep.mubr.f32.mxu0 0.0
      %8632 = vmatmul.mubr.f32.gmra.mrb[0].mxu0 %v8552
      %v8633 = vpop.f32.mrb[0].mxu0
      %v8634 = vadd.f32 %v8537, %v8633
      %v8635 = vpop.f32.mrb[0].mxu0
      %8636 = vmatprep.mubr.f32.mxu0 0.0
      %8637 = vmatmul.mubr.f32.gmra.mrb[0].mxu0 %v8555
      %v8638 = vpop.f32.mrb[0].mxu0
      %v8639 = vadd.f32 %v8542, %v8638
      %v8640 = vpop.f32.mrb[0].mxu0
      %8641 = vdwg.mxu0
      %8642 = vmatprep.subr.mxu0 0.0
      %8643 = vmatpush1.msra.mxu0 %v2659
      %8644 = vmatprep.subr.mxu0 0.0
      %8645 = vmatpush1.msra.mxu0 0.0
      %8646 = vmatprep.subr.mxu0 0.0
      %8647 = vmatpush1.msra.mxu0 0.0
      %8648 = vmatprep.subr.mxu0 0.0
      %8649 = vmatpush1.msra.mxu0 0.0
      %8650 = vmatprep.subr.mxu0 0.0
      %8651 = vmatpush1.msra.mxu0 0.0
      %8652 = vmatprep.subr.mxu0 0.0
      %8653 = vmatpush1.msra.mxu0 0.0
      %8654 = vmatprep.subr.mxu0 0.0
      %8655 = vmatpush1.msra.mxu0 0.0
      %8656 = vmatprep.subr.mxu0 0.0
      %8657 = vmatpush1.msra.mxu0 0.0
      %8658 = vmatprep.subr.mxu0 0.0
      %8659 = vmatpush1.msra.mxu0 0.0
      %8660 = vmatprep.subr.mxu0 0.0
      %8661 = vmatpush1.msra.mxu0 0.0
      %8662 = vmatprep.subr.mxu0 0.0
      %8663 = vmatpush1.msra.mxu0 0.0
      %8664 = vmatprep.subr.mxu0 0.0
      %8665 = vmatpush1.msra.mxu0 0.0
      %8666 = vmatprep.subr.mxu0 0.0
      %8667 = vmatpush1.msra.mxu0 0.0
      %8668 = vmatprep.subr.mxu0 0.0
      %8669 = vmatpush1.msra.mxu0 0.0
      %8670 = vmatprep.subr.mxu0 0.0
      %8671 = vmatpush1.msra.mxu0 0.0
      %8672 = vmatprep.subr.mxu0 0.0
      %8673 = vmatpush1.msra.mxu0 0.0
      %8674 = vmatprep.subr.mxu0 0.0
      %8675 = vmatpush1.msra.mxu0 0.0
      %8676 = vmatprep.subr.mxu0 0.0
      %8677 = vmatpush1.msra.mxu0 0.0
      %8678 = vmatprep.subr.mxu0 0.0
      %8679 = vmatpush1.msra.mxu0 0.0
      %8680 = vmatprep.subr.mxu0 0.0
      %8681 = vmatpush1.msra.mxu0 0.0
      %8682 = vmatprep.subr.mxu0 0.0
      %8683 = vmatpush1.msra.mxu0 0.0
      %8684 = vmatprep.subr.mxu0 0.0
      %8685 = vmatpush1.msra.mxu0 0.0
      %8686 = vmatprep.subr.mxu0 0.0
      %8687 = vmatpush1.msra.mxu0 0.0
      %8688 = vmatprep.subr.mxu0 0.0
      %8689 = vmatpush1.msra.mxu0 0.0
      %8690 = vmatprep.subr.mxu0 0.0
      %8691 = vmatpush1.msra.mxu0 0.0
      %8692 = vmatprep.subr.mxu0 0.0
      %8693 = vmatpush1.msra.mxu0 0.0
      %8694 = vmatprep.subr.mxu0 0.0
      %8695 = vmatpush1.msra.mxu0 0.0
      %8696 = vmatprep.subr.mxu0 0.0
      %8697 = vmatpush1.msra.mxu0 0.0
      %8698 = vmatprep.subr.mxu0 0.0
      %8699 = vmatpush1.msra.mxu0 0.0
      %8700 = vmatprep.subr.mxu0 0.0
      %8701 = vmatpush1.msra.mxu0 0.0
      %8702 = vmatprep.subr.mxu0 0.0
      %8703 = vmatpush1.msra.mxu0 0.0
      %8704 = vmatprep.subr.mxu0 0.0
      %8705 = vmatpush1.msra.mxu0 0.0
      %8706 = vmatprep.mubr.f32.mxu0 0.0
      %8707 = vmatmul.mubr.f32.gmra.mrb[0].mxu0 %v8284
      %v8708 = vpop.f32.mrb[0].mxu0
      %v8709 = vadd.f32 0.0, %v8708
      %v8710 = vpop.f32.mrb[0].mxu0
      %8711 = vmatprep.mubr.f32.mxu0 0.0
      %8712 = vmatmul.mubr.f32.gmra.mrb[0].mxu0 %v8287
      %v8713 = vpop.f32.mrb[0].mxu0
      %v8714 = vadd.f32 0.0, %v8713
      %v8715 = vpop.f32.mrb[0].mxu0
      %8716 = vdwg.mxu0
      %s8717 = scalar_lea.vmem %s71, 64
      %v8718 = vld [vmem:[%s8717] sm:$0xff]
      %v8719 = vld [vmem:[%s8717 + $0x8] sm:$0xff]
      %v8720 = vld [vmem:[%s8717 + $0x10] sm:$0xff]
      %v8721 = vld [vmem:[%s8717 + $0x18] sm:$0xff]
      %v8723 = vsel %vm5515, %v8718, 0
      %v8726 = vsel %vm5515, %v8719, 0
      %v8729 = vsel %vm5515, %v8720, 0
      %v8732 = vsel %vm5515, %v8721, 0
      %8734 = vmatprep.subr.mxu0 0.0
      %8735 = vmatpush1.msra.mxu0 %v8709
      %8736 = vmatprep.subr.mxu0 0.0
      %8737 = vmatpush1.msra.mxu0 %v8714
      %8738 = vmatprep.subr.mxu0 0.0
      %8739 = vmatpush1.msra.mxu0 0.0
      %8740 = vmatprep.subr.mxu0 0.0
      %8741 = vmatpush1.msra.mxu0 0.0
      %8742 = vmatprep.subr.mxu0 0.0
      %8743 = vmatpush1.msra.mxu0 0.0
      %8744 = vmatprep.subr.mxu0 0.0
      %8745 = vmatpush1.msra.mxu0 0.0
      %8746 = vmatprep.subr.mxu0 0.0
      %8747 = vmatpush1.msra.mxu0 0.0
      %8748 = vmatprep.subr.mxu0 0.0
      %8749 = vmatpush1.msra.mxu0 0.0
      %8750 = vmatprep.subr.mxu0 0.0
      %8751 = vmatpush1.msra.mxu0 0.0
      %8752 = vmatprep.subr.mxu0 0.0
      %8753 = vmatpush1.msra.mxu0 0.0
      %8754 = vmatprep.subr.mxu0 0.0
      %8755 = vmatpush1.msra.mxu0 0.0
      %8756 = vmatprep.subr.mxu0 0.0
      %8757 = vmatpush1.msra.mxu0 0.0
      %8758 = vmatprep.subr.mxu0 0.0
      %8759 = vmatpush1.msra.mxu0 0.0
      %8760 = vmatprep.subr.mxu0 0.0
      %8761 = vmatpush1.msra.mxu0 0.0
      %8762 = vmatprep.subr.mxu0 0.0
      %8763 = vmatpush1.msra.mxu0 0.0
      %8764 = vmatprep.subr.mxu0 0.0
      %8765 = vmatpush1.msra.mxu0 0.0
      %8766 = vmatprep.subr.mxu0 0.0
      %8767 = vmatpush1.msra.mxu0 0.0
      %8768 = vmatprep.subr.mxu0 0.0
      %8769 = vmatpush1.msra.mxu0 0.0
      %8770 = vmatprep.subr.mxu0 0.0
      %8771 = vmatpush1.msra.mxu0 0.0
      %8772 = vmatprep.subr.mxu0 0.0
      %8773 = vmatpush1.msra.mxu0 0.0
      %8774 = vmatprep.subr.mxu0 0.0
      %8775 = vmatpush1.msra.mxu0 0.0
      %8776 = vmatprep.subr.mxu0 0.0
      %8777 = vmatpush1.msra.mxu0 0.0
      %8778 = vmatprep.subr.mxu0 0.0
      %8779 = vmatpush1.msra.mxu0 0.0
      %8780 = vmatprep.subr.mxu0 0.0
      %8781 = vmatpush1.msra.mxu0 0.0
      %8782 = vmatprep.subr.mxu0 0.0
      %8783 = vmatpush1.msra.mxu0 0.0
      %8784 = vmatprep.subr.mxu0 0.0
      %8785 = vmatpush1.msra.mxu0 0.0
      %8786 = vmatprep.subr.mxu0 0.0
      %8787 = vmatpush1.msra.mxu0 0.0
      %8788 = vmatprep.subr.mxu0 0.0
      %8789 = vmatpush1.msra.mxu0 0.0
      %8790 = vmatprep.subr.mxu0 0.0
      %8791 = vmatpush1.msra.mxu0 0.0
      %8792 = vmatprep.subr.mxu0 0.0
      %8793 = vmatpush1.msra.mxu0 0.0
      %8794 = vmatprep.subr.mxu0 0.0
      %8795 = vmatpush1.msra.mxu0 0.0
      %8796 = vmatprep.subr.mxu0 0.0
      %8797 = vmatpush1.msra.mxu0 0.0
      %8798 = vmatprep.mubr.f32.mxu0 0.0
      %8799 = vmatmul.mubr.f32.gmra.mrb[0].mxu0 %v8723
      %v8800 = vpop.f32.mrb[0].mxu0
      %v8801 = vadd.f32 0.0, %v8800
      %v8802 = vpop.f32.mrb[0].mxu0
      %8803 = vmatprep.mubr.f32.mxu0 0.0
      %8804 = vmatmul.mubr.f32.gmra.mrb[0].mxu0 %v8726
      %v8805 = vpop.f32.mrb[0].mxu0
      %v8806 = vadd.f32 0.0, %v8805
      %v8807 = vpop.f32.mrb[0].mxu0
      %8808 = vmatprep.mubr.f32.mxu0 0.0
      %8809 = vmatmul.mubr.f32.gmra.mrb[0].mxu0 %v8729
      %v8810 = vpop.f32.mrb[0].mxu0
      %v8811 = vadd.f32 0.0, %v8810
      %v8812 = vpop.f32.mrb[0].mxu0
      %8813 = vmatprep.mubr.f32.mxu0 0.0
      %8814 = vmatmul.mubr.f32.gmra.mrb[0].mxu0 %v8732
      %v8815 = vpop.f32.mrb[0].mxu0
      %v8816 = vadd.f32 0.0, %v8815
      %v8817 = vpop.f32.mrb[0].mxu0
      %8818 = vdwg.mxu0
      %v8819 = vadd.f32 %v8624, %v8801
      %v8820 = vadd.f32 %v8629, %v8806
      %v8821 = vadd.f32 %v8634, %v8811
      %v8822 = vadd.f32 %v8639, %v8816
      %v8823 = vld [vmem:[%s73] sm:$0xff]
      %v8824 = vld [vmem:[%s73 + $0x8] sm:$0xff]
      %v8825 = vld [vmem:[%s73 + $0x10] sm:$0xff]
      %v8826 = vld [vmem:[%s73 + $0x18] sm:$0xff]
      %8828 = vset.pattern.permute.xlu0 0
      %8829 = vperm.xlu0 %8828, %v8823
      %v8830 = vpop.permute.xlu0 %8829
      %8833 = vset.pattern.permute.xlu0 0
      %8834 = vperm.xlu0 %8833, %v8824
      %v8835 = vpop.permute.xlu0 %8834
      %8838 = vset.pattern.permute.xlu0 0
      %8839 = vperm.xlu0 %8838, %v8825
      %v8840 = vpop.permute.xlu0 %8839
      %8843 = vset.pattern.permute.xlu0 0
      %8844 = vperm.xlu0 %8843, %v8826
      %v8845 = vpop.permute.xlu0 %8844
      %v8847 = vadd.f32 %v8819, %v8830
      %v8848 = vadd.f32 %v8820, %v8835
      %v8849 = vadd.f32 %v8821, %v8840
      %v8850 = vadd.f32 %v8822, %v8845
      %v8851 = vld [vmem:[%s75] sm:$0xff]
      %v8852 = vld [vmem:[%s75 + $0x8] sm:$0xff]
      %v8853 = vld [vmem:[%s75 + $0x10] sm:$0xff]
      %v8854 = vld [vmem:[%s75 + $0x18] sm:$0xff]
      %v8855 = vld [vmem:[%s75 + $0x20] sm:$0xff]
      %v8856 = vld [vmem:[%s75 + $0x28] sm:$0xff]
      %v8857 = vld [vmem:[%s75 + $0x30] sm:$0xff]
      %v8858 = vld [vmem:[%s75 + $0x38] sm:$0xff]
      %v8859 = vld [vmem:[%s75 + $0x40] sm:$0xff]
      %v8860 = vld [vmem:[%s75 + $0x48] sm:$0xff]
      %v8861 = vld [vmem:[%s75 + $0x50] sm:$0xff]
      %v8862 = vld [vmem:[%s75 + $0x58] sm:$0xff]
      %v8863 = vld [vmem:[%s75 + $0x60] sm:$0xff]
      %v8864 = vld [vmem:[%s75 + $0x68] sm:$0xff]
      %v8865 = vld [vmem:[%s75 + $0x70] sm:$0xff]
      %v8866 = vld [vmem:[%s75 + $0x78] sm:$0xff]
      %v8868 = vsel %vm4167, %v8851, 0
      %v8871 = vsel %vm4167, %v8852, 0
      %v8874 = vsel %vm4167, %v8853, 0
      %v8877 = vsel %vm4167, %v8854, 0
      %v8880 = vsel %vm4167, %v8855, 0
      %v8883 = vsel %vm4167, %v8856, 0
      %v8886 = vsel %vm4167, %v8857, 0
      %v8889 = vsel %vm4167, %v8858, 0
      %v8892 = vsel %vm4167, %v8859, 0
      %v8895 = vsel %vm4167, %v8860, 0
      %v8898 = vsel %vm4167, %v8861, 0
      %v8901 = vsel %vm4167, %v8862, 0
      %v8904 = vsel %vm4167, %v8863, 0
      %v8907 = vsel %vm4167, %v8864, 0
      %v8910 = vsel %vm4167, %v8865, 0
      %v8913 = vsel %vm4167, %v8866, 0
      %8915 = vmatprep.subr.mxu0 0.0
      %8916 = vmatpush1.msra.mxu0 %v8847
      %8917 = vmatprep.subr.mxu0 0.0
      %8918 = vmatpush1.msra.mxu0 %v8848
      %8919 = vmatprep.subr.mxu0 0.0
      %8920 = vmatpush1.msra.mxu0 %v8849
      %8921 = vmatprep.subr.mxu0 0.0
      %8922 = vmatpush1.msra.mxu0 %v8850
      %8923 = vmatprep.subr.mxu0 0.0
      %8924 = vmatpush1.msra.mxu0 0.0
      %8925 = vmatprep.subr.mxu0 0.0
      %8926 = vmatpush1.msra.mxu0 0.0
      %8927 = vmatprep.subr.mxu0 0.0
      %8928 = vmatpush1.msra.mxu0 0.0
      %8929 = vmatprep.subr.mxu0 0.0
      %8930 = vmatpush1.msra.mxu0 0.0
      %8931 = vmatprep.subr.mxu0 0.0
      %8932 = vmatpush1.msra.mxu0 0.0
      %8933 = vmatprep.subr.mxu0 0.0
      %8934 = vmatpush1.msra.mxu0 0.0
      %8935 = vmatprep.subr.mxu0 0.0
      %8936 = vmatpush1.msra.mxu0 0.0
      %8937 = vmatprep.subr.mxu0 0.0
      %8938 = vmatpush1.msra.mxu0 0.0
      %8939 = vmatprep.subr.mxu0 0.0
      %8940 = vmatpush1.msra.mxu0 0.0
      %8941 = vmatprep.subr.mxu0 0.0
      %8942 = vmatpush1.msra.mxu0 0.0
      %8943 = vmatprep.subr.mxu0 0.0
      %8944 = vmatpush1.msra.mxu0 0.0
      %8945 = vmatprep.subr.mxu0 0.0
      %8946 = vmatpush1.msra.mxu0 0.0
      %8947 = vmatprep.subr.mxu0 0.0
      %8948 = vmatpush1.msra.mxu0 0.0
      %8949 = vmatprep.subr.mxu0 0.0
      %8950 = vmatpush1.msra.mxu0 0.0
      %8951 = vmatprep.subr.mxu0 0.0
      %8952 = vmatpush1.msra.mxu0 0.0
      %8953 = vmatprep.subr.mxu0 0.0
      %8954 = vmatpush1.msra.mxu0 0.0
      %8955 = vmatprep.subr.mxu0 0.0
      %8956 = vmatpush1.msra.mxu0 0.0
      %8957 = vmatprep.subr.mxu0 0.0
      %8958 = vmatpush1.msra.mxu0 0.0
      %8959 = vmatprep.subr.mxu0 0.0
      %8960 = vmatpush1.msra.mxu0 0.0
      %8961 = vmatprep.subr.mxu0 0.0
      %8962 = vmatpush1.msra.mxu0 0.0
      %8963 = vmatprep.subr.mxu0 0.0
      %8964 = vmatpush1.msra.mxu0 0.0
      %8965 = vmatprep.subr.mxu0 0.0
      %8966 = vmatpush1.msra.mxu0 0.0
      %8967 = vmatprep.subr.mxu0 0.0
      %8968 = vmatpush1.msra.mxu0 0.0
      %8969 = vmatprep.subr.mxu0 0.0
      %8970 = vmatpush1.msra.mxu0 0.0
      %8971 = vmatprep.subr.mxu0 0.0
      %8972 = vmatpush1.msra.mxu0 0.0
      %8973 = vmatprep.subr.mxu0 0.0
      %8974 = vmatpush1.msra.mxu0 0.0
      %8975 = vmatprep.subr.mxu0 0.0
      %8976 = vmatpush1.msra.mxu0 0.0
      %8977 = vmatprep.subr.mxu0 0.0
      %8978 = vmatpush1.msra.mxu0 0.0
      %8979 = vmatprep.mubr.f32.mxu0 0.0
      %8980 = vmatmul.mubr.f32.gmra.mrb[0].mxu0 %v8868
      %v8981 = vpop.f32.mrb[0].mxu0
      %v8982 = vadd.f32 0.0, %v8981
      %v8983 = vpop.f32.mrb[0].mxu0
      %8984 = vmatprep.mubr.f32.mxu0 0.0
      %8985 = vmatmul.mubr.f32.gmra.mrb[0].mxu0 %v8871
      %v8986 = vpop.f32.mrb[0].mxu0
      %v8987 = vadd.f32 0.0, %v8986
      %v8988 = vpop.f32.mrb[0].mxu0
      %8989 = vmatprep.mubr.f32.mxu0 0.0
      %8990 = vmatmul.mubr.f32.gmra.mrb[0].mxu0 %v8874
      %v8991 = vpop.f32.mrb[0].mxu0
      %v8992 = vadd.f32 0.0, %v8991
      %v8993 = vpop.f32.mrb[0].mxu0
      %8994 = vmatprep.mubr.f32.mxu0 0.0
      %8995 = vmatmul.mubr.f32.gmra.mrb[0].mxu0 %v8877
      %v8996 = vpop.f32.mrb[0].mxu0
      %v8997 = vadd.f32 0.0, %v8996
      %v8998 = vpop.f32.mrb[0].mxu0
      %8999 = vmatprep.mubr.f32.mxu0 0.0
      %9000 = vmatmul.mubr.f32.gmra.mrb[0].mxu0 %v8880
      %v9001 = vpop.f32.mrb[0].mxu0
      %v9002 = vadd.f32 0.0, %v9001
      %v9003 = vpop.f32.mrb[0].mxu0
      %9004 = vmatprep.mubr.f32.mxu0 0.0
      %9005 = vmatmul.mubr.f32.gmra.mrb[0].mxu0 %v8883
      %v9006 = vpop.f32.mrb[0].mxu0
      %v9007 = vadd.f32 0.0, %v9006
      %v9008 = vpop.f32.mrb[0].mxu0
      %9009 = vmatprep.mubr.f32.mxu0 0.0
      %9010 = vmatmul.mubr.f32.gmra.mrb[0].mxu0 %v8886
      %v9011 = vpop.f32.mrb[0].mxu0
      %v9012 = vadd.f32 0.0, %v9011
      %v9013 = vpop.f32.mrb[0].mxu0
      %9014 = vmatprep.mubr.f32.mxu0 0.0
      %9015 = vmatmul.mubr.f32.gmra.mrb[0].mxu0 %v8889
      %v9016 = vpop.f32.mrb[0].mxu0
      %v9017 = vadd.f32 0.0, %v9016
      %v9018 = vpop.f32.mrb[0].mxu0
      %9019 = vmatprep.mubr.f32.mxu0 0.0
      %9020 = vmatmul.mubr.f32.gmra.mrb[0].mxu0 %v8892
      %v9021 = vpop.f32.mrb[0].mxu0
      %v9022 = vadd.f32 0.0, %v9021
      %v9023 = vpop.f32.mrb[0].mxu0
      %9024 = vmatprep.mubr.f32.mxu0 0.0
      %9025 = vmatmul.mubr.f32.gmra.mrb[0].mxu0 %v8895
      %v9026 = vpop.f32.mrb[0].mxu0
      %v9027 = vadd.f32 0.0, %v9026
      %v9028 = vpop.f32.mrb[0].mxu0
      %9029 = vmatprep.mubr.f32.mxu0 0.0
      %9030 = vmatmul.mubr.f32.gmra.mrb[0].mxu0 %v8898
      %v9031 = vpop.f32.mrb[0].mxu0
      %v9032 = vadd.f32 0.0, %v9031
      %v9033 = vpop.f32.mrb[0].mxu0
      %9034 = vmatprep.mubr.f32.mxu0 0.0
      %9035 = vmatmul.mubr.f32.gmra.mrb[0].mxu0 %v8901
      %v9036 = vpop.f32.mrb[0].mxu0
      %v9037 = vadd.f32 0.0, %v9036
      %v9038 = vpop.f32.mrb[0].mxu0
      %9039 = vmatprep.mubr.f32.mxu0 0.0
      %9040 = vmatmul.mubr.f32.gmra.mrb[0].mxu0 %v8904
      %v9041 = vpop.f32.mrb[0].mxu0
      %v9042 = vadd.f32 0.0, %v9041
      %v9043 = vpop.f32.mrb[0].mxu0
      %9044 = vmatprep.mubr.f32.mxu0 0.0
      %9045 = vmatmul.mubr.f32.gmra.mrb[0].mxu0 %v8907
      %v9046 = vpop.f32.mrb[0].mxu0
      %v9047 = vadd.f32 0.0, %v9046
      %v9048 = vpop.f32.mrb[0].mxu0
      %9049 = vmatprep.mubr.f32.mxu0 0.0
      %9050 = vmatmul.mubr.f32.gmra.mrb[0].mxu0 %v8910
      %v9051 = vpop.f32.mrb[0].mxu0
      %v9052 = vadd.f32 0.0, %v9051
      %v9053 = vpop.f32.mrb[0].mxu0
      %9054 = vmatprep.mubr.f32.mxu0 0.0
      %9055 = vmatmul.mubr.f32.gmra.mrb[0].mxu0 %v8913
      %v9056 = vpop.f32.mrb[0].mxu0
      %v9057 = vadd.f32 0.0, %v9056
      %v9058 = vpop.f32.mrb[0].mxu0
      %9059 = vdwg.mxu0
      %vm9060 = vcmp.eq.s32.totalorder %v1204, 0
      %v9061 = vsel %vm9060, %v8982, 0.0
      %v9062 = vsel %vm9060, %v8987, 0.0
      %v9063 = vsel %vm9060, %v8992, 0.0
      %v9064 = vsel %vm9060, %v8997, 0.0
      %v9065 = vsel %vm9060, %v9002, 0.0
      %v9066 = vsel %vm9060, %v9007, 0.0
      %v9067 = vsel %vm9060, %v9012, 0.0
      %v9068 = vsel %vm9060, %v9017, 0.0
      %v9069 = vsel %vm9060, %v9022, 0.0
      %v9070 = vsel %vm9060, %v9027, 0.0
      %v9071 = vsel %vm9060, %v9032, 0.0
      %v9072 = vsel %vm9060, %v9037, 0.0
      %v9073 = vsel %vm9060, %v9042, 0.0
      %v9074 = vsel %vm9060, %v9047, 0.0
      %v9075 = vsel %vm9060, %v9052, 0.0
      %v9076 = vsel %vm9060, %v9057, 0.0
      %v9077 = vadd.f32 %v9061, 0.0
      %v9078 = vadd.f32 %v9062, 0.0
      %v9079 = vadd.f32 %v9063, 0.0
      %v9080 = vadd.f32 %v9064, 0.0
      %v9081 = vadd.f32 %v9065, 0.0
      %v9082 = vadd.f32 %v9066, 0.0
      %v9083 = vadd.f32 %v9067, 0.0
      %v9084 = vadd.f32 %v9068, 0.0
      %v9085 = vadd.f32 %v9069, 0.0
      %v9086 = vadd.f32 %v9070, 0.0
      %v9087 = vadd.f32 %v9071, 0.0
      %v9088 = vadd.f32 %v9072, 0.0
      %v9089 = vadd.f32 %v9073, 0.0
      %v9090 = vadd.f32 %v9074, 0.0
      %v9091 = vadd.f32 %v9075, 0.0
      %v9092 = vadd.f32 %v9076, 0.0
      %s9093 = scalar_lea.vmem %s75, 128
      %v9094 = vld [vmem:[%s9093] sm:$0xff]
      %v9095 = vld [vmem:[%s9093 + $0x8] sm:$0xff]
      %v9096 = vld [vmem:[%s9093 + $0x10] sm:$0xff]
      %v9097 = vld [vmem:[%s9093 + $0x18] sm:$0xff]
      %v9098 = vld [vmem:[%s9093 + $0x20] sm:$0xff]
      %v9099 = vld [vmem:[%s9093 + $0x28] sm:$0xff]
      %v9100 = vld [vmem:[%s9093 + $0x30] sm:$0xff]
      %v9101 = vld [vmem:[%s9093 + $0x38] sm:$0xff]
      %v9102 = vld [vmem:[%s9093 + $0x40] sm:$0xff]
      %v9103 = vld [vmem:[%s9093 + $0x48] sm:$0xff]
      %v9104 = vld [vmem:[%s9093 + $0x50] sm:$0xff]
      %v9105 = vld [vmem:[%s9093 + $0x58] sm:$0xff]
      %v9106 = vld [vmem:[%s9093 + $0x60] sm:$0xff]
      %v9107 = vld [vmem:[%s9093 + $0x68] sm:$0xff]
      %v9108 = vld [vmem:[%s9093 + $0x70] sm:$0xff]
      %v9109 = vld [vmem:[%s9093 + $0x78] sm:$0xff]
      %v9111 = vsel %vm4167, %v9094, 0
      %v9114 = vsel %vm4167, %v9095, 0
      %v9117 = vsel %vm4167, %v9096, 0
      %v9120 = vsel %vm4167, %v9097, 0
      %v9123 = vsel %vm4167, %v9098, 0
      %v9126 = vsel %vm4167, %v9099, 0
      %v9129 = vsel %vm4167, %v9100, 0
      %v9132 = vsel %vm4167, %v9101, 0
      %v9135 = vsel %vm4167, %v9102, 0
      %v9138 = vsel %vm4167, %v9103, 0
      %v9141 = vsel %vm4167, %v9104, 0
      %v9144 = vsel %vm4167, %v9105, 0
      %v9147 = vsel %vm4167, %v9106, 0
      %v9150 = vsel %vm4167, %v9107, 0
      %v9153 = vsel %vm4167, %v9108, 0
      %v9156 = vsel %vm4167, %v9109, 0
      %9158 = vmatprep.subr.mxu0 0.0
      %9159 = vmatpush1.msra.mxu0 %v8847
      %9160 = vmatprep.subr.mxu0 0.0
      %9161 = vmatpush1.msra.mxu0 %v8848
      %9162 = vmatprep.subr.mxu0 0.0
      %9163 = vmatpush1.msra.mxu0 %v8849
      %9164 = vmatprep.subr.mxu0 0.0
      %9165 = vmatpush1.msra.mxu0 %v8850
      %9166 = vmatprep.subr.mxu0 0.0
      %9167 = vmatpush1.msra.mxu0 0.0
      %9168 = vmatprep.subr.mxu0 0.0
      %9169 = vmatpush1.msra.mxu0 0.0
      %9170 = vmatprep.subr.mxu0 0.0
      %9171 = vmatpush1.msra.mxu0 0.0
      %9172 = vmatprep.subr.mxu0 0.0
      %9173 = vmatpush1.msra.mxu0 0.0
      %9174 = vmatprep.subr.mxu0 0.0
      %9175 = vmatpush1.msra.mxu0 0.0
      %9176 = vmatprep.subr.mxu0 0.0
      %9177 = vmatpush1.msra.mxu0 0.0
      %9178 = vmatprep.subr.mxu0 0.0
      %9179 = vmatpush1.msra.mxu0 0.0
      %9180 = vmatprep.subr.mxu0 0.0
      %9181 = vmatpush1.msra.mxu0 0.0
      %9182 = vmatprep.subr.mxu0 0.0
      %9183 = vmatpush1.msra.mxu0 0.0
      %9184 = vmatprep.subr.mxu0 0.0
      %9185 = vmatpush1.msra.mxu0 0.0
      %9186 = vmatprep.subr.mxu0 0.0
      %9187 = vmatpush1.msra.mxu0 0.0
      %9188 = vmatprep.subr.mxu0 0.0
      %9189 = vmatpush1.msra.mxu0 0.0
      %9190 = vmatprep.subr.mxu0 0.0
      %9191 = vmatpush1.msra.mxu0 0.0
      %9192 = vmatprep.subr.mxu0 0.0
      %9193 = vmatpush1.msra.mxu0 0.0
      %9194 = vmatprep.subr.mxu0 0.0
      %9195 = vmatpush1.msra.mxu0 0.0
      %9196 = vmatprep.subr.mxu0 0.0
      %9197 = vmatpush1.msra.mxu0 0.0
      %9198 = vmatprep.subr.mxu0 0.0
      %9199 = vmatpush1.msra.mxu0 0.0
      %9200 = vmatprep.subr.mxu0 0.0
      %9201 = vmatpush1.msra.mxu0 0.0
      %9202 = vmatprep.subr.mxu0 0.0
      %9203 = vmatpush1.msra.mxu0 0.0
      %9204 = vmatprep.subr.mxu0 0.0
      %9205 = vmatpush1.msra.mxu0 0.0
      %9206 = vmatprep.subr.mxu0 0.0
      %9207 = vmatpush1.msra.mxu0 0.0
      %9208 = vmatprep.subr.mxu0 0.0
      %9209 = vmatpush1.msra.mxu0 0.0
      %9210 = vmatprep.subr.mxu0 0.0
      %9211 = vmatpush1.msra.mxu0 0.0
      %9212 = vmatprep.subr.mxu0 0.0
      %9213 = vmatpush1.msra.mxu0 0.0
      %9214 = vmatprep.subr.mxu0 0.0
      %9215 = vmatpush1.msra.mxu0 0.0
      %9216 = vmatprep.subr.mxu0 0.0
      %9217 = vmatpush1.msra.mxu0 0.0
      %9218 = vmatprep.subr.mxu0 0.0
      %9219 = vmatpush1.msra.mxu0 0.0
      %9220 = vmatprep.subr.mxu0 0.0
      %9221 = vmatpush1.msra.mxu0 0.0
      %9222 = vmatprep.mubr.f32.mxu0 0.0
      %9223 = vmatmul.mubr.f32.gmra.mrb[0].mxu0 %v9111
      %v9224 = vpop.f32.mrb[0].mxu0
      %v9225 = vadd.f32 0.0, %v9224
      %v9226 = vpop.f32.mrb[0].mxu0
      %9227 = vmatprep.mubr.f32.mxu0 0.0
      %9228 = vmatmul.mubr.f32.gmra.mrb[0].mxu0 %v9114
      %v9229 = vpop.f32.mrb[0].mxu0
      %v9230 = vadd.f32 0.0, %v9229
      %v9231 = vpop.f32.mrb[0].mxu0
      %9232 = vmatprep.mubr.f32.mxu0 0.0
      %9233 = vmatmul.mubr.f32.gmra.mrb[0].mxu0 %v9117
      %v9234 = vpop.f32.mrb[0].mxu0
      %v9235 = vadd.f32 0.0, %v9234
      %v9236 = vpop.f32.mrb[0].mxu0
      %9237 = vmatprep.mubr.f32.mxu0 0.0
      %9238 = vmatmul.mubr.f32.gmra.mrb[0].mxu0 %v9120
      %v9239 = vpop.f32.mrb[0].mxu0
      %v9240 = vadd.f32 0.0, %v9239
      %v9241 = vpop.f32.mrb[0].mxu0
      %9242 = vmatprep.mubr.f32.mxu0 0.0
      %9243 = vmatmul.mubr.f32.gmra.mrb[0].mxu0 %v9123
      %v9244 = vpop.f32.mrb[0].mxu0
      %v9245 = vadd.f32 0.0, %v9244
      %v9246 = vpop.f32.mrb[0].mxu0
      %9247 = vmatprep.mubr.f32.mxu0 0.0
      %9248 = vmatmul.mubr.f32.gmra.mrb[0].mxu0 %v9126
      %v9249 = vpop.f32.mrb[0].mxu0
      %v9250 = vadd.f32 0.0, %v9249
      %v9251 = vpop.f32.mrb[0].mxu0
      %9252 = vmatprep.mubr.f32.mxu0 0.0
      %9253 = vmatmul.mubr.f32.gmra.mrb[0].mxu0 %v9129
      %v9254 = vpop.f32.mrb[0].mxu0
      %v9255 = vadd.f32 0.0, %v9254
      %v9256 = vpop.f32.mrb[0].mxu0
      %9257 = vmatprep.mubr.f32.mxu0 0.0
      %9258 = vmatmul.mubr.f32.gmra.mrb[0].mxu0 %v9132
      %v9259 = vpop.f32.mrb[0].mxu0
      %v9260 = vadd.f32 0.0, %v9259
      %v9261 = vpop.f32.mrb[0].mxu0
      %9262 = vmatprep.mubr.f32.mxu0 0.0
      %9263 = vmatmul.mubr.f32.gmra.mrb[0].mxu0 %v9135
      %v9264 = vpop.f32.mrb[0].mxu0
      %v9265 = vadd.f32 0.0, %v9264
      %v9266 = vpop.f32.mrb[0].mxu0
      %9267 = vmatprep.mubr.f32.mxu0 0.0
      %9268 = vmatmul.mubr.f32.gmra.mrb[0].mxu0 %v9138
      %v9269 = vpop.f32.mrb[0].mxu0
      %v9270 = vadd.f32 0.0, %v9269
      %v9271 = vpop.f32.mrb[0].mxu0
      %9272 = vmatprep.mubr.f32.mxu0 0.0
      %9273 = vmatmul.mubr.f32.gmra.mrb[0].mxu0 %v9141
      %v9274 = vpop.f32.mrb[0].mxu0
      %v9275 = vadd.f32 0.0, %v9274
      %v9276 = vpop.f32.mrb[0].mxu0
      %9277 = vmatprep.mubr.f32.mxu0 0.0
      %9278 = vmatmul.mubr.f32.gmra.mrb[0].mxu0 %v9144
      %v9279 = vpop.f32.mrb[0].mxu0
      %v9280 = vadd.f32 0.0, %v9279
      %v9281 = vpop.f32.mrb[0].mxu0
      %9282 = vmatprep.mubr.f32.mxu0 0.0
      %9283 = vmatmul.mubr.f32.gmra.mrb[0].mxu0 %v9147
      %v9284 = vpop.f32.mrb[0].mxu0
      %v9285 = vadd.f32 0.0, %v9284
      %v9286 = vpop.f32.mrb[0].mxu0
      %9287 = vmatprep.mubr.f32.mxu0 0.0
      %9288 = vmatmul.mubr.f32.gmra.mrb[0].mxu0 %v9150
      %v9289 = vpop.f32.mrb[0].mxu0
      %v9290 = vadd.f32 0.0, %v9289
      %v9291 = vpop.f32.mrb[0].mxu0
      %9292 = vmatprep.mubr.f32.mxu0 0.0
      %9293 = vmatmul.mubr.f32.gmra.mrb[0].mxu0 %v9153
      %v9294 = vpop.f32.mrb[0].mxu0
      %v9295 = vadd.f32 0.0, %v9294
      %v9296 = vpop.f32.mrb[0].mxu0
      %9297 = vmatprep.mubr.f32.mxu0 0.0
      %9298 = vmatmul.mubr.f32.gmra.mrb[0].mxu0 %v9156
      %v9299 = vpop.f32.mrb[0].mxu0
      %v9300 = vadd.f32 0.0, %v9299
      %v9301 = vpop.f32.mrb[0].mxu0
      %9302 = vdwg.mxu0
      %vm9303 = vcmp.eq.s32.totalorder %v1204, 1
      %v9304 = vsel %vm9303, %v9225, 0.0
      %v9305 = vsel %vm9303, %v9230, 0.0
      %v9306 = vsel %vm9303, %v9235, 0.0
      %v9307 = vsel %vm9303, %v9240, 0.0
      %v9308 = vsel %vm9303, %v9245, 0.0
      %v9309 = vsel %vm9303, %v9250, 0.0
      %v9310 = vsel %vm9303, %v9255, 0.0
      %v9311 = vsel %vm9303, %v9260, 0.0
      %v9312 = vsel %vm9303, %v9265, 0.0
      %v9313 = vsel %vm9303, %v9270, 0.0
      %v9314 = vsel %vm9303, %v9275, 0.0
      %v9315 = vsel %vm9303, %v9280, 0.0
      %v9316 = vsel %vm9303, %v9285, 0.0
      %v9317 = vsel %vm9303, %v9290, 0.0
      %v9318 = vsel %vm9303, %v9295, 0.0
      %v9319 = vsel %vm9303, %v9300, 0.0
      %v9320 = vadd.f32 %v9077, %v9304
      %v9321 = vadd.f32 %v9078, %v9305
      %v9322 = vadd.f32 %v9079, %v9306
      %v9323 = vadd.f32 %v9080, %v9307
      %v9324 = vadd.f32 %v9081, %v9308
      %v9325 = vadd.f32 %v9082, %v9309
      %v9326 = vadd.f32 %v9083, %v9310
      %v9327 = vadd.f32 %v9084, %v9311
      %v9328 = vadd.f32 %v9085, %v9312
      %v9329 = vadd.f32 %v9086, %v9313
      %v9330 = vadd.f32 %v9087, %v9314
      %v9331 = vadd.f32 %v9088, %v9315
      %v9332 = vadd.f32 %v9089, %v9316
      %v9333 = vadd.f32 %v9090, %v9317
      %v9334 = vadd.f32 %v9091, %v9318
      %v9335 = vadd.f32 %v9092, %v9319
      %s9336 = scalar_lea.vmem %s75, 256
      %v9337 = vld [vmem:[%s9336] sm:$0xff]
      %v9338 = vld [vmem:[%s9336 + $0x8] sm:$0xff]
      %v9339 = vld [vmem:[%s9336 + $0x10] sm:$0xff]
      %v9340 = vld [vmem:[%s9336 + $0x18] sm:$0xff]
      %v9341 = vld [vmem:[%s9336 + $0x20] sm:$0xff]
      %v9342 = vld [vmem:[%s9336 + $0x28] sm:$0xff]
      %v9343 = vld [vmem:[%s9336 + $0x30] sm:$0xff]
      %v9344 = vld [vmem:[%s9336 + $0x38] sm:$0xff]
      %v9345 = vld [vmem:[%s9336 + $0x40] sm:$0xff]
      %v9346 = vld [vmem:[%s9336 + $0x48] sm:$0xff]
      %v9347 = vld [vmem:[%s9336 + $0x50] sm:$0xff]
      %v9348 = vld [vmem:[%s9336 + $0x58] sm:$0xff]
      %v9349 = vld [vmem:[%s9336 + $0x60] sm:$0xff]
      %v9350 = vld [vmem:[%s9336 + $0x68] sm:$0xff]
      %v9351 = vld [vmem:[%s9336 + $0x70] sm:$0xff]
      %v9352 = vld [vmem:[%s9336 + $0x78] sm:$0xff]
      %v9354 = vsel %vm4167, %v9337, 0
      %v9357 = vsel %vm4167, %v9338, 0
      %v9360 = vsel %vm4167, %v9339, 0
      %v9363 = vsel %vm4167, %v9340, 0
      %v9366 = vsel %vm4167, %v9341, 0
      %v9369 = vsel %vm4167, %v9342, 0
      %v9372 = vsel %vm4167, %v9343, 0
      %v9375 = vsel %vm4167, %v9344, 0
      %v9378 = vsel %vm4167, %v9345, 0
      %v9381 = vsel %vm4167, %v9346, 0
      %v9384 = vsel %vm4167, %v9347, 0
      %v9387 = vsel %vm4167, %v9348, 0
      %v9390 = vsel %vm4167, %v9349, 0
      %v9393 = vsel %vm4167, %v9350, 0
      %v9396 = vsel %vm4167, %v9351, 0
      %v9399 = vsel %vm4167, %v9352, 0
      %9401 = vmatprep.subr.mxu0 0.0
      %9402 = vmatpush1.msra.mxu0 %v8847
      %9403 = vmatprep.subr.mxu0 0.0
      %9404 = vmatpush1.msra.mxu0 %v8848
      %9405 = vmatprep.subr.mxu0 0.0
      %9406 = vmatpush1.msra.mxu0 %v8849
      %9407 = vmatprep.subr.mxu0 0.0
      %9408 = vmatpush1.msra.mxu0 %v8850
      %9409 = vmatprep.subr.mxu0 0.0
      %9410 = vmatpush1.msra.mxu0 0.0
      %9411 = vmatprep.subr.mxu0 0.0
      %9412 = vmatpush1.msra.mxu0 0.0
      %9413 = vmatprep.subr.mxu0 0.0
      %9414 = vmatpush1.msra.mxu0 0.0
      %9415 = vmatprep.subr.mxu0 0.0
      %9416 = vmatpush1.msra.mxu0 0.0
      %9417 = vmatprep.subr.mxu0 0.0
      %9418 = vmatpush1.msra.mxu0 0.0
      %9419 = vmatprep.subr.mxu0 0.0
      %9420 = vmatpush1.msra.mxu0 0.0
      %9421 = vmatprep.subr.mxu0 0.0
      %9422 = vmatpush1.msra.mxu0 0.0
      %9423 = vmatprep.subr.mxu0 0.0
      %9424 = vmatpush1.msra.mxu0 0.0
      %9425 = vmatprep.subr.mxu0 0.0
      %9426 = vmatpush1.msra.mxu0 0.0
      %9427 = vmatprep.subr.mxu0 0.0
      %9428 = vmatpush1.msra.mxu0 0.0
      %9429 = vmatprep.subr.mxu0 0.0
      %9430 = vmatpush1.msra.mxu0 0.0
      %9431 = vmatprep.subr.mxu0 0.0
      %9432 = vmatpush1.msra.mxu0 0.0
      %9433 = vmatprep.subr.mxu0 0.0
      %9434 = vmatpush1.msra.mxu0 0.0
      %9435 = vmatprep.subr.mxu0 0.0
      %9436 = vmatpush1.msra.mxu0 0.0
      %9437 = vmatprep.subr.mxu0 0.0
      %9438 = vmatpush1.msra.mxu0 0.0
      %9439 = vmatprep.subr.mxu0 0.0
      %9440 = vmatpush1.msra.mxu0 0.0
      %9441 = vmatprep.subr.mxu0 0.0
      %9442 = vmatpush1.msra.mxu0 0.0
      %9443 = vmatprep.subr.mxu0 0.0
      %9444 = vmatpush1.msra.mxu0 0.0
      %9445 = vmatprep.subr.mxu0 0.0
      %9446 = vmatpush1.msra.mxu0 0.0
      %9447 = vmatprep.subr.mxu0 0.0
      %9448 = vmatpush1.msra.mxu0 0.0
      %9449 = vmatprep.subr.mxu0 0.0
      %9450 = vmatpush1.msra.mxu0 0.0
      %9451 = vmatprep.subr.mxu0 0.0
      %9452 = vmatpush1.msra.mxu0 0.0
      %9453 = vmatprep.subr.mxu0 0.0
      %9454 = vmatpush1.msra.mxu0 0.0
      %9455 = vmatprep.subr.mxu0 0.0
      %9456 = vmatpush1.msra.mxu0 0.0
      %9457 = vmatprep.subr.mxu0 0.0
      %9458 = vmatpush1.msra.mxu0 0.0
      %9459 = vmatprep.subr.mxu0 0.0
      %9460 = vmatpush1.msra.mxu0 0.0
      %9461 = vmatprep.subr.mxu0 0.0
      %9462 = vmatpush1.msra.mxu0 0.0
      %9463 = vmatprep.subr.mxu0 0.0
      %9464 = vmatpush1.msra.mxu0 0.0
      %9465 = vmatprep.mubr.f32.mxu0 0.0
      %9466 = vmatmul.mubr.f32.gmra.mrb[0].mxu0 %v9354
      %v9467 = vpop.f32.mrb[0].mxu0
      %v9468 = vadd.f32 0.0, %v9467
      %v9469 = vpop.f32.mrb[0].mxu0
      %9470 = vmatprep.mubr.f32.mxu0 0.0
      %9471 = vmatmul.mubr.f32.gmra.mrb[0].mxu0 %v9357
      %v9472 = vpop.f32.mrb[0].mxu0
      %v9473 = vadd.f32 0.0, %v9472
      %v9474 = vpop.f32.mrb[0].mxu0
      %9475 = vmatprep.mubr.f32.mxu0 0.0
      %9476 = vmatmul.mubr.f32.gmra.mrb[0].mxu0 %v9360
      %v9477 = vpop.f32.mrb[0].mxu0
      %v9478 = vadd.f32 0.0, %v9477
      %v9479 = vpop.f32.mrb[0].mxu0
      %9480 = vmatprep.mubr.f32.mxu0 0.0
      %9481 = vmatmul.mubr.f32.gmra.mrb[0].mxu0 %v9363
      %v9482 = vpop.f32.mrb[0].mxu0
      %v9483 = vadd.f32 0.0, %v9482
      %v9484 = vpop.f32.mrb[0].mxu0
      %9485 = vmatprep.mubr.f32.mxu0 0.0
      %9486 = vmatmul.mubr.f32.gmra.mrb[0].mxu0 %v9366
      %v9487 = vpop.f32.mrb[0].mxu0
      %v9488 = vadd.f32 0.0, %v9487
      %v9489 = vpop.f32.mrb[0].mxu0
      %9490 = vmatprep.mubr.f32.mxu0 0.0
      %9491 = vmatmul.mubr.f32.gmra.mrb[0].mxu0 %v9369
      %v9492 = vpop.f32.mrb[0].mxu0
      %v9493 = vadd.f32 0.0, %v9492
      %v9494 = vpop.f32.mrb[0].mxu0
      %9495 = vmatprep.mubr.f32.mxu0 0.0
      %9496 = vmatmul.mubr.f32.gmra.mrb[0].mxu0 %v9372
      %v9497 = vpop.f32.mrb[0].mxu0
      %v9498 = vadd.f32 0.0, %v9497
      %v9499 = vpop.f32.mrb[0].mxu0
      %9500 = vmatprep.mubr.f32.mxu0 0.0
      %9501 = vmatmul.mubr.f32.gmra.mrb[0].mxu0 %v9375
      %v9502 = vpop.f32.mrb[0].mxu0
      %v9503 = vadd.f32 0.0, %v9502
      %v9504 = vpop.f32.mrb[0].mxu0
      %9505 = vmatprep.mubr.f32.mxu0 0.0
      %9506 = vmatmul.mubr.f32.gmra.mrb[0].mxu0 %v9378
      %v9507 = vpop.f32.mrb[0].mxu0
      %v9508 = vadd.f32 0.0, %v9507
      %v9509 = vpop.f32.mrb[0].mxu0
      %9510 = vmatprep.mubr.f32.mxu0 0.0
      %9511 = vmatmul.mubr.f32.gmra.mrb[0].mxu0 %v9381
      %v9512 = vpop.f32.mrb[0].mxu0
      %v9513 = vadd.f32 0.0, %v9512
      %v9514 = vpop.f32.mrb[0].mxu0
      %9515 = vmatprep.mubr.f32.mxu0 0.0
      %9516 = vmatmul.mubr.f32.gmra.mrb[0].mxu0 %v9384
      %v9517 = vpop.f32.mrb[0].mxu0
      %v9518 = vadd.f32 0.0, %v9517
      %v9519 = vpop.f32.mrb[0].mxu0
      %9520 = vmatprep.mubr.f32.mxu0 0.0
      %9521 = vmatmul.mubr.f32.gmra.mrb[0].mxu0 %v9387
      %v9522 = vpop.f32.mrb[0].mxu0
      %v9523 = vadd.f32 0.0, %v9522
      %v9524 = vpop.f32.mrb[0].mxu0
      %9525 = vmatprep.mubr.f32.mxu0 0.0
      %9526 = vmatmul.mubr.f32.gmra.mrb[0].mxu0 %v9390
      %v9527 = vpop.f32.mrb[0].mxu0
      %v9528 = vadd.f32 0.0, %v9527
      %v9529 = vpop.f32.mrb[0].mxu0
      %9530 = vmatprep.mubr.f32.mxu0 0.0
      %9531 = vmatmul.mubr.f32.gmra.mrb[0].mxu0 %v9393
      %v9532 = vpop.f32.mrb[0].mxu0
      %v9533 = vadd.f32 0.0, %v9532
      %v9534 = vpop.f32.mrb[0].mxu0
      %9535 = vmatprep.mubr.f32.mxu0 0.0
      %9536 = vmatmul.mubr.f32.gmra.mrb[0].mxu0 %v9396
      %v9537 = vpop.f32.mrb[0].mxu0
      %v9538 = vadd.f32 0.0, %v9537
      %v9539 = vpop.f32.mrb[0].mxu0
      %9540 = vmatprep.mubr.f32.mxu0 0.0
      %9541 = vmatmul.mubr.f32.gmra.mrb[0].mxu0 %v9399
      %v9542 = vpop.f32.mrb[0].mxu0
      %v9543 = vadd.f32 0.0, %v9542
      %v9544 = vpop.f32.mrb[0].mxu0
      %9545 = vdwg.mxu0
      %vm9546 = vcmp.eq.s32.totalorder %v1204, 2
      %v9547 = vsel %vm9546, %v9468, 0.0
      %v9548 = vsel %vm9546, %v9473, 0.0
      %v9549 = vsel %vm9546, %v9478, 0.0
      %v9550 = vsel %vm9546, %v9483, 0.0
      %v9551 = vsel %vm9546, %v9488, 0.0
      %v9552 = vsel %vm9546, %v9493, 0.0
      %v9553 = vsel %vm9546, %v9498, 0.0
      %v9554 = vsel %vm9546, %v9503, 0.0
      %v9555 = vsel %vm9546, %v9508, 0.0
      %v9556 = vsel %vm9546, %v9513, 0.0
      %v9557 = vsel %vm9546, %v9518, 0.0
      %v9558 = vsel %vm9546, %v9523, 0.0
      %v9559 = vsel %vm9546, %v9528, 0.0
      %v9560 = vsel %vm9546, %v9533, 0.0
      %v9561 = vsel %vm9546, %v9538, 0.0
      %v9562 = vsel %vm9546, %v9543, 0.0
      %v9563 = vadd.f32 %v9320, %v9547
      %v9564 = vadd.f32 %v9321, %v9548
      %v9565 = vadd.f32 %v9322, %v9549
      %v9566 = vadd.f32 %v9323, %v9550
      %v9567 = vadd.f32 %v9324, %v9551
      %v9568 = vadd.f32 %v9325, %v9552
      %v9569 = vadd.f32 %v9326, %v9553
      %v9570 = vadd.f32 %v9327, %v9554
      %v9571 = vadd.f32 %v9328, %v9555
      %v9572 = vadd.f32 %v9329, %v9556
      %v9573 = vadd.f32 %v9330, %v9557
      %v9574 = vadd.f32 %v9331, %v9558
      %v9575 = vadd.f32 %v9332, %v9559
      %v9576 = vadd.f32 %v9333, %v9560
      %v9577 = vadd.f32 %v9334, %v9561
      %v9578 = vadd.f32 %v9335, %v9562
      %s9579 = scalar_lea.vmem %s75, 384
      %v9580 = vld [vmem:[%s9579] sm:$0xff]
      %v9581 = vld [vmem:[%s9579 + $0x8] sm:$0xff]
      %v9582 = vld [vmem:[%s9579 + $0x10] sm:$0xff]
      %v9583 = vld [vmem:[%s9579 + $0x18] sm:$0xff]
      %v9584 = vld [vmem:[%s9579 + $0x20] sm:$0xff]
      %v9585 = vld [vmem:[%s9579 + $0x28] sm:$0xff]
      %v9586 = vld [vmem:[%s9579 + $0x30] sm:$0xff]
      %v9587 = vld [vmem:[%s9579 + $0x38] sm:$0xff]
      %v9588 = vld [vmem:[%s9579 + $0x40] sm:$0xff]
      %v9589 = vld [vmem:[%s9579 + $0x48] sm:$0xff]
      %v9590 = vld [vmem:[%s9579 + $0x50] sm:$0xff]
      %v9591 = vld [vmem:[%s9579 + $0x58] sm:$0xff]
      %v9592 = vld [vmem:[%s9579 + $0x60] sm:$0xff]
      %v9593 = vld [vmem:[%s9579 + $0x68] sm:$0xff]
      %v9594 = vld [vmem:[%s9579 + $0x70] sm:$0xff]
      %v9595 = vld [vmem:[%s9579 + $0x78] sm:$0xff]
      %v9597 = vsel %vm4167, %v9580, 0
      %v9600 = vsel %vm4167, %v9581, 0
      %v9603 = vsel %vm4167, %v9582, 0
      %v9606 = vsel %vm4167, %v9583, 0
      %v9609 = vsel %vm4167, %v9584, 0
      %v9612 = vsel %vm4167, %v9585, 0
      %v9615 = vsel %vm4167, %v9586, 0
      %v9618 = vsel %vm4167, %v9587, 0
      %v9621 = vsel %vm4167, %v9588, 0
      %v9624 = vsel %vm4167, %v9589, 0
      %v9627 = vsel %vm4167, %v9590, 0
      %v9630 = vsel %vm4167, %v9591, 0
      %v9633 = vsel %vm4167, %v9592, 0
      %v9636 = vsel %vm4167, %v9593, 0
      %v9639 = vsel %vm4167, %v9594, 0
      %v9642 = vsel %vm4167, %v9595, 0
      %9644 = vmatprep.subr.mxu0 0.0
      %9645 = vmatpush1.msra.mxu0 %v8847
      %9646 = vmatprep.subr.mxu0 0.0
      %9647 = vmatpush1.msra.mxu0 %v8848
      %9648 = vmatprep.subr.mxu0 0.0
      %9649 = vmatpush1.msra.mxu0 %v8849
      %9650 = vmatprep.subr.mxu0 0.0
      %9651 = vmatpush1.msra.mxu0 %v8850
      %9652 = vmatprep.subr.mxu0 0.0
      %9653 = vmatpush1.msra.mxu0 0.0
      %9654 = vmatprep.subr.mxu0 0.0
      %9655 = vmatpush1.msra.mxu0 0.0
      %9656 = vmatprep.subr.mxu0 0.0
      %9657 = vmatpush1.msra.mxu0 0.0
      %9658 = vmatprep.subr.mxu0 0.0
      %9659 = vmatpush1.msra.mxu0 0.0
      %9660 = vmatprep.subr.mxu0 0.0
      %9661 = vmatpush1.msra.mxu0 0.0
      %9662 = vmatprep.subr.mxu0 0.0
      %9663 = vmatpush1.msra.mxu0 0.0
      %9664 = vmatprep.subr.mxu0 0.0
      %9665 = vmatpush1.msra.mxu0 0.0
      %9666 = vmatprep.subr.mxu0 0.0
      %9667 = vmatpush1.msra.mxu0 0.0
      %9668 = vmatprep.subr.mxu0 0.0
      %9669 = vmatpush1.msra.mxu0 0.0
      %9670 = vmatprep.subr.mxu0 0.0
      %9671 = vmatpush1.msra.mxu0 0.0
      %9672 = vmatprep.subr.mxu0 0.0
      %9673 = vmatpush1.msra.mxu0 0.0
      %9674 = vmatprep.subr.mxu0 0.0
      %9675 = vmatpush1.msra.mxu0 0.0
      %9676 = vmatprep.subr.mxu0 0.0
      %9677 = vmatpush1.msra.mxu0 0.0
      %9678 = vmatprep.subr.mxu0 0.0
      %9679 = vmatpush1.msra.mxu0 0.0
      %9680 = vmatprep.subr.mxu0 0.0
      %9681 = vmatpush1.msra.mxu0 0.0
      %9682 = vmatprep.subr.mxu0 0.0
      %9683 = vmatpush1.msra.mxu0 0.0
      %9684 = vmatprep.subr.mxu0 0.0
      %9685 = vmatpush1.msra.mxu0 0.0
      %9686 = vmatprep.subr.mxu0 0.0
      %9687 = vmatpush1.msra.mxu0 0.0
      %9688 = vmatprep.subr.mxu0 0.0
      %9689 = vmatpush1.msra.mxu0 0.0
      %9690 = vmatprep.subr.mxu0 0.0
      %9691 = vmatpush1.msra.mxu0 0.0
      %9692 = vmatprep.subr.mxu0 0.0
      %9693 = vmatpush1.msra.mxu0 0.0
      %9694 = vmatprep.subr.mxu0 0.0
      %9695 = vmatpush1.msra.mxu0 0.0
      %9696 = vmatprep.subr.mxu0 0.0
      %9697 = vmatpush1.msra.mxu0 0.0
      %9698 = vmatprep.subr.mxu0 0.0
      %9699 = vmatpush1.msra.mxu0 0.0
      %9700 = vmatprep.subr.mxu0 0.0
      %9701 = vmatpush1.msra.mxu0 0.0
      %9702 = vmatprep.subr.mxu0 0.0
      %9703 = vmatpush1.msra.mxu0 0.0
      %9704 = vmatprep.subr.mxu0 0.0
      %9705 = vmatpush1.msra.mxu0 0.0
      %9706 = vmatprep.subr.mxu0 0.0
      %9707 = vmatpush1.msra.mxu0 0.0
      %9708 = vmatprep.mubr.f32.mxu0 0.0
      %9709 = vmatmul.mubr.f32.gmra.mrb[0].mxu0 %v9597
      %v9710 = vpop.f32.mrb[0].mxu0
      %v9711 = vadd.f32 0.0, %v9710
      %v9712 = vpop.f32.mrb[0].mxu0
      %9713 = vmatprep.mubr.f32.mxu0 0.0
      %9714 = vmatmul.mubr.f32.gmra.mrb[0].mxu0 %v9600
      %v9715 = vpop.f32.mrb[0].mxu0
      %v9716 = vadd.f32 0.0, %v9715
      %v9717 = vpop.f32.mrb[0].mxu0
      %9718 = vmatprep.mubr.f32.mxu0 0.0
      %9719 = vmatmul.mubr.f32.gmra.mrb[0].mxu0 %v9603
      %v9720 = vpop.f32.mrb[0].mxu0
      %v9721 = vadd.f32 0.0, %v9720
      %v9722 = vpop.f32.mrb[0].mxu0
      %9723 = vmatprep.mubr.f32.mxu0 0.0
      %9724 = vmatmul.mubr.f32.gmra.mrb[0].mxu0 %v9606
      %v9725 = vpop.f32.mrb[0].mxu0
      %v9726 = vadd.f32 0.0, %v9725
      %v9727 = vpop.f32.mrb[0].mxu0
      %9728 = vmatprep.mubr.f32.mxu0 0.0
      %9729 = vmatmul.mubr.f32.gmra.mrb[0].mxu0 %v9609
      %v9730 = vpop.f32.mrb[0].mxu0
      %v9731 = vadd.f32 0.0, %v9730
      %v9732 = vpop.f32.mrb[0].mxu0
      %9733 = vmatprep.mubr.f32.mxu0 0.0
      %9734 = vmatmul.mubr.f32.gmra.mrb[0].mxu0 %v9612
      %v9735 = vpop.f32.mrb[0].mxu0
      %v9736 = vadd.f32 0.0, %v9735
      %v9737 = vpop.f32.mrb[0].mxu0
      %9738 = vmatprep.mubr.f32.mxu0 0.0
      %9739 = vmatmul.mubr.f32.gmra.mrb[0].mxu0 %v9615
      %v9740 = vpop.f32.mrb[0].mxu0
      %v9741 = vadd.f32 0.0, %v9740
      %v9742 = vpop.f32.mrb[0].mxu0
      %9743 = vmatprep.mubr.f32.mxu0 0.0
      %9744 = vmatmul.mubr.f32.gmra.mrb[0].mxu0 %v9618
      %v9745 = vpop.f32.mrb[0].mxu0
      %v9746 = vadd.f32 0.0, %v9745
      %v9747 = vpop.f32.mrb[0].mxu0
      %9748 = vmatprep.mubr.f32.mxu0 0.0
      %9749 = vmatmul.mubr.f32.gmra.mrb[0].mxu0 %v9621
      %v9750 = vpop.f32.mrb[0].mxu0
      %v9751 = vadd.f32 0.0, %v9750
      %v9752 = vpop.f32.mrb[0].mxu0
      %9753 = vmatprep.mubr.f32.mxu0 0.0
      %9754 = vmatmul.mubr.f32.gmra.mrb[0].mxu0 %v9624
      %v9755 = vpop.f32.mrb[0].mxu0
      %v9756 = vadd.f32 0.0, %v9755
      %v9757 = vpop.f32.mrb[0].mxu0
      %9758 = vmatprep.mubr.f32.mxu0 0.0
      %9759 = vmatmul.mubr.f32.gmra.mrb[0].mxu0 %v9627
      %v9760 = vpop.f32.mrb[0].mxu0
      %v9761 = vadd.f32 0.0, %v9760
      %v9762 = vpop.f32.mrb[0].mxu0
      %9763 = vmatprep.mubr.f32.mxu0 0.0
      %9764 = vmatmul.mubr.f32.gmra.mrb[0].mxu0 %v9630
      %v9765 = vpop.f32.mrb[0].mxu0
      %v9766 = vadd.f32 0.0, %v9765
      %v9767 = vpop.f32.mrb[0].mxu0
      %9768 = vmatprep.mubr.f32.mxu0 0.0
      %9769 = vmatmul.mubr.f32.gmra.mrb[0].mxu0 %v9633
      %v9770 = vpop.f32.mrb[0].mxu0
      %v9771 = vadd.f32 0.0, %v9770
      %v9772 = vpop.f32.mrb[0].mxu0
      %9773 = vmatprep.mubr.f32.mxu0 0.0
      %9774 = vmatmul.mubr.f32.gmra.mrb[0].mxu0 %v9636
      %v9775 = vpop.f32.mrb[0].mxu0
      %v9776 = vadd.f32 0.0, %v9775
      %v9777 = vpop.f32.mrb[0].mxu0
      %9778 = vmatprep.mubr.f32.mxu0 0.0
      %9779 = vmatmul.mubr.f32.gmra.mrb[0].mxu0 %v9639
      %v9780 = vpop.f32.mrb[0].mxu0
      %v9781 = vadd.f32 0.0, %v9780
      %v9782 = vpop.f32.mrb[0].mxu0
      %9783 = vmatprep.mubr.f32.mxu0 0.0
      %9784 = vmatmul.mubr.f32.gmra.mrb[0].mxu0 %v9642
      %v9785 = vpop.f32.mrb[0].mxu0
      %v9786 = vadd.f32 0.0, %v9785
      %v9787 = vpop.f32.mrb[0].mxu0
      %9788 = vdwg.mxu0
      %vm9789 = vcmp.eq.s32.totalorder %v1204, 3
      %v9790 = vsel %vm9789, %v9711, 0.0
      %v9791 = vsel %vm9789, %v9716, 0.0
      %v9792 = vsel %vm9789, %v9721, 0.0
      %v9793 = vsel %vm9789, %v9726, 0.0
      %v9794 = vsel %vm9789, %v9731, 0.0
      %v9795 = vsel %vm9789, %v9736, 0.0
      %v9796 = vsel %vm9789, %v9741, 0.0
      %v9797 = vsel %vm9789, %v9746, 0.0
      %v9798 = vsel %vm9789, %v9751, 0.0
      %v9799 = vsel %vm9789, %v9756, 0.0
      %v9800 = vsel %vm9789, %v9761, 0.0
      %v9801 = vsel %vm9789, %v9766, 0.0
      %v9802 = vsel %vm9789, %v9771, 0.0
      %v9803 = vsel %vm9789, %v9776, 0.0
      %v9804 = vsel %vm9789, %v9781, 0.0
      %v9805 = vsel %vm9789, %v9786, 0.0
      %v9806 = vadd.f32 %v9563, %v9790
      %v9807 = vadd.f32 %v9564, %v9791
      %v9808 = vadd.f32 %v9565, %v9792
      %v9809 = vadd.f32 %v9566, %v9793
      %v9810 = vadd.f32 %v9567, %v9794
      %v9811 = vadd.f32 %v9568, %v9795
      %v9812 = vadd.f32 %v9569, %v9796
      %v9813 = vadd.f32 %v9570, %v9797
      %v9814 = vadd.f32 %v9571, %v9798
      %v9815 = vadd.f32 %v9572, %v9799
      %v9816 = vadd.f32 %v9573, %v9800
      %v9817 = vadd.f32 %v9574, %v9801
      %v9818 = vadd.f32 %v9575, %v9802
      %v9819 = vadd.f32 %v9576, %v9803
      %v9820 = vadd.f32 %v9577, %v9804
      %v9821 = vadd.f32 %v9578, %v9805
      %vm9822 = vcmask 31744
      %v9823 = vsel %vm9822, %v9806, 0.0
      %9824 = vadd.xlane.f32.xlu0 %v9823
      %v9825 = vpop.xlane.xlu0 %9824
      %v9826 = vsel %vm9822, %v9807, 0.0
      %9827 = vadd.xlane.f32.xlu0 %v9826
      %v9828 = vpop.xlane.xlu0 %9827
      %v9829 = vsel %vm9822, %v9808, 0.0
      %9830 = vadd.xlane.f32.xlu0 %v9829
      %v9831 = vpop.xlane.xlu0 %9830
      %v9832 = vsel %vm9822, %v9809, 0.0
      %9833 = vadd.xlane.f32.xlu0 %v9832
      %v9834 = vpop.xlane.xlu0 %9833
      %v9835 = vsel %vm9822, %v9810, 0.0
      %9836 = vadd.xlane.f32.xlu0 %v9835
      %v9837 = vpop.xlane.xlu0 %9836
      %v9838 = vsel %vm9822, %v9811, 0.0
      %9839 = vadd.xlane.f32.xlu0 %v9838
      %v9840 = vpop.xlane.xlu0 %9839
      %v9841 = vsel %vm9822, %v9812, 0.0
      %9842 = vadd.xlane.f32.xlu0 %v9841
      %v9843 = vpop.xlane.xlu0 %9842
      %v9844 = vsel %vm9822, %v9813, 0.0
      %9845 = vadd.xlane.f32.xlu0 %v9844
      %v9846 = vpop.xlane.xlu0 %9845
      %v9847 = vsel %vm9822, %v9814, 0.0
      %9848 = vadd.xlane.f32.xlu0 %v9847
      %v9849 = vpop.xlane.xlu0 %9848
      %v9850 = vsel %vm9822, %v9815, 0.0
      %9851 = vadd.xlane.f32.xlu0 %v9850
      %v9852 = vpop.xlane.xlu0 %9851
      %v9853 = vsel %vm9822, %v9816, 0.0
      %9854 = vadd.xlane.f32.xlu0 %v9853
      %v9855 = vpop.xlane.xlu0 %9854
      %v9856 = vsel %vm9822, %v9817, 0.0
      %9857 = vadd.xlane.f32.xlu0 %v9856
      %v9858 = vpop.xlane.xlu0 %9857
      %v9859 = vsel %vm9822, %v9818, 0.0
      %9860 = vadd.xlane.f32.xlu0 %v9859
      %v9861 = vpop.xlane.xlu0 %9860
      %v9862 = vsel %vm9822, %v9819, 0.0
      %9863 = vadd.xlane.f32.xlu0 %v9862
      %v9864 = vpop.xlane.xlu0 %9863
      %v9865 = vsel %vm9822, %v9820, 0.0
      %9866 = vadd.xlane.f32.xlu0 %v9865
      %v9867 = vpop.xlane.xlu0 %9866
      %v9868 = vsel %vm9822, %v9821, 0.0
      %9869 = vadd.xlane.f32.xlu0 %v9868
      %v9870 = vpop.xlane.xlu0 %9869
      %v9871 = vld [vmem:[%s77] sm:$0xff]
      %v9872 = vld [vmem:[%s77 + $0x8] sm:$0xff]
      %v9873 = vld [vmem:[%s77 + $0x10] sm:$0xff]
      %v9874 = vld [vmem:[%s77 + $0x18] sm:$0xff]
      %v9875 = vld [vmem:[%s77 + $0x20] sm:$0xff]
      %v9876 = vld [vmem:[%s77 + $0x28] sm:$0xff]
      %v9877 = vld [vmem:[%s77 + $0x30] sm:$0xff]
      %v9878 = vld [vmem:[%s77 + $0x38] sm:$0xff]
      %v9879 = vld [vmem:[%s77 + $0x40] sm:$0xff]
      %v9880 = vld [vmem:[%s77 + $0x48] sm:$0xff]
      %v9881 = vld [vmem:[%s77 + $0x50] sm:$0xff]
      %v9882 = vld [vmem:[%s77 + $0x58] sm:$0xff]
      %v9883 = vld [vmem:[%s77 + $0x60] sm:$0xff]
      %v9884 = vld [vmem:[%s77 + $0x68] sm:$0xff]
      %v9885 = vld [vmem:[%s77 + $0x70] sm:$0xff]
      %v9886 = vld [vmem:[%s77 + $0x78] sm:$0xff]
      %v9887 = vadd.f32 %v9825, %v9871
      %v9888 = vadd.f32 %v9828, %v9872
      %v9889 = vadd.f32 %v9831, %v9873
      %v9890 = vadd.f32 %v9834, %v9874
      %v9891 = vadd.f32 %v9837, %v9875
      %v9892 = vadd.f32 %v9840, %v9876
      %v9893 = vadd.f32 %v9843, %v9877
      %v9894 = vadd.f32 %v9846, %v9878
      %v9895 = vadd.f32 %v9849, %v9879
      %v9896 = vadd.f32 %v9852, %v9880
      %v9897 = vadd.f32 %v9855, %v9881
      %v9898 = vadd.f32 %v9858, %v9882
      %v9899 = vadd.f32 %v9861, %v9883
      %v9900 = vadd.f32 %v9864, %v9884
      %v9901 = vadd.f32 %v9867, %v9885
      %v9902 = vadd.f32 %v9870, %v9886
      %vm9903 = vcmask 7168
      %9904 = vst.msk [vmem:[%s1176] sm:$0xff] %vm9903, %v9887
      %9905 = vst.msk [vmem:[%s1176 + $0x8] sm:$0xff] %vm9903, %v9888
      %9906 = vst.msk [vmem:[%s1176 + $0x10] sm:$0xff] %vm9903, %v9889
      %9907 = vst.msk [vmem:[%s1176 + $0x18] sm:$0xff] %vm9903, %v9890
      %9908 = vst.msk [vmem:[%s1176 + $0x20] sm:$0xff] %vm9903, %v9891
      %9909 = vst.msk [vmem:[%s1176 + $0x28] sm:$0xff] %vm9903, %v9892
      %9910 = vst.msk [vmem:[%s1176 + $0x30] sm:$0xff] %vm9903, %v9893
      %9911 = vst.msk [vmem:[%s1176 + $0x38] sm:$0xff] %vm9903, %v9894
      %9912 = vst.msk [vmem:[%s1176 + $0x40] sm:$0xff] %vm9903, %v9895
      %9913 = vst.msk [vmem:[%s1176 + $0x48] sm:$0xff] %vm9903, %v9896
      %9914 = vst.msk [vmem:[%s1176 + $0x50] sm:$0xff] %vm9903, %v9897
      %9915 = vst.msk [vmem:[%s1176 + $0x58] sm:$0xff] %vm9903, %v9898
      %9916 = vst.msk [vmem:[%s1176 + $0x60] sm:$0xff] %vm9903, %v9899
      %9917 = vst.msk [vmem:[%s1176 + $0x68] sm:$0xff] %vm9903, %v9900
      %9918 = vst.msk [vmem:[%s1176 + $0x70] sm:$0xff] %vm9903, %v9901
      %9919 = vst.msk [vmem:[%s1176 + $0x78] sm:$0xff] %vm9903, %v9902
      %p9920 = scmp.lt.s32.totalorder %s90, 1
      %s9921 = scalar_select %p9920, %s90, 1
      %s9922 = smul.addr %s9921, 16
      %s9923 = smul.addr %s9922, 8
      %s9924 = scalar_lea.vmem %s79, %s9923
      // Predicated region
      $region177: #{_lambda_.1} parent=175 // pred_check
        %p9925 = pneg %p932
      $region178: #{_lambda_.1} parent=175 // pred_check_branch
        %9927 = sbr.rel (%p9925) target = $region180
      $region179: #{_lambda_.1} parent=175 // pred_region
        _
      $region180: #{_lambda_.1} parent=175 // pred_fallthru
        _
    $region176: #{_lambda_.1} parent=5 // pred_fallthru
      _
    %p9928 = scmp.le.s32.totalorder 2, %s85
    // Predicated region
    $region181: #{_lambda_.1} parent=5 // pred_check
      %p9929 = pneg %p9928
    $region182: #{_lambda_.1} parent=5 // pred_check_branch
      %9931 = sbr.rel (%p9929) target = $region184
    $region183: #{_lambda_.1} parent=5 // pred_region
      %s9932 = ssub.s32 %s85, 2
      // Predicated region
      $region185: #{_lambda_.1} parent=183 // pred_check
        %p9933 = pneg %p938
      $region186: #{_lambda_.1} parent=183 // pred_check_branch
        %9935 = sbr.rel (%p9933) target = $region188
      $region187: #{_lambda_.1} parent=183 // pred_region
        %p9936 = scmp.lt.s32.totalorder %s91, 1
        %s9937 = scalar_select %p9936, %s91, 1
        %s9938 = smul.addr %s9937, 16
        %s9939 = smul.addr %s9938, 8
        %s9940 = scalar_lea.vmem %s79, %s9939
      $region188: #{_lambda_.1} parent=183 // pred_fallthru
        _
    $region184: #{_lambda_.1} parent=5 // pred_fallthru
      _
  $region6: #{_lambda_.1} parent=0 // loop_footer
    %s89 = sadd.s32 1, %s85
  $region7: #{_lambda_.1} parent=0 // loop_footer_branch
    %84 = sbr.rel target = $region3
  $region8: #{_lambda_.1} parent=0 // loop_exit
    _

</llo_original>
